<compile_context>
chip_gen: v7x
topology: tpu7x:2x2x1
jax: 0.10.0
libtpu: 0.0.40
codegen_flags: <defaults>
</compile_context>

<pallas_src>
import functools

import jax
import jax.numpy as jnp
import numpy as np
from jax import lax
from jax.experimental import pallas as pl
from jax.experimental.pallas import tpu as pltpu


# ----------------------------------------------------------------------------- #
# Fused per-stream kernel: replicate-pad -> conv0 (+ReLU) -> replicate-pad ->
# conv1 (all heads), one grid step per stream, batch folded into the matmul M.
# ----------------------------------------------------------------------------- #
def _fused_stream_kernel(x_ref, w0_ref, b0_ref, w1t_ref, b1_ref, o_ref,
                         xp_ref, p0_ref, yp_ref, p1_ref,
                         *, N, H, W, Cin, Hid, Ctot):
    # x_ref  : (N, H, W, Cin)        input tile for this stream
    # w0_ref : (9*Cin, Hid)          stage-0 weights, taps flattened into K
    # b0_ref : (1, Hid)
    # w1t_ref: (Ctot, 9*Hid)         stage-1 weights, pre-transposed (heads on rows)
    # b1_ref : (Ctot, 1)
    # o_ref  : (Ctot, N*H*W)         lane-dense output (spatial on lanes)
    # scratch: xp (N,H+2,W+2,Cin), p0 (N*H*W, 9*Cin), yp (N,H+2,W+2,Hid),
    #          p1 (N*H*W, 9*Hid)
    NHW = N * H * W

    # ---- replicate-pad x into xp_ref ------------------------------------- #
    x = x_ref[...]
    xp_ref[:, 1:H + 1, 1:W + 1, :] = x
    xp_ref[:, 0:1, 1:W + 1, :] = x[:, 0:1]
    xp_ref[:, H + 1:H + 2, 1:W + 1, :] = x[:, H - 1:H]
    xp_ref[:, :, 0:1, :] = xp_ref[:, :, 1:2, :]
    xp_ref[:, :, W + 1:W + 2, :] = xp_ref[:, :, W:W + 1, :]

    # ---- stage 0: im2col-lite patches + ONE matmul + bias + ReLU ---------- #
    t = 0
    for dh in range(3):
        for dw in range(3):
            slab = xp_ref[:, dh:dh + H, dw:dw + W, :]          # (N, H, W, Cin)
            p0_ref[:, t * Cin:(t + 1) * Cin] = slab.reshape(NHW, Cin)
            t += 1
    y = jnp.dot(p0_ref[...], w0_ref[...],
                preferred_element_type=jnp.float32)            # (NHW, Hid)
    y = jnp.maximum(y + b0_ref[...], 0.0)

    # ---- replicate-pad y into yp_ref (y stays in VMEM, no HBM round trip) - #
    y4 = y.reshape(N, H, W, Hid)
    yp_ref[:, 1:H + 1, 1:W + 1, :] = y4
    yp_ref[:, 0:1, 1:W + 1, :] = y4[:, 0:1]
    yp_ref[:, H + 1:H + 2, 1:W + 1, :] = y4[:, H - 1:H]
    yp_ref[:, :, 0:1, :] = yp_ref[:, :, 1:2, :]
    yp_ref[:, :, W + 1:W + 2, :] = yp_ref[:, :, W:W + 1, :]

    # ---- stage 1: im2col-lite patches + ONE transposed matmul ------------- #
    t = 0
    for dh in range(3):
        for dw in range(3):
            slab = yp_ref[:, dh:dh + H, dw:dw + W, :]          # (N, H, W, Hid)
            p1_ref[:, t * Hid:(t + 1) * Hid] = slab.reshape(NHW, Hid)
            t += 1
    # z_t[co, m] = sum_k w1t[co, k] * p1[m, k]   (a @ b^T form, lane-dense result)
    z_t = lax.dot_general(w1t_ref[...], p1_ref[...],
                          (((1,), (1,)), ((), ())),
                          preferred_element_type=jnp.float32)   # (Ctot, NHW)
    o_ref[...] = (z_t + b1_ref[...]).astype(o_ref.dtype)


def fused_cross_convs(x_stack, w0f, b0, w1t, b1):
    """x_stack: (S, N, H, W, Cin); w0f: (S, 9*Cin, Hid); b0: (S, 1, Hid);
       w1t: (S, Ctot, 9*Hid); b1: (S, Ctot, 1) -> (S, Ctot, N*H*W)."""
    S, N, H, W, Cin = x_stack.shape
    Hid = w0f.shape[-1]
    Ctot = w1t.shape[1]
    NHW = N * H * W
    kern = functools.partial(_fused_stream_kernel, N=N, H=H, W=W,
                             Cin=Cin, Hid=Hid, Ctot=Ctot)
    return pl.pallas_call(
        kern,
        out_shape=jax.ShapeDtypeStruct((S, Ctot, NHW), jnp.float32),
        grid=(S,),
        in_specs=[
            pl.BlockSpec((pl.Squeezed(), N, H, W, Cin),
                         lambda s: (s, 0, 0, 0, 0)),
            pl.BlockSpec((pl.Squeezed(), 9 * Cin, Hid), lambda s: (s, 0, 0)),
            pl.BlockSpec((pl.Squeezed(), 1, Hid), lambda s: (s, 0, 0)),
            pl.BlockSpec((pl.Squeezed(), Ctot, 9 * Hid), lambda s: (s, 0, 0)),
            pl.BlockSpec((pl.Squeezed(), Ctot, 1), lambda s: (s, 0, 0)),
        ],
        out_specs=pl.BlockSpec((pl.Squeezed(), Ctot, NHW),
                               lambda s: (s, 0, 0)),
        scratch_shapes=[
            pltpu.VMEM((N, H + 2, W + 2, Cin), jnp.float32),   # padded x
            pltpu.VMEM((NHW, 9 * Cin), jnp.float32),           # stage-0 patches
            pltpu.VMEM((N, H + 2, W + 2, Hid), jnp.float32),   # padded y
            pltpu.VMEM((NHW, 9 * Hid), jnp.float32),           # stage-1 patches
        ],
        # 5 parallel steps; on v7x (2 TCs) one could split N out for a 10-way
        # even split, but fewer/bigger steps win on single-TC v5e/v6e.
        compiler_params=pltpu.CompilerParams(
            dimension_semantics=("parallel",)),
    )(x_stack, w0f, b0, w1t, b1)


# ----------------------------------------------------------------------------- #
# Parameter init (deterministic, shapes per the module's __init__; HWIO weights)
# ----------------------------------------------------------------------------- #
def init_params(key, in_channels, channels, channels_hidden):
    names = []
    for i in range(5):
        names.append((f"conv_scale{i}_0", in_channels, channels_hidden))
        names.append((f"conv_scale{i}_1", channels_hidden, channels))
    for k in range(4):
        names.append((f"topview_up{k}", channels_hidden, channels))
        names.append((f"topview_down{k}", channels_hidden, channels))
    for a, bpair in [("1", "2"), ("1", "4"), ("2", "1"), ("2", "3"),
                     ("3", "2"), ("3", "4"), ("4", "1"), ("4", "3")]:
        names.append((f"cross_conv{a}{bpair}", channels_hidden, channels))

    params = {}
    for (name, cin, cout) in names:
        key, kw, kb = jax.random.split(key, 3)
        params[name + "_w"] = 0.1 * jax.random.normal(kw, (3, 3, cin, cout),
                                                      jnp.float32)
        params[name + "_b"] = 0.1 * jax.random.normal(kb, (cout,), jnp.float32)

    # gammas: nn.Parameter(torch.zeros(1)) in __init__; set deterministic nonzero
    # values here so the synthetic forward is non-trivial.
    for i in range(5):
        params[f"gamma{i}"] = jnp.float32(0.1 * (i + 1))

    # deterministic permutation of the 5 scales (module uses np.random.permutation)
    perm = np.array([2, 0, 4, 1, 3], dtype=np.int64)
    perm_inv = np.zeros_like(perm)
    for i, p in enumerate(perm):
        perm_inv[p] = i
    params["perm"] = perm
    params["perm_inv"] = perm_inv
    return params


# ----------------------------------------------------------------------------- #
# Forward pass (single Pallas kernel for all 21 convs; tiny XLA glue elsewhere)
# ----------------------------------------------------------------------------- #
def forward(params, xs_nchw):
    perm, perm_inv = params["perm"], params["perm_inv"]
    Cin = params["conv_scale0_0_w"].shape[2]
    Hid = params["conv_scale0_0_w"].shape[3]
    C = params["conv_scale0_1_w"].shape[-1]

    # NCHW -> NHWC, apply the scale permutation, stack streams.
    xs = [jnp.transpose(x, (0, 2, 3, 1)) for x in xs_nchw]
    xs = [xs[int(perm[i])] for i in range(5)]
    x_stack = jnp.stack(xs, axis=0)                       # (5, N, H, W, Cin)
    S, N, H, W, _ = x_stack.shape

    # Stage-0 weights flattened to (9*Cin, Hid) (tap index major, channel minor).
    w0f = jnp.stack([params[f"conv_scale{i}_0_w"].reshape(9 * Cin, Hid)
                     for i in range(5)], axis=0)          # (5, 9*Cin, Hid)
    b0 = jnp.stack([params[f"conv_scale{i}_0_b"] for i in range(5)],
                   axis=0)[:, None, :]                    # (5, 1, Hid)

    # Stage-1: every consumer of y_i packed along output channels ("heads").
    # Stream 0 has 5 consumers, streams 1-4 have 4 (+ one zero head); the zero
    # head costs no extra MXU passes (Ctot=5*C << 128), only negligible writeback.
    zeros_w = jnp.zeros_like(params["conv_scale0_1_w"])
    zeros_b = jnp.zeros_like(params["conv_scale0_1_b"])
    head_names = [
        ["conv_scale0_1", "topview_up0", "topview_up1", "topview_up2", "topview_up3"],
        ["conv_scale1_1", "topview_down0", "cross_conv12", "cross_conv14", None],
        ["conv_scale2_1", "topview_down1", "cross_conv21", "cross_conv23", None],
        ["conv_scale3_1", "topview_down2", "cross_conv32", "cross_conv34", None],
        ["conv_scale4_1", "topview_down3", "cross_conv41", "cross_conv43", None],
    ]
    Ctot = 5 * C
    w1 = jnp.stack(
        [jnp.concatenate([params[h + "_w"] if h else zeros_w for h in hs], axis=-1)
         for hs in head_names], axis=0)                   # (5, 3, 3, Hid, 5*C)
    # Pre-transpose in XLA (free) so the kernel's dot_general yields a lane-dense
    # (Ctot, N*H*W) result without any in-kernel transpose.
    w1t = jnp.transpose(w1.reshape(S, 9 * Hid, Ctot), (0, 2, 1))   # (5, Ctot, 9*Hid)
    b1 = jnp.stack(
        [jnp.concatenate([params[h + "_b"] if h else zeros_b for h in hs], axis=-1)
         for hs in head_names], axis=0)[:, :, None]       # (5, Ctot, 1)

    z = fused_cross_convs(x_stack, w0f, b0, w1t, b1)      # (5, Ctot, N*H*W)
    zz = z.reshape(S, 5, C, N, H, W)

    def head(s, k):
        return zz[s, k]                                   # (C, N, H, W)

    main = [head(s, 0) for s in range(5)]
    top_up = [head(0, k) for k in range(1, 5)]            # topview_up0..3 on y0
    top_down = [head(s, 1) for s in range(1, 5)]          # topview_down0..3 on y1..y4
    y12, y14 = head(1, 2), head(1, 3)
    y21, y23 = head(2, 2), head(2, 3)
    y32, y34 = head(3, 2), head(3, 3)
    y41, y43 = head(4, 2), head(4, 3)

    out0 = main[0] + 0.25 * (top_down[0] + top_down[1] + top_down[2] + top_down[3])
    out1 = main[1] + (1.0 / 3.0) * (top_up[0] + y21 + y41)
    out2 = main[2] + (1.0 / 3.0) * (top_up[1] + y12 + y32)
    out3 = main[3] + (1.0 / 3.0) * (top_up[2] + y23 + y43)
    out4 = main[4] + (1.0 / 3.0) * (top_up[3] + y14 + y34)

    outs = [out0 * params["gamma0"], out1 * params["gamma1"],
            out2 * params["gamma2"], out3 * params["gamma3"],
            out4 * params["gamma4"]]
    outs = [outs[int(perm_inv[i])] for i in range(5)]
    # (C, N, H, W) -> (N, C, H, W)
    return tuple(jnp.transpose(o, (1, 0, 2, 3)) for o in outs)


# ----------------------------------------------------------------------------- #
# Pure-JAX reference (mirrors the PyTorch forward op-by-op) for validation
# ----------------------------------------------------------------------------- #
def reference_forward(params, xs_nchw):
    def conv(name, x_nhwc):
        xpad = jnp.pad(x_nhwc, ((0, 0), (1, 1), (1, 1), (0, 0)), mode="edge")
        out = jax.lax.conv_general_dilated(
            xpad, params[name + "_w"], (1, 1), "VALID",
            dimension_numbers=("NHWC", "HWIO", "NHWC"))
        return out + params[name + "_b"]

    perm, perm_inv = params["perm"], params["perm_inv"]
    xs = [jnp.transpose(x, (0, 2, 3, 1)) for x in xs_nchw]
    x = [xs[int(perm[i])] for i in range(5)]
    y = [jax.nn.relu(conv(f"conv_scale{i}_0", x[i])) for i in range(5)]
    out = [conv(f"conv_scale{i}_1", y[i]) for i in range(5)]
    top_up = [conv(f"topview_up{k}", y[0]) for k in range(4)]
    top_down = [conv(f"topview_down{k}", y[k + 1]) for k in range(4)]
    y21, y41 = conv("cross_conv21", y[2]), conv("cross_conv41", y[4])
    y12, y32 = conv("cross_conv12", y[1]), conv("cross_conv32", y[3])
    y23, y43 = conv("cross_conv23", y[2]), conv("cross_conv43", y[4])
    y14, y34 = conv("cross_conv14", y[1]), conv("cross_conv34", y[3])
    out[0] = out[0] + 0.25 * (top_down[0] + top_down[1] + top_down[2] + top_down[3])
    out[1] = out[1] + (1.0 / 3.0) * (top_up[0] + y21 + y41)
    out[2] = out[2] + (1.0 / 3.0) * (top_up[1] + y12 + y32)
    out[3] = out[3] + (1.0 / 3.0) * (top_up[2] + y23 + y43)
    out[4] = out[4] + (1.0 / 3.0) * (top_up[3] + y14 + y34)
    out = [out[i] * params[f"gamma{i}"] for i in range(5)]
    out = [out[int(perm_inv[i])] for i in range(5)]
    return tuple(jnp.transpose(o, (0, 3, 1, 2)) for o in out)


# ----------------------------------------------------------------------------- #
if __name__ == "__main__":
    N, C_IN, C_OUT, HID, HW = 2, 4, 4, 8, 16

    key = jax.random.PRNGKey(0)
    key, kp = jax.random.split(key)
    params = init_params(kp, C_IN, C_OUT, HID)

    xs = []
    for _ in range(5):
        key, kx = jax.random.split(key)
        xs.append(jax.random.normal(kx, (N, C_IN, HW, HW), jnp.float32))

    outs = forward(params, xs)
    outs = jax.block_until_ready(outs)

    refs = jax.block_until_ready(reference_forward(params, xs))
    for o, r in zip(outs, refs):
        assert o.shape == (N, C_OUT, HW, HW)
        np.testing.assert_allclose(np.asarray(o), np.asarray(r),
                                   rtol=1e-4, atol=1e-4)

    print("KERNEL_OK")
</pallas_src>

<mosaic_0001>
module attributes {stable_mosaic.version = 11 : i64} {
  func.func @_fused_stream_kernel(%arg0: i32, %arg1: memref<1x2x16x16x4xf32, #tpu.memory_space<vmem>>, %arg2: memref<1x36x8xf32, #tpu.memory_space<vmem>>, %arg3: memref<1x1x8xf32, #tpu.memory_space<vmem>>, %arg4: memref<1x20x72xf32, #tpu.memory_space<vmem>>, %arg5: memref<1x20x1xf32, #tpu.memory_space<vmem>>, %arg6: memref<1x20x512xf32, #tpu.memory_space<vmem>>, %arg7: memref<2x18x18x4xf32, #tpu.memory_space<vmem>>, %arg8: memref<512x36xf32, #tpu.memory_space<vmem>>, %arg9: memref<2x18x18x8xf32, #tpu.memory_space<vmem>>, %arg10: memref<512x72xf32, #tpu.memory_space<vmem>>) attributes {dimension_semantics = [#tpu.dimension_semantics<parallel>], iteration_bounds = array<i64: 5>, scalar_prefetch = 0 : i64, scratch_operands = 4 : i64, tpu.core_type = #tpu.core_type<tc>, window_params = [{transform_indices = @transform_0, window_bounds = array<i64: 1, 2, 16, 16, 4>}, {transform_indices = @transform_1, window_bounds = array<i64: 1, 36, 8>}, {transform_indices = @transform_2, window_bounds = array<i64: 1, 1, 8>}, {transform_indices = @transform_3, window_bounds = array<i64: 1, 20, 72>}, {transform_indices = @transform_4, window_bounds = array<i64: 1, 20, 1>}, {transform_indices = @transform_5, window_bounds = array<i64: 1, 20, 512>}]} {
    %c0 = arith.constant 0 : index
    %c0_0 = arith.constant 0 : index
    %c0_1 = arith.constant 0 : index
    %c0_2 = arith.constant 0 : index
    %c0_3 = arith.constant 0 : index
    %0 = vector.load %arg1[%c0, %c0_0, %c0_1, %c0_2, %c0_3] : memref<1x2x16x16x4xf32, #tpu.memory_space<vmem>>, vector<1x2x16x16x4xf32>
    %1 = vector.shape_cast %0 : vector<1x2x16x16x4xf32> to vector<2x16x16x4xf32>
    %c0_4 = arith.constant 0 : index
    %c1 = arith.constant 1 : index
    %c1_5 = arith.constant 1 : index
    %c0_6 = arith.constant 0 : index
    %2 = vector.load %arg7[%c0_4, %c1, %c1_5, %c0_6] : memref<2x18x18x4xf32, #tpu.memory_space<vmem>>, vector<2x16x16x4xf32>
    tpu.vector_store %arg7[%c0_4, %c1, %c1_5, %c0_6], %1 {strides = array<i32>} : memref<2x18x18x4xf32, #tpu.memory_space<vmem>>, vector<2x16x16x4xf32>,
    %3 = vector.extract_strided_slice %1 {offsets = [0, 0, 0, 0], sizes = [2, 1, 16, 4], strides = [1, 1, 1, 1]} : vector<2x16x16x4xf32> to vector<2x1x16x4xf32>
    %c0_7 = arith.constant 0 : index
    %c0_8 = arith.constant 0 : index
    %c1_9 = arith.constant 1 : index
    %c0_10 = arith.constant 0 : index
    %4 = vector.load %arg7[%c0_7, %c0_8, %c1_9, %c0_10] : memref<2x18x18x4xf32, #tpu.memory_space<vmem>>, vector<2x1x16x4xf32>
    tpu.vector_store %arg7[%c0_7, %c0_8, %c1_9, %c0_10], %3 {strides = array<i32>} : memref<2x18x18x4xf32, #tpu.memory_space<vmem>>, vector<2x1x16x4xf32>,
    %5 = vector.extract_strided_slice %1 {offsets = [0, 15, 0, 0], sizes = [2, 1, 16, 4], strides = [1, 1, 1, 1]} : vector<2x16x16x4xf32> to vector<2x1x16x4xf32>
    %c0_11 = arith.constant 0 : index
    %c17 = arith.constant 17 : index
    %c1_12 = arith.constant 1 : index
    %c0_13 = arith.constant 0 : index
    %6 = vector.load %arg7[%c0_11, %c17, %c1_12, %c0_13] : memref<2x18x18x4xf32, #tpu.memory_space<vmem>>, vector<2x1x16x4xf32>
    tpu.vector_store %arg7[%c0_11, %c17, %c1_12, %c0_13], %5 {strides = array<i32>} : memref<2x18x18x4xf32, #tpu.memory_space<vmem>>, vector<2x1x16x4xf32>,
    %c0_14 = arith.constant 0 : index
    %c0_15 = arith.constant 0 : index
    %c1_16 = arith.constant 1 : index
    %c0_17 = arith.constant 0 : index
    %7 = vector.load %arg7[%c0_14, %c0_15, %c1_16, %c0_17] : memref<2x18x18x4xf32, #tpu.memory_space<vmem>>, vector<2x18x1x4xf32>
    %c0_18 = arith.constant 0 : index
    %c0_19 = arith.constant 0 : index
    %c0_20 = arith.constant 0 : index
    %c0_21 = arith.constant 0 : index
    %8 = vector.load %arg7[%c0_18, %c0_19, %c0_20, %c0_21] : memref<2x18x18x4xf32, #tpu.memory_space<vmem>>, vector<2x18x1x4xf32>
    tpu.vector_store %arg7[%c0_18, %c0_19, %c0_20, %c0_21], %7 {strides = array<i32>} : memref<2x18x18x4xf32, #tpu.memory_space<vmem>>, vector<2x18x1x4xf32>,
    %c0_22 = arith.constant 0 : index
    %c0_23 = arith.constant 0 : index
    %c16 = arith.constant 16 : index
    %c0_24 = arith.constant 0 : index
    %9 = vector.load %arg7[%c0_22, %c0_23, %c16, %c0_24] : memref<2x18x18x4xf32, #tpu.memory_space<vmem>>, vector<2x18x1x4xf32>
    %c0_25 = arith.constant 0 : index
    %c0_26 = arith.constant 0 : index
    %c17_27 = arith.constant 17 : index
    %c0_28 = arith.constant 0 : index
    %10 = vector.load %arg7[%c0_25, %c0_26, %c17_27, %c0_28] : memref<2x18x18x4xf32, #tpu.memory_space<vmem>>, vector<2x18x1x4xf32>
    tpu.vector_store %arg7[%c0_25, %c0_26, %c17_27, %c0_28], %9 {strides = array<i32>} : memref<2x18x18x4xf32, #tpu.memory_space<vmem>>, vector<2x18x1x4xf32>,
    %c0_29 = arith.constant 0 : index
    %c0_30 = arith.constant 0 : index
    %c0_31 = arith.constant 0 : index
    %c0_32 = arith.constant 0 : index
    %11 = vector.load %arg7[%c0_29, %c0_30, %c0_31, %c0_32] : memref<2x18x18x4xf32, #tpu.memory_space<vmem>>, vector<2x16x16x4xf32>
    %12 = vector.shape_cast %11 : vector<2x16x16x4xf32> to vector<512x4xf32>
    %c0_33 = arith.constant 0 : index
    %c0_34 = arith.constant 0 : index
    %13 = vector.load %arg8[%c0_33, %c0_34] : memref<512x36xf32, #tpu.memory_space<vmem>>, vector<512x4xf32>
    tpu.vector_store %arg8[%c0_33, %c0_34], %12 {strides = array<i32>} : memref<512x36xf32, #tpu.memory_space<vmem>>, vector<512x4xf32>,
    %c0_35 = arith.constant 0 : index
    %c0_36 = arith.constant 0 : index
    %c1_37 = arith.constant 1 : index
    %c0_38 = arith.constant 0 : index
    %14 = vector.load %arg7[%c0_35, %c0_36, %c1_37, %c0_38] : memref<2x18x18x4xf32, #tpu.memory_space<vmem>>, vector<2x16x16x4xf32>
    %15 = vector.shape_cast %14 : vector<2x16x16x4xf32> to vector<512x4xf32>
    %c0_39 = arith.constant 0 : index
    %c4 = arith.constant 4 : index
    %16 = vector.load %arg8[%c0_39, %c4] : memref<512x36xf32, #tpu.memory_space<vmem>>, vector<512x4xf32>
    tpu.vector_store %arg8[%c0_39, %c4], %15 {strides = array<i32>} : memref<512x36xf32, #tpu.memory_space<vmem>>, vector<512x4xf32>,
    %c0_40 = arith.constant 0 : index
    %c0_41 = arith.constant 0 : index
    %c2 = arith.constant 2 : index
    %c0_42 = arith.constant 0 : index
    %17 = vector.load %arg7[%c0_40, %c0_41, %c2, %c0_42] : memref<2x18x18x4xf32, #tpu.memory_space<vmem>>, vector<2x16x16x4xf32>
    %18 = vector.shape_cast %17 : vector<2x16x16x4xf32> to vector<512x4xf32>
    %c0_43 = arith.constant 0 : index
    %c8 = arith.constant 8 : index
    %19 = vector.load %arg8[%c0_43, %c8] : memref<512x36xf32, #tpu.memory_space<vmem>>, vector<512x4xf32>
    tpu.vector_store %arg8[%c0_43, %c8], %18 {strides = array<i32>} : memref<512x36xf32, #tpu.memory_space<vmem>>, vector<512x4xf32>,
    %c0_44 = arith.constant 0 : index
    %c1_45 = arith.constant 1 : index
    %c0_46 = arith.constant 0 : index
    %c0_47 = arith.constant 0 : index
    %20 = vector.load %arg7[%c0_44, %c1_45, %c0_46, %c0_47] : memref<2x18x18x4xf32, #tpu.memory_space<vmem>>, vector<2x16x16x4xf32>
    %21 = vector.shape_cast %20 : vector<2x16x16x4xf32> to vector<512x4xf32>
    %c0_48 = arith.constant 0 : index
    %c12 = arith.constant 12 : index
    %22 = vector.load %arg8[%c0_48, %c12] : memref<512x36xf32, #tpu.memory_space<vmem>>, vector<512x4xf32>
    tpu.vector_store %arg8[%c0_48, %c12], %21 {strides = array<i32>} : memref<512x36xf32, #tpu.memory_space<vmem>>, vector<512x4xf32>,
    %c0_49 = arith.constant 0 : index
    %c1_50 = arith.constant 1 : index
    %c1_51 = arith.constant 1 : index
    %c0_52 = arith.constant 0 : index
    %23 = vector.load %arg7[%c0_49, %c1_50, %c1_51, %c0_52] : memref<2x18x18x4xf32, #tpu.memory_space<vmem>>, vector<2x16x16x4xf32>
    %24 = vector.shape_cast %23 : vector<2x16x16x4xf32> to vector<512x4xf32>
    %c0_53 = arith.constant 0 : index
    %c16_54 = arith.constant 16 : index
    %25 = vector.load %arg8[%c0_53, %c16_54] : memref<512x36xf32, #tpu.memory_space<vmem>>, vector<512x4xf32>
    tpu.vector_store %arg8[%c0_53, %c16_54], %24 {strides = array<i32>} : memref<512x36xf32, #tpu.memory_space<vmem>>, vector<512x4xf32>,
    %c0_55 = arith.constant 0 : index
    %c1_56 = arith.constant 1 : index
    %c2_57 = arith.constant 2 : index
    %c0_58 = arith.constant 0 : index
    %26 = vector.load %arg7[%c0_55, %c1_56, %c2_57, %c0_58] : memref<2x18x18x4xf32, #tpu.memory_space<vmem>>, vector<2x16x16x4xf32>
    %27 = vector.shape_cast %26 : vector<2x16x16x4xf32> to vector<512x4xf32>
    %c0_59 = arith.constant 0 : index
    %c20 = arith.constant 20 : index
    %28 = vector.load %arg8[%c0_59, %c20] : memref<512x36xf32, #tpu.memory_space<vmem>>, vector<512x4xf32>
    tpu.vector_store %arg8[%c0_59, %c20], %27 {strides = array<i32>} : memref<512x36xf32, #tpu.memory_space<vmem>>, vector<512x4xf32>,
    %c0_60 = arith.constant 0 : index
    %c2_61 = arith.constant 2 : index
    %c0_62 = arith.constant 0 : index
    %c0_63 = arith.constant 0 : index
    %29 = vector.load %arg7[%c0_60, %c2_61, %c0_62, %c0_63] : memref<2x18x18x4xf32, #tpu.memory_space<vmem>>, vector<2x16x16x4xf32>
    %30 = vector.shape_cast %29 : vector<2x16x16x4xf32> to vector<512x4xf32>
    %c0_64 = arith.constant 0 : index
    %c24 = arith.constant 24 : index
    %31 = vector.load %arg8[%c0_64, %c24] : memref<512x36xf32, #tpu.memory_space<vmem>>, vector<512x4xf32>
    tpu.vector_store %arg8[%c0_64, %c24], %30 {strides = array<i32>} : memref<512x36xf32, #tpu.memory_space<vmem>>, vector<512x4xf32>,
    %c0_65 = arith.constant 0 : index
    %c2_66 = arith.constant 2 : index
    %c1_67 = arith.constant 1 : index
    %c0_68 = arith.constant 0 : index
    %32 = vector.load %arg7[%c0_65, %c2_66, %c1_67, %c0_68] : memref<2x18x18x4xf32, #tpu.memory_space<vmem>>, vector<2x16x16x4xf32>
    %33 = vector.shape_cast %32 : vector<2x16x16x4xf32> to vector<512x4xf32>
    %c0_69 = arith.constant 0 : index
    %c28 = arith.constant 28 : index
    %34 = vector.load %arg8[%c0_69, %c28] : memref<512x36xf32, #tpu.memory_space<vmem>>, vector<512x4xf32>
    tpu.vector_store %arg8[%c0_69, %c28], %33 {strides = array<i32>} : memref<512x36xf32, #tpu.memory_space<vmem>>, vector<512x4xf32>,
    %c0_70 = arith.constant 0 : index
    %c2_71 = arith.constant 2 : index
    %c2_72 = arith.constant 2 : index
    %c0_73 = arith.constant 0 : index
    %35 = vector.load %arg7[%c0_70, %c2_71, %c2_72, %c0_73] : memref<2x18x18x4xf32, #tpu.memory_space<vmem>>, vector<2x16x16x4xf32>
    %36 = vector.shape_cast %35 : vector<2x16x16x4xf32> to vector<512x4xf32>
    %c0_74 = arith.constant 0 : index
    %c32 = arith.constant 32 : index
    %37 = vector.load %arg8[%c0_74, %c32] : memref<512x36xf32, #tpu.memory_space<vmem>>, vector<512x4xf32>
    tpu.vector_store %arg8[%c0_74, %c32], %36 {strides = array<i32>} : memref<512x36xf32, #tpu.memory_space<vmem>>, vector<512x4xf32>,
    %c0_75 = arith.constant 0 : index
    %c0_76 = arith.constant 0 : index
    %38 = vector.load %arg8[%c0_75, %c0_76] : memref<512x36xf32, #tpu.memory_space<vmem>>, vector<512x36xf32>
    %c0_77 = arith.constant 0 : index
    %c0_78 = arith.constant 0 : index
    %c0_79 = arith.constant 0 : index
    %39 = vector.load %arg2[%c0_77, %c0_78, %c0_79] : memref<1x36x8xf32, #tpu.memory_space<vmem>>, vector<1x36x8xf32>
    %40 = vector.shape_cast %39 : vector<1x36x8xf32> to vector<36x8xf32>
    %cst = arith.constant dense<0.000000e+00> : vector<512x8xf32>
    %41 = tpu.matmul %38, %40, %cst {dimension_numbers = #tpu.dot_dimension_numbers<[1], [0], [0], [1], [0, 0, 1, 1], [], []>} : vector<512x36xf32>, vector<36x8xf32>, vector<512x8xf32> -> vector<512x8xf32>
    %c0_80 = arith.constant 0 : index
    %c0_81 = arith.constant 0 : index
    %c0_82 = arith.constant 0 : index
    %42 = vector.load %arg3[%c0_80, %c0_81, %c0_82] : memref<1x1x8xf32, #tpu.memory_space<vmem>>, vector<1x1x8xf32>
    %43 = vector.shape_cast %42 : vector<1x1x8xf32> to vector<1x8xf32>
    %44 = vector.broadcast %43 : vector<1x8xf32> to vector<512x8xf32>
    %45 = arith.addf %41, %44 : vector<512x8xf32>
    %cst_83 = arith.constant 0.000000e+00 : f32
    %46 = vector.broadcast %cst_83 : f32 to vector<512x8xf32>
    %47 = arith.maximumf %45, %46 : vector<512x8xf32>
    %48 = vector.shape_cast %47 : vector<512x8xf32> to vector<2x16x16x8xf32>
    %c0_84 = arith.constant 0 : index
    %c1_85 = arith.constant 1 : index
    %c1_86 = arith.constant 1 : index
    %c0_87 = arith.constant 0 : index
    %49 = vector.load %arg9[%c0_84, %c1_85, %c1_86, %c0_87] : memref<2x18x18x8xf32, #tpu.memory_space<vmem>>, vector<2x16x16x8xf32>
    tpu.vector_store %arg9[%c0_84, %c1_85, %c1_86, %c0_87], %48 {strides = array<i32>} : memref<2x18x18x8xf32, #tpu.memory_space<vmem>>, vector<2x16x16x8xf32>,
    %50 = vector.extract_strided_slice %48 {offsets = [0, 0, 0, 0], sizes = [2, 1, 16, 8], strides = [1, 1, 1, 1]} : vector<2x16x16x8xf32> to vector<2x1x16x8xf32>
    %c0_88 = arith.constant 0 : index
    %c0_89 = arith.constant 0 : index
    %c1_90 = arith.constant 1 : index
    %c0_91 = arith.constant 0 : index
    %51 = vector.load %arg9[%c0_88, %c0_89, %c1_90, %c0_91] : memref<2x18x18x8xf32, #tpu.memory_space<vmem>>, vector<2x1x16x8xf32>
    tpu.vector_store %arg9[%c0_88, %c0_89, %c1_90, %c0_91], %50 {strides = array<i32>} : memref<2x18x18x8xf32, #tpu.memory_space<vmem>>, vector<2x1x16x8xf32>,
    %52 = vector.extract_strided_slice %48 {offsets = [0, 15, 0, 0], sizes = [2, 1, 16, 8], strides = [1, 1, 1, 1]} : vector<2x16x16x8xf32> to vector<2x1x16x8xf32>
    %c0_92 = arith.constant 0 : index
    %c17_93 = arith.constant 17 : index
    %c1_94 = arith.constant 1 : index
    %c0_95 = arith.constant 0 : index
    %53 = vector.load %arg9[%c0_92, %c17_93, %c1_94, %c0_95] : memref<2x18x18x8xf32, #tpu.memory_space<vmem>>, vector<2x1x16x8xf32>
    tpu.vector_store %arg9[%c0_92, %c17_93, %c1_94, %c0_95], %52 {strides = array<i32>} : memref<2x18x18x8xf32, #tpu.memory_space<vmem>>, vector<2x1x16x8xf32>,
    %c0_96 = arith.constant 0 : index
    %c0_97 = arith.constant 0 : index
    %c1_98 = arith.constant 1 : index
    %c0_99 = arith.constant 0 : index
    %54 = vector.load %arg9[%c0_96, %c0_97, %c1_98, %c0_99] : memref<2x18x18x8xf32, #tpu.memory_space<vmem>>, vector<2x18x1x8xf32>
    %c0_100 = arith.constant 0 : index
    %c0_101 = arith.constant 0 : index
    %c0_102 = arith.constant 0 : index
    %c0_103 = arith.constant 0 : index
    %55 = vector.load %arg9[%c0_100, %c0_101, %c0_102, %c0_103] : memref<2x18x18x8xf32, #tpu.memory_space<vmem>>, vector<2x18x1x8xf32>
    tpu.vector_store %arg9[%c0_100, %c0_101, %c0_102, %c0_103], %54 {strides = array<i32>} : memref<2x18x18x8xf32, #tpu.memory_space<vmem>>, vector<2x18x1x8xf32>,
    %c0_104 = arith.constant 0 : index
    %c0_105 = arith.constant 0 : index
    %c16_106 = arith.constant 16 : index
    %c0_107 = arith.constant 0 : index
    %56 = vector.load %arg9[%c0_104, %c0_105, %c16_106, %c0_107] : memref<2x18x18x8xf32, #tpu.memory_space<vmem>>, vector<2x18x1x8xf32>
    %c0_108 = arith.constant 0 : index
    %c0_109 = arith.constant 0 : index
    %c17_110 = arith.constant 17 : index
    %c0_111 = arith.constant 0 : index
    %57 = vector.load %arg9[%c0_108, %c0_109, %c17_110, %c0_111] : memref<2x18x18x8xf32, #tpu.memory_space<vmem>>, vector<2x18x1x8xf32>
    tpu.vector_store %arg9[%c0_108, %c0_109, %c17_110, %c0_111], %56 {strides = array<i32>} : memref<2x18x18x8xf32, #tpu.memory_space<vmem>>, vector<2x18x1x8xf32>,
    %c0_112 = arith.constant 0 : index
    %c0_113 = arith.constant 0 : index
    %c0_114 = arith.constant 0 : index
    %c0_115 = arith.constant 0 : index
    %58 = vector.load %arg9[%c0_112, %c0_113, %c0_114, %c0_115] : memref<2x18x18x8xf32, #tpu.memory_space<vmem>>, vector<2x16x16x8xf32>
    %59 = vector.shape_cast %58 : vector<2x16x16x8xf32> to vector<512x8xf32>
    %c0_116 = arith.constant 0 : index
    %c0_117 = arith.constant 0 : index
    %60 = vector.load %arg10[%c0_116, %c0_117] : memref<512x72xf32, #tpu.memory_space<vmem>>, vector<512x8xf32>
    tpu.vector_store %arg10[%c0_116, %c0_117], %59 {strides = array<i32>} : memref<512x72xf32, #tpu.memory_space<vmem>>, vector<512x8xf32>,
    %c0_118 = arith.constant 0 : index
    %c0_119 = arith.constant 0 : index
    %c1_120 = arith.constant 1 : index
    %c0_121 = arith.constant 0 : index
    %61 = vector.load %arg9[%c0_118, %c0_119, %c1_120, %c0_121] : memref<2x18x18x8xf32, #tpu.memory_space<vmem>>, vector<2x16x16x8xf32>
    %62 = vector.shape_cast %61 : vector<2x16x16x8xf32> to vector<512x8xf32>
    %c0_122 = arith.constant 0 : index
    %c8_123 = arith.constant 8 : index
    %63 = vector.load %arg10[%c0_122, %c8_123] : memref<512x72xf32, #tpu.memory_space<vmem>>, vector<512x8xf32>
    tpu.vector_store %arg10[%c0_122, %c8_123], %62 {strides = array<i32>} : memref<512x72xf32, #tpu.memory_space<vmem>>, vector<512x8xf32>,
    %c0_124 = arith.constant 0 : index
    %c0_125 = arith.constant 0 : index
    %c2_126 = arith.constant 2 : index
    %c0_127 = arith.constant 0 : index
    %64 = vector.load %arg9[%c0_124, %c0_125, %c2_126, %c0_127] : memref<2x18x18x8xf32, #tpu.memory_space<vmem>>, vector<2x16x16x8xf32>
    %65 = vector.shape_cast %64 : vector<2x16x16x8xf32> to vector<512x8xf32>
    %c0_128 = arith.constant 0 : index
    %c16_129 = arith.constant 16 : index
    %66 = vector.load %arg10[%c0_128, %c16_129] : memref<512x72xf32, #tpu.memory_space<vmem>>, vector<512x8xf32>
    tpu.vector_store %arg10[%c0_128, %c16_129], %65 {strides = array<i32>} : memref<512x72xf32, #tpu.memory_space<vmem>>, vector<512x8xf32>,
    %c0_130 = arith.constant 0 : index
    %c1_131 = arith.constant 1 : index
    %c0_132 = arith.constant 0 : index
    %c0_133 = arith.constant 0 : index
    %67 = vector.load %arg9[%c0_130, %c1_131, %c0_132, %c0_133] : memref<2x18x18x8xf32, #tpu.memory_space<vmem>>, vector<2x16x16x8xf32>
    %68 = vector.shape_cast %67 : vector<2x16x16x8xf32> to vector<512x8xf32>
    %c0_134 = arith.constant 0 : index
    %c24_135 = arith.constant 24 : index
    %69 = vector.load %arg10[%c0_134, %c24_135] : memref<512x72xf32, #tpu.memory_space<vmem>>, vector<512x8xf32>
    tpu.vector_store %arg10[%c0_134, %c24_135], %68 {strides = array<i32>} : memref<512x72xf32, #tpu.memory_space<vmem>>, vector<512x8xf32>,
    %c0_136 = arith.constant 0 : index
    %c1_137 = arith.constant 1 : index
    %c1_138 = arith.constant 1 : index
    %c0_139 = arith.constant 0 : index
    %70 = vector.load %arg9[%c0_136, %c1_137, %c1_138, %c0_139] : memref<2x18x18x8xf32, #tpu.memory_space<vmem>>, vector<2x16x16x8xf32>
    %71 = vector.shape_cast %70 : vector<2x16x16x8xf32> to vector<512x8xf32>
    %c0_140 = arith.constant 0 : index
    %c32_141 = arith.constant 32 : index
    %72 = vector.load %arg10[%c0_140, %c32_141] : memref<512x72xf32, #tpu.memory_space<vmem>>, vector<512x8xf32>
    tpu.vector_store %arg10[%c0_140, %c32_141], %71 {strides = array<i32>} : memref<512x72xf32, #tpu.memory_space<vmem>>, vector<512x8xf32>,
    %c0_142 = arith.constant 0 : index
    %c1_143 = arith.constant 1 : index
    %c2_144 = arith.constant 2 : index
    %c0_145 = arith.constant 0 : index
    %73 = vector.load %arg9[%c0_142, %c1_143, %c2_144, %c0_145] : memref<2x18x18x8xf32, #tpu.memory_space<vmem>>, vector<2x16x16x8xf32>
    %74 = vector.shape_cast %73 : vector<2x16x16x8xf32> to vector<512x8xf32>
    %c0_146 = arith.constant 0 : index
    %c40 = arith.constant 40 : index
    %75 = vector.load %arg10[%c0_146, %c40] : memref<512x72xf32, #tpu.memory_space<vmem>>, vector<512x8xf32>
    tpu.vector_store %arg10[%c0_146, %c40], %74 {strides = array<i32>} : memref<512x72xf32, #tpu.memory_space<vmem>>, vector<512x8xf32>,
    %c0_147 = arith.constant 0 : index
    %c2_148 = arith.constant 2 : index
    %c0_149 = arith.constant 0 : index
    %c0_150 = arith.constant 0 : index
    %76 = vector.load %arg9[%c0_147, %c2_148, %c0_149, %c0_150] : memref<2x18x18x8xf32, #tpu.memory_space<vmem>>, vector<2x16x16x8xf32>
    %77 = vector.shape_cast %76 : vector<2x16x16x8xf32> to vector<512x8xf32>
    %c0_151 = arith.constant 0 : index
    %c48 = arith.constant 48 : index
    %78 = vector.load %arg10[%c0_151, %c48] : memref<512x72xf32, #tpu.memory_space<vmem>>, vector<512x8xf32>
    tpu.vector_store %arg10[%c0_151, %c48], %77 {strides = array<i32>} : memref<512x72xf32, #tpu.memory_space<vmem>>, vector<512x8xf32>,
    %c0_152 = arith.constant 0 : index
    %c2_153 = arith.constant 2 : index
    %c1_154 = arith.constant 1 : index
    %c0_155 = arith.constant 0 : index
    %79 = vector.load %arg9[%c0_152, %c2_153, %c1_154, %c0_155] : memref<2x18x18x8xf32, #tpu.memory_space<vmem>>, vector<2x16x16x8xf32>
    %80 = vector.shape_cast %79 : vector<2x16x16x8xf32> to vector<512x8xf32>
    %c0_156 = arith.constant 0 : index
    %c56 = arith.constant 56 : index
    %81 = vector.load %arg10[%c0_156, %c56] : memref<512x72xf32, #tpu.memory_space<vmem>>, vector<512x8xf32>
    tpu.vector_store %arg10[%c0_156, %c56], %80 {strides = array<i32>} : memref<512x72xf32, #tpu.memory_space<vmem>>, vector<512x8xf32>,
    %c0_157 = arith.constant 0 : index
    %c2_158 = arith.constant 2 : index
    %c2_159 = arith.constant 2 : index
    %c0_160 = arith.constant 0 : index
    %82 = vector.load %arg9[%c0_157, %c2_158, %c2_159, %c0_160] : memref<2x18x18x8xf32, #tpu.memory_space<vmem>>, vector<2x16x16x8xf32>
    %83 = vector.shape_cast %82 : vector<2x16x16x8xf32> to vector<512x8xf32>
    %c0_161 = arith.constant 0 : index
    %c64 = arith.constant 64 : index
    %84 = vector.load %arg10[%c0_161, %c64] : memref<512x72xf32, #tpu.memory_space<vmem>>, vector<512x8xf32>
    tpu.vector_store %arg10[%c0_161, %c64], %83 {strides = array<i32>} : memref<512x72xf32, #tpu.memory_space<vmem>>, vector<512x8xf32>,
    %c0_162 = arith.constant 0 : index
    %c0_163 = arith.constant 0 : index
    %c0_164 = arith.constant 0 : index
    %85 = vector.load %arg4[%c0_162, %c0_163, %c0_164] : memref<1x20x72xf32, #tpu.memory_space<vmem>>, vector<1x20x72xf32>
    %86 = vector.shape_cast %85 : vector<1x20x72xf32> to vector<20x72xf32>
    %c0_165 = arith.constant 0 : index
    %c0_166 = arith.constant 0 : index
    %87 = vector.load %arg10[%c0_165, %c0_166] : memref<512x72xf32, #tpu.memory_space<vmem>>, vector<512x72xf32>
    %cst_167 = arith.constant dense<0.000000e+00> : vector<20x512xf32>
    %88 = tpu.matmul %86, %87, %cst_167 {dimension_numbers = #tpu.dot_dimension_numbers<[1], [1], [0], [0], [0, 0, 1, 0], [], []>} : vector<20x72xf32>, vector<512x72xf32>, vector<20x512xf32> -> vector<20x512xf32>
    %c0_168 = arith.constant 0 : index
    %c0_169 = arith.constant 0 : index
    %c0_170 = arith.constant 0 : index
    %89 = vector.load %arg5[%c0_168, %c0_169, %c0_170] : memref<1x20x1xf32, #tpu.memory_space<vmem>>, vector<1x20x1xf32>
    %90 = vector.shape_cast %89 : vector<1x20x1xf32> to vector<20x1xf32>
    %91 = vector.broadcast %90 : vector<20x1xf32> to vector<20x512xf32>
    %92 = arith.addf %88, %91 : vector<20x512xf32>
    %c0_171 = arith.constant 0 : index
    %c0_172 = arith.constant 0 : index
    %c0_173 = arith.constant 0 : index
    %93 = vector.load %arg6[%c0_171, %c0_172, %c0_173] : memref<1x20x512xf32, #tpu.memory_space<vmem>>, vector<1x20x512xf32>
    %94 = vector.shape_cast %93 : vector<1x20x512xf32> to vector<20x512xf32>
    %95 = vector.shape_cast %92 : vector<20x512xf32> to vector<1x20x512xf32>
    tpu.vector_store %arg6[%c0_171, %c0_172, %c0_173], %95 {strides = array<i32>} : memref<1x20x512xf32, #tpu.memory_space<vmem>>, vector<1x20x512xf32>,
    return
  }
  func.func @transform_0(%arg0: i32) -> (i32, i32, i32, i32, i32) {
    %c0_i32 = arith.constant 0 : i32
    %c0_i32_0 = arith.constant 0 : i32
    %c0_i32_1 = arith.constant 0 : i32
    %c0_i32_2 = arith.constant 0 : i32
    %c0_i32_3 = arith.constant 0 : i32
    return %arg0, %c0_i32, %c0_i32_0, %c0_i32_1, %c0_i32_2 : i32, i32, i32, i32, i32
  }
  func.func @transform_1(%arg0: i32) -> (i32, i32, i32) {
    %c0_i32 = arith.constant 0 : i32
    %c0_i32_0 = arith.constant 0 : i32
    %c0_i32_1 = arith.constant 0 : i32
    return %arg0, %c0_i32, %c0_i32_0 : i32, i32, i32
  }
  func.func @transform_2(%arg0: i32) -> (i32, i32, i32) {
    %c0_i32 = arith.constant 0 : i32
    %c0_i32_0 = arith.constant 0 : i32
    %c0_i32_1 = arith.constant 0 : i32
    return %arg0, %c0_i32, %c0_i32_0 : i32, i32, i32
  }
  func.func @transform_3(%arg0: i32) -> (i32, i32, i32) {
    %c0_i32 = arith.constant 0 : i32
    %c0_i32_0 = arith.constant 0 : i32
    %c0_i32_1 = arith.constant 0 : i32
    return %arg0, %c0_i32, %c0_i32_0 : i32, i32, i32
  }
  func.func @transform_4(%arg0: i32) -> (i32, i32, i32) {
    %c0_i32 = arith.constant 0 : i32
    %c0_i32_0 = arith.constant 0 : i32
    %c0_i32_1 = arith.constant 0 : i32
    return %arg0, %c0_i32, %c0_i32_0 : i32, i32, i32
  }
  func.func @transform_5(%arg0: i32) -> (i32, i32, i32) {
    %c0_i32 = arith.constant 0 : i32
    %c0_i32_0 = arith.constant 0 : i32
    %c0_i32_1 = arith.constant 0 : i32
    return %arg0, %c0_i32, %c0_i32_0 : i32, i32, i32
  }
}

</mosaic_0001>

<llo_original>
// kernel: tpu_custom_call.1
$region0: #{tpu_custom_call.1}
  #allocation0 [shape = 'u32[]', space=smem, size = 0x4, offset = 0x4, fixed_abs, tag = 'smem constant byte address 0x4 - core index']
  #allocation1 [shape = 'u32[144,128]{1,0:T(1,128)}', space=vmem, size = 0x12000, scoped, tag = 'internal scratch']
  #allocation2 [shape = 'f32[2,18,18,4]{3,2,1,0:T(8,128)}', space=vmem, size = 0x6c000, scoped, tag = 'scratch operand']
  #allocation3 [shape = 'f32[512,36]{1,0:T(8,128)}', space=vmem, size = 0x40000, scoped, tag = 'scratch operand']
  #allocation4 [shape = 'f32[2,18,18,8]{3,2,1,0:T(8,128)}', space=vmem, size = 0x6c000, scoped, tag = 'scratch operand']
  #allocation5 [shape = 'f32[512,72]{1,0:T(8,128)}', space=vmem, size = 0x40000, scoped, tag = 'scratch operand']
  %s0 = inlined_call_operand.vmem [shape: f32[5,2,16,16,4], index: 0, kind: input, shape index: {}]
  %s1 = inlined_call_operand.vmem [shape: f32[5,36,8], index: 1, kind: input, shape index: {}]
  %s2 = inlined_call_operand.vmem [shape: f32[5,1,8], index: 2, kind: input, shape index: {}]
  %s3 = inlined_call_operand.vmem [shape: f32[5,20,72], index: 3, kind: input, shape index: {}]
  %s4 = inlined_call_operand.vmem [shape: f32[5,20,1], index: 4, kind: input, shape index: {}]
  %s5 = inlined_call_operand.hbm [shape: f32[5,20,512], index: 5, kind: output, shape index: {}]
  %s6 = sld [smem:[#allocation0]]
  $region53: #{tpu_custom_call.1} parent=0
    _
  %s8 = ssub.s32 1, %s6
  %s9 = scalar_select 0, %s8, %s6
  $region1: #{tpu_custom_call.1} parent=0
    #allocation6 [shape = 'u8[98304]{0}', space=vmem, size = 0x18000, scoped, tag = 'output window, operand 0']
    #allocation7 [shape = 's32[2]{0}', space=sflag, size = 0x8, scoped, tag = 'scoped memory for tpu_custom_call.1']
    %10 = vsyncpa [#allocation7], 0
    %s11 = scalar_lea.sflag [#allocation7], 1
    %12 = vsyncpa %s11, 0
    loop: start=0, step=1, limit=7
    $region2: #{tpu_custom_call.1} parent=1 // loop_pre_header
      _
    $region3: #{tpu_custom_call.1} parent=1 // loop_header
      %s14 = sphi 0, %s18
      %p15 = scmp.ge.s32.totalorder %s14, 7
      %s24 = sphi 0, %s26
      %s27 = sphi 0, %s24
      %s28 = sphi 0, %s27
      %s44 = sphi 0, %s28
      %s50 = sphi 0, %s52
      %s53 = sphi 0, %s50
      %s54 = sphi 0, %s53
      %s70 = sphi 0, %s54
      %s76 = sphi 0, %s78
      %s79 = sphi 0, %s76
      %s80 = sphi 0, %s79
      %s96 = sphi 0, %s80
      %s102 = sphi 0, %s104
      %s105 = sphi 0, %s102
      %s106 = sphi 0, %s105
      %s122 = sphi 0, %s106
      %s128 = sphi 0, %s130
      %s131 = sphi 0, %s128
      %s132 = sphi 0, %s131
      %s148 = sphi 0, %s132
      %s154 = sphi 0, %s156
      %s157 = sphi 0, %s154
      %s158 = sphi 0, %s157
      %s174 = sphi 0, %s158
    $region4: #{tpu_custom_call.1} parent=1 // loop_header_branch
      %17 = sbr.rel (%p15) target = $region8
    $region5: #{tpu_custom_call.1} parent=1 // loop_body
      %s19 = ssub.s32 %s14, 1
      %s20 = ssub.s32 %s14, 2
      %s21 = sadd.s32 %s14, 1
      %s22 = ssub.s32 %s14, %s21
      %p23 = scmp.eq.s32.totalorder %s22, 0
      %s25 = sadd.s32 %s24, 1
      %s26 = scalar_select %p23, %s24, %s25
      %p29 = pneg %p23
      %p30 = scmp.eq.s32.totalorder %s14, 4
      %p31 = por %p29, %p30
      %p32 = scmp.ne.s32.totalorder %s24, %s27
      %p33 = scmp.eq.s32.totalorder %s14, 0
      %p34 = por %p32, %p33
      %p35 = scmp.ne.s32.totalorder %s24, %s27
      %p36 = scmp.eq.s32.totalorder %s19, 4
      %p37 = por %p35, %p36
      %p38 = scmp.ne.s32.totalorder %s27, %s28
      %p39 = scmp.eq.s32.totalorder %s19, 0
      %p40 = por %p38, %p39
      %p41 = scmp.ne.s32.totalorder %s27, %s28
      %p42 = scmp.eq.s32.totalorder %s20, 4
      %p43 = por %p41, %p42
      %p45 = scmp.ne.s32.totalorder %s28, %s44
      %p46 = scmp.eq.s32.totalorder %s20, 0
      %p47 = por %p45, %p46
      %s48 = ssub.s32 %s14, %s21
      %p49 = scmp.eq.s32.totalorder %s48, 0
      %s51 = sadd.s32 %s50, 1
      %s52 = scalar_select %p49, %s50, %s51
      %p55 = pneg %p49
      %p56 = scmp.eq.s32.totalorder %s14, 4
      %p57 = por %p55, %p56
      %p58 = scmp.ne.s32.totalorder %s50, %s53
      %p59 = scmp.eq.s32.totalorder %s14, 0
      %p60 = por %p58, %p59
      %p61 = scmp.ne.s32.totalorder %s50, %s53
      %p62 = scmp.eq.s32.totalorder %s19, 4
      %p63 = por %p61, %p62
      %p64 = scmp.ne.s32.totalorder %s53, %s54
      %p65 = scmp.eq.s32.totalorder %s19, 0
      %p66 = por %p64, %p65
      %p67 = scmp.ne.s32.totalorder %s53, %s54
      %p68 = scmp.eq.s32.totalorder %s20, 4
      %p69 = por %p67, %p68
      %p71 = scmp.ne.s32.totalorder %s54, %s70
      %p72 = scmp.eq.s32.totalorder %s20, 0
      %p73 = por %p71, %p72
      %s74 = ssub.s32 %s14, %s21
      %p75 = scmp.eq.s32.totalorder %s74, 0
      %s77 = sadd.s32 %s76, 1
      %s78 = scalar_select %p75, %s76, %s77
      %p81 = pneg %p75
      %p82 = scmp.eq.s32.totalorder %s14, 4
      %p83 = por %p81, %p82
      %p84 = scmp.ne.s32.totalorder %s76, %s79
      %p85 = scmp.eq.s32.totalorder %s14, 0
      %p86 = por %p84, %p85
      %p87 = scmp.ne.s32.totalorder %s76, %s79
      %p88 = scmp.eq.s32.totalorder %s19, 4
      %p89 = por %p87, %p88
      %p90 = scmp.ne.s32.totalorder %s79, %s80
      %p91 = scmp.eq.s32.totalorder %s19, 0
      %p92 = por %p90, %p91
      %p93 = scmp.ne.s32.totalorder %s79, %s80
      %p94 = scmp.eq.s32.totalorder %s20, 4
      %p95 = por %p93, %p94
      %p97 = scmp.ne.s32.totalorder %s80, %s96
      %p98 = scmp.eq.s32.totalorder %s20, 0
      %p99 = por %p97, %p98
      %s100 = ssub.s32 %s14, %s21
      %p101 = scmp.eq.s32.totalorder %s100, 0
      %s103 = sadd.s32 %s102, 1
      %s104 = scalar_select %p101, %s102, %s103
      %p107 = pneg %p101
      %p108 = scmp.eq.s32.totalorder %s14, 4
      %p109 = por %p107, %p108
      %p110 = scmp.ne.s32.totalorder %s102, %s105
      %p111 = scmp.eq.s32.totalorder %s14, 0
      %p112 = por %p110, %p111
      %p113 = scmp.ne.s32.totalorder %s102, %s105
      %p114 = scmp.eq.s32.totalorder %s19, 4
      %p115 = por %p113, %p114
      %p116 = scmp.ne.s32.totalorder %s105, %s106
      %p117 = scmp.eq.s32.totalorder %s19, 0
      %p118 = por %p116, %p117
      %p119 = scmp.ne.s32.totalorder %s105, %s106
      %p120 = scmp.eq.s32.totalorder %s20, 4
      %p121 = por %p119, %p120
      %p123 = scmp.ne.s32.totalorder %s106, %s122
      %p124 = scmp.eq.s32.totalorder %s20, 0
      %p125 = por %p123, %p124
      %s126 = ssub.s32 %s14, %s21
      %p127 = scmp.eq.s32.totalorder %s126, 0
      %s129 = sadd.s32 %s128, 1
      %s130 = scalar_select %p127, %s128, %s129
      %p133 = pneg %p127
      %p134 = scmp.eq.s32.totalorder %s14, 4
      %p135 = por %p133, %p134
      %p136 = scmp.ne.s32.totalorder %s128, %s131
      %p137 = scmp.eq.s32.totalorder %s14, 0
      %p138 = por %p136, %p137
      %p139 = scmp.ne.s32.totalorder %s128, %s131
      %p140 = scmp.eq.s32.totalorder %s19, 4
      %p141 = por %p139, %p140
      %p142 = scmp.ne.s32.totalorder %s131, %s132
      %p143 = scmp.eq.s32.totalorder %s19, 0
      %p144 = por %p142, %p143
      %p145 = scmp.ne.s32.totalorder %s131, %s132
      %p146 = scmp.eq.s32.totalorder %s20, 4
      %p147 = por %p145, %p146
      %p149 = scmp.ne.s32.totalorder %s132, %s148
      %p150 = scmp.eq.s32.totalorder %s20, 0
      %p151 = por %p149, %p150
      %s152 = ssub.s32 %s14, %s21
      %p153 = scmp.eq.s32.totalorder %s152, 0
      %s155 = sadd.s32 %s154, 1
      %s156 = scalar_select %p153, %s154, %s155
      %p159 = pneg %p153
      %p160 = scmp.eq.s32.totalorder %s14, 4
      %p161 = por %p159, %p160
      %p162 = scmp.ne.s32.totalorder %s154, %s157
      %p163 = scmp.eq.s32.totalorder %s14, 0
      %p164 = por %p162, %p163
      %p165 = scmp.ne.s32.totalorder %s154, %s157
      %p166 = scmp.eq.s32.totalorder %s19, 4
      %p167 = por %p165, %p166
      %p168 = scmp.ne.s32.totalorder %s157, %s158
      %p169 = scmp.eq.s32.totalorder %s19, 0
      %p170 = por %p168, %p169
      %p171 = scmp.ne.s32.totalorder %s157, %s158
      %p172 = scmp.eq.s32.totalorder %s20, 4
      %p173 = por %p171, %p172
      %p175 = scmp.ne.s32.totalorder %s158, %s174
      %p176 = scmp.eq.s32.totalorder %s20, 0
      %p177 = por %p175, %p176
      %p178 = scmp.le.s32.totalorder 1, %s14
      %p179 = scmp.lt.s32.totalorder %s14, 6
      %p180 = pnand %p178, %p179
      %p181 = pneg %p180
      // Predicated region
      $region9: #{tpu_custom_call.1} parent=5 // pred_check
        _
      $region10: #{tpu_custom_call.1} parent=5 // pred_check_branch
        %183 = sbr.rel (%p180) target = $region12
      $region11: #{tpu_custom_call.1} parent=5 // pred_region
        %s184 = ssub.s32 %s14, 1
      $region12: #{tpu_custom_call.1} parent=5 // pred_fallthru
        _
      %p185 = scmp.lt.s32.totalorder %s14, 5
      // Predicated region
      $region13: #{tpu_custom_call.1} parent=5 // pred_check
        %p186 = pneg %p185
      $region14: #{tpu_custom_call.1} parent=5 // pred_check_branch
        %188 = sbr.rel (%p186) target = $region16
      $region15: #{tpu_custom_call.1} parent=5 // pred_region
        // Predicated region
        $region17: #{tpu_custom_call.1} parent=15 // pred_check
          %p189 = pneg %p34
        $region18: #{tpu_custom_call.1} parent=15 // pred_check_branch
          %191 = sbr.rel (%p189) target = $region20
        $region19: #{tpu_custom_call.1} parent=15 // pred_region
          %p192 = scmp.lt.s32.totalorder %s14, 4
          %s193 = scalar_select %p192, %s14, 4
          %s194 = smul.addr %s193, 64
          %s195 = smul.addr %s194, 8
          %s196 = scalar_lea.vmem %s0, %s195
        $region20: #{tpu_custom_call.1} parent=15 // pred_fallthru
          _
        // Predicated region
        $region21: #{tpu_custom_call.1} parent=15 // pred_check
          %p197 = pneg %p60
        $region22: #{tpu_custom_call.1} parent=15 // pred_check_branch
          %199 = sbr.rel (%p197) target = $region24
        $region23: #{tpu_custom_call.1} parent=15 // pred_region
          %p200 = scmp.lt.s32.totalorder %s14, 4
          %s201 = scalar_select %p200, %s14, 4
          %s202 = smul.addr %s201, 5
          %s203 = smul.addr %s202, 8
          %s204 = scalar_lea.vmem %s1, %s203
        $region24: #{tpu_custom_call.1} parent=15 // pred_fallthru
          _
        // Predicated region
        $region25: #{tpu_custom_call.1} parent=15 // pred_check
          %p205 = pneg %p86
        $region26: #{tpu_custom_call.1} parent=15 // pred_check_branch
          %207 = sbr.rel (%p205) target = $region28
        $region27: #{tpu_custom_call.1} parent=15 // pred_region
          %p208 = scmp.lt.s32.totalorder %s14, 4
          %s209 = scalar_select %p208, %s14, 4
          %s210 = scalar_lea.vmem %s2, %s209
        $region28: #{tpu_custom_call.1} parent=15 // pred_fallthru
          _
        // Predicated region
        $region29: #{tpu_custom_call.1} parent=15 // pred_check
          %p211 = pneg %p112
        $region30: #{tpu_custom_call.1} parent=15 // pred_check_branch
          %213 = sbr.rel (%p211) target = $region32
        $region31: #{tpu_custom_call.1} parent=15 // pred_region
          %p214 = scmp.lt.s32.totalorder %s14, 4
          %s215 = scalar_select %p214, %s14, 4
          %s216 = smul.addr %s215, 3
          %s217 = smul.addr %s216, 8
          %s218 = scalar_lea.vmem %s3, %s217
        $region32: #{tpu_custom_call.1} parent=15 // pred_fallthru
          _
        // Predicated region
        $region33: #{tpu_custom_call.1} parent=15 // pred_check
          %p219 = pneg %p138
        $region34: #{tpu_custom_call.1} parent=15 // pred_check_branch
          %221 = sbr.rel (%p219) target = $region36
        $region35: #{tpu_custom_call.1} parent=15 // pred_region
          %p222 = scmp.lt.s32.totalorder %s14, 4
          %s223 = scalar_select %p222, %s14, 4
          %s224 = smul.addr %s223, 3
          %s225 = smul.addr %s224, 8
          %s226 = scalar_lea.vmem %s4, %s225
        $region36: #{tpu_custom_call.1} parent=15 // pred_fallthru
          _
      $region16: #{tpu_custom_call.1} parent=5 // pred_fallthru
        _
      %p227 = scmp.le.s32.totalorder 1, %s14
      %p228 = scmp.lt.s32.totalorder %s14, 6
      %p229 = pnand %p227, %p228
      %p230 = pneg %p229
      // Predicated region
      $region37: #{tpu_custom_call.1} parent=5 // pred_check
        _
      $region38: #{tpu_custom_call.1} parent=5 // pred_check_branch
        %232 = sbr.rel (%p229) target = $region40
      $region39: #{tpu_custom_call.1} parent=5 // pred_region
        %s233 = ssub.s32 %s14, 1
        %p234 = scmp.lt.s32.totalorder %s19, 4
        %s235 = scalar_select %p234, %s19, 4
        %s236 = smul.addr %s235, 64
        %s237 = smul.addr %s236, 8
        %s238 = scalar_lea.vmem %s0, %s237
        %p239 = pneg %p40
        %p240 = pneg %p37
        %p241 = scmp.lt.s32.totalorder %s19, 4
        %s242 = scalar_select %p241, %s19, 4
        %s243 = smul.addr %s242, 5
        %s244 = smul.addr %s243, 8
        %s245 = scalar_lea.vmem %s1, %s244
        %p246 = pneg %p66
        %p247 = pneg %p63
        %p248 = scmp.lt.s32.totalorder %s19, 4
        %s249 = scalar_select %p248, %s19, 4
        %s250 = scalar_lea.vmem %s2, %s249
        %p251 = pneg %p92
        %p252 = pneg %p89
        %p253 = scmp.lt.s32.totalorder %s19, 4
        %s254 = scalar_select %p253, %s19, 4
        %s255 = smul.addr %s254, 3
        %s256 = smul.addr %s255, 8
        %s257 = scalar_lea.vmem %s3, %s256
        %p258 = pneg %p118
        %p259 = pneg %p115
        %p260 = scmp.lt.s32.totalorder %s19, 4
        %s261 = scalar_select %p260, %s19, 4
        %s262 = smul.addr %s261, 3
        %s263 = smul.addr %s262, 8
        %s264 = scalar_lea.vmem %s4, %s263
        %p265 = pneg %p144
        %p266 = pneg %p141
        %p267 = pneg %p170
        %p268 = pneg %p167
        %s269 = sand.u32 %s157, 1
        %s270 = scalar_lea.sflag [#allocation7], %s269
        %s271 = sand.u32 %s157, 1
        %s272 = smul.addr %s271, 96
        %s273 = scalar_lea.vmem [#allocation6], %s272
        %p274 = scmp.lt.s32.totalorder %s19, 4
        %s275 = scalar_select %p274, %s19, 4
        %s276 = smul.addr %s275, 64
        %s277 = smul.addr %s276, 8
        %s278 = scalar_lea.vmem %s0, %s277
        %p279 = scmp.lt.s32.totalorder %s19, 4
        %s280 = scalar_select %p279, %s19, 4
        %s281 = smul.addr %s280, 5
        %s282 = smul.addr %s281, 8
        %s283 = scalar_lea.vmem %s1, %s282
        %p284 = scmp.lt.s32.totalorder %s19, 4
        %s285 = scalar_select %p284, %s19, 4
        %s286 = scalar_lea.vmem %s2, %s285
        %p287 = scmp.lt.s32.totalorder %s19, 4
        %s288 = scalar_select %p287, %s19, 4
        %s289 = smul.addr %s288, 3
        %s290 = smul.addr %s289, 8
        %s291 = scalar_lea.vmem %s3, %s290
        %p292 = scmp.lt.s32.totalorder %s19, 4
        %s293 = scalar_select %p292, %s19, 4
        %s294 = smul.addr %s293, 3
        %s295 = smul.addr %s294, 8
        %s296 = scalar_lea.vmem %s4, %s295
        %v297 = vld [vmem:[%s278] sm:$0xff]
        %v298 = vld [vmem:[%s278 + $0x8] sm:$0xff]
        %v299 = vld [vmem:[%s278 + $0x10] sm:$0xff]
        %v300 = vld [vmem:[%s278 + $0x18] sm:$0xff]
        %v301 = vld [vmem:[%s278 + $0x20] sm:$0xff]
        %v302 = vld [vmem:[%s278 + $0x28] sm:$0xff]
        %v303 = vld [vmem:[%s278 + $0x30] sm:$0xff]
        %v304 = vld [vmem:[%s278 + $0x38] sm:$0xff]
        %v305 = vld [vmem:[%s278 + $0x40] sm:$0xff]
        %v306 = vld [vmem:[%s278 + $0x48] sm:$0xff]
        %v307 = vld [vmem:[%s278 + $0x50] sm:$0xff]
        %v308 = vld [vmem:[%s278 + $0x58] sm:$0xff]
        %v309 = vld [vmem:[%s278 + $0x60] sm:$0xff]
        %v310 = vld [vmem:[%s278 + $0x68] sm:$0xff]
        %v311 = vld [vmem:[%s278 + $0x70] sm:$0xff]
        %v312 = vld [vmem:[%s278 + $0x78] sm:$0xff]
        %v313 = vld [vmem:[%s278 + $0x80] sm:$0xff]
        %v314 = vld [vmem:[%s278 + $0x88] sm:$0xff]
        %v315 = vld [vmem:[%s278 + $0x90] sm:$0xff]
        %v316 = vld [vmem:[%s278 + $0x98] sm:$0xff]
        %v317 = vld [vmem:[%s278 + $0xa0] sm:$0xff]
        %v318 = vld [vmem:[%s278 + $0xa8] sm:$0xff]
        %v319 = vld [vmem:[%s278 + $0xb0] sm:$0xff]
        %v320 = vld [vmem:[%s278 + $0xb8] sm:$0xff]
        %v321 = vld [vmem:[%s278 + $0xc0] sm:$0xff]
        %v322 = vld [vmem:[%s278 + $0xc8] sm:$0xff]
        %v323 = vld [vmem:[%s278 + $0xd0] sm:$0xff]
        %v324 = vld [vmem:[%s278 + $0xd8] sm:$0xff]
        %v325 = vld [vmem:[%s278 + $0xe0] sm:$0xff]
        %v326 = vld [vmem:[%s278 + $0xe8] sm:$0xff]
        %v327 = vld [vmem:[%s278 + $0xf0] sm:$0xff]
        %v328 = vld [vmem:[%s278 + $0xf8] sm:$0xff]
        %v329 = vld [vmem:[%s278 + $0x100] sm:$0xff]
        %v330 = vld [vmem:[%s278 + $0x108] sm:$0xff]
        %v331 = vld [vmem:[%s278 + $0x110] sm:$0xff]
        %v332 = vld [vmem:[%s278 + $0x118] sm:$0xff]
        %v333 = vld [vmem:[%s278 + $0x120] sm:$0xff]
        %v334 = vld [vmem:[%s278 + $0x128] sm:$0xff]
        %v335 = vld [vmem:[%s278 + $0x130] sm:$0xff]
        %v336 = vld [vmem:[%s278 + $0x138] sm:$0xff]
        %v337 = vld [vmem:[%s278 + $0x140] sm:$0xff]
        %v338 = vld [vmem:[%s278 + $0x148] sm:$0xff]
        %v339 = vld [vmem:[%s278 + $0x150] sm:$0xff]
        %v340 = vld [vmem:[%s278 + $0x158] sm:$0xff]
        %v341 = vld [vmem:[%s278 + $0x160] sm:$0xff]
        %v342 = vld [vmem:[%s278 + $0x168] sm:$0xff]
        %v343 = vld [vmem:[%s278 + $0x170] sm:$0xff]
        %v344 = vld [vmem:[%s278 + $0x178] sm:$0xff]
        %v345 = vld [vmem:[%s278 + $0x180] sm:$0xff]
        %v346 = vld [vmem:[%s278 + $0x188] sm:$0xff]
        %v347 = vld [vmem:[%s278 + $0x190] sm:$0xff]
        %v348 = vld [vmem:[%s278 + $0x198] sm:$0xff]
        %v349 = vld [vmem:[%s278 + $0x1a0] sm:$0xff]
        %v350 = vld [vmem:[%s278 + $0x1a8] sm:$0xff]
        %v351 = vld [vmem:[%s278 + $0x1b0] sm:$0xff]
        %v352 = vld [vmem:[%s278 + $0x1b8] sm:$0xff]
        %v353 = vld [vmem:[%s278 + $0x1c0] sm:$0xff]
        %v354 = vld [vmem:[%s278 + $0x1c8] sm:$0xff]
        %v355 = vld [vmem:[%s278 + $0x1d0] sm:$0xff]
        %v356 = vld [vmem:[%s278 + $0x1d8] sm:$0xff]
        %v357 = vld [vmem:[%s278 + $0x1e0] sm:$0xff]
        %v358 = vld [vmem:[%s278 + $0x1e8] sm:$0xff]
        %v359 = vld [vmem:[%s278 + $0x1f0] sm:$0xff]
        %v360 = vld [vmem:[%s278 + $0x1f8] sm:$0xff]
        %s361 = scalar_lea.vmem [#allocation2], 24
        %vm362 = vcmask 31744
        %363 = vst.msk [vmem:[%s361 + $0x1] sm:$0xff] %vm362, %v297
        %364 = vst.msk [vmem:[%s361 + $0x9] sm:$0xff] %vm362, %v298
        %365 = vst.msk [vmem:[%s361 + $0x19] sm:$0xff] %vm362, %v299
        %366 = vst.msk [vmem:[%s361 + $0x21] sm:$0xff] %vm362, %v300
        %367 = vst.msk [vmem:[%s361 + $0x31] sm:$0xff] %vm362, %v301
        %368 = vst.msk [vmem:[%s361 + $0x39] sm:$0xff] %vm362, %v302
        %369 = vst.msk [vmem:[%s361 + $0x49] sm:$0xff] %vm362, %v303
        %370 = vst.msk [vmem:[%s361 + $0x51] sm:$0xff] %vm362, %v304
        %371 = vst.msk [vmem:[%s361 + $0x61] sm:$0xff] %vm362, %v305
        %372 = vst.msk [vmem:[%s361 + $0x69] sm:$0xff] %vm362, %v306
        %373 = vst.msk [vmem:[%s361 + $0x79] sm:$0xff] %vm362, %v307
        %374 = vst.msk [vmem:[%s361 + $0x81] sm:$0xff] %vm362, %v308
        %375 = vst.msk [vmem:[%s361 + $0x91] sm:$0xff] %vm362, %v309
        %376 = vst.msk [vmem:[%s361 + $0x99] sm:$0xff] %vm362, %v310
        %377 = vst.msk [vmem:[%s361 + $0xa9] sm:$0xff] %vm362, %v311
        %378 = vst.msk [vmem:[%s361 + $0xb1] sm:$0xff] %vm362, %v312
        %379 = vst.msk [vmem:[%s361 + $0xc1] sm:$0xff] %vm362, %v313
        %380 = vst.msk [vmem:[%s361 + $0xc9] sm:$0xff] %vm362, %v314
        %381 = vst.msk [vmem:[%s361 + $0xd9] sm:$0xff] %vm362, %v315
        %382 = vst.msk [vmem:[%s361 + $0xe1] sm:$0xff] %vm362, %v316
        %383 = vst.msk [vmem:[%s361 + $0xf1] sm:$0xff] %vm362, %v317
        %384 = vst.msk [vmem:[%s361 + $0xf9] sm:$0xff] %vm362, %v318
        %385 = vst.msk [vmem:[%s361 + $0x109] sm:$0xff] %vm362, %v319
        %386 = vst.msk [vmem:[%s361 + $0x111] sm:$0xff] %vm362, %v320
        %387 = vst.msk [vmem:[%s361 + $0x121] sm:$0xff] %vm362, %v321
        %388 = vst.msk [vmem:[%s361 + $0x129] sm:$0xff] %vm362, %v322
        %389 = vst.msk [vmem:[%s361 + $0x139] sm:$0xff] %vm362, %v323
        %390 = vst.msk [vmem:[%s361 + $0x141] sm:$0xff] %vm362, %v324
        %391 = vst.msk [vmem:[%s361 + $0x151] sm:$0xff] %vm362, %v325
        %392 = vst.msk [vmem:[%s361 + $0x159] sm:$0xff] %vm362, %v326
        %393 = vst.msk [vmem:[%s361 + $0x169] sm:$0xff] %vm362, %v327
        %394 = vst.msk [vmem:[%s361 + $0x171] sm:$0xff] %vm362, %v328
        %395 = vst.msk [vmem:[%s361 + $0x1b1] sm:$0xff] %vm362, %v329
        %396 = vst.msk [vmem:[%s361 + $0x1b9] sm:$0xff] %vm362, %v330
        %397 = vst.msk [vmem:[%s361 + $0x1c9] sm:$0xff] %vm362, %v331
        %398 = vst.msk [vmem:[%s361 + $0x1d1] sm:$0xff] %vm362, %v332
        %399 = vst.msk [vmem:[%s361 + $0x1e1] sm:$0xff] %vm362, %v333
        %400 = vst.msk [vmem:[%s361 + $0x1e9] sm:$0xff] %vm362, %v334
        %401 = vst.msk [vmem:[%s361 + $0x1f9] sm:$0xff] %vm362, %v335
        %402 = vst.msk [vmem:[%s361 + $0x201] sm:$0xff] %vm362, %v336
        %403 = vst.msk [vmem:[%s361 + $0x211] sm:$0xff] %vm362, %v337
        %404 = vst.msk [vmem:[%s361 + $0x219] sm:$0xff] %vm362, %v338
        %405 = vst.msk [vmem:[%s361 + $0x229] sm:$0xff] %vm362, %v339
        %406 = vst.msk [vmem:[%s361 + $0x231] sm:$0xff] %vm362, %v340
        %407 = vst.msk [vmem:[%s361 + $0x241] sm:$0xff] %vm362, %v341
        %408 = vst.msk [vmem:[%s361 + $0x249] sm:$0xff] %vm362, %v342
        %409 = vst.msk [vmem:[%s361 + $0x259] sm:$0xff] %vm362, %v343
        %410 = vst.msk [vmem:[%s361 + $0x261] sm:$0xff] %vm362, %v344
        %411 = vst.msk [vmem:[%s361 + $0x271] sm:$0xff] %vm362, %v345
        %412 = vst.msk [vmem:[%s361 + $0x279] sm:$0xff] %vm362, %v346
        %413 = vst.msk [vmem:[%s361 + $0x289] sm:$0xff] %vm362, %v347
        %414 = vst.msk [vmem:[%s361 + $0x291] sm:$0xff] %vm362, %v348
        %415 = vst.msk [vmem:[%s361 + $0x2a1] sm:$0xff] %vm362, %v349
        %416 = vst.msk [vmem:[%s361 + $0x2a9] sm:$0xff] %vm362, %v350
        %417 = vst.msk [vmem:[%s361 + $0x2b9] sm:$0xff] %vm362, %v351
        %418 = vst.msk [vmem:[%s361 + $0x2c1] sm:$0xff] %vm362, %v352
        %419 = vst.msk [vmem:[%s361 + $0x2d1] sm:$0xff] %vm362, %v353
        %420 = vst.msk [vmem:[%s361 + $0x2d9] sm:$0xff] %vm362, %v354
        %421 = vst.msk [vmem:[%s361 + $0x2e9] sm:$0xff] %vm362, %v355
        %422 = vst.msk [vmem:[%s361 + $0x2f1] sm:$0xff] %vm362, %v356
        %423 = vst.msk [vmem:[%s361 + $0x301] sm:$0xff] %vm362, %v357
        %424 = vst.msk [vmem:[%s361 + $0x309] sm:$0xff] %vm362, %v358
        %425 = vst.msk [vmem:[%s361 + $0x319] sm:$0xff] %vm362, %v359
        %426 = vst.msk [vmem:[%s361 + $0x321] sm:$0xff] %vm362, %v360
        %427 = vst.msk [vmem:[#allocation2 + $0x1] sm:$0xff] %vm362, %v297
        %428 = vst.msk [vmem:[#allocation2 + $0x9] sm:$0xff] %vm362, %v298
        %429 = vst.msk [vmem:[#allocation2 + $0x1b1] sm:$0xff] %vm362, %v329
        %430 = vst.msk [vmem:[#allocation2 + $0x1b9] sm:$0xff] %vm362, %v330
        %s431 = scalar_lea.vmem [#allocation2], 408
        %432 = vst.msk [vmem:[%s431 + $0x1] sm:$0xff] %vm362, %v327
        %433 = vst.msk [vmem:[%s431 + $0x9] sm:$0xff] %vm362, %v328
        %434 = vst.msk [vmem:[%s431 + $0x1b1] sm:$0xff] %vm362, %v359
        %435 = vst.msk [vmem:[%s431 + $0x1b9] sm:$0xff] %vm362, %v360
        %v436 = vld [vmem:[#allocation2 + $0x1] sm:$0x1]
        %v437 = vld [vmem:[#allocation2 + $0x19] sm:$0x1]
        %v438 = vld [vmem:[#allocation2 + $0x31] sm:$0x1]
        %v439 = vld [vmem:[#allocation2 + $0x49] sm:$0x1]
        %v440 = vld [vmem:[#allocation2 + $0x61] sm:$0x1]
        %v441 = vld [vmem:[#allocation2 + $0x79] sm:$0x1]
        %v442 = vld [vmem:[#allocation2 + $0x91] sm:$0x1]
        %v443 = vld [vmem:[#allocation2 + $0xa9] sm:$0x1]
        %v444 = vld [vmem:[#allocation2 + $0xc1] sm:$0x1]
        %v445 = vld [vmem:[#allocation2 + $0xd9] sm:$0x1]
        %v446 = vld [vmem:[#allocation2 + $0xf1] sm:$0x1]
        %v447 = vld [vmem:[#allocation2 + $0x109] sm:$0x1]
        %v448 = vld [vmem:[#allocation2 + $0x121] sm:$0x1]
        %v449 = vld [vmem:[#allocation2 + $0x139] sm:$0x1]
        %v450 = vld [vmem:[#allocation2 + $0x151] sm:$0x1]
        %v451 = vld [vmem:[#allocation2 + $0x169] sm:$0x1]
        %v452 = vld [vmem:[#allocation2 + $0x181] sm:$0x1]
        %v453 = vld [vmem:[#allocation2 + $0x199] sm:$0x1]
        %v454 = vld [vmem:[#allocation2 + $0x1b1] sm:$0x1]
        %v455 = vld [vmem:[#allocation2 + $0x1c9] sm:$0x1]
        %v456 = vld [vmem:[#allocation2 + $0x1e1] sm:$0x1]
        %v457 = vld [vmem:[#allocation2 + $0x1f9] sm:$0x1]
        %v458 = vld [vmem:[#allocation2 + $0x211] sm:$0x1]
        %v459 = vld [vmem:[#allocation2 + $0x229] sm:$0x1]
        %v460 = vld [vmem:[#allocation2 + $0x241] sm:$0x1]
        %v461 = vld [vmem:[#allocation2 + $0x259] sm:$0x1]
        %v462 = vld [vmem:[#allocation2 + $0x271] sm:$0x1]
        %v463 = vld [vmem:[#allocation2 + $0x289] sm:$0x1]
        %v464 = vld [vmem:[#allocation2 + $0x2a1] sm:$0x1]
        %v465 = vld [vmem:[#allocation2 + $0x2b9] sm:$0x1]
        %v466 = vld [vmem:[#allocation2 + $0x2d1] sm:$0x1]
        %v467 = vld [vmem:[#allocation2 + $0x2e9] sm:$0x1]
        %v468 = vld [vmem:[#allocation2 + $0x301] sm:$0x1]
        %v469 = vld [vmem:[#allocation2 + $0x319] sm:$0x1]
        %v470 = vld [vmem:[#allocation2 + $0x331] sm:$0x1]
        %v471 = vld [vmem:[#allocation2 + $0x349] sm:$0x1]
        %vm472 = vcmask 24576
        %473 = vst.msk [vmem:[#allocation2] sm:$0x1] %vm472, %v436
        %474 = vst.msk [vmem:[#allocation2 + $0x18] sm:$0x1] %vm472, %v437
        %475 = vst.msk [vmem:[#allocation2 + $0x30] sm:$0x1] %vm472, %v438
        %476 = vst.msk [vmem:[#allocation2 + $0x48] sm:$0x1] %vm472, %v439
        %477 = vst.msk [vmem:[#allocation2 + $0x60] sm:$0x1] %vm472, %v440
        %478 = vst.msk [vmem:[#allocation2 + $0x78] sm:$0x1] %vm472, %v441
        %479 = vst.msk [vmem:[#allocation2 + $0x90] sm:$0x1] %vm472, %v442
        %480 = vst.msk [vmem:[#allocation2 + $0xa8] sm:$0x1] %vm472, %v443
        %481 = vst.msk [vmem:[#allocation2 + $0xc0] sm:$0x1] %vm472, %v444
        %482 = vst.msk [vmem:[#allocation2 + $0xd8] sm:$0x1] %vm472, %v445
        %483 = vst.msk [vmem:[#allocation2 + $0xf0] sm:$0x1] %vm472, %v446
        %484 = vst.msk [vmem:[#allocation2 + $0x108] sm:$0x1] %vm472, %v447
        %485 = vst.msk [vmem:[#allocation2 + $0x120] sm:$0x1] %vm472, %v448
        %486 = vst.msk [vmem:[#allocation2 + $0x138] sm:$0x1] %vm472, %v449
        %487 = vst.msk [vmem:[#allocation2 + $0x150] sm:$0x1] %vm472, %v450
        %488 = vst.msk [vmem:[#allocation2 + $0x168] sm:$0x1] %vm472, %v451
        %489 = vst.msk [vmem:[#allocation2 + $0x180] sm:$0x1] %vm472, %v452
        %490 = vst.msk [vmem:[#allocation2 + $0x198] sm:$0x1] %vm472, %v453
        %491 = vst.msk [vmem:[#allocation2 + $0x1b0] sm:$0x1] %vm472, %v454
        %492 = vst.msk [vmem:[#allocation2 + $0x1c8] sm:$0x1] %vm472, %v455
        %493 = vst.msk [vmem:[#allocation2 + $0x1e0] sm:$0x1] %vm472, %v456
        %494 = vst.msk [vmem:[#allocation2 + $0x1f8] sm:$0x1] %vm472, %v457
        %495 = vst.msk [vmem:[#allocation2 + $0x210] sm:$0x1] %vm472, %v458
        %496 = vst.msk [vmem:[#allocation2 + $0x228] sm:$0x1] %vm472, %v459
        %497 = vst.msk [vmem:[#allocation2 + $0x240] sm:$0x1] %vm472, %v460
        %498 = vst.msk [vmem:[#allocation2 + $0x258] sm:$0x1] %vm472, %v461
        %499 = vst.msk [vmem:[#allocation2 + $0x270] sm:$0x1] %vm472, %v462
        %500 = vst.msk [vmem:[#allocation2 + $0x288] sm:$0x1] %vm472, %v463
        %501 = vst.msk [vmem:[#allocation2 + $0x2a0] sm:$0x1] %vm472, %v464
        %502 = vst.msk [vmem:[#allocation2 + $0x2b8] sm:$0x1] %vm472, %v465
        %503 = vst.msk [vmem:[#allocation2 + $0x2d0] sm:$0x1] %vm472, %v466
        %504 = vst.msk [vmem:[#allocation2 + $0x2e8] sm:$0x1] %vm472, %v467
        %505 = vst.msk [vmem:[#allocation2 + $0x300] sm:$0x1] %vm472, %v468
        %506 = vst.msk [vmem:[#allocation2 + $0x318] sm:$0x1] %vm472, %v469
        %507 = vst.msk [vmem:[#allocation2 + $0x330] sm:$0x1] %vm472, %v470
        %508 = vst.msk [vmem:[#allocation2 + $0x348] sm:$0x1] %vm472, %v471
        %v509 = vld [vmem:[#allocation2 + $0x10] sm:$0x1]
        %v510 = vld [vmem:[#allocation2 + $0x28] sm:$0x1]
        %v511 = vld [vmem:[#allocation2 + $0x40] sm:$0x1]
        %v512 = vld [vmem:[#allocation2 + $0x58] sm:$0x1]
        %v513 = vld [vmem:[#allocation2 + $0x70] sm:$0x1]
        %v514 = vld [vmem:[#allocation2 + $0x88] sm:$0x1]
        %v515 = vld [vmem:[#allocation2 + $0xa0] sm:$0x1]
        %v516 = vld [vmem:[#allocation2 + $0xb8] sm:$0x1]
        %v517 = vld [vmem:[#allocation2 + $0xd0] sm:$0x1]
        %v518 = vld [vmem:[#allocation2 + $0xe8] sm:$0x1]
        %v519 = vld [vmem:[#allocation2 + $0x100] sm:$0x1]
        %v520 = vld [vmem:[#allocation2 + $0x118] sm:$0x1]
        %v521 = vld [vmem:[#allocation2 + $0x130] sm:$0x1]
        %v522 = vld [vmem:[#allocation2 + $0x148] sm:$0x1]
        %v523 = vld [vmem:[#allocation2 + $0x160] sm:$0x1]
        %v524 = vld [vmem:[#allocation2 + $0x178] sm:$0x1]
        %v525 = vld [vmem:[#allocation2 + $0x190] sm:$0x1]
        %v526 = vld [vmem:[#allocation2 + $0x1a8] sm:$0x1]
        %v527 = vld [vmem:[#allocation2 + $0x1c0] sm:$0x1]
        %v528 = vld [vmem:[#allocation2 + $0x1d8] sm:$0x1]
        %v529 = vld [vmem:[#allocation2 + $0x1f0] sm:$0x1]
        %v530 = vld [vmem:[#allocation2 + $0x208] sm:$0x1]
        %v531 = vld [vmem:[#allocation2 + $0x220] sm:$0x1]
        %v532 = vld [vmem:[#allocation2 + $0x238] sm:$0x1]
        %v533 = vld [vmem:[#allocation2 + $0x250] sm:$0x1]
        %v534 = vld [vmem:[#allocation2 + $0x268] sm:$0x1]
        %v535 = vld [vmem:[#allocation2 + $0x280] sm:$0x1]
        %v536 = vld [vmem:[#allocation2 + $0x298] sm:$0x1]
        %v537 = vld [vmem:[#allocation2 + $0x2b0] sm:$0x1]
        %v538 = vld [vmem:[#allocation2 + $0x2c8] sm:$0x1]
        %v539 = vld [vmem:[#allocation2 + $0x2e0] sm:$0x1]
        %v540 = vld [vmem:[#allocation2 + $0x2f8] sm:$0x1]
        %v541 = vld [vmem:[#allocation2 + $0x310] sm:$0x1]
        %v542 = vld [vmem:[#allocation2 + $0x328] sm:$0x1]
        %v543 = vld [vmem:[#allocation2 + $0x340] sm:$0x1]
        %v544 = vld [vmem:[#allocation2 + $0x358] sm:$0x1]
        %545 = vst.msk [vmem:[#allocation2 + $0x11] sm:$0x1] %vm472, %v509
        %546 = vst.msk [vmem:[#allocation2 + $0x29] sm:$0x1] %vm472, %v510
        %547 = vst.msk [vmem:[#allocation2 + $0x41] sm:$0x1] %vm472, %v511
        %548 = vst.msk [vmem:[#allocation2 + $0x59] sm:$0x1] %vm472, %v512
        %549 = vst.msk [vmem:[#allocation2 + $0x71] sm:$0x1] %vm472, %v513
        %550 = vst.msk [vmem:[#allocation2 + $0x89] sm:$0x1] %vm472, %v514
        %551 = vst.msk [vmem:[#allocation2 + $0xa1] sm:$0x1] %vm472, %v515
        %552 = vst.msk [vmem:[#allocation2 + $0xb9] sm:$0x1] %vm472, %v516
        %553 = vst.msk [vmem:[#allocation2 + $0xd1] sm:$0x1] %vm472, %v517
        %554 = vst.msk [vmem:[#allocation2 + $0xe9] sm:$0x1] %vm472, %v518
        %555 = vst.msk [vmem:[#allocation2 + $0x101] sm:$0x1] %vm472, %v519
        %556 = vst.msk [vmem:[#allocation2 + $0x119] sm:$0x1] %vm472, %v520
        %557 = vst.msk [vmem:[#allocation2 + $0x131] sm:$0x1] %vm472, %v521
        %558 = vst.msk [vmem:[#allocation2 + $0x149] sm:$0x1] %vm472, %v522
        %559 = vst.msk [vmem:[#allocation2 + $0x161] sm:$0x1] %vm472, %v523
        %560 = vst.msk [vmem:[#allocation2 + $0x179] sm:$0x1] %vm472, %v524
        %561 = vst.msk [vmem:[#allocation2 + $0x191] sm:$0x1] %vm472, %v525
        %562 = vst.msk [vmem:[#allocation2 + $0x1a9] sm:$0x1] %vm472, %v526
        %563 = vst.msk [vmem:[#allocation2 + $0x1c1] sm:$0x1] %vm472, %v527
        %564 = vst.msk [vmem:[#allocation2 + $0x1d9] sm:$0x1] %vm472, %v528
        %565 = vst.msk [vmem:[#allocation2 + $0x1f1] sm:$0x1] %vm472, %v529
        %566 = vst.msk [vmem:[#allocation2 + $0x209] sm:$0x1] %vm472, %v530
        %567 = vst.msk [vmem:[#allocation2 + $0x221] sm:$0x1] %vm472, %v531
        %568 = vst.msk [vmem:[#allocation2 + $0x239] sm:$0x1] %vm472, %v532
        %569 = vst.msk [vmem:[#allocation2 + $0x251] sm:$0x1] %vm472, %v533
        %570 = vst.msk [vmem:[#allocation2 + $0x269] sm:$0x1] %vm472, %v534
        %571 = vst.msk [vmem:[#allocation2 + $0x281] sm:$0x1] %vm472, %v535
        %572 = vst.msk [vmem:[#allocation2 + $0x299] sm:$0x1] %vm472, %v536
        %573 = vst.msk [vmem:[#allocation2 + $0x2b1] sm:$0x1] %vm472, %v537
        %574 = vst.msk [vmem:[#allocation2 + $0x2c9] sm:$0x1] %vm472, %v538
        %575 = vst.msk [vmem:[#allocation2 + $0x2e1] sm:$0x1] %vm472, %v539
        %576 = vst.msk [vmem:[#allocation2 + $0x2f9] sm:$0x1] %vm472, %v540
        %577 = vst.msk [vmem:[#allocation2 + $0x311] sm:$0x1] %vm472, %v541
        %578 = vst.msk [vmem:[#allocation2 + $0x329] sm:$0x1] %vm472, %v542
        %579 = vst.msk [vmem:[#allocation2 + $0x341] sm:$0x1] %vm472, %v543
        %580 = vst.msk [vmem:[#allocation2 + $0x359] sm:$0x1] %vm472, %v544
        %v581 = vld [vmem:[#allocation2] sm:$0xff]
        %v582 = vld [vmem:[#allocation2 + $0x8] sm:$0xff]
        %v583 = vld [vmem:[#allocation2 + $0x18] sm:$0xff]
        %v584 = vld [vmem:[#allocation2 + $0x20] sm:$0xff]
        %v585 = vld [vmem:[#allocation2 + $0x30] sm:$0xff]
        %v586 = vld [vmem:[#allocation2 + $0x38] sm:$0xff]
        %v587 = vld [vmem:[#allocation2 + $0x48] sm:$0xff]
        %v588 = vld [vmem:[#allocation2 + $0x50] sm:$0xff]
        %v589 = vld [vmem:[#allocation2 + $0x60] sm:$0xff]
        %v590 = vld [vmem:[#allocation2 + $0x68] sm:$0xff]
        %v591 = vld [vmem:[#allocation2 + $0x78] sm:$0xff]
        %v592 = vld [vmem:[#allocation2 + $0x80] sm:$0xff]
        %v593 = vld [vmem:[#allocation2 + $0x90] sm:$0xff]
        %v594 = vld [vmem:[#allocation2 + $0x98] sm:$0xff]
        %v595 = vld [vmem:[#allocation2 + $0xa8] sm:$0xff]
        %v596 = vld [vmem:[#allocation2 + $0xb0] sm:$0xff]
        %v597 = vld [vmem:[#allocation2 + $0xc0] sm:$0xff]
        %v598 = vld [vmem:[#allocation2 + $0xc8] sm:$0xff]
        %v599 = vld [vmem:[#allocation2 + $0xd8] sm:$0xff]
        %v600 = vld [vmem:[#allocation2 + $0xe0] sm:$0xff]
        %v601 = vld [vmem:[#allocation2 + $0xf0] sm:$0xff]
        %v602 = vld [vmem:[#allocation2 + $0xf8] sm:$0xff]
        %v603 = vld [vmem:[#allocation2 + $0x108] sm:$0xff]
        %v604 = vld [vmem:[#allocation2 + $0x110] sm:$0xff]
        %v605 = vld [vmem:[#allocation2 + $0x120] sm:$0xff]
        %v606 = vld [vmem:[#allocation2 + $0x128] sm:$0xff]
        %v607 = vld [vmem:[#allocation2 + $0x138] sm:$0xff]
        %v608 = vld [vmem:[#allocation2 + $0x140] sm:$0xff]
        %v609 = vld [vmem:[#allocation2 + $0x150] sm:$0xff]
        %v610 = vld [vmem:[#allocation2 + $0x158] sm:$0xff]
        %v611 = vld [vmem:[#allocation2 + $0x168] sm:$0xff]
        %v612 = vld [vmem:[#allocation2 + $0x170] sm:$0xff]
        %v613 = vld [vmem:[#allocation2 + $0x1b0] sm:$0xff]
        %v614 = vld [vmem:[#allocation2 + $0x1b8] sm:$0xff]
        %v615 = vld [vmem:[#allocation2 + $0x1c8] sm:$0xff]
        %v616 = vld [vmem:[#allocation2 + $0x1d0] sm:$0xff]
        %v617 = vld [vmem:[#allocation2 + $0x1e0] sm:$0xff]
        %v618 = vld [vmem:[#allocation2 + $0x1e8] sm:$0xff]
        %v619 = vld [vmem:[#allocation2 + $0x1f8] sm:$0xff]
        %v620 = vld [vmem:[#allocation2 + $0x200] sm:$0xff]
        %v621 = vld [vmem:[#allocation2 + $0x210] sm:$0xff]
        %v622 = vld [vmem:[#allocation2 + $0x218] sm:$0xff]
        %v623 = vld [vmem:[#allocation2 + $0x228] sm:$0xff]
        %v624 = vld [vmem:[#allocation2 + $0x230] sm:$0xff]
        %v625 = vld [vmem:[#allocation2 + $0x240] sm:$0xff]
        %v626 = vld [vmem:[#allocation2 + $0x248] sm:$0xff]
        %v627 = vld [vmem:[#allocation2 + $0x258] sm:$0xff]
        %v628 = vld [vmem:[#allocation2 + $0x260] sm:$0xff]
        %v629 = vld [vmem:[#allocation2 + $0x270] sm:$0xff]
        %v630 = vld [vmem:[#allocation2 + $0x278] sm:$0xff]
        %v631 = vld [vmem:[#allocation2 + $0x288] sm:$0xff]
        %v632 = vld [vmem:[#allocation2 + $0x290] sm:$0xff]
        %v633 = vld [vmem:[#allocation2 + $0x2a0] sm:$0xff]
        %v634 = vld [vmem:[#allocation2 + $0x2a8] sm:$0xff]
        %v635 = vld [vmem:[#allocation2 + $0x2b8] sm:$0xff]
        %v636 = vld [vmem:[#allocation2 + $0x2c0] sm:$0xff]
        %v637 = vld [vmem:[#allocation2 + $0x2d0] sm:$0xff]
        %v638 = vld [vmem:[#allocation2 + $0x2d8] sm:$0xff]
        %v639 = vld [vmem:[#allocation2 + $0x2e8] sm:$0xff]
        %v640 = vld [vmem:[#allocation2 + $0x2f0] sm:$0xff]
        %v641 = vld [vmem:[#allocation2 + $0x300] sm:$0xff]
        %v642 = vld [vmem:[#allocation2 + $0x308] sm:$0xff]
        %v643 = vld [vmem:[#allocation2 + $0x318] sm:$0xff]
        %v644 = vld [vmem:[#allocation2 + $0x320] sm:$0xff]
        %645 = vst.msk [vmem:[#allocation3] sm:$0xff] %vm362, %v581
        %646 = vst.msk [vmem:[#allocation3 + $0x8] sm:$0xff] %vm362, %v582
        %647 = vst.msk [vmem:[#allocation3 + $0x10] sm:$0xff] %vm362, %v583
        %648 = vst.msk [vmem:[#allocation3 + $0x18] sm:$0xff] %vm362, %v584
        %649 = vst.msk [vmem:[#allocation3 + $0x20] sm:$0xff] %vm362, %v585
        %650 = vst.msk [vmem:[#allocation3 + $0x28] sm:$0xff] %vm362, %v586
        %651 = vst.msk [vmem:[#allocation3 + $0x30] sm:$0xff] %vm362, %v587
        %652 = vst.msk [vmem:[#allocation3 + $0x38] sm:$0xff] %vm362, %v588
        %653 = vst.msk [vmem:[#allocation3 + $0x40] sm:$0xff] %vm362, %v589
        %654 = vst.msk [vmem:[#allocation3 + $0x48] sm:$0xff] %vm362, %v590
        %655 = vst.msk [vmem:[#allocation3 + $0x50] sm:$0xff] %vm362, %v591
        %656 = vst.msk [vmem:[#allocation3 + $0x58] sm:$0xff] %vm362, %v592
        %657 = vst.msk [vmem:[#allocation3 + $0x60] sm:$0xff] %vm362, %v593
        %658 = vst.msk [vmem:[#allocation3 + $0x68] sm:$0xff] %vm362, %v594
        %659 = vst.msk [vmem:[#allocation3 + $0x70] sm:$0xff] %vm362, %v595
        %660 = vst.msk [vmem:[#allocation3 + $0x78] sm:$0xff] %vm362, %v596
        %661 = vst.msk [vmem:[#allocation3 + $0x80] sm:$0xff] %vm362, %v597
        %662 = vst.msk [vmem:[#allocation3 + $0x88] sm:$0xff] %vm362, %v598
        %663 = vst.msk [vmem:[#allocation3 + $0x90] sm:$0xff] %vm362, %v599
        %664 = vst.msk [vmem:[#allocation3 + $0x98] sm:$0xff] %vm362, %v600
        %665 = vst.msk [vmem:[#allocation3 + $0xa0] sm:$0xff] %vm362, %v601
        %666 = vst.msk [vmem:[#allocation3 + $0xa8] sm:$0xff] %vm362, %v602
        %667 = vst.msk [vmem:[#allocation3 + $0xb0] sm:$0xff] %vm362, %v603
        %668 = vst.msk [vmem:[#allocation3 + $0xb8] sm:$0xff] %vm362, %v604
        %669 = vst.msk [vmem:[#allocation3 + $0xc0] sm:$0xff] %vm362, %v605
        %670 = vst.msk [vmem:[#allocation3 + $0xc8] sm:$0xff] %vm362, %v606
        %671 = vst.msk [vmem:[#allocation3 + $0xd0] sm:$0xff] %vm362, %v607
        %672 = vst.msk [vmem:[#allocation3 + $0xd8] sm:$0xff] %vm362, %v608
        %673 = vst.msk [vmem:[#allocation3 + $0xe0] sm:$0xff] %vm362, %v609
        %674 = vst.msk [vmem:[#allocation3 + $0xe8] sm:$0xff] %vm362, %v610
        %675 = vst.msk [vmem:[#allocation3 + $0xf0] sm:$0xff] %vm362, %v611
        %676 = vst.msk [vmem:[#allocation3 + $0xf8] sm:$0xff] %vm362, %v612
        %677 = vst.msk [vmem:[#allocation3 + $0x100] sm:$0xff] %vm362, %v613
        %678 = vst.msk [vmem:[#allocation3 + $0x108] sm:$0xff] %vm362, %v614
        %679 = vst.msk [vmem:[#allocation3 + $0x110] sm:$0xff] %vm362, %v615
        %680 = vst.msk [vmem:[#allocation3 + $0x118] sm:$0xff] %vm362, %v616
        %681 = vst.msk [vmem:[#allocation3 + $0x120] sm:$0xff] %vm362, %v617
        %682 = vst.msk [vmem:[#allocation3 + $0x128] sm:$0xff] %vm362, %v618
        %683 = vst.msk [vmem:[#allocation3 + $0x130] sm:$0xff] %vm362, %v619
        %684 = vst.msk [vmem:[#allocation3 + $0x138] sm:$0xff] %vm362, %v620
        %685 = vst.msk [vmem:[#allocation3 + $0x140] sm:$0xff] %vm362, %v621
        %686 = vst.msk [vmem:[#allocation3 + $0x148] sm:$0xff] %vm362, %v622
        %687 = vst.msk [vmem:[#allocation3 + $0x150] sm:$0xff] %vm362, %v623
        %688 = vst.msk [vmem:[#allocation3 + $0x158] sm:$0xff] %vm362, %v624
        %689 = vst.msk [vmem:[#allocation3 + $0x160] sm:$0xff] %vm362, %v625
        %690 = vst.msk [vmem:[#allocation3 + $0x168] sm:$0xff] %vm362, %v626
        %691 = vst.msk [vmem:[#allocation3 + $0x170] sm:$0xff] %vm362, %v627
        %692 = vst.msk [vmem:[#allocation3 + $0x178] sm:$0xff] %vm362, %v628
        %693 = vst.msk [vmem:[#allocation3 + $0x180] sm:$0xff] %vm362, %v629
        %694 = vst.msk [vmem:[#allocation3 + $0x188] sm:$0xff] %vm362, %v630
        %695 = vst.msk [vmem:[#allocation3 + $0x190] sm:$0xff] %vm362, %v631
        %696 = vst.msk [vmem:[#allocation3 + $0x198] sm:$0xff] %vm362, %v632
        %697 = vst.msk [vmem:[#allocation3 + $0x1a0] sm:$0xff] %vm362, %v633
        %698 = vst.msk [vmem:[#allocation3 + $0x1a8] sm:$0xff] %vm362, %v634
        %699 = vst.msk [vmem:[#allocation3 + $0x1b0] sm:$0xff] %vm362, %v635
        %700 = vst.msk [vmem:[#allocation3 + $0x1b8] sm:$0xff] %vm362, %v636
        %701 = vst.msk [vmem:[#allocation3 + $0x1c0] sm:$0xff] %vm362, %v637
        %702 = vst.msk [vmem:[#allocation3 + $0x1c8] sm:$0xff] %vm362, %v638
        %703 = vst.msk [vmem:[#allocation3 + $0x1d0] sm:$0xff] %vm362, %v639
        %704 = vst.msk [vmem:[#allocation3 + $0x1d8] sm:$0xff] %vm362, %v640
        %705 = vst.msk [vmem:[#allocation3 + $0x1e0] sm:$0xff] %vm362, %v641
        %706 = vst.msk [vmem:[#allocation3 + $0x1e8] sm:$0xff] %vm362, %v642
        %707 = vst.msk [vmem:[#allocation3 + $0x1f0] sm:$0xff] %vm362, %v643
        %708 = vst.msk [vmem:[#allocation3 + $0x1f8] sm:$0xff] %vm362, %v644
        %v709 = vld [vmem:[#allocation2 + $0x1] sm:$0xff]
        %v710 = vld [vmem:[#allocation2 + $0x9] sm:$0xff]
        %v711 = vld [vmem:[#allocation2 + $0x19] sm:$0xff]
        %v712 = vld [vmem:[#allocation2 + $0x21] sm:$0xff]
        %v713 = vld [vmem:[#allocation2 + $0x31] sm:$0xff]
        %v714 = vld [vmem:[#allocation2 + $0x39] sm:$0xff]
        %v715 = vld [vmem:[#allocation2 + $0x49] sm:$0xff]
        %v716 = vld [vmem:[#allocation2 + $0x51] sm:$0xff]
        %v717 = vld [vmem:[#allocation2 + $0x61] sm:$0xff]
        %v718 = vld [vmem:[#allocation2 + $0x69] sm:$0xff]
        %v719 = vld [vmem:[#allocation2 + $0x79] sm:$0xff]
        %v720 = vld [vmem:[#allocation2 + $0x81] sm:$0xff]
        %v721 = vld [vmem:[#allocation2 + $0x91] sm:$0xff]
        %v722 = vld [vmem:[#allocation2 + $0x99] sm:$0xff]
        %v723 = vld [vmem:[#allocation2 + $0xa9] sm:$0xff]
        %v724 = vld [vmem:[#allocation2 + $0xb1] sm:$0xff]
        %v725 = vld [vmem:[#allocation2 + $0xc1] sm:$0xff]
        %v726 = vld [vmem:[#allocation2 + $0xc9] sm:$0xff]
        %v727 = vld [vmem:[#allocation2 + $0xd9] sm:$0xff]
        %v728 = vld [vmem:[#allocation2 + $0xe1] sm:$0xff]
        %v729 = vld [vmem:[#allocation2 + $0xf1] sm:$0xff]
        %v730 = vld [vmem:[#allocation2 + $0xf9] sm:$0xff]
        %v731 = vld [vmem:[#allocation2 + $0x109] sm:$0xff]
        %v732 = vld [vmem:[#allocation2 + $0x111] sm:$0xff]
        %v733 = vld [vmem:[#allocation2 + $0x121] sm:$0xff]
        %v734 = vld [vmem:[#allocation2 + $0x129] sm:$0xff]
        %v735 = vld [vmem:[#allocation2 + $0x139] sm:$0xff]
        %v736 = vld [vmem:[#allocation2 + $0x141] sm:$0xff]
        %v737 = vld [vmem:[#allocation2 + $0x151] sm:$0xff]
        %v738 = vld [vmem:[#allocation2 + $0x159] sm:$0xff]
        %v739 = vld [vmem:[#allocation2 + $0x169] sm:$0xff]
        %v740 = vld [vmem:[#allocation2 + $0x171] sm:$0xff]
        %v741 = vld [vmem:[#allocation2 + $0x1b1] sm:$0xff]
        %v742 = vld [vmem:[#allocation2 + $0x1b9] sm:$0xff]
        %v743 = vld [vmem:[#allocation2 + $0x1c9] sm:$0xff]
        %v744 = vld [vmem:[#allocation2 + $0x1d1] sm:$0xff]
        %v745 = vld [vmem:[#allocation2 + $0x1e1] sm:$0xff]
        %v746 = vld [vmem:[#allocation2 + $0x1e9] sm:$0xff]
        %v747 = vld [vmem:[#allocation2 + $0x1f9] sm:$0xff]
        %v748 = vld [vmem:[#allocation2 + $0x201] sm:$0xff]
        %v749 = vld [vmem:[#allocation2 + $0x211] sm:$0xff]
        %v750 = vld [vmem:[#allocation2 + $0x219] sm:$0xff]
        %v751 = vld [vmem:[#allocation2 + $0x229] sm:$0xff]
        %v752 = vld [vmem:[#allocation2 + $0x231] sm:$0xff]
        %v753 = vld [vmem:[#allocation2 + $0x241] sm:$0xff]
        %v754 = vld [vmem:[#allocation2 + $0x249] sm:$0xff]
        %v755 = vld [vmem:[#allocation2 + $0x259] sm:$0xff]
        %v756 = vld [vmem:[#allocation2 + $0x261] sm:$0xff]
        %v757 = vld [vmem:[#allocation2 + $0x271] sm:$0xff]
        %v758 = vld [vmem:[#allocation2 + $0x279] sm:$0xff]
        %v759 = vld [vmem:[#allocation2 + $0x289] sm:$0xff]
        %v760 = vld [vmem:[#allocation2 + $0x291] sm:$0xff]
        %v761 = vld [vmem:[#allocation2 + $0x2a1] sm:$0xff]
        %v762 = vld [vmem:[#allocation2 + $0x2a9] sm:$0xff]
        %v763 = vld [vmem:[#allocation2 + $0x2b9] sm:$0xff]
        %v764 = vld [vmem:[#allocation2 + $0x2c1] sm:$0xff]
        %v765 = vld [vmem:[#allocation2 + $0x2d1] sm:$0xff]
        %v766 = vld [vmem:[#allocation2 + $0x2d9] sm:$0xff]
        %v767 = vld [vmem:[#allocation2 + $0x2e9] sm:$0xff]
        %v768 = vld [vmem:[#allocation2 + $0x2f1] sm:$0xff]
        %v769 = vld [vmem:[#allocation2 + $0x301] sm:$0xff]
        %v770 = vld [vmem:[#allocation2 + $0x309] sm:$0xff]
        %v771 = vld [vmem:[#allocation2 + $0x319] sm:$0xff]
        %v772 = vld [vmem:[#allocation2 + $0x321] sm:$0xff]
        %837 = vrot.lane.b32.xlu0 %v709, 4
        %v838 = vpop.permute.xlu0 %837
        %839 = vrot.lane.b32.xlu0 %v710, 4
        %v840 = vpop.permute.xlu0 %839
        %841 = vrot.lane.b32.xlu0 %v711, 4
        %v842 = vpop.permute.xlu0 %841
        %843 = vrot.lane.b32.xlu0 %v712, 4
        %v844 = vpop.permute.xlu0 %843
        %845 = vrot.lane.b32.xlu0 %v713, 4
        %v846 = vpop.permute.xlu0 %845
        %847 = vrot.lane.b32.xlu0 %v714, 4
        %v848 = vpop.permute.xlu0 %847
        %849 = vrot.lane.b32.xlu0 %v715, 4
        %v850 = vpop.permute.xlu0 %849
        %851 = vrot.lane.b32.xlu0 %v716, 4
        %v852 = vpop.permute.xlu0 %851
        %853 = vrot.lane.b32.xlu0 %v717, 4
        %v854 = vpop.permute.xlu0 %853
        %855 = vrot.lane.b32.xlu0 %v718, 4
        %v856 = vpop.permute.xlu0 %855
        %857 = vrot.lane.b32.xlu0 %v719, 4
        %v858 = vpop.permute.xlu0 %857
        %859 = vrot.lane.b32.xlu0 %v720, 4
        %v860 = vpop.permute.xlu0 %859
        %861 = vrot.lane.b32.xlu0 %v721, 4
        %v862 = vpop.permute.xlu0 %861
        %863 = vrot.lane.b32.xlu0 %v722, 4
        %v864 = vpop.permute.xlu0 %863
        %865 = vrot.lane.b32.xlu0 %v723, 4
        %v866 = vpop.permute.xlu0 %865
        %867 = vrot.lane.b32.xlu0 %v724, 4
        %v868 = vpop.permute.xlu0 %867
        %869 = vrot.lane.b32.xlu0 %v725, 4
        %v870 = vpop.permute.xlu0 %869
        %871 = vrot.lane.b32.xlu0 %v726, 4
        %v872 = vpop.permute.xlu0 %871
        %873 = vrot.lane.b32.xlu0 %v727, 4
        %v874 = vpop.permute.xlu0 %873
        %875 = vrot.lane.b32.xlu0 %v728, 4
        %v876 = vpop.permute.xlu0 %875
        %877 = vrot.lane.b32.xlu0 %v729, 4
        %v878 = vpop.permute.xlu0 %877
        %879 = vrot.lane.b32.xlu0 %v730, 4
        %v880 = vpop.permute.xlu0 %879
        %881 = vrot.lane.b32.xlu0 %v731, 4
        %v882 = vpop.permute.xlu0 %881
        %883 = vrot.lane.b32.xlu0 %v732, 4
        %v884 = vpop.permute.xlu0 %883
        %885 = vrot.lane.b32.xlu0 %v733, 4
        %v886 = vpop.permute.xlu0 %885
        %887 = vrot.lane.b32.xlu0 %v734, 4
        %v888 = vpop.permute.xlu0 %887
        %889 = vrot.lane.b32.xlu0 %v735, 4
        %v890 = vpop.permute.xlu0 %889
        %891 = vrot.lane.b32.xlu0 %v736, 4
        %v892 = vpop.permute.xlu0 %891
        %893 = vrot.lane.b32.xlu0 %v737, 4
        %v894 = vpop.permute.xlu0 %893
        %895 = vrot.lane.b32.xlu0 %v738, 4
        %v896 = vpop.permute.xlu0 %895
        %897 = vrot.lane.b32.xlu0 %v739, 4
        %v898 = vpop.permute.xlu0 %897
        %899 = vrot.lane.b32.xlu0 %v740, 4
        %v900 = vpop.permute.xlu0 %899
        %901 = vrot.lane.b32.xlu0 %v741, 4
        %v902 = vpop.permute.xlu0 %901
        %903 = vrot.lane.b32.xlu0 %v742, 4
        %v904 = vpop.permute.xlu0 %903
        %905 = vrot.lane.b32.xlu0 %v743, 4
        %v906 = vpop.permute.xlu0 %905
        %907 = vrot.lane.b32.xlu0 %v744, 4
        %v908 = vpop.permute.xlu0 %907
        %909 = vrot.lane.b32.xlu0 %v745, 4
        %v910 = vpop.permute.xlu0 %909
        %911 = vrot.lane.b32.xlu0 %v746, 4
        %v912 = vpop.permute.xlu0 %911
        %913 = vrot.lane.b32.xlu0 %v747, 4
        %v914 = vpop.permute.xlu0 %913
        %915 = vrot.lane.b32.xlu0 %v748, 4
        %v916 = vpop.permute.xlu0 %915
        %917 = vrot.lane.b32.xlu0 %v749, 4
        %v918 = vpop.permute.xlu0 %917
        %919 = vrot.lane.b32.xlu0 %v750, 4
        %v920 = vpop.permute.xlu0 %919
        %921 = vrot.lane.b32.xlu0 %v751, 4
        %v922 = vpop.permute.xlu0 %921
        %923 = vrot.lane.b32.xlu0 %v752, 4
        %v924 = vpop.permute.xlu0 %923
        %925 = vrot.lane.b32.xlu0 %v753, 4
        %v926 = vpop.permute.xlu0 %925
        %927 = vrot.lane.b32.xlu0 %v754, 4
        %v928 = vpop.permute.xlu0 %927
        %929 = vrot.lane.b32.xlu0 %v755, 4
        %v930 = vpop.permute.xlu0 %929
        %931 = vrot.lane.b32.xlu0 %v756, 4
        %v932 = vpop.permute.xlu0 %931
        %933 = vrot.lane.b32.xlu0 %v757, 4
        %v934 = vpop.permute.xlu0 %933
        %935 = vrot.lane.b32.xlu0 %v758, 4
        %v936 = vpop.permute.xlu0 %935
        %937 = vrot.lane.b32.xlu0 %v759, 4
        %v938 = vpop.permute.xlu0 %937
        %939 = vrot.lane.b32.xlu0 %v760, 4
        %v940 = vpop.permute.xlu0 %939
        %941 = vrot.lane.b32.xlu0 %v761, 4
        %v942 = vpop.permute.xlu0 %941
        %943 = vrot.lane.b32.xlu0 %v762, 4
        %v944 = vpop.permute.xlu0 %943
        %945 = vrot.lane.b32.xlu0 %v763, 4
        %v946 = vpop.permute.xlu0 %945
        %947 = vrot.lane.b32.xlu0 %v764, 4
        %v948 = vpop.permute.xlu0 %947
        %949 = vrot.lane.b32.xlu0 %v765, 4
        %v950 = vpop.permute.xlu0 %949
        %951 = vrot.lane.b32.xlu0 %v766, 4
        %v952 = vpop.permute.xlu0 %951
        %953 = vrot.lane.b32.xlu0 %v767, 4
        %v954 = vpop.permute.xlu0 %953
        %955 = vrot.lane.b32.xlu0 %v768, 4
        %v956 = vpop.permute.xlu0 %955
        %957 = vrot.lane.b32.xlu0 %v769, 4
        %v958 = vpop.permute.xlu0 %957
        %959 = vrot.lane.b32.xlu0 %v770, 4
        %v960 = vpop.permute.xlu0 %959
        %961 = vrot.lane.b32.xlu0 %v771, 4
        %v962 = vpop.permute.xlu0 %961
        %963 = vrot.lane.b32.xlu0 %v772, 4
        %v964 = vpop.permute.xlu0 %963
        %vm1029 = vcmask 64544
        %1030 = vst.msk [vmem:[#allocation3] sm:$0xff] %vm1029, %v838
        %1031 = vst.msk [vmem:[#allocation3 + $0x8] sm:$0xff] %vm1029, %v840
        %1032 = vst.msk [vmem:[#allocation3 + $0x10] sm:$0xff] %vm1029, %v842
        %1033 = vst.msk [vmem:[#allocation3 + $0x18] sm:$0xff] %vm1029, %v844
        %1034 = vst.msk [vmem:[#allocation3 + $0x20] sm:$0xff] %vm1029, %v846
        %1035 = vst.msk [vmem:[#allocation3 + $0x28] sm:$0xff] %vm1029, %v848
        %1036 = vst.msk [vmem:[#allocation3 + $0x30] sm:$0xff] %vm1029, %v850
        %1037 = vst.msk [vmem:[#allocation3 + $0x38] sm:$0xff] %vm1029, %v852
        %1038 = vst.msk [vmem:[#allocation3 + $0x40] sm:$0xff] %vm1029, %v854
        %1039 = vst.msk [vmem:[#allocation3 + $0x48] sm:$0xff] %vm1029, %v856
        %1040 = vst.msk [vmem:[#allocation3 + $0x50] sm:$0xff] %vm1029, %v858
        %1041 = vst.msk [vmem:[#allocation3 + $0x58] sm:$0xff] %vm1029, %v860
        %1042 = vst.msk [vmem:[#allocation3 + $0x60] sm:$0xff] %vm1029, %v862
        %1043 = vst.msk [vmem:[#allocation3 + $0x68] sm:$0xff] %vm1029, %v864
        %1044 = vst.msk [vmem:[#allocation3 + $0x70] sm:$0xff] %vm1029, %v866
        %1045 = vst.msk [vmem:[#allocation3 + $0x78] sm:$0xff] %vm1029, %v868
        %1046 = vst.msk [vmem:[#allocation3 + $0x80] sm:$0xff] %vm1029, %v870
        %1047 = vst.msk [vmem:[#allocation3 + $0x88] sm:$0xff] %vm1029, %v872
        %1048 = vst.msk [vmem:[#allocation3 + $0x90] sm:$0xff] %vm1029, %v874
        %1049 = vst.msk [vmem:[#allocation3 + $0x98] sm:$0xff] %vm1029, %v876
        %1050 = vst.msk [vmem:[#allocation3 + $0xa0] sm:$0xff] %vm1029, %v878
        %1051 = vst.msk [vmem:[#allocation3 + $0xa8] sm:$0xff] %vm1029, %v880
        %1052 = vst.msk [vmem:[#allocation3 + $0xb0] sm:$0xff] %vm1029, %v882
        %1053 = vst.msk [vmem:[#allocation3 + $0xb8] sm:$0xff] %vm1029, %v884
        %1054 = vst.msk [vmem:[#allocation3 + $0xc0] sm:$0xff] %vm1029, %v886
        %1055 = vst.msk [vmem:[#allocation3 + $0xc8] sm:$0xff] %vm1029, %v888
        %1056 = vst.msk [vmem:[#allocation3 + $0xd0] sm:$0xff] %vm1029, %v890
        %1057 = vst.msk [vmem:[#allocation3 + $0xd8] sm:$0xff] %vm1029, %v892
        %1058 = vst.msk [vmem:[#allocation3 + $0xe0] sm:$0xff] %vm1029, %v894
        %1059 = vst.msk [vmem:[#allocation3 + $0xe8] sm:$0xff] %vm1029, %v896
        %1060 = vst.msk [vmem:[#allocation3 + $0xf0] sm:$0xff] %vm1029, %v898
        %1061 = vst.msk [vmem:[#allocation3 + $0xf8] sm:$0xff] %vm1029, %v900
        %1062 = vst.msk [vmem:[#allocation3 + $0x100] sm:$0xff] %vm1029, %v902
        %1063 = vst.msk [vmem:[#allocation3 + $0x108] sm:$0xff] %vm1029, %v904
        %1064 = vst.msk [vmem:[#allocation3 + $0x110] sm:$0xff] %vm1029, %v906
        %1065 = vst.msk [vmem:[#allocation3 + $0x118] sm:$0xff] %vm1029, %v908
        %1066 = vst.msk [vmem:[#allocation3 + $0x120] sm:$0xff] %vm1029, %v910
        %1067 = vst.msk [vmem:[#allocation3 + $0x128] sm:$0xff] %vm1029, %v912
        %1068 = vst.msk [vmem:[#allocation3 + $0x130] sm:$0xff] %vm1029, %v914
        %1069 = vst.msk [vmem:[#allocation3 + $0x138] sm:$0xff] %vm1029, %v916
        %1070 = vst.msk [vmem:[#allocation3 + $0x140] sm:$0xff] %vm1029, %v918
        %1071 = vst.msk [vmem:[#allocation3 + $0x148] sm:$0xff] %vm1029, %v920
        %1072 = vst.msk [vmem:[#allocation3 + $0x150] sm:$0xff] %vm1029, %v922
        %1073 = vst.msk [vmem:[#allocation3 + $0x158] sm:$0xff] %vm1029, %v924
        %1074 = vst.msk [vmem:[#allocation3 + $0x160] sm:$0xff] %vm1029, %v926
        %1075 = vst.msk [vmem:[#allocation3 + $0x168] sm:$0xff] %vm1029, %v928
        %1076 = vst.msk [vmem:[#allocation3 + $0x170] sm:$0xff] %vm1029, %v930
        %1077 = vst.msk [vmem:[#allocation3 + $0x178] sm:$0xff] %vm1029, %v932
        %1078 = vst.msk [vmem:[#allocation3 + $0x180] sm:$0xff] %vm1029, %v934
        %1079 = vst.msk [vmem:[#allocation3 + $0x188] sm:$0xff] %vm1029, %v936
        %1080 = vst.msk [vmem:[#allocation3 + $0x190] sm:$0xff] %vm1029, %v938
        %1081 = vst.msk [vmem:[#allocation3 + $0x198] sm:$0xff] %vm1029, %v940
        %1082 = vst.msk [vmem:[#allocation3 + $0x1a0] sm:$0xff] %vm1029, %v942
        %1083 = vst.msk [vmem:[#allocation3 + $0x1a8] sm:$0xff] %vm1029, %v944
        %1084 = vst.msk [vmem:[#allocation3 + $0x1b0] sm:$0xff] %vm1029, %v946
        %1085 = vst.msk [vmem:[#allocation3 + $0x1b8] sm:$0xff] %vm1029, %v948
        %1086 = vst.msk [vmem:[#allocation3 + $0x1c0] sm:$0xff] %vm1029, %v950
        %1087 = vst.msk [vmem:[#allocation3 + $0x1c8] sm:$0xff] %vm1029, %v952
        %1088 = vst.msk [vmem:[#allocation3 + $0x1d0] sm:$0xff] %vm1029, %v954
        %1089 = vst.msk [vmem:[#allocation3 + $0x1d8] sm:$0xff] %vm1029, %v956
        %1090 = vst.msk [vmem:[#allocation3 + $0x1e0] sm:$0xff] %vm1029, %v958
        %1091 = vst.msk [vmem:[#allocation3 + $0x1e8] sm:$0xff] %vm1029, %v960
        %1092 = vst.msk [vmem:[#allocation3 + $0x1f0] sm:$0xff] %vm1029, %v962
        %1093 = vst.msk [vmem:[#allocation3 + $0x1f8] sm:$0xff] %vm1029, %v964
        %v1094 = vld [vmem:[#allocation2 + $0x2] sm:$0xff]
        %v1095 = vld [vmem:[#allocation2 + $0xa] sm:$0xff]
        %v1096 = vld [vmem:[#allocation2 + $0x1a] sm:$0xff]
        %v1097 = vld [vmem:[#allocation2 + $0x22] sm:$0xff]
        %v1098 = vld [vmem:[#allocation2 + $0x32] sm:$0xff]
        %v1099 = vld [vmem:[#allocation2 + $0x3a] sm:$0xff]
        %v1100 = vld [vmem:[#allocation2 + $0x4a] sm:$0xff]
        %v1101 = vld [vmem:[#allocation2 + $0x52] sm:$0xff]
        %v1102 = vld [vmem:[#allocation2 + $0x62] sm:$0xff]
        %v1103 = vld [vmem:[#allocation2 + $0x6a] sm:$0xff]
        %v1104 = vld [vmem:[#allocation2 + $0x7a] sm:$0xff]
        %v1105 = vld [vmem:[#allocation2 + $0x82] sm:$0xff]
        %v1106 = vld [vmem:[#allocation2 + $0x92] sm:$0xff]
        %v1107 = vld [vmem:[#allocation2 + $0x9a] sm:$0xff]
        %v1108 = vld [vmem:[#allocation2 + $0xaa] sm:$0xff]
        %v1109 = vld [vmem:[#allocation2 + $0xb2] sm:$0xff]
        %v1110 = vld [vmem:[#allocation2 + $0xc2] sm:$0xff]
        %v1111 = vld [vmem:[#allocation2 + $0xca] sm:$0xff]
        %v1112 = vld [vmem:[#allocation2 + $0xda] sm:$0xff]
        %v1113 = vld [vmem:[#allocation2 + $0xe2] sm:$0xff]
        %v1114 = vld [vmem:[#allocation2 + $0xf2] sm:$0xff]
        %v1115 = vld [vmem:[#allocation2 + $0xfa] sm:$0xff]
        %v1116 = vld [vmem:[#allocation2 + $0x10a] sm:$0xff]
        %v1117 = vld [vmem:[#allocation2 + $0x112] sm:$0xff]
        %v1118 = vld [vmem:[#allocation2 + $0x122] sm:$0xff]
        %v1119 = vld [vmem:[#allocation2 + $0x12a] sm:$0xff]
        %v1120 = vld [vmem:[#allocation2 + $0x13a] sm:$0xff]
        %v1121 = vld [vmem:[#allocation2 + $0x142] sm:$0xff]
        %v1122 = vld [vmem:[#allocation2 + $0x152] sm:$0xff]
        %v1123 = vld [vmem:[#allocation2 + $0x15a] sm:$0xff]
        %v1124 = vld [vmem:[#allocation2 + $0x16a] sm:$0xff]
        %v1125 = vld [vmem:[#allocation2 + $0x172] sm:$0xff]
        %v1126 = vld [vmem:[#allocation2 + $0x1b2] sm:$0xff]
        %v1127 = vld [vmem:[#allocation2 + $0x1ba] sm:$0xff]
        %v1128 = vld [vmem:[#allocation2 + $0x1ca] sm:$0xff]
        %v1129 = vld [vmem:[#allocation2 + $0x1d2] sm:$0xff]
        %v1130 = vld [vmem:[#allocation2 + $0x1e2] sm:$0xff]
        %v1131 = vld [vmem:[#allocation2 + $0x1ea] sm:$0xff]
        %v1132 = vld [vmem:[#allocation2 + $0x1fa] sm:$0xff]
        %v1133 = vld [vmem:[#allocation2 + $0x202] sm:$0xff]
        %v1134 = vld [vmem:[#allocation2 + $0x212] sm:$0xff]
        %v1135 = vld [vmem:[#allocation2 + $0x21a] sm:$0xff]
        %v1136 = vld [vmem:[#allocation2 + $0x22a] sm:$0xff]
        %v1137 = vld [vmem:[#allocation2 + $0x232] sm:$0xff]
        %v1138 = vld [vmem:[#allocation2 + $0x242] sm:$0xff]
        %v1139 = vld [vmem:[#allocation2 + $0x24a] sm:$0xff]
        %v1140 = vld [vmem:[#allocation2 + $0x25a] sm:$0xff]
        %v1141 = vld [vmem:[#allocation2 + $0x262] sm:$0xff]
        %v1142 = vld [vmem:[#allocation2 + $0x272] sm:$0xff]
        %v1143 = vld [vmem:[#allocation2 + $0x27a] sm:$0xff]
        %v1144 = vld [vmem:[#allocation2 + $0x28a] sm:$0xff]
        %v1145 = vld [vmem:[#allocation2 + $0x292] sm:$0xff]
        %v1146 = vld [vmem:[#allocation2 + $0x2a2] sm:$0xff]
        %v1147 = vld [vmem:[#allocation2 + $0x2aa] sm:$0xff]
        %v1148 = vld [vmem:[#allocation2 + $0x2ba] sm:$0xff]
        %v1149 = vld [vmem:[#allocation2 + $0x2c2] sm:$0xff]
        %v1150 = vld [vmem:[#allocation2 + $0x2d2] sm:$0xff]
        %v1151 = vld [vmem:[#allocation2 + $0x2da] sm:$0xff]
        %v1152 = vld [vmem:[#allocation2 + $0x2ea] sm:$0xff]
        %v1153 = vld [vmem:[#allocation2 + $0x2f2] sm:$0xff]
        %v1154 = vld [vmem:[#allocation2 + $0x302] sm:$0xff]
        %v1155 = vld [vmem:[#allocation2 + $0x30a] sm:$0xff]
        %v1156 = vld [vmem:[#allocation2 + $0x31a] sm:$0xff]
        %v1157 = vld [vmem:[#allocation2 + $0x322] sm:$0xff]
        %1222 = vrot.lane.b32.xlu0 %v1094, 8
        %v1223 = vpop.permute.xlu0 %1222
        %1224 = vrot.lane.b32.xlu0 %v1095, 8
        %v1225 = vpop.permute.xlu0 %1224
        %1226 = vrot.lane.b32.xlu0 %v1096, 8
        %v1227 = vpop.permute.xlu0 %1226
        %1228 = vrot.lane.b32.xlu0 %v1097, 8
        %v1229 = vpop.permute.xlu0 %1228
        %1230 = vrot.lane.b32.xlu0 %v1098, 8
        %v1231 = vpop.permute.xlu0 %1230
        %1232 = vrot.lane.b32.xlu0 %v1099, 8
        %v1233 = vpop.permute.xlu0 %1232
        %1234 = vrot.lane.b32.xlu0 %v1100, 8
        %v1235 = vpop.permute.xlu0 %1234
        %1236 = vrot.lane.b32.xlu0 %v1101, 8
        %v1237 = vpop.permute.xlu0 %1236
        %1238 = vrot.lane.b32.xlu0 %v1102, 8
        %v1239 = vpop.permute.xlu0 %1238
        %1240 = vrot.lane.b32.xlu0 %v1103, 8
        %v1241 = vpop.permute.xlu0 %1240
        %1242 = vrot.lane.b32.xlu0 %v1104, 8
        %v1243 = vpop.permute.xlu0 %1242
        %1244 = vrot.lane.b32.xlu0 %v1105, 8
        %v1245 = vpop.permute.xlu0 %1244
        %1246 = vrot.lane.b32.xlu0 %v1106, 8
        %v1247 = vpop.permute.xlu0 %1246
        %1248 = vrot.lane.b32.xlu0 %v1107, 8
        %v1249 = vpop.permute.xlu0 %1248
        %1250 = vrot.lane.b32.xlu0 %v1108, 8
        %v1251 = vpop.permute.xlu0 %1250
        %1252 = vrot.lane.b32.xlu0 %v1109, 8
        %v1253 = vpop.permute.xlu0 %1252
        %1254 = vrot.lane.b32.xlu0 %v1110, 8
        %v1255 = vpop.permute.xlu0 %1254
        %1256 = vrot.lane.b32.xlu0 %v1111, 8
        %v1257 = vpop.permute.xlu0 %1256
        %1258 = vrot.lane.b32.xlu0 %v1112, 8
        %v1259 = vpop.permute.xlu0 %1258
        %1260 = vrot.lane.b32.xlu0 %v1113, 8
        %v1261 = vpop.permute.xlu0 %1260
        %1262 = vrot.lane.b32.xlu0 %v1114, 8
        %v1263 = vpop.permute.xlu0 %1262
        %1264 = vrot.lane.b32.xlu0 %v1115, 8
        %v1265 = vpop.permute.xlu0 %1264
        %1266 = vrot.lane.b32.xlu0 %v1116, 8
        %v1267 = vpop.permute.xlu0 %1266
        %1268 = vrot.lane.b32.xlu0 %v1117, 8
        %v1269 = vpop.permute.xlu0 %1268
        %1270 = vrot.lane.b32.xlu0 %v1118, 8
        %v1271 = vpop.permute.xlu0 %1270
        %1272 = vrot.lane.b32.xlu0 %v1119, 8
        %v1273 = vpop.permute.xlu0 %1272
        %1274 = vrot.lane.b32.xlu0 %v1120, 8
        %v1275 = vpop.permute.xlu0 %1274
        %1276 = vrot.lane.b32.xlu0 %v1121, 8
        %v1277 = vpop.permute.xlu0 %1276
        %1278 = vrot.lane.b32.xlu0 %v1122, 8
        %v1279 = vpop.permute.xlu0 %1278
        %1280 = vrot.lane.b32.xlu0 %v1123, 8
        %v1281 = vpop.permute.xlu0 %1280
        %1282 = vrot.lane.b32.xlu0 %v1124, 8
        %v1283 = vpop.permute.xlu0 %1282
        %1284 = vrot.lane.b32.xlu0 %v1125, 8
        %v1285 = vpop.permute.xlu0 %1284
        %1286 = vrot.lane.b32.xlu0 %v1126, 8
        %v1287 = vpop.permute.xlu0 %1286
        %1288 = vrot.lane.b32.xlu0 %v1127, 8
        %v1289 = vpop.permute.xlu0 %1288
        %1290 = vrot.lane.b32.xlu0 %v1128, 8
        %v1291 = vpop.permute.xlu0 %1290
        %1292 = vrot.lane.b32.xlu0 %v1129, 8
        %v1293 = vpop.permute.xlu0 %1292
        %1294 = vrot.lane.b32.xlu0 %v1130, 8
        %v1295 = vpop.permute.xlu0 %1294
        %1296 = vrot.lane.b32.xlu0 %v1131, 8
        %v1297 = vpop.permute.xlu0 %1296
        %1298 = vrot.lane.b32.xlu0 %v1132, 8
        %v1299 = vpop.permute.xlu0 %1298
        %1300 = vrot.lane.b32.xlu0 %v1133, 8
        %v1301 = vpop.permute.xlu0 %1300
        %1302 = vrot.lane.b32.xlu0 %v1134, 8
        %v1303 = vpop.permute.xlu0 %1302
        %1304 = vrot.lane.b32.xlu0 %v1135, 8
        %v1305 = vpop.permute.xlu0 %1304
        %1306 = vrot.lane.b32.xlu0 %v1136, 8
        %v1307 = vpop.permute.xlu0 %1306
        %1308 = vrot.lane.b32.xlu0 %v1137, 8
        %v1309 = vpop.permute.xlu0 %1308
        %1310 = vrot.lane.b32.xlu0 %v1138, 8
        %v1311 = vpop.permute.xlu0 %1310
        %1312 = vrot.lane.b32.xlu0 %v1139, 8
        %v1313 = vpop.permute.xlu0 %1312
        %1314 = vrot.lane.b32.xlu0 %v1140, 8
        %v1315 = vpop.permute.xlu0 %1314
        %1316 = vrot.lane.b32.xlu0 %v1141, 8
        %v1317 = vpop.permute.xlu0 %1316
        %1318 = vrot.lane.b32.xlu0 %v1142, 8
        %v1319 = vpop.permute.xlu0 %1318
        %1320 = vrot.lane.b32.xlu0 %v1143, 8
        %v1321 = vpop.permute.xlu0 %1320
        %1322 = vrot.lane.b32.xlu0 %v1144, 8
        %v1323 = vpop.permute.xlu0 %1322
        %1324 = vrot.lane.b32.xlu0 %v1145, 8
        %v1325 = vpop.permute.xlu0 %1324
        %1326 = vrot.lane.b32.xlu0 %v1146, 8
        %v1327 = vpop.permute.xlu0 %1326
        %1328 = vrot.lane.b32.xlu0 %v1147, 8
        %v1329 = vpop.permute.xlu0 %1328
        %1330 = vrot.lane.b32.xlu0 %v1148, 8
        %v1331 = vpop.permute.xlu0 %1330
        %1332 = vrot.lane.b32.xlu0 %v1149, 8
        %v1333 = vpop.permute.xlu0 %1332
        %1334 = vrot.lane.b32.xlu0 %v1150, 8
        %v1335 = vpop.permute.xlu0 %1334
        %1336 = vrot.lane.b32.xlu0 %v1151, 8
        %v1337 = vpop.permute.xlu0 %1336
        %1338 = vrot.lane.b32.xlu0 %v1152, 8
        %v1339 = vpop.permute.xlu0 %1338
        %1340 = vrot.lane.b32.xlu0 %v1153, 8
        %v1341 = vpop.permute.xlu0 %1340
        %1342 = vrot.lane.b32.xlu0 %v1154, 8
        %v1343 = vpop.permute.xlu0 %1342
        %1344 = vrot.lane.b32.xlu0 %v1155, 8
        %v1345 = vpop.permute.xlu0 %1344
        %1346 = vrot.lane.b32.xlu0 %v1156, 8
        %v1347 = vpop.permute.xlu0 %1346
        %1348 = vrot.lane.b32.xlu0 %v1157, 8
        %v1349 = vpop.permute.xlu0 %1348
        %vm1414 = vcmask 97344
        %1415 = vst.msk [vmem:[#allocation3] sm:$0xff] %vm1414, %v1223
        %1416 = vst.msk [vmem:[#allocation3 + $0x8] sm:$0xff] %vm1414, %v1225
        %1417 = vst.msk [vmem:[#allocation3 + $0x10] sm:$0xff] %vm1414, %v1227
        %1418 = vst.msk [vmem:[#allocation3 + $0x18] sm:$0xff] %vm1414, %v1229
        %1419 = vst.msk [vmem:[#allocation3 + $0x20] sm:$0xff] %vm1414, %v1231
        %1420 = vst.msk [vmem:[#allocation3 + $0x28] sm:$0xff] %vm1414, %v1233
        %1421 = vst.msk [vmem:[#allocation3 + $0x30] sm:$0xff] %vm1414, %v1235
        %1422 = vst.msk [vmem:[#allocation3 + $0x38] sm:$0xff] %vm1414, %v1237
        %1423 = vst.msk [vmem:[#allocation3 + $0x40] sm:$0xff] %vm1414, %v1239
        %1424 = vst.msk [vmem:[#allocation3 + $0x48] sm:$0xff] %vm1414, %v1241
        %1425 = vst.msk [vmem:[#allocation3 + $0x50] sm:$0xff] %vm1414, %v1243
        %1426 = vst.msk [vmem:[#allocation3 + $0x58] sm:$0xff] %vm1414, %v1245
        %1427 = vst.msk [vmem:[#allocation3 + $0x60] sm:$0xff] %vm1414, %v1247
        %1428 = vst.msk [vmem:[#allocation3 + $0x68] sm:$0xff] %vm1414, %v1249
        %1429 = vst.msk [vmem:[#allocation3 + $0x70] sm:$0xff] %vm1414, %v1251
        %1430 = vst.msk [vmem:[#allocation3 + $0x78] sm:$0xff] %vm1414, %v1253
        %1431 = vst.msk [vmem:[#allocation3 + $0x80] sm:$0xff] %vm1414, %v1255
        %1432 = vst.msk [vmem:[#allocation3 + $0x88] sm:$0xff] %vm1414, %v1257
        %1433 = vst.msk [vmem:[#allocation3 + $0x90] sm:$0xff] %vm1414, %v1259
        %1434 = vst.msk [vmem:[#allocation3 + $0x98] sm:$0xff] %vm1414, %v1261
        %1435 = vst.msk [vmem:[#allocation3 + $0xa0] sm:$0xff] %vm1414, %v1263
        %1436 = vst.msk [vmem:[#allocation3 + $0xa8] sm:$0xff] %vm1414, %v1265
        %1437 = vst.msk [vmem:[#allocation3 + $0xb0] sm:$0xff] %vm1414, %v1267
        %1438 = vst.msk [vmem:[#allocation3 + $0xb8] sm:$0xff] %vm1414, %v1269
        %1439 = vst.msk [vmem:[#allocation3 + $0xc0] sm:$0xff] %vm1414, %v1271
        %1440 = vst.msk [vmem:[#allocation3 + $0xc8] sm:$0xff] %vm1414, %v1273
        %1441 = vst.msk [vmem:[#allocation3 + $0xd0] sm:$0xff] %vm1414, %v1275
        %1442 = vst.msk [vmem:[#allocation3 + $0xd8] sm:$0xff] %vm1414, %v1277
        %1443 = vst.msk [vmem:[#allocation3 + $0xe0] sm:$0xff] %vm1414, %v1279
        %1444 = vst.msk [vmem:[#allocation3 + $0xe8] sm:$0xff] %vm1414, %v1281
        %1445 = vst.msk [vmem:[#allocation3 + $0xf0] sm:$0xff] %vm1414, %v1283
        %1446 = vst.msk [vmem:[#allocation3 + $0xf8] sm:$0xff] %vm1414, %v1285
        %1447 = vst.msk [vmem:[#allocation3 + $0x100] sm:$0xff] %vm1414, %v1287
        %1448 = vst.msk [vmem:[#allocation3 + $0x108] sm:$0xff] %vm1414, %v1289
        %1449 = vst.msk [vmem:[#allocation3 + $0x110] sm:$0xff] %vm1414, %v1291
        %1450 = vst.msk [vmem:[#allocation3 + $0x118] sm:$0xff] %vm1414, %v1293
        %1451 = vst.msk [vmem:[#allocation3 + $0x120] sm:$0xff] %vm1414, %v1295
        %1452 = vst.msk [vmem:[#allocation3 + $0x128] sm:$0xff] %vm1414, %v1297
        %1453 = vst.msk [vmem:[#allocation3 + $0x130] sm:$0xff] %vm1414, %v1299
        %1454 = vst.msk [vmem:[#allocation3 + $0x138] sm:$0xff] %vm1414, %v1301
        %1455 = vst.msk [vmem:[#allocation3 + $0x140] sm:$0xff] %vm1414, %v1303
        %1456 = vst.msk [vmem:[#allocation3 + $0x148] sm:$0xff] %vm1414, %v1305
        %1457 = vst.msk [vmem:[#allocation3 + $0x150] sm:$0xff] %vm1414, %v1307
        %1458 = vst.msk [vmem:[#allocation3 + $0x158] sm:$0xff] %vm1414, %v1309
        %1459 = vst.msk [vmem:[#allocation3 + $0x160] sm:$0xff] %vm1414, %v1311
        %1460 = vst.msk [vmem:[#allocation3 + $0x168] sm:$0xff] %vm1414, %v1313
        %1461 = vst.msk [vmem:[#allocation3 + $0x170] sm:$0xff] %vm1414, %v1315
        %1462 = vst.msk [vmem:[#allocation3 + $0x178] sm:$0xff] %vm1414, %v1317
        %1463 = vst.msk [vmem:[#allocation3 + $0x180] sm:$0xff] %vm1414, %v1319
        %1464 = vst.msk [vmem:[#allocation3 + $0x188] sm:$0xff] %vm1414, %v1321
        %1465 = vst.msk [vmem:[#allocation3 + $0x190] sm:$0xff] %vm1414, %v1323
        %1466 = vst.msk [vmem:[#allocation3 + $0x198] sm:$0xff] %vm1414, %v1325
        %1467 = vst.msk [vmem:[#allocation3 + $0x1a0] sm:$0xff] %vm1414, %v1327
        %1468 = vst.msk [vmem:[#allocation3 + $0x1a8] sm:$0xff] %vm1414, %v1329
        %1469 = vst.msk [vmem:[#allocation3 + $0x1b0] sm:$0xff] %vm1414, %v1331
        %1470 = vst.msk [vmem:[#allocation3 + $0x1b8] sm:$0xff] %vm1414, %v1333
        %1471 = vst.msk [vmem:[#allocation3 + $0x1c0] sm:$0xff] %vm1414, %v1335
        %1472 = vst.msk [vmem:[#allocation3 + $0x1c8] sm:$0xff] %vm1414, %v1337
        %1473 = vst.msk [vmem:[#allocation3 + $0x1d0] sm:$0xff] %vm1414, %v1339
        %1474 = vst.msk [vmem:[#allocation3 + $0x1d8] sm:$0xff] %vm1414, %v1341
        %1475 = vst.msk [vmem:[#allocation3 + $0x1e0] sm:$0xff] %vm1414, %v1343
        %1476 = vst.msk [vmem:[#allocation3 + $0x1e8] sm:$0xff] %vm1414, %v1345
        %1477 = vst.msk [vmem:[#allocation3 + $0x1f0] sm:$0xff] %vm1414, %v1347
        %1478 = vst.msk [vmem:[#allocation3 + $0x1f8] sm:$0xff] %vm1414, %v1349
        %v1479 = vld [vmem:[%s361] sm:$0xff]
        %v1480 = vld [vmem:[%s361 + $0x8] sm:$0xff]
        %v1481 = vld [vmem:[%s361 + $0x18] sm:$0xff]
        %v1482 = vld [vmem:[%s361 + $0x20] sm:$0xff]
        %v1483 = vld [vmem:[%s361 + $0x30] sm:$0xff]
        %v1484 = vld [vmem:[%s361 + $0x38] sm:$0xff]
        %v1485 = vld [vmem:[%s361 + $0x48] sm:$0xff]
        %v1486 = vld [vmem:[%s361 + $0x50] sm:$0xff]
        %v1487 = vld [vmem:[%s361 + $0x60] sm:$0xff]
        %v1488 = vld [vmem:[%s361 + $0x68] sm:$0xff]
        %v1489 = vld [vmem:[%s361 + $0x78] sm:$0xff]
        %v1490 = vld [vmem:[%s361 + $0x80] sm:$0xff]
        %v1491 = vld [vmem:[%s361 + $0x90] sm:$0xff]
        %v1492 = vld [vmem:[%s361 + $0x98] sm:$0xff]
        %v1493 = vld [vmem:[%s361 + $0xa8] sm:$0xff]
        %v1494 = vld [vmem:[%s361 + $0xb0] sm:$0xff]
        %v1495 = vld [vmem:[%s361 + $0xc0] sm:$0xff]
        %v1496 = vld [vmem:[%s361 + $0xc8] sm:$0xff]
        %v1497 = vld [vmem:[%s361 + $0xd8] sm:$0xff]
        %v1498 = vld [vmem:[%s361 + $0xe0] sm:$0xff]
        %v1499 = vld [vmem:[%s361 + $0xf0] sm:$0xff]
        %v1500 = vld [vmem:[%s361 + $0xf8] sm:$0xff]
        %v1501 = vld [vmem:[%s361 + $0x108] sm:$0xff]
        %v1502 = vld [vmem:[%s361 + $0x110] sm:$0xff]
        %v1503 = vld [vmem:[%s361 + $0x120] sm:$0xff]
        %v1504 = vld [vmem:[%s361 + $0x128] sm:$0xff]
        %v1505 = vld [vmem:[%s361 + $0x138] sm:$0xff]
        %v1506 = vld [vmem:[%s361 + $0x140] sm:$0xff]
        %v1507 = vld [vmem:[%s361 + $0x150] sm:$0xff]
        %v1508 = vld [vmem:[%s361 + $0x158] sm:$0xff]
        %v1509 = vld [vmem:[%s361 + $0x168] sm:$0xff]
        %v1510 = vld [vmem:[%s361 + $0x170] sm:$0xff]
        %v1511 = vld [vmem:[%s361 + $0x1b0] sm:$0xff]
        %v1512 = vld [vmem:[%s361 + $0x1b8] sm:$0xff]
        %v1513 = vld [vmem:[%s361 + $0x1c8] sm:$0xff]
        %v1514 = vld [vmem:[%s361 + $0x1d0] sm:$0xff]
        %v1515 = vld [vmem:[%s361 + $0x1e0] sm:$0xff]
        %v1516 = vld [vmem:[%s361 + $0x1e8] sm:$0xff]
        %v1517 = vld [vmem:[%s361 + $0x1f8] sm:$0xff]
        %v1518 = vld [vmem:[%s361 + $0x200] sm:$0xff]
        %v1519 = vld [vmem:[%s361 + $0x210] sm:$0xff]
        %v1520 = vld [vmem:[%s361 + $0x218] sm:$0xff]
        %v1521 = vld [vmem:[%s361 + $0x228] sm:$0xff]
        %v1522 = vld [vmem:[%s361 + $0x230] sm:$0xff]
        %v1523 = vld [vmem:[%s361 + $0x240] sm:$0xff]
        %v1524 = vld [vmem:[%s361 + $0x248] sm:$0xff]
        %v1525 = vld [vmem:[%s361 + $0x258] sm:$0xff]
        %v1526 = vld [vmem:[%s361 + $0x260] sm:$0xff]
        %v1527 = vld [vmem:[%s361 + $0x270] sm:$0xff]
        %v1528 = vld [vmem:[%s361 + $0x278] sm:$0xff]
        %v1529 = vld [vmem:[%s361 + $0x288] sm:$0xff]
        %v1530 = vld [vmem:[%s361 + $0x290] sm:$0xff]
        %v1531 = vld [vmem:[%s361 + $0x2a0] sm:$0xff]
        %v1532 = vld [vmem:[%s361 + $0x2a8] sm:$0xff]
        %v1533 = vld [vmem:[%s361 + $0x2b8] sm:$0xff]
        %v1534 = vld [vmem:[%s361 + $0x2c0] sm:$0xff]
        %v1535 = vld [vmem:[%s361 + $0x2d0] sm:$0xff]
        %v1536 = vld [vmem:[%s361 + $0x2d8] sm:$0xff]
        %v1537 = vld [vmem:[%s361 + $0x2e8] sm:$0xff]
        %v1538 = vld [vmem:[%s361 + $0x2f0] sm:$0xff]
        %v1539 = vld [vmem:[%s361 + $0x300] sm:$0xff]
        %v1540 = vld [vmem:[%s361 + $0x308] sm:$0xff]
        %v1541 = vld [vmem:[%s361 + $0x318] sm:$0xff]
        %v1542 = vld [vmem:[%s361 + $0x320] sm:$0xff]
        %1607 = vrot.lane.b32.xlu0 %v1479, 12
        %v1608 = vpop.permute.xlu0 %1607
        %1609 = vrot.lane.b32.xlu0 %v1480, 12
        %v1610 = vpop.permute.xlu0 %1609
        %1611 = vrot.lane.b32.xlu0 %v1481, 12
        %v1612 = vpop.permute.xlu0 %1611
        %1613 = vrot.lane.b32.xlu0 %v1482, 12
        %v1614 = vpop.permute.xlu0 %1613
        %1615 = vrot.lane.b32.xlu0 %v1483, 12
        %v1616 = vpop.permute.xlu0 %1615
        %1617 = vrot.lane.b32.xlu0 %v1484, 12
        %v1618 = vpop.permute.xlu0 %1617
        %1619 = vrot.lane.b32.xlu0 %v1485, 12
        %v1620 = vpop.permute.xlu0 %1619
        %1621 = vrot.lane.b32.xlu0 %v1486, 12
        %v1622 = vpop.permute.xlu0 %1621
        %1623 = vrot.lane.b32.xlu0 %v1487, 12
        %v1624 = vpop.permute.xlu0 %1623
        %1625 = vrot.lane.b32.xlu0 %v1488, 12
        %v1626 = vpop.permute.xlu0 %1625
        %1627 = vrot.lane.b32.xlu0 %v1489, 12
        %v1628 = vpop.permute.xlu0 %1627
        %1629 = vrot.lane.b32.xlu0 %v1490, 12
        %v1630 = vpop.permute.xlu0 %1629
        %1631 = vrot.lane.b32.xlu0 %v1491, 12
        %v1632 = vpop.permute.xlu0 %1631
        %1633 = vrot.lane.b32.xlu0 %v1492, 12
        %v1634 = vpop.permute.xlu0 %1633
        %1635 = vrot.lane.b32.xlu0 %v1493, 12
        %v1636 = vpop.permute.xlu0 %1635
        %1637 = vrot.lane.b32.xlu0 %v1494, 12
        %v1638 = vpop.permute.xlu0 %1637
        %1639 = vrot.lane.b32.xlu0 %v1495, 12
        %v1640 = vpop.permute.xlu0 %1639
        %1641 = vrot.lane.b32.xlu0 %v1496, 12
        %v1642 = vpop.permute.xlu0 %1641
        %1643 = vrot.lane.b32.xlu0 %v1497, 12
        %v1644 = vpop.permute.xlu0 %1643
        %1645 = vrot.lane.b32.xlu0 %v1498, 12
        %v1646 = vpop.permute.xlu0 %1645
        %1647 = vrot.lane.b32.xlu0 %v1499, 12
        %v1648 = vpop.permute.xlu0 %1647
        %1649 = vrot.lane.b32.xlu0 %v1500, 12
        %v1650 = vpop.permute.xlu0 %1649
        %1651 = vrot.lane.b32.xlu0 %v1501, 12
        %v1652 = vpop.permute.xlu0 %1651
        %1653 = vrot.lane.b32.xlu0 %v1502, 12
        %v1654 = vpop.permute.xlu0 %1653
        %1655 = vrot.lane.b32.xlu0 %v1503, 12
        %v1656 = vpop.permute.xlu0 %1655
        %1657 = vrot.lane.b32.xlu0 %v1504, 12
        %v1658 = vpop.permute.xlu0 %1657
        %1659 = vrot.lane.b32.xlu0 %v1505, 12
        %v1660 = vpop.permute.xlu0 %1659
        %1661 = vrot.lane.b32.xlu0 %v1506, 12
        %v1662 = vpop.permute.xlu0 %1661
        %1663 = vrot.lane.b32.xlu0 %v1507, 12
        %v1664 = vpop.permute.xlu0 %1663
        %1665 = vrot.lane.b32.xlu0 %v1508, 12
        %v1666 = vpop.permute.xlu0 %1665
        %1667 = vrot.lane.b32.xlu0 %v1509, 12
        %v1668 = vpop.permute.xlu0 %1667
        %1669 = vrot.lane.b32.xlu0 %v1510, 12
        %v1670 = vpop.permute.xlu0 %1669
        %1671 = vrot.lane.b32.xlu0 %v1511, 12
        %v1672 = vpop.permute.xlu0 %1671
        %1673 = vrot.lane.b32.xlu0 %v1512, 12
        %v1674 = vpop.permute.xlu0 %1673
        %1675 = vrot.lane.b32.xlu0 %v1513, 12
        %v1676 = vpop.permute.xlu0 %1675
        %1677 = vrot.lane.b32.xlu0 %v1514, 12
        %v1678 = vpop.permute.xlu0 %1677
        %1679 = vrot.lane.b32.xlu0 %v1515, 12
        %v1680 = vpop.permute.xlu0 %1679
        %1681 = vrot.lane.b32.xlu0 %v1516, 12
        %v1682 = vpop.permute.xlu0 %1681
        %1683 = vrot.lane.b32.xlu0 %v1517, 12
        %v1684 = vpop.permute.xlu0 %1683
        %1685 = vrot.lane.b32.xlu0 %v1518, 12
        %v1686 = vpop.permute.xlu0 %1685
        %1687 = vrot.lane.b32.xlu0 %v1519, 12
        %v1688 = vpop.permute.xlu0 %1687
        %1689 = vrot.lane.b32.xlu0 %v1520, 12
        %v1690 = vpop.permute.xlu0 %1689
        %1691 = vrot.lane.b32.xlu0 %v1521, 12
        %v1692 = vpop.permute.xlu0 %1691
        %1693 = vrot.lane.b32.xlu0 %v1522, 12
        %v1694 = vpop.permute.xlu0 %1693
        %1695 = vrot.lane.b32.xlu0 %v1523, 12
        %v1696 = vpop.permute.xlu0 %1695
        %1697 = vrot.lane.b32.xlu0 %v1524, 12
        %v1698 = vpop.permute.xlu0 %1697
        %1699 = vrot.lane.b32.xlu0 %v1525, 12
        %v1700 = vpop.permute.xlu0 %1699
        %1701 = vrot.lane.b32.xlu0 %v1526, 12
        %v1702 = vpop.permute.xlu0 %1701
        %1703 = vrot.lane.b32.xlu0 %v1527, 12
        %v1704 = vpop.permute.xlu0 %1703
        %1705 = vrot.lane.b32.xlu0 %v1528, 12
        %v1706 = vpop.permute.xlu0 %1705
        %1707 = vrot.lane.b32.xlu0 %v1529, 12
        %v1708 = vpop.permute.xlu0 %1707
        %1709 = vrot.lane.b32.xlu0 %v1530, 12
        %v1710 = vpop.permute.xlu0 %1709
        %1711 = vrot.lane.b32.xlu0 %v1531, 12
        %v1712 = vpop.permute.xlu0 %1711
        %1713 = vrot.lane.b32.xlu0 %v1532, 12
        %v1714 = vpop.permute.xlu0 %1713
        %1715 = vrot.lane.b32.xlu0 %v1533, 12
        %v1716 = vpop.permute.xlu0 %1715
        %1717 = vrot.lane.b32.xlu0 %v1534, 12
        %v1718 = vpop.permute.xlu0 %1717
        %1719 = vrot.lane.b32.xlu0 %v1535, 12
        %v1720 = vpop.permute.xlu0 %1719
        %1721 = vrot.lane.b32.xlu0 %v1536, 12
        %v1722 = vpop.permute.xlu0 %1721
        %1723 = vrot.lane.b32.xlu0 %v1537, 12
        %v1724 = vpop.permute.xlu0 %1723
        %1725 = vrot.lane.b32.xlu0 %v1538, 12
        %v1726 = vpop.permute.xlu0 %1725
        %1727 = vrot.lane.b32.xlu0 %v1539, 12
        %v1728 = vpop.permute.xlu0 %1727
        %1729 = vrot.lane.b32.xlu0 %v1540, 12
        %v1730 = vpop.permute.xlu0 %1729
        %1731 = vrot.lane.b32.xlu0 %v1541, 12
        %v1732 = vpop.permute.xlu0 %1731
        %1733 = vrot.lane.b32.xlu0 %v1542, 12
        %v1734 = vpop.permute.xlu0 %1733
        %vm1799 = vcmask 130144
        %1800 = vst.msk [vmem:[#allocation3] sm:$0xff] %vm1799, %v1608
        %1801 = vst.msk [vmem:[#allocation3 + $0x8] sm:$0xff] %vm1799, %v1610
        %1802 = vst.msk [vmem:[#allocation3 + $0x10] sm:$0xff] %vm1799, %v1612
        %1803 = vst.msk [vmem:[#allocation3 + $0x18] sm:$0xff] %vm1799, %v1614
        %1804 = vst.msk [vmem:[#allocation3 + $0x20] sm:$0xff] %vm1799, %v1616
        %1805 = vst.msk [vmem:[#allocation3 + $0x28] sm:$0xff] %vm1799, %v1618
        %1806 = vst.msk [vmem:[#allocation3 + $0x30] sm:$0xff] %vm1799, %v1620
        %1807 = vst.msk [vmem:[#allocation3 + $0x38] sm:$0xff] %vm1799, %v1622
        %1808 = vst.msk [vmem:[#allocation3 + $0x40] sm:$0xff] %vm1799, %v1624
        %1809 = vst.msk [vmem:[#allocation3 + $0x48] sm:$0xff] %vm1799, %v1626
        %1810 = vst.msk [vmem:[#allocation3 + $0x50] sm:$0xff] %vm1799, %v1628
        %1811 = vst.msk [vmem:[#allocation3 + $0x58] sm:$0xff] %vm1799, %v1630
        %1812 = vst.msk [vmem:[#allocation3 + $0x60] sm:$0xff] %vm1799, %v1632
        %1813 = vst.msk [vmem:[#allocation3 + $0x68] sm:$0xff] %vm1799, %v1634
        %1814 = vst.msk [vmem:[#allocation3 + $0x70] sm:$0xff] %vm1799, %v1636
        %1815 = vst.msk [vmem:[#allocation3 + $0x78] sm:$0xff] %vm1799, %v1638
        %1816 = vst.msk [vmem:[#allocation3 + $0x80] sm:$0xff] %vm1799, %v1640
        %1817 = vst.msk [vmem:[#allocation3 + $0x88] sm:$0xff] %vm1799, %v1642
        %1818 = vst.msk [vmem:[#allocation3 + $0x90] sm:$0xff] %vm1799, %v1644
        %1819 = vst.msk [vmem:[#allocation3 + $0x98] sm:$0xff] %vm1799, %v1646
        %1820 = vst.msk [vmem:[#allocation3 + $0xa0] sm:$0xff] %vm1799, %v1648
        %1821 = vst.msk [vmem:[#allocation3 + $0xa8] sm:$0xff] %vm1799, %v1650
        %1822 = vst.msk [vmem:[#allocation3 + $0xb0] sm:$0xff] %vm1799, %v1652
        %1823 = vst.msk [vmem:[#allocation3 + $0xb8] sm:$0xff] %vm1799, %v1654
        %1824 = vst.msk [vmem:[#allocation3 + $0xc0] sm:$0xff] %vm1799, %v1656
        %1825 = vst.msk [vmem:[#allocation3 + $0xc8] sm:$0xff] %vm1799, %v1658
        %1826 = vst.msk [vmem:[#allocation3 + $0xd0] sm:$0xff] %vm1799, %v1660
        %1827 = vst.msk [vmem:[#allocation3 + $0xd8] sm:$0xff] %vm1799, %v1662
        %1828 = vst.msk [vmem:[#allocation3 + $0xe0] sm:$0xff] %vm1799, %v1664
        %1829 = vst.msk [vmem:[#allocation3 + $0xe8] sm:$0xff] %vm1799, %v1666
        %1830 = vst.msk [vmem:[#allocation3 + $0xf0] sm:$0xff] %vm1799, %v1668
        %1831 = vst.msk [vmem:[#allocation3 + $0xf8] sm:$0xff] %vm1799, %v1670
        %1832 = vst.msk [vmem:[#allocation3 + $0x100] sm:$0xff] %vm1799, %v1672
        %1833 = vst.msk [vmem:[#allocation3 + $0x108] sm:$0xff] %vm1799, %v1674
        %1834 = vst.msk [vmem:[#allocation3 + $0x110] sm:$0xff] %vm1799, %v1676
        %1835 = vst.msk [vmem:[#allocation3 + $0x118] sm:$0xff] %vm1799, %v1678
        %1836 = vst.msk [vmem:[#allocation3 + $0x120] sm:$0xff] %vm1799, %v1680
        %1837 = vst.msk [vmem:[#allocation3 + $0x128] sm:$0xff] %vm1799, %v1682
        %1838 = vst.msk [vmem:[#allocation3 + $0x130] sm:$0xff] %vm1799, %v1684
        %1839 = vst.msk [vmem:[#allocation3 + $0x138] sm:$0xff] %vm1799, %v1686
        %1840 = vst.msk [vmem:[#allocation3 + $0x140] sm:$0xff] %vm1799, %v1688
        %1841 = vst.msk [vmem:[#allocation3 + $0x148] sm:$0xff] %vm1799, %v1690
        %1842 = vst.msk [vmem:[#allocation3 + $0x150] sm:$0xff] %vm1799, %v1692
        %1843 = vst.msk [vmem:[#allocation3 + $0x158] sm:$0xff] %vm1799, %v1694
        %1844 = vst.msk [vmem:[#allocation3 + $0x160] sm:$0xff] %vm1799, %v1696
        %1845 = vst.msk [vmem:[#allocation3 + $0x168] sm:$0xff] %vm1799, %v1698
        %1846 = vst.msk [vmem:[#allocation3 + $0x170] sm:$0xff] %vm1799, %v1700
        %1847 = vst.msk [vmem:[#allocation3 + $0x178] sm:$0xff] %vm1799, %v1702
        %1848 = vst.msk [vmem:[#allocation3 + $0x180] sm:$0xff] %vm1799, %v1704
        %1849 = vst.msk [vmem:[#allocation3 + $0x188] sm:$0xff] %vm1799, %v1706
        %1850 = vst.msk [vmem:[#allocation3 + $0x190] sm:$0xff] %vm1799, %v1708
        %1851 = vst.msk [vmem:[#allocation3 + $0x198] sm:$0xff] %vm1799, %v1710
        %1852 = vst.msk [vmem:[#allocation3 + $0x1a0] sm:$0xff] %vm1799, %v1712
        %1853 = vst.msk [vmem:[#allocation3 + $0x1a8] sm:$0xff] %vm1799, %v1714
        %1854 = vst.msk [vmem:[#allocation3 + $0x1b0] sm:$0xff] %vm1799, %v1716
        %1855 = vst.msk [vmem:[#allocation3 + $0x1b8] sm:$0xff] %vm1799, %v1718
        %1856 = vst.msk [vmem:[#allocation3 + $0x1c0] sm:$0xff] %vm1799, %v1720
        %1857 = vst.msk [vmem:[#allocation3 + $0x1c8] sm:$0xff] %vm1799, %v1722
        %1858 = vst.msk [vmem:[#allocation3 + $0x1d0] sm:$0xff] %vm1799, %v1724
        %1859 = vst.msk [vmem:[#allocation3 + $0x1d8] sm:$0xff] %vm1799, %v1726
        %1860 = vst.msk [vmem:[#allocation3 + $0x1e0] sm:$0xff] %vm1799, %v1728
        %1861 = vst.msk [vmem:[#allocation3 + $0x1e8] sm:$0xff] %vm1799, %v1730
        %1862 = vst.msk [vmem:[#allocation3 + $0x1f0] sm:$0xff] %vm1799, %v1732
        %1863 = vst.msk [vmem:[#allocation3 + $0x1f8] sm:$0xff] %vm1799, %v1734
        %v1864 = vld [vmem:[%s361 + $0x1] sm:$0xff]
        %v1865 = vld [vmem:[%s361 + $0x9] sm:$0xff]
        %v1866 = vld [vmem:[%s361 + $0x19] sm:$0xff]
        %v1867 = vld [vmem:[%s361 + $0x21] sm:$0xff]
        %v1868 = vld [vmem:[%s361 + $0x31] sm:$0xff]
        %v1869 = vld [vmem:[%s361 + $0x39] sm:$0xff]
        %v1870 = vld [vmem:[%s361 + $0x49] sm:$0xff]
        %v1871 = vld [vmem:[%s361 + $0x51] sm:$0xff]
        %v1872 = vld [vmem:[%s361 + $0x61] sm:$0xff]
        %v1873 = vld [vmem:[%s361 + $0x69] sm:$0xff]
        %v1874 = vld [vmem:[%s361 + $0x79] sm:$0xff]
        %v1875 = vld [vmem:[%s361 + $0x81] sm:$0xff]
        %v1876 = vld [vmem:[%s361 + $0x91] sm:$0xff]
        %v1877 = vld [vmem:[%s361 + $0x99] sm:$0xff]
        %v1878 = vld [vmem:[%s361 + $0xa9] sm:$0xff]
        %v1879 = vld [vmem:[%s361 + $0xb1] sm:$0xff]
        %v1880 = vld [vmem:[%s361 + $0xc1] sm:$0xff]
        %v1881 = vld [vmem:[%s361 + $0xc9] sm:$0xff]
        %v1882 = vld [vmem:[%s361 + $0xd9] sm:$0xff]
        %v1883 = vld [vmem:[%s361 + $0xe1] sm:$0xff]
        %v1884 = vld [vmem:[%s361 + $0xf1] sm:$0xff]
        %v1885 = vld [vmem:[%s361 + $0xf9] sm:$0xff]
        %v1886 = vld [vmem:[%s361 + $0x109] sm:$0xff]
        %v1887 = vld [vmem:[%s361 + $0x111] sm:$0xff]
        %v1888 = vld [vmem:[%s361 + $0x121] sm:$0xff]
        %v1889 = vld [vmem:[%s361 + $0x129] sm:$0xff]
        %v1890 = vld [vmem:[%s361 + $0x139] sm:$0xff]
        %v1891 = vld [vmem:[%s361 + $0x141] sm:$0xff]
        %v1892 = vld [vmem:[%s361 + $0x151] sm:$0xff]
        %v1893 = vld [vmem:[%s361 + $0x159] sm:$0xff]
        %v1894 = vld [vmem:[%s361 + $0x169] sm:$0xff]
        %v1895 = vld [vmem:[%s361 + $0x171] sm:$0xff]
        %v1896 = vld [vmem:[%s361 + $0x1b1] sm:$0xff]
        %v1897 = vld [vmem:[%s361 + $0x1b9] sm:$0xff]
        %v1898 = vld [vmem:[%s361 + $0x1c9] sm:$0xff]
        %v1899 = vld [vmem:[%s361 + $0x1d1] sm:$0xff]
        %v1900 = vld [vmem:[%s361 + $0x1e1] sm:$0xff]
        %v1901 = vld [vmem:[%s361 + $0x1e9] sm:$0xff]
        %v1902 = vld [vmem:[%s361 + $0x1f9] sm:$0xff]
        %v1903 = vld [vmem:[%s361 + $0x201] sm:$0xff]
        %v1904 = vld [vmem:[%s361 + $0x211] sm:$0xff]
        %v1905 = vld [vmem:[%s361 + $0x219] sm:$0xff]
        %v1906 = vld [vmem:[%s361 + $0x229] sm:$0xff]
        %v1907 = vld [vmem:[%s361 + $0x231] sm:$0xff]
        %v1908 = vld [vmem:[%s361 + $0x241] sm:$0xff]
        %v1909 = vld [vmem:[%s361 + $0x249] sm:$0xff]
        %v1910 = vld [vmem:[%s361 + $0x259] sm:$0xff]
        %v1911 = vld [vmem:[%s361 + $0x261] sm:$0xff]
        %v1912 = vld [vmem:[%s361 + $0x271] sm:$0xff]
        %v1913 = vld [vmem:[%s361 + $0x279] sm:$0xff]
        %v1914 = vld [vmem:[%s361 + $0x289] sm:$0xff]
        %v1915 = vld [vmem:[%s361 + $0x291] sm:$0xff]
        %v1916 = vld [vmem:[%s361 + $0x2a1] sm:$0xff]
        %v1917 = vld [vmem:[%s361 + $0x2a9] sm:$0xff]
        %v1918 = vld [vmem:[%s361 + $0x2b9] sm:$0xff]
        %v1919 = vld [vmem:[%s361 + $0x2c1] sm:$0xff]
        %v1920 = vld [vmem:[%s361 + $0x2d1] sm:$0xff]
        %v1921 = vld [vmem:[%s361 + $0x2d9] sm:$0xff]
        %v1922 = vld [vmem:[%s361 + $0x2e9] sm:$0xff]
        %v1923 = vld [vmem:[%s361 + $0x2f1] sm:$0xff]
        %v1924 = vld [vmem:[%s361 + $0x301] sm:$0xff]
        %v1925 = vld [vmem:[%s361 + $0x309] sm:$0xff]
        %v1926 = vld [vmem:[%s361 + $0x319] sm:$0xff]
        %v1927 = vld [vmem:[%s361 + $0x321] sm:$0xff]
        %1992 = vrot.lane.b32.xlu0 %v1864, 16
        %v1993 = vpop.permute.xlu0 %1992
        %1994 = vrot.lane.b32.xlu0 %v1865, 16
        %v1995 = vpop.permute.xlu0 %1994
        %1996 = vrot.lane.b32.xlu0 %v1866, 16
        %v1997 = vpop.permute.xlu0 %1996
        %1998 = vrot.lane.b32.xlu0 %v1867, 16
        %v1999 = vpop.permute.xlu0 %1998
        %2000 = vrot.lane.b32.xlu0 %v1868, 16
        %v2001 = vpop.permute.xlu0 %2000
        %2002 = vrot.lane.b32.xlu0 %v1869, 16
        %v2003 = vpop.permute.xlu0 %2002
        %2004 = vrot.lane.b32.xlu0 %v1870, 16
        %v2005 = vpop.permute.xlu0 %2004
        %2006 = vrot.lane.b32.xlu0 %v1871, 16
        %v2007 = vpop.permute.xlu0 %2006
        %2008 = vrot.lane.b32.xlu0 %v1872, 16
        %v2009 = vpop.permute.xlu0 %2008
        %2010 = vrot.lane.b32.xlu0 %v1873, 16
        %v2011 = vpop.permute.xlu0 %2010
        %2012 = vrot.lane.b32.xlu0 %v1874, 16
        %v2013 = vpop.permute.xlu0 %2012
        %2014 = vrot.lane.b32.xlu0 %v1875, 16
        %v2015 = vpop.permute.xlu0 %2014
        %2016 = vrot.lane.b32.xlu0 %v1876, 16
        %v2017 = vpop.permute.xlu0 %2016
        %2018 = vrot.lane.b32.xlu0 %v1877, 16
        %v2019 = vpop.permute.xlu0 %2018
        %2020 = vrot.lane.b32.xlu0 %v1878, 16
        %v2021 = vpop.permute.xlu0 %2020
        %2022 = vrot.lane.b32.xlu0 %v1879, 16
        %v2023 = vpop.permute.xlu0 %2022
        %2024 = vrot.lane.b32.xlu0 %v1880, 16
        %v2025 = vpop.permute.xlu0 %2024
        %2026 = vrot.lane.b32.xlu0 %v1881, 16
        %v2027 = vpop.permute.xlu0 %2026
        %2028 = vrot.lane.b32.xlu0 %v1882, 16
        %v2029 = vpop.permute.xlu0 %2028
        %2030 = vrot.lane.b32.xlu0 %v1883, 16
        %v2031 = vpop.permute.xlu0 %2030
        %2032 = vrot.lane.b32.xlu0 %v1884, 16
        %v2033 = vpop.permute.xlu0 %2032
        %2034 = vrot.lane.b32.xlu0 %v1885, 16
        %v2035 = vpop.permute.xlu0 %2034
        %2036 = vrot.lane.b32.xlu0 %v1886, 16
        %v2037 = vpop.permute.xlu0 %2036
        %2038 = vrot.lane.b32.xlu0 %v1887, 16
        %v2039 = vpop.permute.xlu0 %2038
        %2040 = vrot.lane.b32.xlu0 %v1888, 16
        %v2041 = vpop.permute.xlu0 %2040
        %2042 = vrot.lane.b32.xlu0 %v1889, 16
        %v2043 = vpop.permute.xlu0 %2042
        %2044 = vrot.lane.b32.xlu0 %v1890, 16
        %v2045 = vpop.permute.xlu0 %2044
        %2046 = vrot.lane.b32.xlu0 %v1891, 16
        %v2047 = vpop.permute.xlu0 %2046
        %2048 = vrot.lane.b32.xlu0 %v1892, 16
        %v2049 = vpop.permute.xlu0 %2048
        %2050 = vrot.lane.b32.xlu0 %v1893, 16
        %v2051 = vpop.permute.xlu0 %2050
        %2052 = vrot.lane.b32.xlu0 %v1894, 16
        %v2053 = vpop.permute.xlu0 %2052
        %2054 = vrot.lane.b32.xlu0 %v1895, 16
        %v2055 = vpop.permute.xlu0 %2054
        %2056 = vrot.lane.b32.xlu0 %v1896, 16
        %v2057 = vpop.permute.xlu0 %2056
        %2058 = vrot.lane.b32.xlu0 %v1897, 16
        %v2059 = vpop.permute.xlu0 %2058
        %2060 = vrot.lane.b32.xlu0 %v1898, 16
        %v2061 = vpop.permute.xlu0 %2060
        %2062 = vrot.lane.b32.xlu0 %v1899, 16
        %v2063 = vpop.permute.xlu0 %2062
        %2064 = vrot.lane.b32.xlu0 %v1900, 16
        %v2065 = vpop.permute.xlu0 %2064
        %2066 = vrot.lane.b32.xlu0 %v1901, 16
        %v2067 = vpop.permute.xlu0 %2066
        %2068 = vrot.lane.b32.xlu0 %v1902, 16
        %v2069 = vpop.permute.xlu0 %2068
        %2070 = vrot.lane.b32.xlu0 %v1903, 16
        %v2071 = vpop.permute.xlu0 %2070
        %2072 = vrot.lane.b32.xlu0 %v1904, 16
        %v2073 = vpop.permute.xlu0 %2072
        %2074 = vrot.lane.b32.xlu0 %v1905, 16
        %v2075 = vpop.permute.xlu0 %2074
        %2076 = vrot.lane.b32.xlu0 %v1906, 16
        %v2077 = vpop.permute.xlu0 %2076
        %2078 = vrot.lane.b32.xlu0 %v1907, 16
        %v2079 = vpop.permute.xlu0 %2078
        %2080 = vrot.lane.b32.xlu0 %v1908, 16
        %v2081 = vpop.permute.xlu0 %2080
        %2082 = vrot.lane.b32.xlu0 %v1909, 16
        %v2083 = vpop.permute.xlu0 %2082
        %2084 = vrot.lane.b32.xlu0 %v1910, 16
        %v2085 = vpop.permute.xlu0 %2084
        %2086 = vrot.lane.b32.xlu0 %v1911, 16
        %v2087 = vpop.permute.xlu0 %2086
        %2088 = vrot.lane.b32.xlu0 %v1912, 16
        %v2089 = vpop.permute.xlu0 %2088
        %2090 = vrot.lane.b32.xlu0 %v1913, 16
        %v2091 = vpop.permute.xlu0 %2090
        %2092 = vrot.lane.b32.xlu0 %v1914, 16
        %v2093 = vpop.permute.xlu0 %2092
        %2094 = vrot.lane.b32.xlu0 %v1915, 16
        %v2095 = vpop.permute.xlu0 %2094
        %2096 = vrot.lane.b32.xlu0 %v1916, 16
        %v2097 = vpop.permute.xlu0 %2096
        %2098 = vrot.lane.b32.xlu0 %v1917, 16
        %v2099 = vpop.permute.xlu0 %2098
        %2100 = vrot.lane.b32.xlu0 %v1918, 16
        %v2101 = vpop.permute.xlu0 %2100
        %2102 = vrot.lane.b32.xlu0 %v1919, 16
        %v2103 = vpop.permute.xlu0 %2102
        %2104 = vrot.lane.b32.xlu0 %v1920, 16
        %v2105 = vpop.permute.xlu0 %2104
        %2106 = vrot.lane.b32.xlu0 %v1921, 16
        %v2107 = vpop.permute.xlu0 %2106
        %2108 = vrot.lane.b32.xlu0 %v1922, 16
        %v2109 = vpop.permute.xlu0 %2108
        %2110 = vrot.lane.b32.xlu0 %v1923, 16
        %v2111 = vpop.permute.xlu0 %2110
        %2112 = vrot.lane.b32.xlu0 %v1924, 16
        %v2113 = vpop.permute.xlu0 %2112
        %2114 = vrot.lane.b32.xlu0 %v1925, 16
        %v2115 = vpop.permute.xlu0 %2114
        %2116 = vrot.lane.b32.xlu0 %v1926, 16
        %v2117 = vpop.permute.xlu0 %2116
        %2118 = vrot.lane.b32.xlu0 %v1927, 16
        %v2119 = vpop.permute.xlu0 %2118
        %vm2184 = vcmask 162944
        %2185 = vst.msk [vmem:[#allocation3] sm:$0xff] %vm2184, %v1993
        %2186 = vst.msk [vmem:[#allocation3 + $0x8] sm:$0xff] %vm2184, %v1995
        %2187 = vst.msk [vmem:[#allocation3 + $0x10] sm:$0xff] %vm2184, %v1997
        %2188 = vst.msk [vmem:[#allocation3 + $0x18] sm:$0xff] %vm2184, %v1999
        %2189 = vst.msk [vmem:[#allocation3 + $0x20] sm:$0xff] %vm2184, %v2001
        %2190 = vst.msk [vmem:[#allocation3 + $0x28] sm:$0xff] %vm2184, %v2003
        %2191 = vst.msk [vmem:[#allocation3 + $0x30] sm:$0xff] %vm2184, %v2005
        %2192 = vst.msk [vmem:[#allocation3 + $0x38] sm:$0xff] %vm2184, %v2007
        %2193 = vst.msk [vmem:[#allocation3 + $0x40] sm:$0xff] %vm2184, %v2009
        %2194 = vst.msk [vmem:[#allocation3 + $0x48] sm:$0xff] %vm2184, %v2011
        %2195 = vst.msk [vmem:[#allocation3 + $0x50] sm:$0xff] %vm2184, %v2013
        %2196 = vst.msk [vmem:[#allocation3 + $0x58] sm:$0xff] %vm2184, %v2015
        %2197 = vst.msk [vmem:[#allocation3 + $0x60] sm:$0xff] %vm2184, %v2017
        %2198 = vst.msk [vmem:[#allocation3 + $0x68] sm:$0xff] %vm2184, %v2019
        %2199 = vst.msk [vmem:[#allocation3 + $0x70] sm:$0xff] %vm2184, %v2021
        %2200 = vst.msk [vmem:[#allocation3 + $0x78] sm:$0xff] %vm2184, %v2023
        %2201 = vst.msk [vmem:[#allocation3 + $0x80] sm:$0xff] %vm2184, %v2025
        %2202 = vst.msk [vmem:[#allocation3 + $0x88] sm:$0xff] %vm2184, %v2027
        %2203 = vst.msk [vmem:[#allocation3 + $0x90] sm:$0xff] %vm2184, %v2029
        %2204 = vst.msk [vmem:[#allocation3 + $0x98] sm:$0xff] %vm2184, %v2031
        %2205 = vst.msk [vmem:[#allocation3 + $0xa0] sm:$0xff] %vm2184, %v2033
        %2206 = vst.msk [vmem:[#allocation3 + $0xa8] sm:$0xff] %vm2184, %v2035
        %2207 = vst.msk [vmem:[#allocation3 + $0xb0] sm:$0xff] %vm2184, %v2037
        %2208 = vst.msk [vmem:[#allocation3 + $0xb8] sm:$0xff] %vm2184, %v2039
        %2209 = vst.msk [vmem:[#allocation3 + $0xc0] sm:$0xff] %vm2184, %v2041
        %2210 = vst.msk [vmem:[#allocation3 + $0xc8] sm:$0xff] %vm2184, %v2043
        %2211 = vst.msk [vmem:[#allocation3 + $0xd0] sm:$0xff] %vm2184, %v2045
        %2212 = vst.msk [vmem:[#allocation3 + $0xd8] sm:$0xff] %vm2184, %v2047
        %2213 = vst.msk [vmem:[#allocation3 + $0xe0] sm:$0xff] %vm2184, %v2049
        %2214 = vst.msk [vmem:[#allocation3 + $0xe8] sm:$0xff] %vm2184, %v2051
        %2215 = vst.msk [vmem:[#allocation3 + $0xf0] sm:$0xff] %vm2184, %v2053
        %2216 = vst.msk [vmem:[#allocation3 + $0xf8] sm:$0xff] %vm2184, %v2055
        %2217 = vst.msk [vmem:[#allocation3 + $0x100] sm:$0xff] %vm2184, %v2057
        %2218 = vst.msk [vmem:[#allocation3 + $0x108] sm:$0xff] %vm2184, %v2059
        %2219 = vst.msk [vmem:[#allocation3 + $0x110] sm:$0xff] %vm2184, %v2061
        %2220 = vst.msk [vmem:[#allocation3 + $0x118] sm:$0xff] %vm2184, %v2063
        %2221 = vst.msk [vmem:[#allocation3 + $0x120] sm:$0xff] %vm2184, %v2065
        %2222 = vst.msk [vmem:[#allocation3 + $0x128] sm:$0xff] %vm2184, %v2067
        %2223 = vst.msk [vmem:[#allocation3 + $0x130] sm:$0xff] %vm2184, %v2069
        %2224 = vst.msk [vmem:[#allocation3 + $0x138] sm:$0xff] %vm2184, %v2071
        %2225 = vst.msk [vmem:[#allocation3 + $0x140] sm:$0xff] %vm2184, %v2073
        %2226 = vst.msk [vmem:[#allocation3 + $0x148] sm:$0xff] %vm2184, %v2075
        %2227 = vst.msk [vmem:[#allocation3 + $0x150] sm:$0xff] %vm2184, %v2077
        %2228 = vst.msk [vmem:[#allocation3 + $0x158] sm:$0xff] %vm2184, %v2079
        %2229 = vst.msk [vmem:[#allocation3 + $0x160] sm:$0xff] %vm2184, %v2081
        %2230 = vst.msk [vmem:[#allocation3 + $0x168] sm:$0xff] %vm2184, %v2083
        %2231 = vst.msk [vmem:[#allocation3 + $0x170] sm:$0xff] %vm2184, %v2085
        %2232 = vst.msk [vmem:[#allocation3 + $0x178] sm:$0xff] %vm2184, %v2087
        %2233 = vst.msk [vmem:[#allocation3 + $0x180] sm:$0xff] %vm2184, %v2089
        %2234 = vst.msk [vmem:[#allocation3 + $0x188] sm:$0xff] %vm2184, %v2091
        %2235 = vst.msk [vmem:[#allocation3 + $0x190] sm:$0xff] %vm2184, %v2093
        %2236 = vst.msk [vmem:[#allocation3 + $0x198] sm:$0xff] %vm2184, %v2095
        %2237 = vst.msk [vmem:[#allocation3 + $0x1a0] sm:$0xff] %vm2184, %v2097
        %2238 = vst.msk [vmem:[#allocation3 + $0x1a8] sm:$0xff] %vm2184, %v2099
        %2239 = vst.msk [vmem:[#allocation3 + $0x1b0] sm:$0xff] %vm2184, %v2101
        %2240 = vst.msk [vmem:[#allocation3 + $0x1b8] sm:$0xff] %vm2184, %v2103
        %2241 = vst.msk [vmem:[#allocation3 + $0x1c0] sm:$0xff] %vm2184, %v2105
        %2242 = vst.msk [vmem:[#allocation3 + $0x1c8] sm:$0xff] %vm2184, %v2107
        %2243 = vst.msk [vmem:[#allocation3 + $0x1d0] sm:$0xff] %vm2184, %v2109
        %2244 = vst.msk [vmem:[#allocation3 + $0x1d8] sm:$0xff] %vm2184, %v2111
        %2245 = vst.msk [vmem:[#allocation3 + $0x1e0] sm:$0xff] %vm2184, %v2113
        %2246 = vst.msk [vmem:[#allocation3 + $0x1e8] sm:$0xff] %vm2184, %v2115
        %2247 = vst.msk [vmem:[#allocation3 + $0x1f0] sm:$0xff] %vm2184, %v2117
        %2248 = vst.msk [vmem:[#allocation3 + $0x1f8] sm:$0xff] %vm2184, %v2119
        %v2249 = vld [vmem:[%s361 + $0x2] sm:$0xff]
        %v2250 = vld [vmem:[%s361 + $0xa] sm:$0xff]
        %v2251 = vld [vmem:[%s361 + $0x1a] sm:$0xff]
        %v2252 = vld [vmem:[%s361 + $0x22] sm:$0xff]
        %v2253 = vld [vmem:[%s361 + $0x32] sm:$0xff]
        %v2254 = vld [vmem:[%s361 + $0x3a] sm:$0xff]
        %v2255 = vld [vmem:[%s361 + $0x4a] sm:$0xff]
        %v2256 = vld [vmem:[%s361 + $0x52] sm:$0xff]
        %v2257 = vld [vmem:[%s361 + $0x62] sm:$0xff]
        %v2258 = vld [vmem:[%s361 + $0x6a] sm:$0xff]
        %v2259 = vld [vmem:[%s361 + $0x7a] sm:$0xff]
        %v2260 = vld [vmem:[%s361 + $0x82] sm:$0xff]
        %v2261 = vld [vmem:[%s361 + $0x92] sm:$0xff]
        %v2262 = vld [vmem:[%s361 + $0x9a] sm:$0xff]
        %v2263 = vld [vmem:[%s361 + $0xaa] sm:$0xff]
        %v2264 = vld [vmem:[%s361 + $0xb2] sm:$0xff]
        %v2265 = vld [vmem:[%s361 + $0xc2] sm:$0xff]
        %v2266 = vld [vmem:[%s361 + $0xca] sm:$0xff]
        %v2267 = vld [vmem:[%s361 + $0xda] sm:$0xff]
        %v2268 = vld [vmem:[%s361 + $0xe2] sm:$0xff]
        %v2269 = vld [vmem:[%s361 + $0xf2] sm:$0xff]
        %v2270 = vld [vmem:[%s361 + $0xfa] sm:$0xff]
        %v2271 = vld [vmem:[%s361 + $0x10a] sm:$0xff]
        %v2272 = vld [vmem:[%s361 + $0x112] sm:$0xff]
        %v2273 = vld [vmem:[%s361 + $0x122] sm:$0xff]
        %v2274 = vld [vmem:[%s361 + $0x12a] sm:$0xff]
        %v2275 = vld [vmem:[%s361 + $0x13a] sm:$0xff]
        %v2276 = vld [vmem:[%s361 + $0x142] sm:$0xff]
        %v2277 = vld [vmem:[%s361 + $0x152] sm:$0xff]
        %v2278 = vld [vmem:[%s361 + $0x15a] sm:$0xff]
        %v2279 = vld [vmem:[%s361 + $0x16a] sm:$0xff]
        %v2280 = vld [vmem:[%s361 + $0x172] sm:$0xff]
        %v2281 = vld [vmem:[%s361 + $0x1b2] sm:$0xff]
        %v2282 = vld [vmem:[%s361 + $0x1ba] sm:$0xff]
        %v2283 = vld [vmem:[%s361 + $0x1ca] sm:$0xff]
        %v2284 = vld [vmem:[%s361 + $0x1d2] sm:$0xff]
        %v2285 = vld [vmem:[%s361 + $0x1e2] sm:$0xff]
        %v2286 = vld [vmem:[%s361 + $0x1ea] sm:$0xff]
        %v2287 = vld [vmem:[%s361 + $0x1fa] sm:$0xff]
        %v2288 = vld [vmem:[%s361 + $0x202] sm:$0xff]
        %v2289 = vld [vmem:[%s361 + $0x212] sm:$0xff]
        %v2290 = vld [vmem:[%s361 + $0x21a] sm:$0xff]
        %v2291 = vld [vmem:[%s361 + $0x22a] sm:$0xff]
        %v2292 = vld [vmem:[%s361 + $0x232] sm:$0xff]
        %v2293 = vld [vmem:[%s361 + $0x242] sm:$0xff]
        %v2294 = vld [vmem:[%s361 + $0x24a] sm:$0xff]
        %v2295 = vld [vmem:[%s361 + $0x25a] sm:$0xff]
        %v2296 = vld [vmem:[%s361 + $0x262] sm:$0xff]
        %v2297 = vld [vmem:[%s361 + $0x272] sm:$0xff]
        %v2298 = vld [vmem:[%s361 + $0x27a] sm:$0xff]
        %v2299 = vld [vmem:[%s361 + $0x28a] sm:$0xff]
        %v2300 = vld [vmem:[%s361 + $0x292] sm:$0xff]
        %v2301 = vld [vmem:[%s361 + $0x2a2] sm:$0xff]
        %v2302 = vld [vmem:[%s361 + $0x2aa] sm:$0xff]
        %v2303 = vld [vmem:[%s361 + $0x2ba] sm:$0xff]
        %v2304 = vld [vmem:[%s361 + $0x2c2] sm:$0xff]
        %v2305 = vld [vmem:[%s361 + $0x2d2] sm:$0xff]
        %v2306 = vld [vmem:[%s361 + $0x2da] sm:$0xff]
        %v2307 = vld [vmem:[%s361 + $0x2ea] sm:$0xff]
        %v2308 = vld [vmem:[%s361 + $0x2f2] sm:$0xff]
        %v2309 = vld [vmem:[%s361 + $0x302] sm:$0xff]
        %v2310 = vld [vmem:[%s361 + $0x30a] sm:$0xff]
        %v2311 = vld [vmem:[%s361 + $0x31a] sm:$0xff]
        %v2312 = vld [vmem:[%s361 + $0x322] sm:$0xff]
        %2377 = vrot.lane.b32.xlu0 %v2249, 20
        %v2378 = vpop.permute.xlu0 %2377
        %2379 = vrot.lane.b32.xlu0 %v2250, 20
        %v2380 = vpop.permute.xlu0 %2379
        %2381 = vrot.lane.b32.xlu0 %v2251, 20
        %v2382 = vpop.permute.xlu0 %2381
        %2383 = vrot.lane.b32.xlu0 %v2252, 20
        %v2384 = vpop.permute.xlu0 %2383
        %2385 = vrot.lane.b32.xlu0 %v2253, 20
        %v2386 = vpop.permute.xlu0 %2385
        %2387 = vrot.lane.b32.xlu0 %v2254, 20
        %v2388 = vpop.permute.xlu0 %2387
        %2389 = vrot.lane.b32.xlu0 %v2255, 20
        %v2390 = vpop.permute.xlu0 %2389
        %2391 = vrot.lane.b32.xlu0 %v2256, 20
        %v2392 = vpop.permute.xlu0 %2391
        %2393 = vrot.lane.b32.xlu0 %v2257, 20
        %v2394 = vpop.permute.xlu0 %2393
        %2395 = vrot.lane.b32.xlu0 %v2258, 20
        %v2396 = vpop.permute.xlu0 %2395
        %2397 = vrot.lane.b32.xlu0 %v2259, 20
        %v2398 = vpop.permute.xlu0 %2397
        %2399 = vrot.lane.b32.xlu0 %v2260, 20
        %v2400 = vpop.permute.xlu0 %2399
        %2401 = vrot.lane.b32.xlu0 %v2261, 20
        %v2402 = vpop.permute.xlu0 %2401
        %2403 = vrot.lane.b32.xlu0 %v2262, 20
        %v2404 = vpop.permute.xlu0 %2403
        %2405 = vrot.lane.b32.xlu0 %v2263, 20
        %v2406 = vpop.permute.xlu0 %2405
        %2407 = vrot.lane.b32.xlu0 %v2264, 20
        %v2408 = vpop.permute.xlu0 %2407
        %2409 = vrot.lane.b32.xlu0 %v2265, 20
        %v2410 = vpop.permute.xlu0 %2409
        %2411 = vrot.lane.b32.xlu0 %v2266, 20
        %v2412 = vpop.permute.xlu0 %2411
        %2413 = vrot.lane.b32.xlu0 %v2267, 20
        %v2414 = vpop.permute.xlu0 %2413
        %2415 = vrot.lane.b32.xlu0 %v2268, 20
        %v2416 = vpop.permute.xlu0 %2415
        %2417 = vrot.lane.b32.xlu0 %v2269, 20
        %v2418 = vpop.permute.xlu0 %2417
        %2419 = vrot.lane.b32.xlu0 %v2270, 20
        %v2420 = vpop.permute.xlu0 %2419
        %2421 = vrot.lane.b32.xlu0 %v2271, 20
        %v2422 = vpop.permute.xlu0 %2421
        %2423 = vrot.lane.b32.xlu0 %v2272, 20
        %v2424 = vpop.permute.xlu0 %2423
        %2425 = vrot.lane.b32.xlu0 %v2273, 20
        %v2426 = vpop.permute.xlu0 %2425
        %2427 = vrot.lane.b32.xlu0 %v2274, 20
        %v2428 = vpop.permute.xlu0 %2427
        %2429 = vrot.lane.b32.xlu0 %v2275, 20
        %v2430 = vpop.permute.xlu0 %2429
        %2431 = vrot.lane.b32.xlu0 %v2276, 20
        %v2432 = vpop.permute.xlu0 %2431
        %2433 = vrot.lane.b32.xlu0 %v2277, 20
        %v2434 = vpop.permute.xlu0 %2433
        %2435 = vrot.lane.b32.xlu0 %v2278, 20
        %v2436 = vpop.permute.xlu0 %2435
        %2437 = vrot.lane.b32.xlu0 %v2279, 20
        %v2438 = vpop.permute.xlu0 %2437
        %2439 = vrot.lane.b32.xlu0 %v2280, 20
        %v2440 = vpop.permute.xlu0 %2439
        %2441 = vrot.lane.b32.xlu0 %v2281, 20
        %v2442 = vpop.permute.xlu0 %2441
        %2443 = vrot.lane.b32.xlu0 %v2282, 20
        %v2444 = vpop.permute.xlu0 %2443
        %2445 = vrot.lane.b32.xlu0 %v2283, 20
        %v2446 = vpop.permute.xlu0 %2445
        %2447 = vrot.lane.b32.xlu0 %v2284, 20
        %v2448 = vpop.permute.xlu0 %2447
        %2449 = vrot.lane.b32.xlu0 %v2285, 20
        %v2450 = vpop.permute.xlu0 %2449
        %2451 = vrot.lane.b32.xlu0 %v2286, 20
        %v2452 = vpop.permute.xlu0 %2451
        %2453 = vrot.lane.b32.xlu0 %v2287, 20
        %v2454 = vpop.permute.xlu0 %2453
        %2455 = vrot.lane.b32.xlu0 %v2288, 20
        %v2456 = vpop.permute.xlu0 %2455
        %2457 = vrot.lane.b32.xlu0 %v2289, 20
        %v2458 = vpop.permute.xlu0 %2457
        %2459 = vrot.lane.b32.xlu0 %v2290, 20
        %v2460 = vpop.permute.xlu0 %2459
        %2461 = vrot.lane.b32.xlu0 %v2291, 20
        %v2462 = vpop.permute.xlu0 %2461
        %2463 = vrot.lane.b32.xlu0 %v2292, 20
        %v2464 = vpop.permute.xlu0 %2463
        %2465 = vrot.lane.b32.xlu0 %v2293, 20
        %v2466 = vpop.permute.xlu0 %2465
        %2467 = vrot.lane.b32.xlu0 %v2294, 20
        %v2468 = vpop.permute.xlu0 %2467
        %2469 = vrot.lane.b32.xlu0 %v2295, 20
        %v2470 = vpop.permute.xlu0 %2469
        %2471 = vrot.lane.b32.xlu0 %v2296, 20
        %v2472 = vpop.permute.xlu0 %2471
        %2473 = vrot.lane.b32.xlu0 %v2297, 20
        %v2474 = vpop.permute.xlu0 %2473
        %2475 = vrot.lane.b32.xlu0 %v2298, 20
        %v2476 = vpop.permute.xlu0 %2475
        %2477 = vrot.lane.b32.xlu0 %v2299, 20
        %v2478 = vpop.permute.xlu0 %2477
        %2479 = vrot.lane.b32.xlu0 %v2300, 20
        %v2480 = vpop.permute.xlu0 %2479
        %2481 = vrot.lane.b32.xlu0 %v2301, 20
        %v2482 = vpop.permute.xlu0 %2481
        %2483 = vrot.lane.b32.xlu0 %v2302, 20
        %v2484 = vpop.permute.xlu0 %2483
        %2485 = vrot.lane.b32.xlu0 %v2303, 20
        %v2486 = vpop.permute.xlu0 %2485
        %2487 = vrot.lane.b32.xlu0 %v2304, 20
        %v2488 = vpop.permute.xlu0 %2487
        %2489 = vrot.lane.b32.xlu0 %v2305, 20
        %v2490 = vpop.permute.xlu0 %2489
        %2491 = vrot.lane.b32.xlu0 %v2306, 20
        %v2492 = vpop.permute.xlu0 %2491
        %2493 = vrot.lane.b32.xlu0 %v2307, 20
        %v2494 = vpop.permute.xlu0 %2493
        %2495 = vrot.lane.b32.xlu0 %v2308, 20
        %v2496 = vpop.permute.xlu0 %2495
        %2497 = vrot.lane.b32.xlu0 %v2309, 20
        %v2498 = vpop.permute.xlu0 %2497
        %2499 = vrot.lane.b32.xlu0 %v2310, 20
        %v2500 = vpop.permute.xlu0 %2499
        %2501 = vrot.lane.b32.xlu0 %v2311, 20
        %v2502 = vpop.permute.xlu0 %2501
        %2503 = vrot.lane.b32.xlu0 %v2312, 20
        %v2504 = vpop.permute.xlu0 %2503
        %vm2569 = vcmask 195744
        %2570 = vst.msk [vmem:[#allocation3] sm:$0xff] %vm2569, %v2378
        %2571 = vst.msk [vmem:[#allocation3 + $0x8] sm:$0xff] %vm2569, %v2380
        %2572 = vst.msk [vmem:[#allocation3 + $0x10] sm:$0xff] %vm2569, %v2382
        %2573 = vst.msk [vmem:[#allocation3 + $0x18] sm:$0xff] %vm2569, %v2384
        %2574 = vst.msk [vmem:[#allocation3 + $0x20] sm:$0xff] %vm2569, %v2386
        %2575 = vst.msk [vmem:[#allocation3 + $0x28] sm:$0xff] %vm2569, %v2388
        %2576 = vst.msk [vmem:[#allocation3 + $0x30] sm:$0xff] %vm2569, %v2390
        %2577 = vst.msk [vmem:[#allocation3 + $0x38] sm:$0xff] %vm2569, %v2392
        %2578 = vst.msk [vmem:[#allocation3 + $0x40] sm:$0xff] %vm2569, %v2394
        %2579 = vst.msk [vmem:[#allocation3 + $0x48] sm:$0xff] %vm2569, %v2396
        %2580 = vst.msk [vmem:[#allocation3 + $0x50] sm:$0xff] %vm2569, %v2398
        %2581 = vst.msk [vmem:[#allocation3 + $0x58] sm:$0xff] %vm2569, %v2400
        %2582 = vst.msk [vmem:[#allocation3 + $0x60] sm:$0xff] %vm2569, %v2402
        %2583 = vst.msk [vmem:[#allocation3 + $0x68] sm:$0xff] %vm2569, %v2404
        %2584 = vst.msk [vmem:[#allocation3 + $0x70] sm:$0xff] %vm2569, %v2406
        %2585 = vst.msk [vmem:[#allocation3 + $0x78] sm:$0xff] %vm2569, %v2408
        %2586 = vst.msk [vmem:[#allocation3 + $0x80] sm:$0xff] %vm2569, %v2410
        %2587 = vst.msk [vmem:[#allocation3 + $0x88] sm:$0xff] %vm2569, %v2412
        %2588 = vst.msk [vmem:[#allocation3 + $0x90] sm:$0xff] %vm2569, %v2414
        %2589 = vst.msk [vmem:[#allocation3 + $0x98] sm:$0xff] %vm2569, %v2416
        %2590 = vst.msk [vmem:[#allocation3 + $0xa0] sm:$0xff] %vm2569, %v2418
        %2591 = vst.msk [vmem:[#allocation3 + $0xa8] sm:$0xff] %vm2569, %v2420
        %2592 = vst.msk [vmem:[#allocation3 + $0xb0] sm:$0xff] %vm2569, %v2422
        %2593 = vst.msk [vmem:[#allocation3 + $0xb8] sm:$0xff] %vm2569, %v2424
        %2594 = vst.msk [vmem:[#allocation3 + $0xc0] sm:$0xff] %vm2569, %v2426
        %2595 = vst.msk [vmem:[#allocation3 + $0xc8] sm:$0xff] %vm2569, %v2428
        %2596 = vst.msk [vmem:[#allocation3 + $0xd0] sm:$0xff] %vm2569, %v2430
        %2597 = vst.msk [vmem:[#allocation3 + $0xd8] sm:$0xff] %vm2569, %v2432
        %2598 = vst.msk [vmem:[#allocation3 + $0xe0] sm:$0xff] %vm2569, %v2434
        %2599 = vst.msk [vmem:[#allocation3 + $0xe8] sm:$0xff] %vm2569, %v2436
        %2600 = vst.msk [vmem:[#allocation3 + $0xf0] sm:$0xff] %vm2569, %v2438
        %2601 = vst.msk [vmem:[#allocation3 + $0xf8] sm:$0xff] %vm2569, %v2440
        %2602 = vst.msk [vmem:[#allocation3 + $0x100] sm:$0xff] %vm2569, %v2442
        %2603 = vst.msk [vmem:[#allocation3 + $0x108] sm:$0xff] %vm2569, %v2444
        %2604 = vst.msk [vmem:[#allocation3 + $0x110] sm:$0xff] %vm2569, %v2446
        %2605 = vst.msk [vmem:[#allocation3 + $0x118] sm:$0xff] %vm2569, %v2448
        %2606 = vst.msk [vmem:[#allocation3 + $0x120] sm:$0xff] %vm2569, %v2450
        %2607 = vst.msk [vmem:[#allocation3 + $0x128] sm:$0xff] %vm2569, %v2452
        %2608 = vst.msk [vmem:[#allocation3 + $0x130] sm:$0xff] %vm2569, %v2454
        %2609 = vst.msk [vmem:[#allocation3 + $0x138] sm:$0xff] %vm2569, %v2456
        %2610 = vst.msk [vmem:[#allocation3 + $0x140] sm:$0xff] %vm2569, %v2458
        %2611 = vst.msk [vmem:[#allocation3 + $0x148] sm:$0xff] %vm2569, %v2460
        %2612 = vst.msk [vmem:[#allocation3 + $0x150] sm:$0xff] %vm2569, %v2462
        %2613 = vst.msk [vmem:[#allocation3 + $0x158] sm:$0xff] %vm2569, %v2464
        %2614 = vst.msk [vmem:[#allocation3 + $0x160] sm:$0xff] %vm2569, %v2466
        %2615 = vst.msk [vmem:[#allocation3 + $0x168] sm:$0xff] %vm2569, %v2468
        %2616 = vst.msk [vmem:[#allocation3 + $0x170] sm:$0xff] %vm2569, %v2470
        %2617 = vst.msk [vmem:[#allocation3 + $0x178] sm:$0xff] %vm2569, %v2472
        %2618 = vst.msk [vmem:[#allocation3 + $0x180] sm:$0xff] %vm2569, %v2474
        %2619 = vst.msk [vmem:[#allocation3 + $0x188] sm:$0xff] %vm2569, %v2476
        %2620 = vst.msk [vmem:[#allocation3 + $0x190] sm:$0xff] %vm2569, %v2478
        %2621 = vst.msk [vmem:[#allocation3 + $0x198] sm:$0xff] %vm2569, %v2480
        %2622 = vst.msk [vmem:[#allocation3 + $0x1a0] sm:$0xff] %vm2569, %v2482
        %2623 = vst.msk [vmem:[#allocation3 + $0x1a8] sm:$0xff] %vm2569, %v2484
        %2624 = vst.msk [vmem:[#allocation3 + $0x1b0] sm:$0xff] %vm2569, %v2486
        %2625 = vst.msk [vmem:[#allocation3 + $0x1b8] sm:$0xff] %vm2569, %v2488
        %2626 = vst.msk [vmem:[#allocation3 + $0x1c0] sm:$0xff] %vm2569, %v2490
        %2627 = vst.msk [vmem:[#allocation3 + $0x1c8] sm:$0xff] %vm2569, %v2492
        %2628 = vst.msk [vmem:[#allocation3 + $0x1d0] sm:$0xff] %vm2569, %v2494
        %2629 = vst.msk [vmem:[#allocation3 + $0x1d8] sm:$0xff] %vm2569, %v2496
        %2630 = vst.msk [vmem:[#allocation3 + $0x1e0] sm:$0xff] %vm2569, %v2498
        %2631 = vst.msk [vmem:[#allocation3 + $0x1e8] sm:$0xff] %vm2569, %v2500
        %2632 = vst.msk [vmem:[#allocation3 + $0x1f0] sm:$0xff] %vm2569, %v2502
        %2633 = vst.msk [vmem:[#allocation3 + $0x1f8] sm:$0xff] %vm2569, %v2504
        %s2634 = scalar_lea.vmem [#allocation2], 48
        %v2635 = vld [vmem:[%s2634] sm:$0xff]
        %v2636 = vld [vmem:[%s2634 + $0x8] sm:$0xff]
        %v2637 = vld [vmem:[%s2634 + $0x18] sm:$0xff]
        %v2638 = vld [vmem:[%s2634 + $0x20] sm:$0xff]
        %v2639 = vld [vmem:[%s2634 + $0x30] sm:$0xff]
        %v2640 = vld [vmem:[%s2634 + $0x38] sm:$0xff]
        %v2641 = vld [vmem:[%s2634 + $0x48] sm:$0xff]
        %v2642 = vld [vmem:[%s2634 + $0x50] sm:$0xff]
        %v2643 = vld [vmem:[%s2634 + $0x60] sm:$0xff]
        %v2644 = vld [vmem:[%s2634 + $0x68] sm:$0xff]
        %v2645 = vld [vmem:[%s2634 + $0x78] sm:$0xff]
        %v2646 = vld [vmem:[%s2634 + $0x80] sm:$0xff]
        %v2647 = vld [vmem:[%s2634 + $0x90] sm:$0xff]
        %v2648 = vld [vmem:[%s2634 + $0x98] sm:$0xff]
        %v2649 = vld [vmem:[%s2634 + $0xa8] sm:$0xff]
        %v2650 = vld [vmem:[%s2634 + $0xb0] sm:$0xff]
        %v2651 = vld [vmem:[%s2634 + $0xc0] sm:$0xff]
        %v2652 = vld [vmem:[%s2634 + $0xc8] sm:$0xff]
        %v2653 = vld [vmem:[%s2634 + $0xd8] sm:$0xff]
        %v2654 = vld [vmem:[%s2634 + $0xe0] sm:$0xff]
        %v2655 = vld [vmem:[%s2634 + $0xf0] sm:$0xff]
        %v2656 = vld [vmem:[%s2634 + $0xf8] sm:$0xff]
        %v2657 = vld [vmem:[%s2634 + $0x108] sm:$0xff]
        %v2658 = vld [vmem:[%s2634 + $0x110] sm:$0xff]
        %v2659 = vld [vmem:[%s2634 + $0x120] sm:$0xff]
        %v2660 = vld [vmem:[%s2634 + $0x128] sm:$0xff]
        %v2661 = vld [vmem:[%s2634 + $0x138] sm:$0xff]
        %v2662 = vld [vmem:[%s2634 + $0x140] sm:$0xff]
        %v2663 = vld [vmem:[%s2634 + $0x150] sm:$0xff]
        %v2664 = vld [vmem:[%s2634 + $0x158] sm:$0xff]
        %v2665 = vld [vmem:[%s2634 + $0x168] sm:$0xff]
        %v2666 = vld [vmem:[%s2634 + $0x170] sm:$0xff]
        %v2667 = vld [vmem:[%s2634 + $0x1b0] sm:$0xff]
        %v2668 = vld [vmem:[%s2634 + $0x1b8] sm:$0xff]
        %v2669 = vld [vmem:[%s2634 + $0x1c8] sm:$0xff]
        %v2670 = vld [vmem:[%s2634 + $0x1d0] sm:$0xff]
        %v2671 = vld [vmem:[%s2634 + $0x1e0] sm:$0xff]
        %v2672 = vld [vmem:[%s2634 + $0x1e8] sm:$0xff]
        %v2673 = vld [vmem:[%s2634 + $0x1f8] sm:$0xff]
        %v2674 = vld [vmem:[%s2634 + $0x200] sm:$0xff]
        %v2675 = vld [vmem:[%s2634 + $0x210] sm:$0xff]
        %v2676 = vld [vmem:[%s2634 + $0x218] sm:$0xff]
        %v2677 = vld [vmem:[%s2634 + $0x228] sm:$0xff]
        %v2678 = vld [vmem:[%s2634 + $0x230] sm:$0xff]
        %v2679 = vld [vmem:[%s2634 + $0x240] sm:$0xff]
        %v2680 = vld [vmem:[%s2634 + $0x248] sm:$0xff]
        %v2681 = vld [vmem:[%s2634 + $0x258] sm:$0xff]
        %v2682 = vld [vmem:[%s2634 + $0x260] sm:$0xff]
        %v2683 = vld [vmem:[%s2634 + $0x270] sm:$0xff]
        %v2684 = vld [vmem:[%s2634 + $0x278] sm:$0xff]
        %v2685 = vld [vmem:[%s2634 + $0x288] sm:$0xff]
        %v2686 = vld [vmem:[%s2634 + $0x290] sm:$0xff]
        %v2687 = vld [vmem:[%s2634 + $0x2a0] sm:$0xff]
        %v2688 = vld [vmem:[%s2634 + $0x2a8] sm:$0xff]
        %v2689 = vld [vmem:[%s2634 + $0x2b8] sm:$0xff]
        %v2690 = vld [vmem:[%s2634 + $0x2c0] sm:$0xff]
        %v2691 = vld [vmem:[%s2634 + $0x2d0] sm:$0xff]
        %v2692 = vld [vmem:[%s2634 + $0x2d8] sm:$0xff]
        %v2693 = vld [vmem:[%s2634 + $0x2e8] sm:$0xff]
        %v2694 = vld [vmem:[%s2634 + $0x2f0] sm:$0xff]
        %v2695 = vld [vmem:[%s2634 + $0x300] sm:$0xff]
        %v2696 = vld [vmem:[%s2634 + $0x308] sm:$0xff]
        %v2697 = vld [vmem:[%s2634 + $0x318] sm:$0xff]
        %v2698 = vld [vmem:[%s2634 + $0x320] sm:$0xff]
        %2763 = vrot.lane.b32.xlu0 %v2635, 24
        %v2764 = vpop.permute.xlu0 %2763
        %2765 = vrot.lane.b32.xlu0 %v2636, 24
        %v2766 = vpop.permute.xlu0 %2765
        %2767 = vrot.lane.b32.xlu0 %v2637, 24
        %v2768 = vpop.permute.xlu0 %2767
        %2769 = vrot.lane.b32.xlu0 %v2638, 24
        %v2770 = vpop.permute.xlu0 %2769
        %2771 = vrot.lane.b32.xlu0 %v2639, 24
        %v2772 = vpop.permute.xlu0 %2771
        %2773 = vrot.lane.b32.xlu0 %v2640, 24
        %v2774 = vpop.permute.xlu0 %2773
        %2775 = vrot.lane.b32.xlu0 %v2641, 24
        %v2776 = vpop.permute.xlu0 %2775
        %2777 = vrot.lane.b32.xlu0 %v2642, 24
        %v2778 = vpop.permute.xlu0 %2777
        %2779 = vrot.lane.b32.xlu0 %v2643, 24
        %v2780 = vpop.permute.xlu0 %2779
        %2781 = vrot.lane.b32.xlu0 %v2644, 24
        %v2782 = vpop.permute.xlu0 %2781
        %2783 = vrot.lane.b32.xlu0 %v2645, 24
        %v2784 = vpop.permute.xlu0 %2783
        %2785 = vrot.lane.b32.xlu0 %v2646, 24
        %v2786 = vpop.permute.xlu0 %2785
        %2787 = vrot.lane.b32.xlu0 %v2647, 24
        %v2788 = vpop.permute.xlu0 %2787
        %2789 = vrot.lane.b32.xlu0 %v2648, 24
        %v2790 = vpop.permute.xlu0 %2789
        %2791 = vrot.lane.b32.xlu0 %v2649, 24
        %v2792 = vpop.permute.xlu0 %2791
        %2793 = vrot.lane.b32.xlu0 %v2650, 24
        %v2794 = vpop.permute.xlu0 %2793
        %2795 = vrot.lane.b32.xlu0 %v2651, 24
        %v2796 = vpop.permute.xlu0 %2795
        %2797 = vrot.lane.b32.xlu0 %v2652, 24
        %v2798 = vpop.permute.xlu0 %2797
        %2799 = vrot.lane.b32.xlu0 %v2653, 24
        %v2800 = vpop.permute.xlu0 %2799
        %2801 = vrot.lane.b32.xlu0 %v2654, 24
        %v2802 = vpop.permute.xlu0 %2801
        %2803 = vrot.lane.b32.xlu0 %v2655, 24
        %v2804 = vpop.permute.xlu0 %2803
        %2805 = vrot.lane.b32.xlu0 %v2656, 24
        %v2806 = vpop.permute.xlu0 %2805
        %2807 = vrot.lane.b32.xlu0 %v2657, 24
        %v2808 = vpop.permute.xlu0 %2807
        %2809 = vrot.lane.b32.xlu0 %v2658, 24
        %v2810 = vpop.permute.xlu0 %2809
        %2811 = vrot.lane.b32.xlu0 %v2659, 24
        %v2812 = vpop.permute.xlu0 %2811
        %2813 = vrot.lane.b32.xlu0 %v2660, 24
        %v2814 = vpop.permute.xlu0 %2813
        %2815 = vrot.lane.b32.xlu0 %v2661, 24
        %v2816 = vpop.permute.xlu0 %2815
        %2817 = vrot.lane.b32.xlu0 %v2662, 24
        %v2818 = vpop.permute.xlu0 %2817
        %2819 = vrot.lane.b32.xlu0 %v2663, 24
        %v2820 = vpop.permute.xlu0 %2819
        %2821 = vrot.lane.b32.xlu0 %v2664, 24
        %v2822 = vpop.permute.xlu0 %2821
        %2823 = vrot.lane.b32.xlu0 %v2665, 24
        %v2824 = vpop.permute.xlu0 %2823
        %2825 = vrot.lane.b32.xlu0 %v2666, 24
        %v2826 = vpop.permute.xlu0 %2825
        %2827 = vrot.lane.b32.xlu0 %v2667, 24
        %v2828 = vpop.permute.xlu0 %2827
        %2829 = vrot.lane.b32.xlu0 %v2668, 24
        %v2830 = vpop.permute.xlu0 %2829
        %2831 = vrot.lane.b32.xlu0 %v2669, 24
        %v2832 = vpop.permute.xlu0 %2831
        %2833 = vrot.lane.b32.xlu0 %v2670, 24
        %v2834 = vpop.permute.xlu0 %2833
        %2835 = vrot.lane.b32.xlu0 %v2671, 24
        %v2836 = vpop.permute.xlu0 %2835
        %2837 = vrot.lane.b32.xlu0 %v2672, 24
        %v2838 = vpop.permute.xlu0 %2837
        %2839 = vrot.lane.b32.xlu0 %v2673, 24
        %v2840 = vpop.permute.xlu0 %2839
        %2841 = vrot.lane.b32.xlu0 %v2674, 24
        %v2842 = vpop.permute.xlu0 %2841
        %2843 = vrot.lane.b32.xlu0 %v2675, 24
        %v2844 = vpop.permute.xlu0 %2843
        %2845 = vrot.lane.b32.xlu0 %v2676, 24
        %v2846 = vpop.permute.xlu0 %2845
        %2847 = vrot.lane.b32.xlu0 %v2677, 24
        %v2848 = vpop.permute.xlu0 %2847
        %2849 = vrot.lane.b32.xlu0 %v2678, 24
        %v2850 = vpop.permute.xlu0 %2849
        %2851 = vrot.lane.b32.xlu0 %v2679, 24
        %v2852 = vpop.permute.xlu0 %2851
        %2853 = vrot.lane.b32.xlu0 %v2680, 24
        %v2854 = vpop.permute.xlu0 %2853
        %2855 = vrot.lane.b32.xlu0 %v2681, 24
        %v2856 = vpop.permute.xlu0 %2855
        %2857 = vrot.lane.b32.xlu0 %v2682, 24
        %v2858 = vpop.permute.xlu0 %2857
        %2859 = vrot.lane.b32.xlu0 %v2683, 24
        %v2860 = vpop.permute.xlu0 %2859
        %2861 = vrot.lane.b32.xlu0 %v2684, 24
        %v2862 = vpop.permute.xlu0 %2861
        %2863 = vrot.lane.b32.xlu0 %v2685, 24
        %v2864 = vpop.permute.xlu0 %2863
        %2865 = vrot.lane.b32.xlu0 %v2686, 24
        %v2866 = vpop.permute.xlu0 %2865
        %2867 = vrot.lane.b32.xlu0 %v2687, 24
        %v2868 = vpop.permute.xlu0 %2867
        %2869 = vrot.lane.b32.xlu0 %v2688, 24
        %v2870 = vpop.permute.xlu0 %2869
        %2871 = vrot.lane.b32.xlu0 %v2689, 24
        %v2872 = vpop.permute.xlu0 %2871
        %2873 = vrot.lane.b32.xlu0 %v2690, 24
        %v2874 = vpop.permute.xlu0 %2873
        %2875 = vrot.lane.b32.xlu0 %v2691, 24
        %v2876 = vpop.permute.xlu0 %2875
        %2877 = vrot.lane.b32.xlu0 %v2692, 24
        %v2878 = vpop.permute.xlu0 %2877
        %2879 = vrot.lane.b32.xlu0 %v2693, 24
        %v2880 = vpop.permute.xlu0 %2879
        %2881 = vrot.lane.b32.xlu0 %v2694, 24
        %v2882 = vpop.permute.xlu0 %2881
        %2883 = vrot.lane.b32.xlu0 %v2695, 24
        %v2884 = vpop.permute.xlu0 %2883
        %2885 = vrot.lane.b32.xlu0 %v2696, 24
        %v2886 = vpop.permute.xlu0 %2885
        %2887 = vrot.lane.b32.xlu0 %v2697, 24
        %v2888 = vpop.permute.xlu0 %2887
        %2889 = vrot.lane.b32.xlu0 %v2698, 24
        %v2890 = vpop.permute.xlu0 %2889
        %vm2955 = vcmask 228544
        %2956 = vst.msk [vmem:[#allocation3] sm:$0xff] %vm2955, %v2764
        %2957 = vst.msk [vmem:[#allocation3 + $0x8] sm:$0xff] %vm2955, %v2766
        %2958 = vst.msk [vmem:[#allocation3 + $0x10] sm:$0xff] %vm2955, %v2768
        %2959 = vst.msk [vmem:[#allocation3 + $0x18] sm:$0xff] %vm2955, %v2770
        %2960 = vst.msk [vmem:[#allocation3 + $0x20] sm:$0xff] %vm2955, %v2772
        %2961 = vst.msk [vmem:[#allocation3 + $0x28] sm:$0xff] %vm2955, %v2774
        %2962 = vst.msk [vmem:[#allocation3 + $0x30] sm:$0xff] %vm2955, %v2776
        %2963 = vst.msk [vmem:[#allocation3 + $0x38] sm:$0xff] %vm2955, %v2778
        %2964 = vst.msk [vmem:[#allocation3 + $0x40] sm:$0xff] %vm2955, %v2780
        %2965 = vst.msk [vmem:[#allocation3 + $0x48] sm:$0xff] %vm2955, %v2782
        %2966 = vst.msk [vmem:[#allocation3 + $0x50] sm:$0xff] %vm2955, %v2784
        %2967 = vst.msk [vmem:[#allocation3 + $0x58] sm:$0xff] %vm2955, %v2786
        %2968 = vst.msk [vmem:[#allocation3 + $0x60] sm:$0xff] %vm2955, %v2788
        %2969 = vst.msk [vmem:[#allocation3 + $0x68] sm:$0xff] %vm2955, %v2790
        %2970 = vst.msk [vmem:[#allocation3 + $0x70] sm:$0xff] %vm2955, %v2792
        %2971 = vst.msk [vmem:[#allocation3 + $0x78] sm:$0xff] %vm2955, %v2794
        %2972 = vst.msk [vmem:[#allocation3 + $0x80] sm:$0xff] %vm2955, %v2796
        %2973 = vst.msk [vmem:[#allocation3 + $0x88] sm:$0xff] %vm2955, %v2798
        %2974 = vst.msk [vmem:[#allocation3 + $0x90] sm:$0xff] %vm2955, %v2800
        %2975 = vst.msk [vmem:[#allocation3 + $0x98] sm:$0xff] %vm2955, %v2802
        %2976 = vst.msk [vmem:[#allocation3 + $0xa0] sm:$0xff] %vm2955, %v2804
        %2977 = vst.msk [vmem:[#allocation3 + $0xa8] sm:$0xff] %vm2955, %v2806
        %2978 = vst.msk [vmem:[#allocation3 + $0xb0] sm:$0xff] %vm2955, %v2808
        %2979 = vst.msk [vmem:[#allocation3 + $0xb8] sm:$0xff] %vm2955, %v2810
        %2980 = vst.msk [vmem:[#allocation3 + $0xc0] sm:$0xff] %vm2955, %v2812
        %2981 = vst.msk [vmem:[#allocation3 + $0xc8] sm:$0xff] %vm2955, %v2814
        %2982 = vst.msk [vmem:[#allocation3 + $0xd0] sm:$0xff] %vm2955, %v2816
        %2983 = vst.msk [vmem:[#allocation3 + $0xd8] sm:$0xff] %vm2955, %v2818
        %2984 = vst.msk [vmem:[#allocation3 + $0xe0] sm:$0xff] %vm2955, %v2820
        %2985 = vst.msk [vmem:[#allocation3 + $0xe8] sm:$0xff] %vm2955, %v2822
        %2986 = vst.msk [vmem:[#allocation3 + $0xf0] sm:$0xff] %vm2955, %v2824
        %2987 = vst.msk [vmem:[#allocation3 + $0xf8] sm:$0xff] %vm2955, %v2826
        %2988 = vst.msk [vmem:[#allocation3 + $0x100] sm:$0xff] %vm2955, %v2828
        %2989 = vst.msk [vmem:[#allocation3 + $0x108] sm:$0xff] %vm2955, %v2830
        %2990 = vst.msk [vmem:[#allocation3 + $0x110] sm:$0xff] %vm2955, %v2832
        %2991 = vst.msk [vmem:[#allocation3 + $0x118] sm:$0xff] %vm2955, %v2834
        %2992 = vst.msk [vmem:[#allocation3 + $0x120] sm:$0xff] %vm2955, %v2836
        %2993 = vst.msk [vmem:[#allocation3 + $0x128] sm:$0xff] %vm2955, %v2838
        %2994 = vst.msk [vmem:[#allocation3 + $0x130] sm:$0xff] %vm2955, %v2840
        %2995 = vst.msk [vmem:[#allocation3 + $0x138] sm:$0xff] %vm2955, %v2842
        %2996 = vst.msk [vmem:[#allocation3 + $0x140] sm:$0xff] %vm2955, %v2844
        %2997 = vst.msk [vmem:[#allocation3 + $0x148] sm:$0xff] %vm2955, %v2846
        %2998 = vst.msk [vmem:[#allocation3 + $0x150] sm:$0xff] %vm2955, %v2848
        %2999 = vst.msk [vmem:[#allocation3 + $0x158] sm:$0xff] %vm2955, %v2850
        %3000 = vst.msk [vmem:[#allocation3 + $0x160] sm:$0xff] %vm2955, %v2852
        %3001 = vst.msk [vmem:[#allocation3 + $0x168] sm:$0xff] %vm2955, %v2854
        %3002 = vst.msk [vmem:[#allocation3 + $0x170] sm:$0xff] %vm2955, %v2856
        %3003 = vst.msk [vmem:[#allocation3 + $0x178] sm:$0xff] %vm2955, %v2858
        %3004 = vst.msk [vmem:[#allocation3 + $0x180] sm:$0xff] %vm2955, %v2860
        %3005 = vst.msk [vmem:[#allocation3 + $0x188] sm:$0xff] %vm2955, %v2862
        %3006 = vst.msk [vmem:[#allocation3 + $0x190] sm:$0xff] %vm2955, %v2864
        %3007 = vst.msk [vmem:[#allocation3 + $0x198] sm:$0xff] %vm2955, %v2866
        %3008 = vst.msk [vmem:[#allocation3 + $0x1a0] sm:$0xff] %vm2955, %v2868
        %3009 = vst.msk [vmem:[#allocation3 + $0x1a8] sm:$0xff] %vm2955, %v2870
        %3010 = vst.msk [vmem:[#allocation3 + $0x1b0] sm:$0xff] %vm2955, %v2872
        %3011 = vst.msk [vmem:[#allocation3 + $0x1b8] sm:$0xff] %vm2955, %v2874
        %3012 = vst.msk [vmem:[#allocation3 + $0x1c0] sm:$0xff] %vm2955, %v2876
        %3013 = vst.msk [vmem:[#allocation3 + $0x1c8] sm:$0xff] %vm2955, %v2878
        %3014 = vst.msk [vmem:[#allocation3 + $0x1d0] sm:$0xff] %vm2955, %v2880
        %3015 = vst.msk [vmem:[#allocation3 + $0x1d8] sm:$0xff] %vm2955, %v2882
        %3016 = vst.msk [vmem:[#allocation3 + $0x1e0] sm:$0xff] %vm2955, %v2884
        %3017 = vst.msk [vmem:[#allocation3 + $0x1e8] sm:$0xff] %vm2955, %v2886
        %3018 = vst.msk [vmem:[#allocation3 + $0x1f0] sm:$0xff] %vm2955, %v2888
        %3019 = vst.msk [vmem:[#allocation3 + $0x1f8] sm:$0xff] %vm2955, %v2890
        %v3020 = vld [vmem:[%s2634 + $0x1] sm:$0xff]
        %v3021 = vld [vmem:[%s2634 + $0x9] sm:$0xff]
        %v3022 = vld [vmem:[%s2634 + $0x19] sm:$0xff]
        %v3023 = vld [vmem:[%s2634 + $0x21] sm:$0xff]
        %v3024 = vld [vmem:[%s2634 + $0x31] sm:$0xff]
        %v3025 = vld [vmem:[%s2634 + $0x39] sm:$0xff]
        %v3026 = vld [vmem:[%s2634 + $0x49] sm:$0xff]
        %v3027 = vld [vmem:[%s2634 + $0x51] sm:$0xff]
        %v3028 = vld [vmem:[%s2634 + $0x61] sm:$0xff]
        %v3029 = vld [vmem:[%s2634 + $0x69] sm:$0xff]
        %v3030 = vld [vmem:[%s2634 + $0x79] sm:$0xff]
        %v3031 = vld [vmem:[%s2634 + $0x81] sm:$0xff]
        %v3032 = vld [vmem:[%s2634 + $0x91] sm:$0xff]
        %v3033 = vld [vmem:[%s2634 + $0x99] sm:$0xff]
        %v3034 = vld [vmem:[%s2634 + $0xa9] sm:$0xff]
        %v3035 = vld [vmem:[%s2634 + $0xb1] sm:$0xff]
        %v3036 = vld [vmem:[%s2634 + $0xc1] sm:$0xff]
        %v3037 = vld [vmem:[%s2634 + $0xc9] sm:$0xff]
        %v3038 = vld [vmem:[%s2634 + $0xd9] sm:$0xff]
        %v3039 = vld [vmem:[%s2634 + $0xe1] sm:$0xff]
        %v3040 = vld [vmem:[%s2634 + $0xf1] sm:$0xff]
        %v3041 = vld [vmem:[%s2634 + $0xf9] sm:$0xff]
        %v3042 = vld [vmem:[%s2634 + $0x109] sm:$0xff]
        %v3043 = vld [vmem:[%s2634 + $0x111] sm:$0xff]
        %v3044 = vld [vmem:[%s2634 + $0x121] sm:$0xff]
        %v3045 = vld [vmem:[%s2634 + $0x129] sm:$0xff]
        %v3046 = vld [vmem:[%s2634 + $0x139] sm:$0xff]
        %v3047 = vld [vmem:[%s2634 + $0x141] sm:$0xff]
        %v3048 = vld [vmem:[%s2634 + $0x151] sm:$0xff]
        %v3049 = vld [vmem:[%s2634 + $0x159] sm:$0xff]
        %v3050 = vld [vmem:[%s2634 + $0x169] sm:$0xff]
        %v3051 = vld [vmem:[%s2634 + $0x171] sm:$0xff]
        %v3052 = vld [vmem:[%s2634 + $0x1b1] sm:$0xff]
        %v3053 = vld [vmem:[%s2634 + $0x1b9] sm:$0xff]
        %v3054 = vld [vmem:[%s2634 + $0x1c9] sm:$0xff]
        %v3055 = vld [vmem:[%s2634 + $0x1d1] sm:$0xff]
        %v3056 = vld [vmem:[%s2634 + $0x1e1] sm:$0xff]
        %v3057 = vld [vmem:[%s2634 + $0x1e9] sm:$0xff]
        %v3058 = vld [vmem:[%s2634 + $0x1f9] sm:$0xff]
        %v3059 = vld [vmem:[%s2634 + $0x201] sm:$0xff]
        %v3060 = vld [vmem:[%s2634 + $0x211] sm:$0xff]
        %v3061 = vld [vmem:[%s2634 + $0x219] sm:$0xff]
        %v3062 = vld [vmem:[%s2634 + $0x229] sm:$0xff]
        %v3063 = vld [vmem:[%s2634 + $0x231] sm:$0xff]
        %v3064 = vld [vmem:[%s2634 + $0x241] sm:$0xff]
        %v3065 = vld [vmem:[%s2634 + $0x249] sm:$0xff]
        %v3066 = vld [vmem:[%s2634 + $0x259] sm:$0xff]
        %v3067 = vld [vmem:[%s2634 + $0x261] sm:$0xff]
        %v3068 = vld [vmem:[%s2634 + $0x271] sm:$0xff]
        %v3069 = vld [vmem:[%s2634 + $0x279] sm:$0xff]
        %v3070 = vld [vmem:[%s2634 + $0x289] sm:$0xff]
        %v3071 = vld [vmem:[%s2634 + $0x291] sm:$0xff]
        %v3072 = vld [vmem:[%s2634 + $0x2a1] sm:$0xff]
        %v3073 = vld [vmem:[%s2634 + $0x2a9] sm:$0xff]
        %v3074 = vld [vmem:[%s2634 + $0x2b9] sm:$0xff]
        %v3075 = vld [vmem:[%s2634 + $0x2c1] sm:$0xff]
        %v3076 = vld [vmem:[%s2634 + $0x2d1] sm:$0xff]
        %v3077 = vld [vmem:[%s2634 + $0x2d9] sm:$0xff]
        %v3078 = vld [vmem:[%s2634 + $0x2e9] sm:$0xff]
        %v3079 = vld [vmem:[%s2634 + $0x2f1] sm:$0xff]
        %v3080 = vld [vmem:[%s2634 + $0x301] sm:$0xff]
        %v3081 = vld [vmem:[%s2634 + $0x309] sm:$0xff]
        %v3082 = vld [vmem:[%s2634 + $0x319] sm:$0xff]
        %v3083 = vld [vmem:[%s2634 + $0x321] sm:$0xff]
        %3148 = vrot.lane.b32.xlu0 %v3020, 28
        %v3149 = vpop.permute.xlu0 %3148
        %3150 = vrot.lane.b32.xlu0 %v3021, 28
        %v3151 = vpop.permute.xlu0 %3150
        %3152 = vrot.lane.b32.xlu0 %v3022, 28
        %v3153 = vpop.permute.xlu0 %3152
        %3154 = vrot.lane.b32.xlu0 %v3023, 28
        %v3155 = vpop.permute.xlu0 %3154
        %3156 = vrot.lane.b32.xlu0 %v3024, 28
        %v3157 = vpop.permute.xlu0 %3156
        %3158 = vrot.lane.b32.xlu0 %v3025, 28
        %v3159 = vpop.permute.xlu0 %3158
        %3160 = vrot.lane.b32.xlu0 %v3026, 28
        %v3161 = vpop.permute.xlu0 %3160
        %3162 = vrot.lane.b32.xlu0 %v3027, 28
        %v3163 = vpop.permute.xlu0 %3162
        %3164 = vrot.lane.b32.xlu0 %v3028, 28
        %v3165 = vpop.permute.xlu0 %3164
        %3166 = vrot.lane.b32.xlu0 %v3029, 28
        %v3167 = vpop.permute.xlu0 %3166
        %3168 = vrot.lane.b32.xlu0 %v3030, 28
        %v3169 = vpop.permute.xlu0 %3168
        %3170 = vrot.lane.b32.xlu0 %v3031, 28
        %v3171 = vpop.permute.xlu0 %3170
        %3172 = vrot.lane.b32.xlu0 %v3032, 28
        %v3173 = vpop.permute.xlu0 %3172
        %3174 = vrot.lane.b32.xlu0 %v3033, 28
        %v3175 = vpop.permute.xlu0 %3174
        %3176 = vrot.lane.b32.xlu0 %v3034, 28
        %v3177 = vpop.permute.xlu0 %3176
        %3178 = vrot.lane.b32.xlu0 %v3035, 28
        %v3179 = vpop.permute.xlu0 %3178
        %3180 = vrot.lane.b32.xlu0 %v3036, 28
        %v3181 = vpop.permute.xlu0 %3180
        %3182 = vrot.lane.b32.xlu0 %v3037, 28
        %v3183 = vpop.permute.xlu0 %3182
        %3184 = vrot.lane.b32.xlu0 %v3038, 28
        %v3185 = vpop.permute.xlu0 %3184
        %3186 = vrot.lane.b32.xlu0 %v3039, 28
        %v3187 = vpop.permute.xlu0 %3186
        %3188 = vrot.lane.b32.xlu0 %v3040, 28
        %v3189 = vpop.permute.xlu0 %3188
        %3190 = vrot.lane.b32.xlu0 %v3041, 28
        %v3191 = vpop.permute.xlu0 %3190
        %3192 = vrot.lane.b32.xlu0 %v3042, 28
        %v3193 = vpop.permute.xlu0 %3192
        %3194 = vrot.lane.b32.xlu0 %v3043, 28
        %v3195 = vpop.permute.xlu0 %3194
        %3196 = vrot.lane.b32.xlu0 %v3044, 28
        %v3197 = vpop.permute.xlu0 %3196
        %3198 = vrot.lane.b32.xlu0 %v3045, 28
        %v3199 = vpop.permute.xlu0 %3198
        %3200 = vrot.lane.b32.xlu0 %v3046, 28
        %v3201 = vpop.permute.xlu0 %3200
        %3202 = vrot.lane.b32.xlu0 %v3047, 28
        %v3203 = vpop.permute.xlu0 %3202
        %3204 = vrot.lane.b32.xlu0 %v3048, 28
        %v3205 = vpop.permute.xlu0 %3204
        %3206 = vrot.lane.b32.xlu0 %v3049, 28
        %v3207 = vpop.permute.xlu0 %3206
        %3208 = vrot.lane.b32.xlu0 %v3050, 28
        %v3209 = vpop.permute.xlu0 %3208
        %3210 = vrot.lane.b32.xlu0 %v3051, 28
        %v3211 = vpop.permute.xlu0 %3210
        %3212 = vrot.lane.b32.xlu0 %v3052, 28
        %v3213 = vpop.permute.xlu0 %3212
        %3214 = vrot.lane.b32.xlu0 %v3053, 28
        %v3215 = vpop.permute.xlu0 %3214
        %3216 = vrot.lane.b32.xlu0 %v3054, 28
        %v3217 = vpop.permute.xlu0 %3216
        %3218 = vrot.lane.b32.xlu0 %v3055, 28
        %v3219 = vpop.permute.xlu0 %3218
        %3220 = vrot.lane.b32.xlu0 %v3056, 28
        %v3221 = vpop.permute.xlu0 %3220
        %3222 = vrot.lane.b32.xlu0 %v3057, 28
        %v3223 = vpop.permute.xlu0 %3222
        %3224 = vrot.lane.b32.xlu0 %v3058, 28
        %v3225 = vpop.permute.xlu0 %3224
        %3226 = vrot.lane.b32.xlu0 %v3059, 28
        %v3227 = vpop.permute.xlu0 %3226
        %3228 = vrot.lane.b32.xlu0 %v3060, 28
        %v3229 = vpop.permute.xlu0 %3228
        %3230 = vrot.lane.b32.xlu0 %v3061, 28
        %v3231 = vpop.permute.xlu0 %3230
        %3232 = vrot.lane.b32.xlu0 %v3062, 28
        %v3233 = vpop.permute.xlu0 %3232
        %3234 = vrot.lane.b32.xlu0 %v3063, 28
        %v3235 = vpop.permute.xlu0 %3234
        %3236 = vrot.lane.b32.xlu0 %v3064, 28
        %v3237 = vpop.permute.xlu0 %3236
        %3238 = vrot.lane.b32.xlu0 %v3065, 28
        %v3239 = vpop.permute.xlu0 %3238
        %3240 = vrot.lane.b32.xlu0 %v3066, 28
        %v3241 = vpop.permute.xlu0 %3240
        %3242 = vrot.lane.b32.xlu0 %v3067, 28
        %v3243 = vpop.permute.xlu0 %3242
        %3244 = vrot.lane.b32.xlu0 %v3068, 28
        %v3245 = vpop.permute.xlu0 %3244
        %3246 = vrot.lane.b32.xlu0 %v3069, 28
        %v3247 = vpop.permute.xlu0 %3246
        %3248 = vrot.lane.b32.xlu0 %v3070, 28
        %v3249 = vpop.permute.xlu0 %3248
        %3250 = vrot.lane.b32.xlu0 %v3071, 28
        %v3251 = vpop.permute.xlu0 %3250
        %3252 = vrot.lane.b32.xlu0 %v3072, 28
        %v3253 = vpop.permute.xlu0 %3252
        %3254 = vrot.lane.b32.xlu0 %v3073, 28
        %v3255 = vpop.permute.xlu0 %3254
        %3256 = vrot.lane.b32.xlu0 %v3074, 28
        %v3257 = vpop.permute.xlu0 %3256
        %3258 = vrot.lane.b32.xlu0 %v3075, 28
        %v3259 = vpop.permute.xlu0 %3258
        %3260 = vrot.lane.b32.xlu0 %v3076, 28
        %v3261 = vpop.permute.xlu0 %3260
        %3262 = vrot.lane.b32.xlu0 %v3077, 28
        %v3263 = vpop.permute.xlu0 %3262
        %3264 = vrot.lane.b32.xlu0 %v3078, 28
        %v3265 = vpop.permute.xlu0 %3264
        %3266 = vrot.lane.b32.xlu0 %v3079, 28
        %v3267 = vpop.permute.xlu0 %3266
        %3268 = vrot.lane.b32.xlu0 %v3080, 28
        %v3269 = vpop.permute.xlu0 %3268
        %3270 = vrot.lane.b32.xlu0 %v3081, 28
        %v3271 = vpop.permute.xlu0 %3270
        %3272 = vrot.lane.b32.xlu0 %v3082, 28
        %v3273 = vpop.permute.xlu0 %3272
        %3274 = vrot.lane.b32.xlu0 %v3083, 28
        %v3275 = vpop.permute.xlu0 %3274
        %vm3340 = vcmask 261344
        %3341 = vst.msk [vmem:[#allocation3] sm:$0xff] %vm3340, %v3149
        %3342 = vst.msk [vmem:[#allocation3 + $0x8] sm:$0xff] %vm3340, %v3151
        %3343 = vst.msk [vmem:[#allocation3 + $0x10] sm:$0xff] %vm3340, %v3153
        %3344 = vst.msk [vmem:[#allocation3 + $0x18] sm:$0xff] %vm3340, %v3155
        %3345 = vst.msk [vmem:[#allocation3 + $0x20] sm:$0xff] %vm3340, %v3157
        %3346 = vst.msk [vmem:[#allocation3 + $0x28] sm:$0xff] %vm3340, %v3159
        %3347 = vst.msk [vmem:[#allocation3 + $0x30] sm:$0xff] %vm3340, %v3161
        %3348 = vst.msk [vmem:[#allocation3 + $0x38] sm:$0xff] %vm3340, %v3163
        %3349 = vst.msk [vmem:[#allocation3 + $0x40] sm:$0xff] %vm3340, %v3165
        %3350 = vst.msk [vmem:[#allocation3 + $0x48] sm:$0xff] %vm3340, %v3167
        %3351 = vst.msk [vmem:[#allocation3 + $0x50] sm:$0xff] %vm3340, %v3169
        %3352 = vst.msk [vmem:[#allocation3 + $0x58] sm:$0xff] %vm3340, %v3171
        %3353 = vst.msk [vmem:[#allocation3 + $0x60] sm:$0xff] %vm3340, %v3173
        %3354 = vst.msk [vmem:[#allocation3 + $0x68] sm:$0xff] %vm3340, %v3175
        %3355 = vst.msk [vmem:[#allocation3 + $0x70] sm:$0xff] %vm3340, %v3177
        %3356 = vst.msk [vmem:[#allocation3 + $0x78] sm:$0xff] %vm3340, %v3179
        %3357 = vst.msk [vmem:[#allocation3 + $0x80] sm:$0xff] %vm3340, %v3181
        %3358 = vst.msk [vmem:[#allocation3 + $0x88] sm:$0xff] %vm3340, %v3183
        %3359 = vst.msk [vmem:[#allocation3 + $0x90] sm:$0xff] %vm3340, %v3185
        %3360 = vst.msk [vmem:[#allocation3 + $0x98] sm:$0xff] %vm3340, %v3187
        %3361 = vst.msk [vmem:[#allocation3 + $0xa0] sm:$0xff] %vm3340, %v3189
        %3362 = vst.msk [vmem:[#allocation3 + $0xa8] sm:$0xff] %vm3340, %v3191
        %3363 = vst.msk [vmem:[#allocation3 + $0xb0] sm:$0xff] %vm3340, %v3193
        %3364 = vst.msk [vmem:[#allocation3 + $0xb8] sm:$0xff] %vm3340, %v3195
        %3365 = vst.msk [vmem:[#allocation3 + $0xc0] sm:$0xff] %vm3340, %v3197
        %3366 = vst.msk [vmem:[#allocation3 + $0xc8] sm:$0xff] %vm3340, %v3199
        %3367 = vst.msk [vmem:[#allocation3 + $0xd0] sm:$0xff] %vm3340, %v3201
        %3368 = vst.msk [vmem:[#allocation3 + $0xd8] sm:$0xff] %vm3340, %v3203
        %3369 = vst.msk [vmem:[#allocation3 + $0xe0] sm:$0xff] %vm3340, %v3205
        %3370 = vst.msk [vmem:[#allocation3 + $0xe8] sm:$0xff] %vm3340, %v3207
        %3371 = vst.msk [vmem:[#allocation3 + $0xf0] sm:$0xff] %vm3340, %v3209
        %3372 = vst.msk [vmem:[#allocation3 + $0xf8] sm:$0xff] %vm3340, %v3211
        %3373 = vst.msk [vmem:[#allocation3 + $0x100] sm:$0xff] %vm3340, %v3213
        %3374 = vst.msk [vmem:[#allocation3 + $0x108] sm:$0xff] %vm3340, %v3215
        %3375 = vst.msk [vmem:[#allocation3 + $0x110] sm:$0xff] %vm3340, %v3217
        %3376 = vst.msk [vmem:[#allocation3 + $0x118] sm:$0xff] %vm3340, %v3219
        %3377 = vst.msk [vmem:[#allocation3 + $0x120] sm:$0xff] %vm3340, %v3221
        %3378 = vst.msk [vmem:[#allocation3 + $0x128] sm:$0xff] %vm3340, %v3223
        %3379 = vst.msk [vmem:[#allocation3 + $0x130] sm:$0xff] %vm3340, %v3225
        %3380 = vst.msk [vmem:[#allocation3 + $0x138] sm:$0xff] %vm3340, %v3227
        %3381 = vst.msk [vmem:[#allocation3 + $0x140] sm:$0xff] %vm3340, %v3229
        %3382 = vst.msk [vmem:[#allocation3 + $0x148] sm:$0xff] %vm3340, %v3231
        %3383 = vst.msk [vmem:[#allocation3 + $0x150] sm:$0xff] %vm3340, %v3233
        %3384 = vst.msk [vmem:[#allocation3 + $0x158] sm:$0xff] %vm3340, %v3235
        %3385 = vst.msk [vmem:[#allocation3 + $0x160] sm:$0xff] %vm3340, %v3237
        %3386 = vst.msk [vmem:[#allocation3 + $0x168] sm:$0xff] %vm3340, %v3239
        %3387 = vst.msk [vmem:[#allocation3 + $0x170] sm:$0xff] %vm3340, %v3241
        %3388 = vst.msk [vmem:[#allocation3 + $0x178] sm:$0xff] %vm3340, %v3243
        %3389 = vst.msk [vmem:[#allocation3 + $0x180] sm:$0xff] %vm3340, %v3245
        %3390 = vst.msk [vmem:[#allocation3 + $0x188] sm:$0xff] %vm3340, %v3247
        %3391 = vst.msk [vmem:[#allocation3 + $0x190] sm:$0xff] %vm3340, %v3249
        %3392 = vst.msk [vmem:[#allocation3 + $0x198] sm:$0xff] %vm3340, %v3251
        %3393 = vst.msk [vmem:[#allocation3 + $0x1a0] sm:$0xff] %vm3340, %v3253
        %3394 = vst.msk [vmem:[#allocation3 + $0x1a8] sm:$0xff] %vm3340, %v3255
        %3395 = vst.msk [vmem:[#allocation3 + $0x1b0] sm:$0xff] %vm3340, %v3257
        %3396 = vst.msk [vmem:[#allocation3 + $0x1b8] sm:$0xff] %vm3340, %v3259
        %3397 = vst.msk [vmem:[#allocation3 + $0x1c0] sm:$0xff] %vm3340, %v3261
        %3398 = vst.msk [vmem:[#allocation3 + $0x1c8] sm:$0xff] %vm3340, %v3263
        %3399 = vst.msk [vmem:[#allocation3 + $0x1d0] sm:$0xff] %vm3340, %v3265
        %3400 = vst.msk [vmem:[#allocation3 + $0x1d8] sm:$0xff] %vm3340, %v3267
        %3401 = vst.msk [vmem:[#allocation3 + $0x1e0] sm:$0xff] %vm3340, %v3269
        %3402 = vst.msk [vmem:[#allocation3 + $0x1e8] sm:$0xff] %vm3340, %v3271
        %3403 = vst.msk [vmem:[#allocation3 + $0x1f0] sm:$0xff] %vm3340, %v3273
        %3404 = vst.msk [vmem:[#allocation3 + $0x1f8] sm:$0xff] %vm3340, %v3275
        %v3405 = vld [vmem:[%s2634 + $0x2] sm:$0xff]
        %v3406 = vld [vmem:[%s2634 + $0xa] sm:$0xff]
        %v3407 = vld [vmem:[%s2634 + $0x1a] sm:$0xff]
        %v3408 = vld [vmem:[%s2634 + $0x22] sm:$0xff]
        %v3409 = vld [vmem:[%s2634 + $0x32] sm:$0xff]
        %v3410 = vld [vmem:[%s2634 + $0x3a] sm:$0xff]
        %v3411 = vld [vmem:[%s2634 + $0x4a] sm:$0xff]
        %v3412 = vld [vmem:[%s2634 + $0x52] sm:$0xff]
        %v3413 = vld [vmem:[%s2634 + $0x62] sm:$0xff]
        %v3414 = vld [vmem:[%s2634 + $0x6a] sm:$0xff]
        %v3415 = vld [vmem:[%s2634 + $0x7a] sm:$0xff]
        %v3416 = vld [vmem:[%s2634 + $0x82] sm:$0xff]
        %v3417 = vld [vmem:[%s2634 + $0x92] sm:$0xff]
        %v3418 = vld [vmem:[%s2634 + $0x9a] sm:$0xff]
        %v3419 = vld [vmem:[%s2634 + $0xaa] sm:$0xff]
        %v3420 = vld [vmem:[%s2634 + $0xb2] sm:$0xff]
        %v3421 = vld [vmem:[%s2634 + $0xc2] sm:$0xff]
        %v3422 = vld [vmem:[%s2634 + $0xca] sm:$0xff]
        %v3423 = vld [vmem:[%s2634 + $0xda] sm:$0xff]
        %v3424 = vld [vmem:[%s2634 + $0xe2] sm:$0xff]
        %v3425 = vld [vmem:[%s2634 + $0xf2] sm:$0xff]
        %v3426 = vld [vmem:[%s2634 + $0xfa] sm:$0xff]
        %v3427 = vld [vmem:[%s2634 + $0x10a] sm:$0xff]
        %v3428 = vld [vmem:[%s2634 + $0x112] sm:$0xff]
        %v3429 = vld [vmem:[%s2634 + $0x122] sm:$0xff]
        %v3430 = vld [vmem:[%s2634 + $0x12a] sm:$0xff]
        %v3431 = vld [vmem:[%s2634 + $0x13a] sm:$0xff]
        %v3432 = vld [vmem:[%s2634 + $0x142] sm:$0xff]
        %v3433 = vld [vmem:[%s2634 + $0x152] sm:$0xff]
        %v3434 = vld [vmem:[%s2634 + $0x15a] sm:$0xff]
        %v3435 = vld [vmem:[%s2634 + $0x16a] sm:$0xff]
        %v3436 = vld [vmem:[%s2634 + $0x172] sm:$0xff]
        %v3437 = vld [vmem:[%s2634 + $0x1b2] sm:$0xff]
        %v3438 = vld [vmem:[%s2634 + $0x1ba] sm:$0xff]
        %v3439 = vld [vmem:[%s2634 + $0x1ca] sm:$0xff]
        %v3440 = vld [vmem:[%s2634 + $0x1d2] sm:$0xff]
        %v3441 = vld [vmem:[%s2634 + $0x1e2] sm:$0xff]
        %v3442 = vld [vmem:[%s2634 + $0x1ea] sm:$0xff]
        %v3443 = vld [vmem:[%s2634 + $0x1fa] sm:$0xff]
        %v3444 = vld [vmem:[%s2634 + $0x202] sm:$0xff]
        %v3445 = vld [vmem:[%s2634 + $0x212] sm:$0xff]
        %v3446 = vld [vmem:[%s2634 + $0x21a] sm:$0xff]
        %v3447 = vld [vmem:[%s2634 + $0x22a] sm:$0xff]
        %v3448 = vld [vmem:[%s2634 + $0x232] sm:$0xff]
        %v3449 = vld [vmem:[%s2634 + $0x242] sm:$0xff]
        %v3450 = vld [vmem:[%s2634 + $0x24a] sm:$0xff]
        %v3451 = vld [vmem:[%s2634 + $0x25a] sm:$0xff]
        %v3452 = vld [vmem:[%s2634 + $0x262] sm:$0xff]
        %v3453 = vld [vmem:[%s2634 + $0x272] sm:$0xff]
        %v3454 = vld [vmem:[%s2634 + $0x27a] sm:$0xff]
        %v3455 = vld [vmem:[%s2634 + $0x28a] sm:$0xff]
        %v3456 = vld [vmem:[%s2634 + $0x292] sm:$0xff]
        %v3457 = vld [vmem:[%s2634 + $0x2a2] sm:$0xff]
        %v3458 = vld [vmem:[%s2634 + $0x2aa] sm:$0xff]
        %v3459 = vld [vmem:[%s2634 + $0x2ba] sm:$0xff]
        %v3460 = vld [vmem:[%s2634 + $0x2c2] sm:$0xff]
        %v3461 = vld [vmem:[%s2634 + $0x2d2] sm:$0xff]
        %v3462 = vld [vmem:[%s2634 + $0x2da] sm:$0xff]
        %v3463 = vld [vmem:[%s2634 + $0x2ea] sm:$0xff]
        %v3464 = vld [vmem:[%s2634 + $0x2f2] sm:$0xff]
        %v3465 = vld [vmem:[%s2634 + $0x302] sm:$0xff]
        %v3466 = vld [vmem:[%s2634 + $0x30a] sm:$0xff]
        %v3467 = vld [vmem:[%s2634 + $0x31a] sm:$0xff]
        %v3468 = vld [vmem:[%s2634 + $0x322] sm:$0xff]
        %3533 = vrot.lane.b32.xlu0 %v3405, 32
        %v3534 = vpop.permute.xlu0 %3533
        %3535 = vrot.lane.b32.xlu0 %v3406, 32
        %v3536 = vpop.permute.xlu0 %3535
        %3537 = vrot.lane.b32.xlu0 %v3407, 32
        %v3538 = vpop.permute.xlu0 %3537
        %3539 = vrot.lane.b32.xlu0 %v3408, 32
        %v3540 = vpop.permute.xlu0 %3539
        %3541 = vrot.lane.b32.xlu0 %v3409, 32
        %v3542 = vpop.permute.xlu0 %3541
        %3543 = vrot.lane.b32.xlu0 %v3410, 32
        %v3544 = vpop.permute.xlu0 %3543
        %3545 = vrot.lane.b32.xlu0 %v3411, 32
        %v3546 = vpop.permute.xlu0 %3545
        %3547 = vrot.lane.b32.xlu0 %v3412, 32
        %v3548 = vpop.permute.xlu0 %3547
        %3549 = vrot.lane.b32.xlu0 %v3413, 32
        %v3550 = vpop.permute.xlu0 %3549
        %3551 = vrot.lane.b32.xlu0 %v3414, 32
        %v3552 = vpop.permute.xlu0 %3551
        %3553 = vrot.lane.b32.xlu0 %v3415, 32
        %v3554 = vpop.permute.xlu0 %3553
        %3555 = vrot.lane.b32.xlu0 %v3416, 32
        %v3556 = vpop.permute.xlu0 %3555
        %3557 = vrot.lane.b32.xlu0 %v3417, 32
        %v3558 = vpop.permute.xlu0 %3557
        %3559 = vrot.lane.b32.xlu0 %v3418, 32
        %v3560 = vpop.permute.xlu0 %3559
        %3561 = vrot.lane.b32.xlu0 %v3419, 32
        %v3562 = vpop.permute.xlu0 %3561
        %3563 = vrot.lane.b32.xlu0 %v3420, 32
        %v3564 = vpop.permute.xlu0 %3563
        %3565 = vrot.lane.b32.xlu0 %v3421, 32
        %v3566 = vpop.permute.xlu0 %3565
        %3567 = vrot.lane.b32.xlu0 %v3422, 32
        %v3568 = vpop.permute.xlu0 %3567
        %3569 = vrot.lane.b32.xlu0 %v3423, 32
        %v3570 = vpop.permute.xlu0 %3569
        %3571 = vrot.lane.b32.xlu0 %v3424, 32
        %v3572 = vpop.permute.xlu0 %3571
        %3573 = vrot.lane.b32.xlu0 %v3425, 32
        %v3574 = vpop.permute.xlu0 %3573
        %3575 = vrot.lane.b32.xlu0 %v3426, 32
        %v3576 = vpop.permute.xlu0 %3575
        %3577 = vrot.lane.b32.xlu0 %v3427, 32
        %v3578 = vpop.permute.xlu0 %3577
        %3579 = vrot.lane.b32.xlu0 %v3428, 32
        %v3580 = vpop.permute.xlu0 %3579
        %3581 = vrot.lane.b32.xlu0 %v3429, 32
        %v3582 = vpop.permute.xlu0 %3581
        %3583 = vrot.lane.b32.xlu0 %v3430, 32
        %v3584 = vpop.permute.xlu0 %3583
        %3585 = vrot.lane.b32.xlu0 %v3431, 32
        %v3586 = vpop.permute.xlu0 %3585
        %3587 = vrot.lane.b32.xlu0 %v3432, 32
        %v3588 = vpop.permute.xlu0 %3587
        %3589 = vrot.lane.b32.xlu0 %v3433, 32
        %v3590 = vpop.permute.xlu0 %3589
        %3591 = vrot.lane.b32.xlu0 %v3434, 32
        %v3592 = vpop.permute.xlu0 %3591
        %3593 = vrot.lane.b32.xlu0 %v3435, 32
        %v3594 = vpop.permute.xlu0 %3593
        %3595 = vrot.lane.b32.xlu0 %v3436, 32
        %v3596 = vpop.permute.xlu0 %3595
        %3597 = vrot.lane.b32.xlu0 %v3437, 32
        %v3598 = vpop.permute.xlu0 %3597
        %3599 = vrot.lane.b32.xlu0 %v3438, 32
        %v3600 = vpop.permute.xlu0 %3599
        %3601 = vrot.lane.b32.xlu0 %v3439, 32
        %v3602 = vpop.permute.xlu0 %3601
        %3603 = vrot.lane.b32.xlu0 %v3440, 32
        %v3604 = vpop.permute.xlu0 %3603
        %3605 = vrot.lane.b32.xlu0 %v3441, 32
        %v3606 = vpop.permute.xlu0 %3605
        %3607 = vrot.lane.b32.xlu0 %v3442, 32
        %v3608 = vpop.permute.xlu0 %3607
        %3609 = vrot.lane.b32.xlu0 %v3443, 32
        %v3610 = vpop.permute.xlu0 %3609
        %3611 = vrot.lane.b32.xlu0 %v3444, 32
        %v3612 = vpop.permute.xlu0 %3611
        %3613 = vrot.lane.b32.xlu0 %v3445, 32
        %v3614 = vpop.permute.xlu0 %3613
        %3615 = vrot.lane.b32.xlu0 %v3446, 32
        %v3616 = vpop.permute.xlu0 %3615
        %3617 = vrot.lane.b32.xlu0 %v3447, 32
        %v3618 = vpop.permute.xlu0 %3617
        %3619 = vrot.lane.b32.xlu0 %v3448, 32
        %v3620 = vpop.permute.xlu0 %3619
        %3621 = vrot.lane.b32.xlu0 %v3449, 32
        %v3622 = vpop.permute.xlu0 %3621
        %3623 = vrot.lane.b32.xlu0 %v3450, 32
        %v3624 = vpop.permute.xlu0 %3623
        %3625 = vrot.lane.b32.xlu0 %v3451, 32
        %v3626 = vpop.permute.xlu0 %3625
        %3627 = vrot.lane.b32.xlu0 %v3452, 32
        %v3628 = vpop.permute.xlu0 %3627
        %3629 = vrot.lane.b32.xlu0 %v3453, 32
        %v3630 = vpop.permute.xlu0 %3629
        %3631 = vrot.lane.b32.xlu0 %v3454, 32
        %v3632 = vpop.permute.xlu0 %3631
        %3633 = vrot.lane.b32.xlu0 %v3455, 32
        %v3634 = vpop.permute.xlu0 %3633
        %3635 = vrot.lane.b32.xlu0 %v3456, 32
        %v3636 = vpop.permute.xlu0 %3635
        %3637 = vrot.lane.b32.xlu0 %v3457, 32
        %v3638 = vpop.permute.xlu0 %3637
        %3639 = vrot.lane.b32.xlu0 %v3458, 32
        %v3640 = vpop.permute.xlu0 %3639
        %3641 = vrot.lane.b32.xlu0 %v3459, 32
        %v3642 = vpop.permute.xlu0 %3641
        %3643 = vrot.lane.b32.xlu0 %v3460, 32
        %v3644 = vpop.permute.xlu0 %3643
        %3645 = vrot.lane.b32.xlu0 %v3461, 32
        %v3646 = vpop.permute.xlu0 %3645
        %3647 = vrot.lane.b32.xlu0 %v3462, 32
        %v3648 = vpop.permute.xlu0 %3647
        %3649 = vrot.lane.b32.xlu0 %v3463, 32
        %v3650 = vpop.permute.xlu0 %3649
        %3651 = vrot.lane.b32.xlu0 %v3464, 32
        %v3652 = vpop.permute.xlu0 %3651
        %3653 = vrot.lane.b32.xlu0 %v3465, 32
        %v3654 = vpop.permute.xlu0 %3653
        %3655 = vrot.lane.b32.xlu0 %v3466, 32
        %v3656 = vpop.permute.xlu0 %3655
        %3657 = vrot.lane.b32.xlu0 %v3467, 32
        %v3658 = vpop.permute.xlu0 %3657
        %3659 = vrot.lane.b32.xlu0 %v3468, 32
        %v3660 = vpop.permute.xlu0 %3659
        %vm3725 = vcmask 294144
        %3726 = vst.msk [vmem:[#allocation3] sm:$0xff] %vm3725, %v3534
        %3727 = vst.msk [vmem:[#allocation3 + $0x8] sm:$0xff] %vm3725, %v3536
        %3728 = vst.msk [vmem:[#allocation3 + $0x10] sm:$0xff] %vm3725, %v3538
        %3729 = vst.msk [vmem:[#allocation3 + $0x18] sm:$0xff] %vm3725, %v3540
        %3730 = vst.msk [vmem:[#allocation3 + $0x20] sm:$0xff] %vm3725, %v3542
        %3731 = vst.msk [vmem:[#allocation3 + $0x28] sm:$0xff] %vm3725, %v3544
        %3732 = vst.msk [vmem:[#allocation3 + $0x30] sm:$0xff] %vm3725, %v3546
        %3733 = vst.msk [vmem:[#allocation3 + $0x38] sm:$0xff] %vm3725, %v3548
        %3734 = vst.msk [vmem:[#allocation3 + $0x40] sm:$0xff] %vm3725, %v3550
        %3735 = vst.msk [vmem:[#allocation3 + $0x48] sm:$0xff] %vm3725, %v3552
        %3736 = vst.msk [vmem:[#allocation3 + $0x50] sm:$0xff] %vm3725, %v3554
        %3737 = vst.msk [vmem:[#allocation3 + $0x58] sm:$0xff] %vm3725, %v3556
        %3738 = vst.msk [vmem:[#allocation3 + $0x60] sm:$0xff] %vm3725, %v3558
        %3739 = vst.msk [vmem:[#allocation3 + $0x68] sm:$0xff] %vm3725, %v3560
        %3740 = vst.msk [vmem:[#allocation3 + $0x70] sm:$0xff] %vm3725, %v3562
        %3741 = vst.msk [vmem:[#allocation3 + $0x78] sm:$0xff] %vm3725, %v3564
        %3742 = vst.msk [vmem:[#allocation3 + $0x80] sm:$0xff] %vm3725, %v3566
        %3743 = vst.msk [vmem:[#allocation3 + $0x88] sm:$0xff] %vm3725, %v3568
        %3744 = vst.msk [vmem:[#allocation3 + $0x90] sm:$0xff] %vm3725, %v3570
        %3745 = vst.msk [vmem:[#allocation3 + $0x98] sm:$0xff] %vm3725, %v3572
        %3746 = vst.msk [vmem:[#allocation3 + $0xa0] sm:$0xff] %vm3725, %v3574
        %3747 = vst.msk [vmem:[#allocation3 + $0xa8] sm:$0xff] %vm3725, %v3576
        %3748 = vst.msk [vmem:[#allocation3 + $0xb0] sm:$0xff] %vm3725, %v3578
        %3749 = vst.msk [vmem:[#allocation3 + $0xb8] sm:$0xff] %vm3725, %v3580
        %3750 = vst.msk [vmem:[#allocation3 + $0xc0] sm:$0xff] %vm3725, %v3582
        %3751 = vst.msk [vmem:[#allocation3 + $0xc8] sm:$0xff] %vm3725, %v3584
        %3752 = vst.msk [vmem:[#allocation3 + $0xd0] sm:$0xff] %vm3725, %v3586
        %3753 = vst.msk [vmem:[#allocation3 + $0xd8] sm:$0xff] %vm3725, %v3588
        %3754 = vst.msk [vmem:[#allocation3 + $0xe0] sm:$0xff] %vm3725, %v3590
        %3755 = vst.msk [vmem:[#allocation3 + $0xe8] sm:$0xff] %vm3725, %v3592
        %3756 = vst.msk [vmem:[#allocation3 + $0xf0] sm:$0xff] %vm3725, %v3594
        %3757 = vst.msk [vmem:[#allocation3 + $0xf8] sm:$0xff] %vm3725, %v3596
        %3758 = vst.msk [vmem:[#allocation3 + $0x100] sm:$0xff] %vm3725, %v3598
        %3759 = vst.msk [vmem:[#allocation3 + $0x108] sm:$0xff] %vm3725, %v3600
        %3760 = vst.msk [vmem:[#allocation3 + $0x110] sm:$0xff] %vm3725, %v3602
        %3761 = vst.msk [vmem:[#allocation3 + $0x118] sm:$0xff] %vm3725, %v3604
        %3762 = vst.msk [vmem:[#allocation3 + $0x120] sm:$0xff] %vm3725, %v3606
        %3763 = vst.msk [vmem:[#allocation3 + $0x128] sm:$0xff] %vm3725, %v3608
        %3764 = vst.msk [vmem:[#allocation3 + $0x130] sm:$0xff] %vm3725, %v3610
        %3765 = vst.msk [vmem:[#allocation3 + $0x138] sm:$0xff] %vm3725, %v3612
        %3766 = vst.msk [vmem:[#allocation3 + $0x140] sm:$0xff] %vm3725, %v3614
        %3767 = vst.msk [vmem:[#allocation3 + $0x148] sm:$0xff] %vm3725, %v3616
        %3768 = vst.msk [vmem:[#allocation3 + $0x150] sm:$0xff] %vm3725, %v3618
        %3769 = vst.msk [vmem:[#allocation3 + $0x158] sm:$0xff] %vm3725, %v3620
        %3770 = vst.msk [vmem:[#allocation3 + $0x160] sm:$0xff] %vm3725, %v3622
        %3771 = vst.msk [vmem:[#allocation3 + $0x168] sm:$0xff] %vm3725, %v3624
        %3772 = vst.msk [vmem:[#allocation3 + $0x170] sm:$0xff] %vm3725, %v3626
        %3773 = vst.msk [vmem:[#allocation3 + $0x178] sm:$0xff] %vm3725, %v3628
        %3774 = vst.msk [vmem:[#allocation3 + $0x180] sm:$0xff] %vm3725, %v3630
        %3775 = vst.msk [vmem:[#allocation3 + $0x188] sm:$0xff] %vm3725, %v3632
        %3776 = vst.msk [vmem:[#allocation3 + $0x190] sm:$0xff] %vm3725, %v3634
        %3777 = vst.msk [vmem:[#allocation3 + $0x198] sm:$0xff] %vm3725, %v3636
        %3778 = vst.msk [vmem:[#allocation3 + $0x1a0] sm:$0xff] %vm3725, %v3638
        %3779 = vst.msk [vmem:[#allocation3 + $0x1a8] sm:$0xff] %vm3725, %v3640
        %3780 = vst.msk [vmem:[#allocation3 + $0x1b0] sm:$0xff] %vm3725, %v3642
        %3781 = vst.msk [vmem:[#allocation3 + $0x1b8] sm:$0xff] %vm3725, %v3644
        %3782 = vst.msk [vmem:[#allocation3 + $0x1c0] sm:$0xff] %vm3725, %v3646
        %3783 = vst.msk [vmem:[#allocation3 + $0x1c8] sm:$0xff] %vm3725, %v3648
        %3784 = vst.msk [vmem:[#allocation3 + $0x1d0] sm:$0xff] %vm3725, %v3650
        %3785 = vst.msk [vmem:[#allocation3 + $0x1d8] sm:$0xff] %vm3725, %v3652
        %3786 = vst.msk [vmem:[#allocation3 + $0x1e0] sm:$0xff] %vm3725, %v3654
        %3787 = vst.msk [vmem:[#allocation3 + $0x1e8] sm:$0xff] %vm3725, %v3656
        %3788 = vst.msk [vmem:[#allocation3 + $0x1f0] sm:$0xff] %vm3725, %v3658
        %3789 = vst.msk [vmem:[#allocation3 + $0x1f8] sm:$0xff] %vm3725, %v3660
        %v3790 = vld [vmem:[#allocation3] sm:$0xff]
        %v3791 = vld [vmem:[#allocation3 + $0x8] sm:$0xff]
        %v3792 = vld [vmem:[#allocation3 + $0x10] sm:$0xff]
        %v3793 = vld [vmem:[#allocation3 + $0x18] sm:$0xff]
        %v3794 = vld [vmem:[#allocation3 + $0x20] sm:$0xff]
        %v3795 = vld [vmem:[#allocation3 + $0x28] sm:$0xff]
        %v3796 = vld [vmem:[#allocation3 + $0x30] sm:$0xff]
        %v3797 = vld [vmem:[#allocation3 + $0x38] sm:$0xff]
        %v3798 = vld [vmem:[#allocation3 + $0x40] sm:$0xff]
        %v3799 = vld [vmem:[#allocation3 + $0x48] sm:$0xff]
        %v3800 = vld [vmem:[#allocation3 + $0x50] sm:$0xff]
        %v3801 = vld [vmem:[#allocation3 + $0x58] sm:$0xff]
        %v3802 = vld [vmem:[#allocation3 + $0x60] sm:$0xff]
        %v3803 = vld [vmem:[#allocation3 + $0x68] sm:$0xff]
        %v3804 = vld [vmem:[#allocation3 + $0x70] sm:$0xff]
        %v3805 = vld [vmem:[#allocation3 + $0x78] sm:$0xff]
        %v3806 = vld [vmem:[#allocation3 + $0x80] sm:$0xff]
        %v3807 = vld [vmem:[#allocation3 + $0x88] sm:$0xff]
        %v3808 = vld [vmem:[#allocation3 + $0x90] sm:$0xff]
        %v3809 = vld [vmem:[#allocation3 + $0x98] sm:$0xff]
        %v3810 = vld [vmem:[#allocation3 + $0xa0] sm:$0xff]
        %v3811 = vld [vmem:[#allocation3 + $0xa8] sm:$0xff]
        %v3812 = vld [vmem:[#allocation3 + $0xb0] sm:$0xff]
        %v3813 = vld [vmem:[#allocation3 + $0xb8] sm:$0xff]
        %v3814 = vld [vmem:[#allocation3 + $0xc0] sm:$0xff]
        %v3815 = vld [vmem:[#allocation3 + $0xc8] sm:$0xff]
        %v3816 = vld [vmem:[#allocation3 + $0xd0] sm:$0xff]
        %v3817 = vld [vmem:[#allocation3 + $0xd8] sm:$0xff]
        %v3818 = vld [vmem:[#allocation3 + $0xe0] sm:$0xff]
        %v3819 = vld [vmem:[#allocation3 + $0xe8] sm:$0xff]
        %v3820 = vld [vmem:[#allocation3 + $0xf0] sm:$0xff]
        %v3821 = vld [vmem:[#allocation3 + $0xf8] sm:$0xff]
        %v3822 = vld [vmem:[#allocation3 + $0x100] sm:$0xff]
        %v3823 = vld [vmem:[#allocation3 + $0x108] sm:$0xff]
        %v3824 = vld [vmem:[#allocation3 + $0x110] sm:$0xff]
        %v3825 = vld [vmem:[#allocation3 + $0x118] sm:$0xff]
        %v3826 = vld [vmem:[#allocation3 + $0x120] sm:$0xff]
        %v3827 = vld [vmem:[#allocation3 + $0x128] sm:$0xff]
        %v3828 = vld [vmem:[#allocation3 + $0x130] sm:$0xff]
        %v3829 = vld [vmem:[#allocation3 + $0x138] sm:$0xff]
        %v3830 = vld [vmem:[#allocation3 + $0x140] sm:$0xff]
        %v3831 = vld [vmem:[#allocation3 + $0x148] sm:$0xff]
        %v3832 = vld [vmem:[#allocation3 + $0x150] sm:$0xff]
        %v3833 = vld [vmem:[#allocation3 + $0x158] sm:$0xff]
        %v3834 = vld [vmem:[#allocation3 + $0x160] sm:$0xff]
        %v3835 = vld [vmem:[#allocation3 + $0x168] sm:$0xff]
        %v3836 = vld [vmem:[#allocation3 + $0x170] sm:$0xff]
        %v3837 = vld [vmem:[#allocation3 + $0x178] sm:$0xff]
        %v3838 = vld [vmem:[#allocation3 + $0x180] sm:$0xff]
        %v3839 = vld [vmem:[#allocation3 + $0x188] sm:$0xff]
        %v3840 = vld [vmem:[#allocation3 + $0x190] sm:$0xff]
        %v3841 = vld [vmem:[#allocation3 + $0x198] sm:$0xff]
        %v3842 = vld [vmem:[#allocation3 + $0x1a0] sm:$0xff]
        %v3843 = vld [vmem:[#allocation3 + $0x1a8] sm:$0xff]
        %v3844 = vld [vmem:[#allocation3 + $0x1b0] sm:$0xff]
        %v3845 = vld [vmem:[#allocation3 + $0x1b8] sm:$0xff]
        %v3846 = vld [vmem:[#allocation3 + $0x1c0] sm:$0xff]
        %v3847 = vld [vmem:[#allocation3 + $0x1c8] sm:$0xff]
        %v3848 = vld [vmem:[#allocation3 + $0x1d0] sm:$0xff]
        %v3849 = vld [vmem:[#allocation3 + $0x1d8] sm:$0xff]
        %v3850 = vld [vmem:[#allocation3 + $0x1e0] sm:$0xff]
        %v3851 = vld [vmem:[#allocation3 + $0x1e8] sm:$0xff]
        %v3852 = vld [vmem:[#allocation3 + $0x1f0] sm:$0xff]
        %v3853 = vld [vmem:[#allocation3 + $0x1f8] sm:$0xff]
        %v3854 = vld [vmem:[%s283] sm:$0xff]
        %v3855 = vld [vmem:[%s283 + $0x8] sm:$0xff]
        %v3856 = vld [vmem:[%s283 + $0x10] sm:$0xff]
        %v3857 = vld [vmem:[%s283 + $0x18] sm:$0xff]
        %v3858 = vld [vmem:[%s283 + $0x20] sm:$0xf]
        %v3859 = vld [vmem:[%s286] sm:$0x1]
        %v3861 = vlaneseq
        %v3862 = vshrl.u32 %v3861, 7
        %v3863 = vsub.s32 0, %v3862
        %v3864 = vrot.slane %v3859, %v3863
        %vm3866 = vcmask 293888
        %v3868 = vsel %vm3866, %v3790, 0
        %v3871 = vsel %vm3866, %v3791, 0
        %v3874 = vsel %vm3866, %v3792, 0
        %v3877 = vsel %vm3866, %v3793, 0
        %v3880 = vsel %vm3866, %v3794, 0
        %v3883 = vsel %vm3866, %v3795, 0
        %v3886 = vsel %vm3866, %v3796, 0
        %v3889 = vsel %vm3866, %v3797, 0
        %v3892 = vsel %vm3866, %v3798, 0
        %v3895 = vsel %vm3866, %v3799, 0
        %v3898 = vsel %vm3866, %v3800, 0
        %v3901 = vsel %vm3866, %v3801, 0
        %v3904 = vsel %vm3866, %v3802, 0
        %v3907 = vsel %vm3866, %v3803, 0
        %v3910 = vsel %vm3866, %v3804, 0
        %v3913 = vsel %vm3866, %v3805, 0
        %v3916 = vsel %vm3866, %v3806, 0
        %v3919 = vsel %vm3866, %v3807, 0
        %v3922 = vsel %vm3866, %v3808, 0
        %v3925 = vsel %vm3866, %v3809, 0
        %v3928 = vsel %vm3866, %v3810, 0
        %v3931 = vsel %vm3866, %v3811, 0
        %v3934 = vsel %vm3866, %v3812, 0
        %v3937 = vsel %vm3866, %v3813, 0
        %v3940 = vsel %vm3866, %v3814, 0
        %v3943 = vsel %vm3866, %v3815, 0
        %v3946 = vsel %vm3866, %v3816, 0
        %v3949 = vsel %vm3866, %v3817, 0
        %v3952 = vsel %vm3866, %v3818, 0
        %v3955 = vsel %vm3866, %v3819, 0
        %v3958 = vsel %vm3866, %v3820, 0
        %v3961 = vsel %vm3866, %v3821, 0
        %v3964 = vsel %vm3866, %v3822, 0
        %v3967 = vsel %vm3866, %v3823, 0
        %v3970 = vsel %vm3866, %v3824, 0
        %v3973 = vsel %vm3866, %v3825, 0
        %v3976 = vsel %vm3866, %v3826, 0
        %v3979 = vsel %vm3866, %v3827, 0
        %v3982 = vsel %vm3866, %v3828, 0
        %v3985 = vsel %vm3866, %v3829, 0
        %v3988 = vsel %vm3866, %v3830, 0
        %v3991 = vsel %vm3866, %v3831, 0
        %v3994 = vsel %vm3866, %v3832, 0
        %v3997 = vsel %vm3866, %v3833, 0
        %v4000 = vsel %vm3866, %v3834, 0
        %v4003 = vsel %vm3866, %v3835, 0
        %v4006 = vsel %vm3866, %v3836, 0
        %v4009 = vsel %vm3866, %v3837, 0
        %v4012 = vsel %vm3866, %v3838, 0
        %v4015 = vsel %vm3866, %v3839, 0
        %v4018 = vsel %vm3866, %v3840, 0
        %v4021 = vsel %vm3866, %v3841, 0
        %v4024 = vsel %vm3866, %v3842, 0
        %v4027 = vsel %vm3866, %v3843, 0
        %v4030 = vsel %vm3866, %v3844, 0
        %v4033 = vsel %vm3866, %v3845, 0
        %v4036 = vsel %vm3866, %v3846, 0
        %v4039 = vsel %vm3866, %v3847, 0
        %v4042 = vsel %vm3866, %v3848, 0
        %v4045 = vsel %vm3866, %v3849, 0
        %v4048 = vsel %vm3866, %v3850, 0
        %v4051 = vsel %vm3866, %v3851, 0
        %v4054 = vsel %vm3866, %v3852, 0
        %v4057 = vsel %vm3866, %v3853, 0
        %vm4059 = vcmask 1043456
        %v4061 = vsel %vm4059, %v3858, 0
        %4063 = vmatprep.subr.mxu0 0.0
        %4064 = vmatpush1.msra.mxu0 %v3854
        %4065 = vmatprep.subr.mxu0 0.0
        %4066 = vmatpush1.msra.mxu0 %v3855
        %4067 = vmatprep.subr.mxu0 0.0
        %4068 = vmatpush1.msra.mxu0 %v3856
        %4069 = vmatprep.subr.mxu0 0.0
        %4070 = vmatpush1.msra.mxu0 %v3857
        %4071 = vmatprep.subr.mxu0 0.0
        %4072 = vmatpush1.msra.mxu0 %v4061
        %4073 = vmatprep.subr.mxu0 0.0
        %4074 = vmatpush1.msra.mxu0 0.0
        %4075 = vmatprep.subr.mxu0 0.0
        %4076 = vmatpush1.msra.mxu0 0.0
        %4077 = vmatprep.subr.mxu0 0.0
        %4078 = vmatpush1.msra.mxu0 0.0
        %4079 = vmatprep.subr.mxu0 0.0
        %4080 = vmatpush1.msra.mxu0 0.0
        %4081 = vmatprep.subr.mxu0 0.0
        %4082 = vmatpush1.msra.mxu0 0.0
        %4083 = vmatprep.subr.mxu0 0.0
        %4084 = vmatpush1.msra.mxu0 0.0
        %4085 = vmatprep.subr.mxu0 0.0
        %4086 = vmatpush1.msra.mxu0 0.0
        %4087 = vmatprep.subr.mxu0 0.0
        %4088 = vmatpush1.msra.mxu0 0.0
        %4089 = vmatprep.subr.mxu0 0.0
        %4090 = vmatpush1.msra.mxu0 0.0
        %4091 = vmatprep.subr.mxu0 0.0
        %4092 = vmatpush1.msra.mxu0 0.0
        %4093 = vmatprep.subr.mxu0 0.0
        %4094 = vmatpush1.msra.mxu0 0.0
        %4095 = vmatprep.subr.mxu0 0.0
        %4096 = vmatpush1.msra.mxu0 0.0
        %4097 = vmatprep.subr.mxu0 0.0
        %4098 = vmatpush1.msra.mxu0 0.0
        %4099 = vmatprep.subr.mxu0 0.0
        %4100 = vmatpush1.msra.mxu0 0.0
        %4101 = vmatprep.subr.mxu0 0.0
        %4102 = vmatpush1.msra.mxu0 0.0
        %4103 = vmatprep.subr.mxu0 0.0
        %4104 = vmatpush1.msra.mxu0 0.0
        %4105 = vmatprep.subr.mxu0 0.0
        %4106 = vmatpush1.msra.mxu0 0.0
        %4107 = vmatprep.subr.mxu0 0.0
        %4108 = vmatpush1.msra.mxu0 0.0
        %4109 = vmatprep.subr.mxu0 0.0
        %4110 = vmatpush1.msra.mxu0 0.0
        %4111 = vmatprep.subr.mxu0 0.0
        %4112 = vmatpush1.msra.mxu0 0.0
        %4113 = vmatprep.subr.mxu0 0.0
        %4114 = vmatpush1.msra.mxu0 0.0
        %4115 = vmatprep.subr.mxu0 0.0
        %4116 = vmatpush1.msra.mxu0 0.0
        %4117 = vmatprep.subr.mxu0 0.0
        %4118 = vmatpush1.msra.mxu0 0.0
        %4119 = vmatprep.subr.mxu0 0.0
        %4120 = vmatpush1.msra.mxu0 0.0
        %4121 = vmatprep.subr.mxu0 0.0
        %4122 = vmatpush1.msra.mxu0 0.0
        %4123 = vmatprep.subr.mxu0 0.0
        %4124 = vmatpush1.msra.mxu0 0.0
        %4125 = vmatprep.subr.mxu0 0.0
        %4126 = vmatpush1.msra.mxu0 0.0
        %4127 = vmatprep.mubr.f32.mxu0 0.0
        %4128 = vmatmul.mubr.f32.gmra.mrb[0].mxu0 %v3868
        %v4129 = vpop.f32.mrb[0].mxu0
        %v4130 = vadd.f32 %v3864, %v4129
        %v4131 = vpop.f32.mrb[0].mxu0
        %4132 = vmatprep.mubr.f32.mxu0 0.0
        %4133 = vmatmul.mubr.f32.gmra.mrb[0].mxu0 %v3871
        %v4134 = vpop.f32.mrb[0].mxu0
        %v4135 = vadd.f32 %v3864, %v4134
        %v4136 = vpop.f32.mrb[0].mxu0
        %4137 = vmatprep.mubr.f32.mxu0 0.0
        %4138 = vmatmul.mubr.f32.gmra.mrb[0].mxu0 %v3874
        %v4139 = vpop.f32.mrb[0].mxu0
        %v4140 = vadd.f32 %v3864, %v4139
        %v4141 = vpop.f32.mrb[0].mxu0
        %4142 = vmatprep.mubr.f32.mxu0 0.0
        %4143 = vmatmul.mubr.f32.gmra.mrb[0].mxu0 %v3877
        %v4144 = vpop.f32.mrb[0].mxu0
        %v4145 = vadd.f32 %v3864, %v4144
        %v4146 = vpop.f32.mrb[0].mxu0
        %4147 = vmatprep.mubr.f32.mxu0 0.0
        %4148 = vmatmul.mubr.f32.gmra.mrb[0].mxu0 %v3880
        %v4149 = vpop.f32.mrb[0].mxu0
        %v4150 = vadd.f32 %v3864, %v4149
        %v4151 = vpop.f32.mrb[0].mxu0
        %4152 = vmatprep.mubr.f32.mxu0 0.0
        %4153 = vmatmul.mubr.f32.gmra.mrb[0].mxu0 %v3883
        %v4154 = vpop.f32.mrb[0].mxu0
        %v4155 = vadd.f32 %v3864, %v4154
        %v4156 = vpop.f32.mrb[0].mxu0
        %4157 = vmatprep.mubr.f32.mxu0 0.0
        %4158 = vmatmul.mubr.f32.gmra.mrb[0].mxu0 %v3886
        %v4159 = vpop.f32.mrb[0].mxu0
        %v4160 = vadd.f32 %v3864, %v4159
        %v4161 = vpop.f32.mrb[0].mxu0
        %4162 = vmatprep.mubr.f32.mxu0 0.0
        %4163 = vmatmul.mubr.f32.gmra.mrb[0].mxu0 %v3889
        %v4164 = vpop.f32.mrb[0].mxu0
        %v4165 = vadd.f32 %v3864, %v4164
        %v4166 = vpop.f32.mrb[0].mxu0
        %4167 = vmatprep.mubr.f32.mxu0 0.0
        %4168 = vmatmul.mubr.f32.gmra.mrb[0].mxu0 %v3892
        %v4169 = vpop.f32.mrb[0].mxu0
        %v4170 = vadd.f32 %v3864, %v4169
        %v4171 = vpop.f32.mrb[0].mxu0
        %4172 = vmatprep.mubr.f32.mxu0 0.0
        %4173 = vmatmul.mubr.f32.gmra.mrb[0].mxu0 %v3895
        %v4174 = vpop.f32.mrb[0].mxu0
        %v4175 = vadd.f32 %v3864, %v4174
        %v4176 = vpop.f32.mrb[0].mxu0
        %4177 = vmatprep.mubr.f32.mxu0 0.0
        %4178 = vmatmul.mubr.f32.gmra.mrb[0].mxu0 %v3898
        %v4179 = vpop.f32.mrb[0].mxu0
        %v4180 = vadd.f32 %v3864, %v4179
        %v4181 = vpop.f32.mrb[0].mxu0
        %4182 = vmatprep.mubr.f32.mxu0 0.0
        %4183 = vmatmul.mubr.f32.gmra.mrb[0].mxu0 %v3901
        %v4184 = vpop.f32.mrb[0].mxu0
        %v4185 = vadd.f32 %v3864, %v4184
        %v4186 = vpop.f32.mrb[0].mxu0
        %4187 = vmatprep.mubr.f32.mxu0 0.0
        %4188 = vmatmul.mubr.f32.gmra.mrb[0].mxu0 %v3904
        %v4189 = vpop.f32.mrb[0].mxu0
        %v4190 = vadd.f32 %v3864, %v4189
        %v4191 = vpop.f32.mrb[0].mxu0
        %4192 = vmatprep.mubr.f32.mxu0 0.0
        %4193 = vmatmul.mubr.f32.gmra.mrb[0].mxu0 %v3907
        %v4194 = vpop.f32.mrb[0].mxu0
        %v4195 = vadd.f32 %v3864, %v4194
        %v4196 = vpop.f32.mrb[0].mxu0
        %4197 = vmatprep.mubr.f32.mxu0 0.0
        %4198 = vmatmul.mubr.f32.gmra.mrb[0].mxu0 %v3910
        %v4199 = vpop.f32.mrb[0].mxu0
        %v4200 = vadd.f32 %v3864, %v4199
        %v4201 = vpop.f32.mrb[0].mxu0
        %4202 = vmatprep.mubr.f32.mxu0 0.0
        %4203 = vmatmul.mubr.f32.gmra.mrb[0].mxu0 %v3913
        %v4204 = vpop.f32.mrb[0].mxu0
        %v4205 = vadd.f32 %v3864, %v4204
        %v4206 = vpop.f32.mrb[0].mxu0
        %4207 = vmatprep.mubr.f32.mxu0 0.0
        %4208 = vmatmul.mubr.f32.gmra.mrb[0].mxu0 %v3916
        %v4209 = vpop.f32.mrb[0].mxu0
        %v4210 = vadd.f32 %v3864, %v4209
        %v4211 = vpop.f32.mrb[0].mxu0
        %4212 = vmatprep.mubr.f32.mxu0 0.0
        %4213 = vmatmul.mubr.f32.gmra.mrb[0].mxu0 %v3919
        %v4214 = vpop.f32.mrb[0].mxu0
        %v4215 = vadd.f32 %v3864, %v4214
        %v4216 = vpop.f32.mrb[0].mxu0
        %4217 = vmatprep.mubr.f32.mxu0 0.0
        %4218 = vmatmul.mubr.f32.gmra.mrb[0].mxu0 %v3922
        %v4219 = vpop.f32.mrb[0].mxu0
        %v4220 = vadd.f32 %v3864, %v4219
        %v4221 = vpop.f32.mrb[0].mxu0
        %4222 = vmatprep.mubr.f32.mxu0 0.0
        %4223 = vmatmul.mubr.f32.gmra.mrb[0].mxu0 %v3925
        %v4224 = vpop.f32.mrb[0].mxu0
        %v4225 = vadd.f32 %v3864, %v4224
        %v4226 = vpop.f32.mrb[0].mxu0
        %4227 = vmatprep.mubr.f32.mxu0 0.0
        %4228 = vmatmul.mubr.f32.gmra.mrb[0].mxu0 %v3928
        %v4229 = vpop.f32.mrb[0].mxu0
        %v4230 = vadd.f32 %v3864, %v4229
        %v4231 = vpop.f32.mrb[0].mxu0
        %4232 = vmatprep.mubr.f32.mxu0 0.0
        %4233 = vmatmul.mubr.f32.gmra.mrb[0].mxu0 %v3931
        %v4234 = vpop.f32.mrb[0].mxu0
        %v4235 = vadd.f32 %v3864, %v4234
        %v4236 = vpop.f32.mrb[0].mxu0
        %4237 = vmatprep.mubr.f32.mxu0 0.0
        %4238 = vmatmul.mubr.f32.gmra.mrb[0].mxu0 %v3934
        %v4239 = vpop.f32.mrb[0].mxu0
        %v4240 = vadd.f32 %v3864, %v4239
        %v4241 = vpop.f32.mrb[0].mxu0
        %4242 = vmatprep.mubr.f32.mxu0 0.0
        %4243 = vmatmul.mubr.f32.gmra.mrb[0].mxu0 %v3937
        %v4244 = vpop.f32.mrb[0].mxu0
        %v4245 = vadd.f32 %v3864, %v4244
        %v4246 = vpop.f32.mrb[0].mxu0
        %4247 = vmatprep.mubr.f32.mxu0 0.0
        %4248 = vmatmul.mubr.f32.gmra.mrb[0].mxu0 %v3940
        %v4249 = vpop.f32.mrb[0].mxu0
        %v4250 = vadd.f32 %v3864, %v4249
        %v4251 = vpop.f32.mrb[0].mxu0
        %4252 = vmatprep.mubr.f32.mxu0 0.0
        %4253 = vmatmul.mubr.f32.gmra.mrb[0].mxu0 %v3943
        %v4254 = vpop.f32.mrb[0].mxu0
        %v4255 = vadd.f32 %v3864, %v4254
        %v4256 = vpop.f32.mrb[0].mxu0
        %4257 = vmatprep.mubr.f32.mxu0 0.0
        %4258 = vmatmul.mubr.f32.gmra.mrb[0].mxu0 %v3946
        %v4259 = vpop.f32.mrb[0].mxu0
        %v4260 = vadd.f32 %v3864, %v4259
        %v4261 = vpop.f32.mrb[0].mxu0
        %4262 = vmatprep.mubr.f32.mxu0 0.0
        %4263 = vmatmul.mubr.f32.gmra.mrb[0].mxu0 %v3949
        %v4264 = vpop.f32.mrb[0].mxu0
        %v4265 = vadd.f32 %v3864, %v4264
        %v4266 = vpop.f32.mrb[0].mxu0
        %4267 = vmatprep.mubr.f32.mxu0 0.0
        %4268 = vmatmul.mubr.f32.gmra.mrb[0].mxu0 %v3952
        %v4269 = vpop.f32.mrb[0].mxu0
        %v4270 = vadd.f32 %v3864, %v4269
        %v4271 = vpop.f32.mrb[0].mxu0
        %4272 = vmatprep.mubr.f32.mxu0 0.0
        %4273 = vmatmul.mubr.f32.gmra.mrb[0].mxu0 %v3955
        %v4274 = vpop.f32.mrb[0].mxu0
        %v4275 = vadd.f32 %v3864, %v4274
        %v4276 = vpop.f32.mrb[0].mxu0
        %4277 = vmatprep.mubr.f32.mxu0 0.0
        %4278 = vmatmul.mubr.f32.gmra.mrb[0].mxu0 %v3958
        %v4279 = vpop.f32.mrb[0].mxu0
        %v4280 = vadd.f32 %v3864, %v4279
        %v4281 = vpop.f32.mrb[0].mxu0
        %4282 = vmatprep.mubr.f32.mxu0 0.0
        %4283 = vmatmul.mubr.f32.gmra.mrb[0].mxu0 %v3961
        %v4284 = vpop.f32.mrb[0].mxu0
        %v4285 = vadd.f32 %v3864, %v4284
        %v4286 = vpop.f32.mrb[0].mxu0
        %4287 = vmatprep.mubr.f32.mxu0 0.0
        %4288 = vmatmul.mubr.f32.gmra.mrb[0].mxu0 %v3964
        %v4289 = vpop.f32.mrb[0].mxu0
        %v4290 = vadd.f32 %v3864, %v4289
        %v4291 = vpop.f32.mrb[0].mxu0
        %4292 = vmatprep.mubr.f32.mxu0 0.0
        %4293 = vmatmul.mubr.f32.gmra.mrb[0].mxu0 %v3967
        %v4294 = vpop.f32.mrb[0].mxu0
        %v4295 = vadd.f32 %v3864, %v4294
        %v4296 = vpop.f32.mrb[0].mxu0
        %4297 = vmatprep.mubr.f32.mxu0 0.0
        %4298 = vmatmul.mubr.f32.gmra.mrb[0].mxu0 %v3970
        %v4299 = vpop.f32.mrb[0].mxu0
        %v4300 = vadd.f32 %v3864, %v4299
        %v4301 = vpop.f32.mrb[0].mxu0
        %4302 = vmatprep.mubr.f32.mxu0 0.0
        %4303 = vmatmul.mubr.f32.gmra.mrb[0].mxu0 %v3973
        %v4304 = vpop.f32.mrb[0].mxu0
        %v4305 = vadd.f32 %v3864, %v4304
        %v4306 = vpop.f32.mrb[0].mxu0
        %4307 = vmatprep.mubr.f32.mxu0 0.0
        %4308 = vmatmul.mubr.f32.gmra.mrb[0].mxu0 %v3976
        %v4309 = vpop.f32.mrb[0].mxu0
        %v4310 = vadd.f32 %v3864, %v4309
        %v4311 = vpop.f32.mrb[0].mxu0
        %4312 = vmatprep.mubr.f32.mxu0 0.0
        %4313 = vmatmul.mubr.f32.gmra.mrb[0].mxu0 %v3979
        %v4314 = vpop.f32.mrb[0].mxu0
        %v4315 = vadd.f32 %v3864, %v4314
        %v4316 = vpop.f32.mrb[0].mxu0
        %4317 = vmatprep.mubr.f32.mxu0 0.0
        %4318 = vmatmul.mubr.f32.gmra.mrb[0].mxu0 %v3982
        %v4319 = vpop.f32.mrb[0].mxu0
        %v4320 = vadd.f32 %v3864, %v4319
        %v4321 = vpop.f32.mrb[0].mxu0
        %4322 = vmatprep.mubr.f32.mxu0 0.0
        %4323 = vmatmul.mubr.f32.gmra.mrb[0].mxu0 %v3985
        %v4324 = vpop.f32.mrb[0].mxu0
        %v4325 = vadd.f32 %v3864, %v4324
        %v4326 = vpop.f32.mrb[0].mxu0
        %4327 = vmatprep.mubr.f32.mxu0 0.0
        %4328 = vmatmul.mubr.f32.gmra.mrb[0].mxu0 %v3988
        %v4329 = vpop.f32.mrb[0].mxu0
        %v4330 = vadd.f32 %v3864, %v4329
        %v4331 = vpop.f32.mrb[0].mxu0
        %4332 = vmatprep.mubr.f32.mxu0 0.0
        %4333 = vmatmul.mubr.f32.gmra.mrb[0].mxu0 %v3991
        %v4334 = vpop.f32.mrb[0].mxu0
        %v4335 = vadd.f32 %v3864, %v4334
        %v4336 = vpop.f32.mrb[0].mxu0
        %4337 = vmatprep.mubr.f32.mxu0 0.0
        %4338 = vmatmul.mubr.f32.gmra.mrb[0].mxu0 %v3994
        %v4339 = vpop.f32.mrb[0].mxu0
        %v4340 = vadd.f32 %v3864, %v4339
        %v4341 = vpop.f32.mrb[0].mxu0
        %4342 = vmatprep.mubr.f32.mxu0 0.0
        %4343 = vmatmul.mubr.f32.gmra.mrb[0].mxu0 %v3997
        %v4344 = vpop.f32.mrb[0].mxu0
        %v4345 = vadd.f32 %v3864, %v4344
        %v4346 = vpop.f32.mrb[0].mxu0
        %4347 = vmatprep.mubr.f32.mxu0 0.0
        %4348 = vmatmul.mubr.f32.gmra.mrb[0].mxu0 %v4000
        %v4349 = vpop.f32.mrb[0].mxu0
        %v4350 = vadd.f32 %v3864, %v4349
        %v4351 = vpop.f32.mrb[0].mxu0
        %4352 = vmatprep.mubr.f32.mxu0 0.0
        %4353 = vmatmul.mubr.f32.gmra.mrb[0].mxu0 %v4003
        %v4354 = vpop.f32.mrb[0].mxu0
        %v4355 = vadd.f32 %v3864, %v4354
        %v4356 = vpop.f32.mrb[0].mxu0
        %4357 = vmatprep.mubr.f32.mxu0 0.0
        %4358 = vmatmul.mubr.f32.gmra.mrb[0].mxu0 %v4006
        %v4359 = vpop.f32.mrb[0].mxu0
        %v4360 = vadd.f32 %v3864, %v4359
        %v4361 = vpop.f32.mrb[0].mxu0
        %4362 = vmatprep.mubr.f32.mxu0 0.0
        %4363 = vmatmul.mubr.f32.gmra.mrb[0].mxu0 %v4009
        %v4364 = vpop.f32.mrb[0].mxu0
        %v4365 = vadd.f32 %v3864, %v4364
        %v4366 = vpop.f32.mrb[0].mxu0
        %4367 = vmatprep.mubr.f32.mxu0 0.0
        %4368 = vmatmul.mubr.f32.gmra.mrb[0].mxu0 %v4012
        %v4369 = vpop.f32.mrb[0].mxu0
        %v4370 = vadd.f32 %v3864, %v4369
        %v4371 = vpop.f32.mrb[0].mxu0
        %4372 = vmatprep.mubr.f32.mxu0 0.0
        %4373 = vmatmul.mubr.f32.gmra.mrb[0].mxu0 %v4015
        %v4374 = vpop.f32.mrb[0].mxu0
        %v4375 = vadd.f32 %v3864, %v4374
        %v4376 = vpop.f32.mrb[0].mxu0
        %4377 = vmatprep.mubr.f32.mxu0 0.0
        %4378 = vmatmul.mubr.f32.gmra.mrb[0].mxu0 %v4018
        %v4379 = vpop.f32.mrb[0].mxu0
        %v4380 = vadd.f32 %v3864, %v4379
        %v4381 = vpop.f32.mrb[0].mxu0
        %4382 = vmatprep.mubr.f32.mxu0 0.0
        %4383 = vmatmul.mubr.f32.gmra.mrb[0].mxu0 %v4021
        %v4384 = vpop.f32.mrb[0].mxu0
        %v4385 = vadd.f32 %v3864, %v4384
        %v4386 = vpop.f32.mrb[0].mxu0
        %4387 = vmatprep.mubr.f32.mxu0 0.0
        %4388 = vmatmul.mubr.f32.gmra.mrb[0].mxu0 %v4024
        %v4389 = vpop.f32.mrb[0].mxu0
        %v4390 = vadd.f32 %v3864, %v4389
        %v4391 = vpop.f32.mrb[0].mxu0
        %4392 = vmatprep.mubr.f32.mxu0 0.0
        %4393 = vmatmul.mubr.f32.gmra.mrb[0].mxu0 %v4027
        %v4394 = vpop.f32.mrb[0].mxu0
        %v4395 = vadd.f32 %v3864, %v4394
        %v4396 = vpop.f32.mrb[0].mxu0
        %4397 = vmatprep.mubr.f32.mxu0 0.0
        %4398 = vmatmul.mubr.f32.gmra.mrb[0].mxu0 %v4030
        %v4399 = vpop.f32.mrb[0].mxu0
        %v4400 = vadd.f32 %v3864, %v4399
        %v4401 = vpop.f32.mrb[0].mxu0
        %4402 = vmatprep.mubr.f32.mxu0 0.0
        %4403 = vmatmul.mubr.f32.gmra.mrb[0].mxu0 %v4033
        %v4404 = vpop.f32.mrb[0].mxu0
        %v4405 = vadd.f32 %v3864, %v4404
        %v4406 = vpop.f32.mrb[0].mxu0
        %4407 = vmatprep.mubr.f32.mxu0 0.0
        %4408 = vmatmul.mubr.f32.gmra.mrb[0].mxu0 %v4036
        %v4409 = vpop.f32.mrb[0].mxu0
        %v4410 = vadd.f32 %v3864, %v4409
        %v4411 = vpop.f32.mrb[0].mxu0
        %4412 = vmatprep.mubr.f32.mxu0 0.0
        %4413 = vmatmul.mubr.f32.gmra.mrb[0].mxu0 %v4039
        %v4414 = vpop.f32.mrb[0].mxu0
        %v4415 = vadd.f32 %v3864, %v4414
        %v4416 = vpop.f32.mrb[0].mxu0
        %4417 = vmatprep.mubr.f32.mxu0 0.0
        %4418 = vmatmul.mubr.f32.gmra.mrb[0].mxu0 %v4042
        %v4419 = vpop.f32.mrb[0].mxu0
        %v4420 = vadd.f32 %v3864, %v4419
        %v4421 = vpop.f32.mrb[0].mxu0
        %4422 = vmatprep.mubr.f32.mxu0 0.0
        %4423 = vmatmul.mubr.f32.gmra.mrb[0].mxu0 %v4045
        %v4424 = vpop.f32.mrb[0].mxu0
        %v4425 = vadd.f32 %v3864, %v4424
        %v4426 = vpop.f32.mrb[0].mxu0
        %4427 = vmatprep.mubr.f32.mxu0 0.0
        %4428 = vmatmul.mubr.f32.gmra.mrb[0].mxu0 %v4048
        %v4429 = vpop.f32.mrb[0].mxu0
        %v4430 = vadd.f32 %v3864, %v4429
        %v4431 = vpop.f32.mrb[0].mxu0
        %4432 = vmatprep.mubr.f32.mxu0 0.0
        %4433 = vmatmul.mubr.f32.gmra.mrb[0].mxu0 %v4051
        %v4434 = vpop.f32.mrb[0].mxu0
        %v4435 = vadd.f32 %v3864, %v4434
        %v4436 = vpop.f32.mrb[0].mxu0
        %4437 = vmatprep.mubr.f32.mxu0 0.0
        %4438 = vmatmul.mubr.f32.gmra.mrb[0].mxu0 %v4054
        %v4439 = vpop.f32.mrb[0].mxu0
        %v4440 = vadd.f32 %v3864, %v4439
        %v4441 = vpop.f32.mrb[0].mxu0
        %4442 = vmatprep.mubr.f32.mxu0 0.0
        %4443 = vmatmul.mubr.f32.gmra.mrb[0].mxu0 %v4057
        %v4444 = vpop.f32.mrb[0].mxu0
        %v4445 = vadd.f32 %v3864, %v4444
        %v4446 = vpop.f32.mrb[0].mxu0
        %4447 = vdwg.mxu0
        %v4448 = vmax.f32 %v4130, 0.0
        %v4449 = vmax.f32 %v4135, 0.0
        %v4450 = vmax.f32 %v4140, 0.0
        %v4451 = vmax.f32 %v4145, 0.0
        %v4452 = vmax.f32 %v4150, 0.0
        %v4453 = vmax.f32 %v4155, 0.0
        %v4454 = vmax.f32 %v4160, 0.0
        %v4455 = vmax.f32 %v4165, 0.0
        %v4456 = vmax.f32 %v4170, 0.0
        %v4457 = vmax.f32 %v4175, 0.0
        %v4458 = vmax.f32 %v4180, 0.0
        %v4459 = vmax.f32 %v4185, 0.0
        %v4460 = vmax.f32 %v4190, 0.0
        %v4461 = vmax.f32 %v4195, 0.0
        %v4462 = vmax.f32 %v4200, 0.0
        %v4463 = vmax.f32 %v4205, 0.0
        %v4464 = vmax.f32 %v4210, 0.0
        %v4465 = vmax.f32 %v4215, 0.0
        %v4466 = vmax.f32 %v4220, 0.0
        %v4467 = vmax.f32 %v4225, 0.0
        %v4468 = vmax.f32 %v4230, 0.0
        %v4469 = vmax.f32 %v4235, 0.0
        %v4470 = vmax.f32 %v4240, 0.0
        %v4471 = vmax.f32 %v4245, 0.0
        %v4472 = vmax.f32 %v4250, 0.0
        %v4473 = vmax.f32 %v4255, 0.0
        %v4474 = vmax.f32 %v4260, 0.0
        %v4475 = vmax.f32 %v4265, 0.0
        %v4476 = vmax.f32 %v4270, 0.0
        %v4477 = vmax.f32 %v4275, 0.0
        %v4478 = vmax.f32 %v4280, 0.0
        %v4479 = vmax.f32 %v4285, 0.0
        %v4480 = vmax.f32 %v4290, 0.0
        %v4481 = vmax.f32 %v4295, 0.0
        %v4482 = vmax.f32 %v4300, 0.0
        %v4483 = vmax.f32 %v4305, 0.0
        %v4484 = vmax.f32 %v4310, 0.0
        %v4485 = vmax.f32 %v4315, 0.0
        %v4486 = vmax.f32 %v4320, 0.0
        %v4487 = vmax.f32 %v4325, 0.0
        %v4488 = vmax.f32 %v4330, 0.0
        %v4489 = vmax.f32 %v4335, 0.0
        %v4490 = vmax.f32 %v4340, 0.0
        %v4491 = vmax.f32 %v4345, 0.0
        %v4492 = vmax.f32 %v4350, 0.0
        %v4493 = vmax.f32 %v4355, 0.0
        %v4494 = vmax.f32 %v4360, 0.0
        %v4495 = vmax.f32 %v4365, 0.0
        %v4496 = vmax.f32 %v4370, 0.0
        %v4497 = vmax.f32 %v4375, 0.0
        %v4498 = vmax.f32 %v4380, 0.0
        %v4499 = vmax.f32 %v4385, 0.0
        %v4500 = vmax.f32 %v4390, 0.0
        %v4501 = vmax.f32 %v4395, 0.0
        %v4502 = vmax.f32 %v4400, 0.0
        %v4503 = vmax.f32 %v4405, 0.0
        %v4504 = vmax.f32 %v4410, 0.0
        %v4505 = vmax.f32 %v4415, 0.0
        %v4506 = vmax.f32 %v4420, 0.0
        %v4507 = vmax.f32 %v4425, 0.0
        %v4508 = vmax.f32 %v4430, 0.0
        %v4509 = vmax.f32 %v4435, 0.0
        %v4510 = vmax.f32 %v4440, 0.0
        %v4511 = vmax.f32 %v4445, 0.0
        %s4512 = scalar_lea.vmem [#allocation4], 24
        %vm4513 = vcmask 64512
        %4514 = vst.msk [vmem:[%s4512 + $0x1] sm:$0xff] %vm4513, %v4448
        %4515 = vst.msk [vmem:[%s4512 + $0x9] sm:$0xff] %vm4513, %v4449
        %4516 = vst.msk [vmem:[%s4512 + $0x19] sm:$0xff] %vm4513, %v4450
        %4517 = vst.msk [vmem:[%s4512 + $0x21] sm:$0xff] %vm4513, %v4451
        %4518 = vst.msk [vmem:[%s4512 + $0x31] sm:$0xff] %vm4513, %v4452
        %4519 = vst.msk [vmem:[%s4512 + $0x39] sm:$0xff] %vm4513, %v4453
        %4520 = vst.msk [vmem:[%s4512 + $0x49] sm:$0xff] %vm4513, %v4454
        %4521 = vst.msk [vmem:[%s4512 + $0x51] sm:$0xff] %vm4513, %v4455
        %4522 = vst.msk [vmem:[%s4512 + $0x61] sm:$0xff] %vm4513, %v4456
        %4523 = vst.msk [vmem:[%s4512 + $0x69] sm:$0xff] %vm4513, %v4457
        %4524 = vst.msk [vmem:[%s4512 + $0x79] sm:$0xff] %vm4513, %v4458
        %4525 = vst.msk [vmem:[%s4512 + $0x81] sm:$0xff] %vm4513, %v4459
        %4526 = vst.msk [vmem:[%s4512 + $0x91] sm:$0xff] %vm4513, %v4460
        %4527 = vst.msk [vmem:[%s4512 + $0x99] sm:$0xff] %vm4513, %v4461
        %4528 = vst.msk [vmem:[%s4512 + $0xa9] sm:$0xff] %vm4513, %v4462
        %4529 = vst.msk [vmem:[%s4512 + $0xb1] sm:$0xff] %vm4513, %v4463
        %4530 = vst.msk [vmem:[%s4512 + $0xc1] sm:$0xff] %vm4513, %v4464
        %4531 = vst.msk [vmem:[%s4512 + $0xc9] sm:$0xff] %vm4513, %v4465
        %4532 = vst.msk [vmem:[%s4512 + $0xd9] sm:$0xff] %vm4513, %v4466
        %4533 = vst.msk [vmem:[%s4512 + $0xe1] sm:$0xff] %vm4513, %v4467
        %4534 = vst.msk [vmem:[%s4512 + $0xf1] sm:$0xff] %vm4513, %v4468
        %4535 = vst.msk [vmem:[%s4512 + $0xf9] sm:$0xff] %vm4513, %v4469
        %4536 = vst.msk [vmem:[%s4512 + $0x109] sm:$0xff] %vm4513, %v4470
        %4537 = vst.msk [vmem:[%s4512 + $0x111] sm:$0xff] %vm4513, %v4471
        %4538 = vst.msk [vmem:[%s4512 + $0x121] sm:$0xff] %vm4513, %v4472
        %4539 = vst.msk [vmem:[%s4512 + $0x129] sm:$0xff] %vm4513, %v4473
        %4540 = vst.msk [vmem:[%s4512 + $0x139] sm:$0xff] %vm4513, %v4474
        %4541 = vst.msk [vmem:[%s4512 + $0x141] sm:$0xff] %vm4513, %v4475
        %4542 = vst.msk [vmem:[%s4512 + $0x151] sm:$0xff] %vm4513, %v4476
        %4543 = vst.msk [vmem:[%s4512 + $0x159] sm:$0xff] %vm4513, %v4477
        %4544 = vst.msk [vmem:[%s4512 + $0x169] sm:$0xff] %vm4513, %v4478
        %4545 = vst.msk [vmem:[%s4512 + $0x171] sm:$0xff] %vm4513, %v4479
        %4546 = vst.msk [vmem:[%s4512 + $0x1b1] sm:$0xff] %vm4513, %v4480
        %4547 = vst.msk [vmem:[%s4512 + $0x1b9] sm:$0xff] %vm4513, %v4481
        %4548 = vst.msk [vmem:[%s4512 + $0x1c9] sm:$0xff] %vm4513, %v4482
        %4549 = vst.msk [vmem:[%s4512 + $0x1d1] sm:$0xff] %vm4513, %v4483
        %4550 = vst.msk [vmem:[%s4512 + $0x1e1] sm:$0xff] %vm4513, %v4484
        %4551 = vst.msk [vmem:[%s4512 + $0x1e9] sm:$0xff] %vm4513, %v4485
        %4552 = vst.msk [vmem:[%s4512 + $0x1f9] sm:$0xff] %vm4513, %v4486
        %4553 = vst.msk [vmem:[%s4512 + $0x201] sm:$0xff] %vm4513, %v4487
        %4554 = vst.msk [vmem:[%s4512 + $0x211] sm:$0xff] %vm4513, %v4488
        %4555 = vst.msk [vmem:[%s4512 + $0x219] sm:$0xff] %vm4513, %v4489
        %4556 = vst.msk [vmem:[%s4512 + $0x229] sm:$0xff] %vm4513, %v4490
        %4557 = vst.msk [vmem:[%s4512 + $0x231] sm:$0xff] %vm4513, %v4491
        %4558 = vst.msk [vmem:[%s4512 + $0x241] sm:$0xff] %vm4513, %v4492
        %4559 = vst.msk [vmem:[%s4512 + $0x249] sm:$0xff] %vm4513, %v4493
        %4560 = vst.msk [vmem:[%s4512 + $0x259] sm:$0xff] %vm4513, %v4494
        %4561 = vst.msk [vmem:[%s4512 + $0x261] sm:$0xff] %vm4513, %v4495
        %4562 = vst.msk [vmem:[%s4512 + $0x271] sm:$0xff] %vm4513, %v4496
        %4563 = vst.msk [vmem:[%s4512 + $0x279] sm:$0xff] %vm4513, %v4497
        %4564 = vst.msk [vmem:[%s4512 + $0x289] sm:$0xff] %vm4513, %v4498
        %4565 = vst.msk [vmem:[%s4512 + $0x291] sm:$0xff] %vm4513, %v4499
        %4566 = vst.msk [vmem:[%s4512 + $0x2a1] sm:$0xff] %vm4513, %v4500
        %4567 = vst.msk [vmem:[%s4512 + $0x2a9] sm:$0xff] %vm4513, %v4501
        %4568 = vst.msk [vmem:[%s4512 + $0x2b9] sm:$0xff] %vm4513, %v4502
        %4569 = vst.msk [vmem:[%s4512 + $0x2c1] sm:$0xff] %vm4513, %v4503
        %4570 = vst.msk [vmem:[%s4512 + $0x2d1] sm:$0xff] %vm4513, %v4504
        %4571 = vst.msk [vmem:[%s4512 + $0x2d9] sm:$0xff] %vm4513, %v4505
        %4572 = vst.msk [vmem:[%s4512 + $0x2e9] sm:$0xff] %vm4513, %v4506
        %4573 = vst.msk [vmem:[%s4512 + $0x2f1] sm:$0xff] %vm4513, %v4507
        %4574 = vst.msk [vmem:[%s4512 + $0x301] sm:$0xff] %vm4513, %v4508
        %4575 = vst.msk [vmem:[%s4512 + $0x309] sm:$0xff] %vm4513, %v4509
        %4576 = vst.msk [vmem:[%s4512 + $0x319] sm:$0xff] %vm4513, %v4510
        %4577 = vst.msk [vmem:[%s4512 + $0x321] sm:$0xff] %vm4513, %v4511
        %4578 = vst.msk [vmem:[#allocation4 + $0x1] sm:$0xff] %vm4513, %v4448
        %4579 = vst.msk [vmem:[#allocation4 + $0x9] sm:$0xff] %vm4513, %v4449
        %4580 = vst.msk [vmem:[#allocation4 + $0x1b1] sm:$0xff] %vm4513, %v4480
        %4581 = vst.msk [vmem:[#allocation4 + $0x1b9] sm:$0xff] %vm4513, %v4481
        %s4582 = scalar_lea.vmem [#allocation4], 408
        %4583 = vst.msk [vmem:[%s4582 + $0x1] sm:$0xff] %vm4513, %v4478
        %4584 = vst.msk [vmem:[%s4582 + $0x9] sm:$0xff] %vm4513, %v4479
        %4585 = vst.msk [vmem:[%s4582 + $0x1b1] sm:$0xff] %vm4513, %v4510
        %4586 = vst.msk [vmem:[%s4582 + $0x1b9] sm:$0xff] %vm4513, %v4511
        %v4587 = vld [vmem:[#allocation4 + $0x1] sm:$0x1]
        %v4588 = vld [vmem:[#allocation4 + $0x19] sm:$0x1]
        %v4589 = vld [vmem:[#allocation4 + $0x31] sm:$0x1]
        %v4590 = vld [vmem:[#allocation4 + $0x49] sm:$0x1]
        %v4591 = vld [vmem:[#allocation4 + $0x61] sm:$0x1]
        %v4592 = vld [vmem:[#allocation4 + $0x79] sm:$0x1]
        %v4593 = vld [vmem:[#allocation4 + $0x91] sm:$0x1]
        %v4594 = vld [vmem:[#allocation4 + $0xa9] sm:$0x1]
        %v4595 = vld [vmem:[#allocation4 + $0xc1] sm:$0x1]
        %v4596 = vld [vmem:[#allocation4 + $0xd9] sm:$0x1]
        %v4597 = vld [vmem:[#allocation4 + $0xf1] sm:$0x1]
        %v4598 = vld [vmem:[#allocation4 + $0x109] sm:$0x1]
        %v4599 = vld [vmem:[#allocation4 + $0x121] sm:$0x1]
        %v4600 = vld [vmem:[#allocation4 + $0x139] sm:$0x1]
        %v4601 = vld [vmem:[#allocation4 + $0x151] sm:$0x1]
        %v4602 = vld [vmem:[#allocation4 + $0x169] sm:$0x1]
        %v4603 = vld [vmem:[#allocation4 + $0x181] sm:$0x1]
        %v4604 = vld [vmem:[#allocation4 + $0x199] sm:$0x1]
        %v4605 = vld [vmem:[#allocation4 + $0x1b1] sm:$0x1]
        %v4606 = vld [vmem:[#allocation4 + $0x1c9] sm:$0x1]
        %v4607 = vld [vmem:[#allocation4 + $0x1e1] sm:$0x1]
        %v4608 = vld [vmem:[#allocation4 + $0x1f9] sm:$0x1]
        %v4609 = vld [vmem:[#allocation4 + $0x211] sm:$0x1]
        %v4610 = vld [vmem:[#allocation4 + $0x229] sm:$0x1]
        %v4611 = vld [vmem:[#allocation4 + $0x241] sm:$0x1]
        %v4612 = vld [vmem:[#allocation4 + $0x259] sm:$0x1]
        %v4613 = vld [vmem:[#allocation4 + $0x271] sm:$0x1]
        %v4614 = vld [vmem:[#allocation4 + $0x289] sm:$0x1]
        %v4615 = vld [vmem:[#allocation4 + $0x2a1] sm:$0x1]
        %v4616 = vld [vmem:[#allocation4 + $0x2b9] sm:$0x1]
        %v4617 = vld [vmem:[#allocation4 + $0x2d1] sm:$0x1]
        %v4618 = vld [vmem:[#allocation4 + $0x2e9] sm:$0x1]
        %v4619 = vld [vmem:[#allocation4 + $0x301] sm:$0x1]
        %v4620 = vld [vmem:[#allocation4 + $0x319] sm:$0x1]
        %v4621 = vld [vmem:[#allocation4 + $0x331] sm:$0x1]
        %v4622 = vld [vmem:[#allocation4 + $0x349] sm:$0x1]
        %vm4623 = vcmask 57344
        %4624 = vst.msk [vmem:[#allocation4] sm:$0x1] %vm4623, %v4587
        %4625 = vst.msk [vmem:[#allocation4 + $0x18] sm:$0x1] %vm4623, %v4588
        %4626 = vst.msk [vmem:[#allocation4 + $0x30] sm:$0x1] %vm4623, %v4589
        %4627 = vst.msk [vmem:[#allocation4 + $0x48] sm:$0x1] %vm4623, %v4590
        %4628 = vst.msk [vmem:[#allocation4 + $0x60] sm:$0x1] %vm4623, %v4591
        %4629 = vst.msk [vmem:[#allocation4 + $0x78] sm:$0x1] %vm4623, %v4592
        %4630 = vst.msk [vmem:[#allocation4 + $0x90] sm:$0x1] %vm4623, %v4593
        %4631 = vst.msk [vmem:[#allocation4 + $0xa8] sm:$0x1] %vm4623, %v4594
        %4632 = vst.msk [vmem:[#allocation4 + $0xc0] sm:$0x1] %vm4623, %v4595
        %4633 = vst.msk [vmem:[#allocation4 + $0xd8] sm:$0x1] %vm4623, %v4596
        %4634 = vst.msk [vmem:[#allocation4 + $0xf0] sm:$0x1] %vm4623, %v4597
        %4635 = vst.msk [vmem:[#allocation4 + $0x108] sm:$0x1] %vm4623, %v4598
        %4636 = vst.msk [vmem:[#allocation4 + $0x120] sm:$0x1] %vm4623, %v4599
        %4637 = vst.msk [vmem:[#allocation4 + $0x138] sm:$0x1] %vm4623, %v4600
        %4638 = vst.msk [vmem:[#allocation4 + $0x150] sm:$0x1] %vm4623, %v4601
        %4639 = vst.msk [vmem:[#allocation4 + $0x168] sm:$0x1] %vm4623, %v4602
        %4640 = vst.msk [vmem:[#allocation4 + $0x180] sm:$0x1] %vm4623, %v4603
        %4641 = vst.msk [vmem:[#allocation4 + $0x198] sm:$0x1] %vm4623, %v4604
        %4642 = vst.msk [vmem:[#allocation4 + $0x1b0] sm:$0x1] %vm4623, %v4605
        %4643 = vst.msk [vmem:[#allocation4 + $0x1c8] sm:$0x1] %vm4623, %v4606
        %4644 = vst.msk [vmem:[#allocation4 + $0x1e0] sm:$0x1] %vm4623, %v4607
        %4645 = vst.msk [vmem:[#allocation4 + $0x1f8] sm:$0x1] %vm4623, %v4608
        %4646 = vst.msk [vmem:[#allocation4 + $0x210] sm:$0x1] %vm4623, %v4609
        %4647 = vst.msk [vmem:[#allocation4 + $0x228] sm:$0x1] %vm4623, %v4610
        %4648 = vst.msk [vmem:[#allocation4 + $0x240] sm:$0x1] %vm4623, %v4611
        %4649 = vst.msk [vmem:[#allocation4 + $0x258] sm:$0x1] %vm4623, %v4612
        %4650 = vst.msk [vmem:[#allocation4 + $0x270] sm:$0x1] %vm4623, %v4613
        %4651 = vst.msk [vmem:[#allocation4 + $0x288] sm:$0x1] %vm4623, %v4614
        %4652 = vst.msk [vmem:[#allocation4 + $0x2a0] sm:$0x1] %vm4623, %v4615
        %4653 = vst.msk [vmem:[#allocation4 + $0x2b8] sm:$0x1] %vm4623, %v4616
        %4654 = vst.msk [vmem:[#allocation4 + $0x2d0] sm:$0x1] %vm4623, %v4617
        %4655 = vst.msk [vmem:[#allocation4 + $0x2e8] sm:$0x1] %vm4623, %v4618
        %4656 = vst.msk [vmem:[#allocation4 + $0x300] sm:$0x1] %vm4623, %v4619
        %4657 = vst.msk [vmem:[#allocation4 + $0x318] sm:$0x1] %vm4623, %v4620
        %4658 = vst.msk [vmem:[#allocation4 + $0x330] sm:$0x1] %vm4623, %v4621
        %4659 = vst.msk [vmem:[#allocation4 + $0x348] sm:$0x1] %vm4623, %v4622
        %v4660 = vld [vmem:[#allocation4 + $0x10] sm:$0x1]
        %v4661 = vld [vmem:[#allocation4 + $0x28] sm:$0x1]
        %v4662 = vld [vmem:[#allocation4 + $0x40] sm:$0x1]
        %v4663 = vld [vmem:[#allocation4 + $0x58] sm:$0x1]
        %v4664 = vld [vmem:[#allocation4 + $0x70] sm:$0x1]
        %v4665 = vld [vmem:[#allocation4 + $0x88] sm:$0x1]
        %v4666 = vld [vmem:[#allocation4 + $0xa0] sm:$0x1]
        %v4667 = vld [vmem:[#allocation4 + $0xb8] sm:$0x1]
        %v4668 = vld [vmem:[#allocation4 + $0xd0] sm:$0x1]
        %v4669 = vld [vmem:[#allocation4 + $0xe8] sm:$0x1]
        %v4670 = vld [vmem:[#allocation4 + $0x100] sm:$0x1]
        %v4671 = vld [vmem:[#allocation4 + $0x118] sm:$0x1]
        %v4672 = vld [vmem:[#allocation4 + $0x130] sm:$0x1]
        %v4673 = vld [vmem:[#allocation4 + $0x148] sm:$0x1]
        %v4674 = vld [vmem:[#allocation4 + $0x160] sm:$0x1]
        %v4675 = vld [vmem:[#allocation4 + $0x178] sm:$0x1]
        %v4676 = vld [vmem:[#allocation4 + $0x190] sm:$0x1]
        %v4677 = vld [vmem:[#allocation4 + $0x1a8] sm:$0x1]
        %v4678 = vld [vmem:[#allocation4 + $0x1c0] sm:$0x1]
        %v4679 = vld [vmem:[#allocation4 + $0x1d8] sm:$0x1]
        %v4680 = vld [vmem:[#allocation4 + $0x1f0] sm:$0x1]
        %v4681 = vld [vmem:[#allocation4 + $0x208] sm:$0x1]
        %v4682 = vld [vmem:[#allocation4 + $0x220] sm:$0x1]
        %v4683 = vld [vmem:[#allocation4 + $0x238] sm:$0x1]
        %v4684 = vld [vmem:[#allocation4 + $0x250] sm:$0x1]
        %v4685 = vld [vmem:[#allocation4 + $0x268] sm:$0x1]
        %v4686 = vld [vmem:[#allocation4 + $0x280] sm:$0x1]
        %v4687 = vld [vmem:[#allocation4 + $0x298] sm:$0x1]
        %v4688 = vld [vmem:[#allocation4 + $0x2b0] sm:$0x1]
        %v4689 = vld [vmem:[#allocation4 + $0x2c8] sm:$0x1]
        %v4690 = vld [vmem:[#allocation4 + $0x2e0] sm:$0x1]
        %v4691 = vld [vmem:[#allocation4 + $0x2f8] sm:$0x1]
        %v4692 = vld [vmem:[#allocation4 + $0x310] sm:$0x1]
        %v4693 = vld [vmem:[#allocation4 + $0x328] sm:$0x1]
        %v4694 = vld [vmem:[#allocation4 + $0x340] sm:$0x1]
        %v4695 = vld [vmem:[#allocation4 + $0x358] sm:$0x1]
        %4696 = vst.msk [vmem:[#allocation4 + $0x11] sm:$0x1] %vm4623, %v4660
        %4697 = vst.msk [vmem:[#allocation4 + $0x29] sm:$0x1] %vm4623, %v4661
        %4698 = vst.msk [vmem:[#allocation4 + $0x41] sm:$0x1] %vm4623, %v4662
        %4699 = vst.msk [vmem:[#allocation4 + $0x59] sm:$0x1] %vm4623, %v4663
        %4700 = vst.msk [vmem:[#allocation4 + $0x71] sm:$0x1] %vm4623, %v4664
        %4701 = vst.msk [vmem:[#allocation4 + $0x89] sm:$0x1] %vm4623, %v4665
        %4702 = vst.msk [vmem:[#allocation4 + $0xa1] sm:$0x1] %vm4623, %v4666
        %4703 = vst.msk [vmem:[#allocation4 + $0xb9] sm:$0x1] %vm4623, %v4667
        %4704 = vst.msk [vmem:[#allocation4 + $0xd1] sm:$0x1] %vm4623, %v4668
        %4705 = vst.msk [vmem:[#allocation4 + $0xe9] sm:$0x1] %vm4623, %v4669
        %4706 = vst.msk [vmem:[#allocation4 + $0x101] sm:$0x1] %vm4623, %v4670
        %4707 = vst.msk [vmem:[#allocation4 + $0x119] sm:$0x1] %vm4623, %v4671
        %4708 = vst.msk [vmem:[#allocation4 + $0x131] sm:$0x1] %vm4623, %v4672
        %4709 = vst.msk [vmem:[#allocation4 + $0x149] sm:$0x1] %vm4623, %v4673
        %4710 = vst.msk [vmem:[#allocation4 + $0x161] sm:$0x1] %vm4623, %v4674
        %4711 = vst.msk [vmem:[#allocation4 + $0x179] sm:$0x1] %vm4623, %v4675
        %4712 = vst.msk [vmem:[#allocation4 + $0x191] sm:$0x1] %vm4623, %v4676
        %4713 = vst.msk [vmem:[#allocation4 + $0x1a9] sm:$0x1] %vm4623, %v4677
        %4714 = vst.msk [vmem:[#allocation4 + $0x1c1] sm:$0x1] %vm4623, %v4678
        %4715 = vst.msk [vmem:[#allocation4 + $0x1d9] sm:$0x1] %vm4623, %v4679
        %4716 = vst.msk [vmem:[#allocation4 + $0x1f1] sm:$0x1] %vm4623, %v4680
        %4717 = vst.msk [vmem:[#allocation4 + $0x209] sm:$0x1] %vm4623, %v4681
        %4718 = vst.msk [vmem:[#allocation4 + $0x221] sm:$0x1] %vm4623, %v4682
        %4719 = vst.msk [vmem:[#allocation4 + $0x239] sm:$0x1] %vm4623, %v4683
        %4720 = vst.msk [vmem:[#allocation4 + $0x251] sm:$0x1] %vm4623, %v4684
        %4721 = vst.msk [vmem:[#allocation4 + $0x269] sm:$0x1] %vm4623, %v4685
        %4722 = vst.msk [vmem:[#allocation4 + $0x281] sm:$0x1] %vm4623, %v4686
        %4723 = vst.msk [vmem:[#allocation4 + $0x299] sm:$0x1] %vm4623, %v4687
        %4724 = vst.msk [vmem:[#allocation4 + $0x2b1] sm:$0x1] %vm4623, %v4688
        %4725 = vst.msk [vmem:[#allocation4 + $0x2c9] sm:$0x1] %vm4623, %v4689
        %4726 = vst.msk [vmem:[#allocation4 + $0x2e1] sm:$0x1] %vm4623, %v4690
        %4727 = vst.msk [vmem:[#allocation4 + $0x2f9] sm:$0x1] %vm4623, %v4691
        %4728 = vst.msk [vmem:[#allocation4 + $0x311] sm:$0x1] %vm4623, %v4692
        %4729 = vst.msk [vmem:[#allocation4 + $0x329] sm:$0x1] %vm4623, %v4693
        %4730 = vst.msk [vmem:[#allocation4 + $0x341] sm:$0x1] %vm4623, %v4694
        %4731 = vst.msk [vmem:[#allocation4 + $0x359] sm:$0x1] %vm4623, %v4695
        %v4732 = vld [vmem:[#allocation4] sm:$0xff]
        %v4733 = vld [vmem:[#allocation4 + $0x8] sm:$0xff]
        %v4734 = vld [vmem:[#allocation4 + $0x18] sm:$0xff]
        %v4735 = vld [vmem:[#allocation4 + $0x20] sm:$0xff]
        %v4736 = vld [vmem:[#allocation4 + $0x30] sm:$0xff]
        %v4737 = vld [vmem:[#allocation4 + $0x38] sm:$0xff]
        %v4738 = vld [vmem:[#allocation4 + $0x48] sm:$0xff]
        %v4739 = vld [vmem:[#allocation4 + $0x50] sm:$0xff]
        %v4740 = vld [vmem:[#allocation4 + $0x60] sm:$0xff]
        %v4741 = vld [vmem:[#allocation4 + $0x68] sm:$0xff]
        %v4742 = vld [vmem:[#allocation4 + $0x78] sm:$0xff]
        %v4743 = vld [vmem:[#allocation4 + $0x80] sm:$0xff]
        %v4744 = vld [vmem:[#allocation4 + $0x90] sm:$0xff]
        %v4745 = vld [vmem:[#allocation4 + $0x98] sm:$0xff]
        %v4746 = vld [vmem:[#allocation4 + $0xa8] sm:$0xff]
        %v4747 = vld [vmem:[#allocation4 + $0xb0] sm:$0xff]
        %v4748 = vld [vmem:[#allocation4 + $0xc0] sm:$0xff]
        %v4749 = vld [vmem:[#allocation4 + $0xc8] sm:$0xff]
        %v4750 = vld [vmem:[#allocation4 + $0xd8] sm:$0xff]
        %v4751 = vld [vmem:[#allocation4 + $0xe0] sm:$0xff]
        %v4752 = vld [vmem:[#allocation4 + $0xf0] sm:$0xff]
        %v4753 = vld [vmem:[#allocation4 + $0xf8] sm:$0xff]
        %v4754 = vld [vmem:[#allocation4 + $0x108] sm:$0xff]
        %v4755 = vld [vmem:[#allocation4 + $0x110] sm:$0xff]
        %v4756 = vld [vmem:[#allocation4 + $0x120] sm:$0xff]
        %v4757 = vld [vmem:[#allocation4 + $0x128] sm:$0xff]
        %v4758 = vld [vmem:[#allocation4 + $0x138] sm:$0xff]
        %v4759 = vld [vmem:[#allocation4 + $0x140] sm:$0xff]
        %v4760 = vld [vmem:[#allocation4 + $0x150] sm:$0xff]
        %v4761 = vld [vmem:[#allocation4 + $0x158] sm:$0xff]
        %v4762 = vld [vmem:[#allocation4 + $0x168] sm:$0xff]
        %v4763 = vld [vmem:[#allocation4 + $0x170] sm:$0xff]
        %v4764 = vld [vmem:[#allocation4 + $0x1b0] sm:$0xff]
        %v4765 = vld [vmem:[#allocation4 + $0x1b8] sm:$0xff]
        %v4766 = vld [vmem:[#allocation4 + $0x1c8] sm:$0xff]
        %v4767 = vld [vmem:[#allocation4 + $0x1d0] sm:$0xff]
        %v4768 = vld [vmem:[#allocation4 + $0x1e0] sm:$0xff]
        %v4769 = vld [vmem:[#allocation4 + $0x1e8] sm:$0xff]
        %v4770 = vld [vmem:[#allocation4 + $0x1f8] sm:$0xff]
        %v4771 = vld [vmem:[#allocation4 + $0x200] sm:$0xff]
        %v4772 = vld [vmem:[#allocation4 + $0x210] sm:$0xff]
        %v4773 = vld [vmem:[#allocation4 + $0x218] sm:$0xff]
        %v4774 = vld [vmem:[#allocation4 + $0x228] sm:$0xff]
        %v4775 = vld [vmem:[#allocation4 + $0x230] sm:$0xff]
        %v4776 = vld [vmem:[#allocation4 + $0x240] sm:$0xff]
        %v4777 = vld [vmem:[#allocation4 + $0x248] sm:$0xff]
        %v4778 = vld [vmem:[#allocation4 + $0x258] sm:$0xff]
        %v4779 = vld [vmem:[#allocation4 + $0x260] sm:$0xff]
        %v4780 = vld [vmem:[#allocation4 + $0x270] sm:$0xff]
        %v4781 = vld [vmem:[#allocation4 + $0x278] sm:$0xff]
        %v4782 = vld [vmem:[#allocation4 + $0x288] sm:$0xff]
        %v4783 = vld [vmem:[#allocation4 + $0x290] sm:$0xff]
        %v4784 = vld [vmem:[#allocation4 + $0x2a0] sm:$0xff]
        %v4785 = vld [vmem:[#allocation4 + $0x2a8] sm:$0xff]
        %v4786 = vld [vmem:[#allocation4 + $0x2b8] sm:$0xff]
        %v4787 = vld [vmem:[#allocation4 + $0x2c0] sm:$0xff]
        %v4788 = vld [vmem:[#allocation4 + $0x2d0] sm:$0xff]
        %v4789 = vld [vmem:[#allocation4 + $0x2d8] sm:$0xff]
        %v4790 = vld [vmem:[#allocation4 + $0x2e8] sm:$0xff]
        %v4791 = vld [vmem:[#allocation4 + $0x2f0] sm:$0xff]
        %v4792 = vld [vmem:[#allocation4 + $0x300] sm:$0xff]
        %v4793 = vld [vmem:[#allocation4 + $0x308] sm:$0xff]
        %v4794 = vld [vmem:[#allocation4 + $0x318] sm:$0xff]
        %v4795 = vld [vmem:[#allocation4 + $0x320] sm:$0xff]
        %4796 = vst.msk [vmem:[#allocation5] sm:$0xff] %vm4513, %v4732
        %4797 = vst.msk [vmem:[#allocation5 + $0x8] sm:$0xff] %vm4513, %v4733
        %4798 = vst.msk [vmem:[#allocation5 + $0x10] sm:$0xff] %vm4513, %v4734
        %4799 = vst.msk [vmem:[#allocation5 + $0x18] sm:$0xff] %vm4513, %v4735
        %4800 = vst.msk [vmem:[#allocation5 + $0x20] sm:$0xff] %vm4513, %v4736
        %4801 = vst.msk [vmem:[#allocation5 + $0x28] sm:$0xff] %vm4513, %v4737
        %4802 = vst.msk [vmem:[#allocation5 + $0x30] sm:$0xff] %vm4513, %v4738
        %4803 = vst.msk [vmem:[#allocation5 + $0x38] sm:$0xff] %vm4513, %v4739
        %4804 = vst.msk [vmem:[#allocation5 + $0x40] sm:$0xff] %vm4513, %v4740
        %4805 = vst.msk [vmem:[#allocation5 + $0x48] sm:$0xff] %vm4513, %v4741
        %4806 = vst.msk [vmem:[#allocation5 + $0x50] sm:$0xff] %vm4513, %v4742
        %4807 = vst.msk [vmem:[#allocation5 + $0x58] sm:$0xff] %vm4513, %v4743
        %4808 = vst.msk [vmem:[#allocation5 + $0x60] sm:$0xff] %vm4513, %v4744
        %4809 = vst.msk [vmem:[#allocation5 + $0x68] sm:$0xff] %vm4513, %v4745
        %4810 = vst.msk [vmem:[#allocation5 + $0x70] sm:$0xff] %vm4513, %v4746
        %4811 = vst.msk [vmem:[#allocation5 + $0x78] sm:$0xff] %vm4513, %v4747
        %4812 = vst.msk [vmem:[#allocation5 + $0x80] sm:$0xff] %vm4513, %v4748
        %4813 = vst.msk [vmem:[#allocation5 + $0x88] sm:$0xff] %vm4513, %v4749
        %4814 = vst.msk [vmem:[#allocation5 + $0x90] sm:$0xff] %vm4513, %v4750
        %4815 = vst.msk [vmem:[#allocation5 + $0x98] sm:$0xff] %vm4513, %v4751
        %4816 = vst.msk [vmem:[#allocation5 + $0xa0] sm:$0xff] %vm4513, %v4752
        %4817 = vst.msk [vmem:[#allocation5 + $0xa8] sm:$0xff] %vm4513, %v4753
        %4818 = vst.msk [vmem:[#allocation5 + $0xb0] sm:$0xff] %vm4513, %v4754
        %4819 = vst.msk [vmem:[#allocation5 + $0xb8] sm:$0xff] %vm4513, %v4755
        %4820 = vst.msk [vmem:[#allocation5 + $0xc0] sm:$0xff] %vm4513, %v4756
        %4821 = vst.msk [vmem:[#allocation5 + $0xc8] sm:$0xff] %vm4513, %v4757
        %4822 = vst.msk [vmem:[#allocation5 + $0xd0] sm:$0xff] %vm4513, %v4758
        %4823 = vst.msk [vmem:[#allocation5 + $0xd8] sm:$0xff] %vm4513, %v4759
        %4824 = vst.msk [vmem:[#allocation5 + $0xe0] sm:$0xff] %vm4513, %v4760
        %4825 = vst.msk [vmem:[#allocation5 + $0xe8] sm:$0xff] %vm4513, %v4761
        %4826 = vst.msk [vmem:[#allocation5 + $0xf0] sm:$0xff] %vm4513, %v4762
        %4827 = vst.msk [vmem:[#allocation5 + $0xf8] sm:$0xff] %vm4513, %v4763
        %4828 = vst.msk [vmem:[#allocation5 + $0x100] sm:$0xff] %vm4513, %v4764
        %4829 = vst.msk [vmem:[#allocation5 + $0x108] sm:$0xff] %vm4513, %v4765
        %4830 = vst.msk [vmem:[#allocation5 + $0x110] sm:$0xff] %vm4513, %v4766
        %4831 = vst.msk [vmem:[#allocation5 + $0x118] sm:$0xff] %vm4513, %v4767
        %4832 = vst.msk [vmem:[#allocation5 + $0x120] sm:$0xff] %vm4513, %v4768
        %4833 = vst.msk [vmem:[#allocation5 + $0x128] sm:$0xff] %vm4513, %v4769
        %4834 = vst.msk [vmem:[#allocation5 + $0x130] sm:$0xff] %vm4513, %v4770
        %4835 = vst.msk [vmem:[#allocation5 + $0x138] sm:$0xff] %vm4513, %v4771
        %4836 = vst.msk [vmem:[#allocation5 + $0x140] sm:$0xff] %vm4513, %v4772
        %4837 = vst.msk [vmem:[#allocation5 + $0x148] sm:$0xff] %vm4513, %v4773
        %4838 = vst.msk [vmem:[#allocation5 + $0x150] sm:$0xff] %vm4513, %v4774
        %4839 = vst.msk [vmem:[#allocation5 + $0x158] sm:$0xff] %vm4513, %v4775
        %4840 = vst.msk [vmem:[#allocation5 + $0x160] sm:$0xff] %vm4513, %v4776
        %4841 = vst.msk [vmem:[#allocation5 + $0x168] sm:$0xff] %vm4513, %v4777
        %4842 = vst.msk [vmem:[#allocation5 + $0x170] sm:$0xff] %vm4513, %v4778
        %4843 = vst.msk [vmem:[#allocation5 + $0x178] sm:$0xff] %vm4513, %v4779
        %4844 = vst.msk [vmem:[#allocation5 + $0x180] sm:$0xff] %vm4513, %v4780
        %4845 = vst.msk [vmem:[#allocation5 + $0x188] sm:$0xff] %vm4513, %v4781
        %4846 = vst.msk [vmem:[#allocation5 + $0x190] sm:$0xff] %vm4513, %v4782
        %4847 = vst.msk [vmem:[#allocation5 + $0x198] sm:$0xff] %vm4513, %v4783
        %4848 = vst.msk [vmem:[#allocation5 + $0x1a0] sm:$0xff] %vm4513, %v4784
        %4849 = vst.msk [vmem:[#allocation5 + $0x1a8] sm:$0xff] %vm4513, %v4785
        %4850 = vst.msk [vmem:[#allocation5 + $0x1b0] sm:$0xff] %vm4513, %v4786
        %4851 = vst.msk [vmem:[#allocation5 + $0x1b8] sm:$0xff] %vm4513, %v4787
        %4852 = vst.msk [vmem:[#allocation5 + $0x1c0] sm:$0xff] %vm4513, %v4788
        %4853 = vst.msk [vmem:[#allocation5 + $0x1c8] sm:$0xff] %vm4513, %v4789
        %4854 = vst.msk [vmem:[#allocation5 + $0x1d0] sm:$0xff] %vm4513, %v4790
        %4855 = vst.msk [vmem:[#allocation5 + $0x1d8] sm:$0xff] %vm4513, %v4791
        %4856 = vst.msk [vmem:[#allocation5 + $0x1e0] sm:$0xff] %vm4513, %v4792
        %4857 = vst.msk [vmem:[#allocation5 + $0x1e8] sm:$0xff] %vm4513, %v4793
        %4858 = vst.msk [vmem:[#allocation5 + $0x1f0] sm:$0xff] %vm4513, %v4794
        %4859 = vst.msk [vmem:[#allocation5 + $0x1f8] sm:$0xff] %vm4513, %v4795
        %v4860 = vld [vmem:[#allocation4 + $0x1] sm:$0xff]
        %v4861 = vld [vmem:[#allocation4 + $0x9] sm:$0xff]
        %v4862 = vld [vmem:[#allocation4 + $0x19] sm:$0xff]
        %v4863 = vld [vmem:[#allocation4 + $0x21] sm:$0xff]
        %v4864 = vld [vmem:[#allocation4 + $0x31] sm:$0xff]
        %v4865 = vld [vmem:[#allocation4 + $0x39] sm:$0xff]
        %v4866 = vld [vmem:[#allocation4 + $0x49] sm:$0xff]
        %v4867 = vld [vmem:[#allocation4 + $0x51] sm:$0xff]
        %v4868 = vld [vmem:[#allocation4 + $0x61] sm:$0xff]
        %v4869 = vld [vmem:[#allocation4 + $0x69] sm:$0xff]
        %v4870 = vld [vmem:[#allocation4 + $0x79] sm:$0xff]
        %v4871 = vld [vmem:[#allocation4 + $0x81] sm:$0xff]
        %v4872 = vld [vmem:[#allocation4 + $0x91] sm:$0xff]
        %v4873 = vld [vmem:[#allocation4 + $0x99] sm:$0xff]
        %v4874 = vld [vmem:[#allocation4 + $0xa9] sm:$0xff]
        %v4875 = vld [vmem:[#allocation4 + $0xb1] sm:$0xff]
        %v4876 = vld [vmem:[#allocation4 + $0xc1] sm:$0xff]
        %v4877 = vld [vmem:[#allocation4 + $0xc9] sm:$0xff]
        %v4878 = vld [vmem:[#allocation4 + $0xd9] sm:$0xff]
        %v4879 = vld [vmem:[#allocation4 + $0xe1] sm:$0xff]
        %v4880 = vld [vmem:[#allocation4 + $0xf1] sm:$0xff]
        %v4881 = vld [vmem:[#allocation4 + $0xf9] sm:$0xff]
        %v4882 = vld [vmem:[#allocation4 + $0x109] sm:$0xff]
        %v4883 = vld [vmem:[#allocation4 + $0x111] sm:$0xff]
        %v4884 = vld [vmem:[#allocation4 + $0x121] sm:$0xff]
        %v4885 = vld [vmem:[#allocation4 + $0x129] sm:$0xff]
        %v4886 = vld [vmem:[#allocation4 + $0x139] sm:$0xff]
        %v4887 = vld [vmem:[#allocation4 + $0x141] sm:$0xff]
        %v4888 = vld [vmem:[#allocation4 + $0x151] sm:$0xff]
        %v4889 = vld [vmem:[#allocation4 + $0x159] sm:$0xff]
        %v4890 = vld [vmem:[#allocation4 + $0x169] sm:$0xff]
        %v4891 = vld [vmem:[#allocation4 + $0x171] sm:$0xff]
        %v4892 = vld [vmem:[#allocation4 + $0x1b1] sm:$0xff]
        %v4893 = vld [vmem:[#allocation4 + $0x1b9] sm:$0xff]
        %v4894 = vld [vmem:[#allocation4 + $0x1c9] sm:$0xff]
        %v4895 = vld [vmem:[#allocation4 + $0x1d1] sm:$0xff]
        %v4896 = vld [vmem:[#allocation4 + $0x1e1] sm:$0xff]
        %v4897 = vld [vmem:[#allocation4 + $0x1e9] sm:$0xff]
        %v4898 = vld [vmem:[#allocation4 + $0x1f9] sm:$0xff]
        %v4899 = vld [vmem:[#allocation4 + $0x201] sm:$0xff]
        %v4900 = vld [vmem:[#allocation4 + $0x211] sm:$0xff]
        %v4901 = vld [vmem:[#allocation4 + $0x219] sm:$0xff]
        %v4902 = vld [vmem:[#allocation4 + $0x229] sm:$0xff]
        %v4903 = vld [vmem:[#allocation4 + $0x231] sm:$0xff]
        %v4904 = vld [vmem:[#allocation4 + $0x241] sm:$0xff]
        %v4905 = vld [vmem:[#allocation4 + $0x249] sm:$0xff]
        %v4906 = vld [vmem:[#allocation4 + $0x259] sm:$0xff]
        %v4907 = vld [vmem:[#allocation4 + $0x261] sm:$0xff]
        %v4908 = vld [vmem:[#allocation4 + $0x271] sm:$0xff]
        %v4909 = vld [vmem:[#allocation4 + $0x279] sm:$0xff]
        %v4910 = vld [vmem:[#allocation4 + $0x289] sm:$0xff]
        %v4911 = vld [vmem:[#allocation4 + $0x291] sm:$0xff]
        %v4912 = vld [vmem:[#allocation4 + $0x2a1] sm:$0xff]
        %v4913 = vld [vmem:[#allocation4 + $0x2a9] sm:$0xff]
        %v4914 = vld [vmem:[#allocation4 + $0x2b9] sm:$0xff]
        %v4915 = vld [vmem:[#allocation4 + $0x2c1] sm:$0xff]
        %v4916 = vld [vmem:[#allocation4 + $0x2d1] sm:$0xff]
        %v4917 = vld [vmem:[#allocation4 + $0x2d9] sm:$0xff]
        %v4918 = vld [vmem:[#allocation4 + $0x2e9] sm:$0xff]
        %v4919 = vld [vmem:[#allocation4 + $0x2f1] sm:$0xff]
        %v4920 = vld [vmem:[#allocation4 + $0x301] sm:$0xff]
        %v4921 = vld [vmem:[#allocation4 + $0x309] sm:$0xff]
        %v4922 = vld [vmem:[#allocation4 + $0x319] sm:$0xff]
        %v4923 = vld [vmem:[#allocation4 + $0x321] sm:$0xff]
        %4988 = vrot.lane.b32.xlu0 %v4860, 8
        %v4989 = vpop.permute.xlu0 %4988
        %4990 = vrot.lane.b32.xlu0 %v4861, 8
        %v4991 = vpop.permute.xlu0 %4990
        %4992 = vrot.lane.b32.xlu0 %v4862, 8
        %v4993 = vpop.permute.xlu0 %4992
        %4994 = vrot.lane.b32.xlu0 %v4863, 8
        %v4995 = vpop.permute.xlu0 %4994
        %4996 = vrot.lane.b32.xlu0 %v4864, 8
        %v4997 = vpop.permute.xlu0 %4996
        %4998 = vrot.lane.b32.xlu0 %v4865, 8
        %v4999 = vpop.permute.xlu0 %4998
        %5000 = vrot.lane.b32.xlu0 %v4866, 8
        %v5001 = vpop.permute.xlu0 %5000
        %5002 = vrot.lane.b32.xlu0 %v4867, 8
        %v5003 = vpop.permute.xlu0 %5002
        %5004 = vrot.lane.b32.xlu0 %v4868, 8
        %v5005 = vpop.permute.xlu0 %5004
        %5006 = vrot.lane.b32.xlu0 %v4869, 8
        %v5007 = vpop.permute.xlu0 %5006
        %5008 = vrot.lane.b32.xlu0 %v4870, 8
        %v5009 = vpop.permute.xlu0 %5008
        %5010 = vrot.lane.b32.xlu0 %v4871, 8
        %v5011 = vpop.permute.xlu0 %5010
        %5012 = vrot.lane.b32.xlu0 %v4872, 8
        %v5013 = vpop.permute.xlu0 %5012
        %5014 = vrot.lane.b32.xlu0 %v4873, 8
        %v5015 = vpop.permute.xlu0 %5014
        %5016 = vrot.lane.b32.xlu0 %v4874, 8
        %v5017 = vpop.permute.xlu0 %5016
        %5018 = vrot.lane.b32.xlu0 %v4875, 8
        %v5019 = vpop.permute.xlu0 %5018
        %5020 = vrot.lane.b32.xlu0 %v4876, 8
        %v5021 = vpop.permute.xlu0 %5020
        %5022 = vrot.lane.b32.xlu0 %v4877, 8
        %v5023 = vpop.permute.xlu0 %5022
        %5024 = vrot.lane.b32.xlu0 %v4878, 8
        %v5025 = vpop.permute.xlu0 %5024
        %5026 = vrot.lane.b32.xlu0 %v4879, 8
        %v5027 = vpop.permute.xlu0 %5026
        %5028 = vrot.lane.b32.xlu0 %v4880, 8
        %v5029 = vpop.permute.xlu0 %5028
        %5030 = vrot.lane.b32.xlu0 %v4881, 8
        %v5031 = vpop.permute.xlu0 %5030
        %5032 = vrot.lane.b32.xlu0 %v4882, 8
        %v5033 = vpop.permute.xlu0 %5032
        %5034 = vrot.lane.b32.xlu0 %v4883, 8
        %v5035 = vpop.permute.xlu0 %5034
        %5036 = vrot.lane.b32.xlu0 %v4884, 8
        %v5037 = vpop.permute.xlu0 %5036
        %5038 = vrot.lane.b32.xlu0 %v4885, 8
        %v5039 = vpop.permute.xlu0 %5038
        %5040 = vrot.lane.b32.xlu0 %v4886, 8
        %v5041 = vpop.permute.xlu0 %5040
        %5042 = vrot.lane.b32.xlu0 %v4887, 8
        %v5043 = vpop.permute.xlu0 %5042
        %5044 = vrot.lane.b32.xlu0 %v4888, 8
        %v5045 = vpop.permute.xlu0 %5044
        %5046 = vrot.lane.b32.xlu0 %v4889, 8
        %v5047 = vpop.permute.xlu0 %5046
        %5048 = vrot.lane.b32.xlu0 %v4890, 8
        %v5049 = vpop.permute.xlu0 %5048
        %5050 = vrot.lane.b32.xlu0 %v4891, 8
        %v5051 = vpop.permute.xlu0 %5050
        %5052 = vrot.lane.b32.xlu0 %v4892, 8
        %v5053 = vpop.permute.xlu0 %5052
        %5054 = vrot.lane.b32.xlu0 %v4893, 8
        %v5055 = vpop.permute.xlu0 %5054
        %5056 = vrot.lane.b32.xlu0 %v4894, 8
        %v5057 = vpop.permute.xlu0 %5056
        %5058 = vrot.lane.b32.xlu0 %v4895, 8
        %v5059 = vpop.permute.xlu0 %5058
        %5060 = vrot.lane.b32.xlu0 %v4896, 8
        %v5061 = vpop.permute.xlu0 %5060
        %5062 = vrot.lane.b32.xlu0 %v4897, 8
        %v5063 = vpop.permute.xlu0 %5062
        %5064 = vrot.lane.b32.xlu0 %v4898, 8
        %v5065 = vpop.permute.xlu0 %5064
        %5066 = vrot.lane.b32.xlu0 %v4899, 8
        %v5067 = vpop.permute.xlu0 %5066
        %5068 = vrot.lane.b32.xlu0 %v4900, 8
        %v5069 = vpop.permute.xlu0 %5068
        %5070 = vrot.lane.b32.xlu0 %v4901, 8
        %v5071 = vpop.permute.xlu0 %5070
        %5072 = vrot.lane.b32.xlu0 %v4902, 8
        %v5073 = vpop.permute.xlu0 %5072
        %5074 = vrot.lane.b32.xlu0 %v4903, 8
        %v5075 = vpop.permute.xlu0 %5074
        %5076 = vrot.lane.b32.xlu0 %v4904, 8
        %v5077 = vpop.permute.xlu0 %5076
        %5078 = vrot.lane.b32.xlu0 %v4905, 8
        %v5079 = vpop.permute.xlu0 %5078
        %5080 = vrot.lane.b32.xlu0 %v4906, 8
        %v5081 = vpop.permute.xlu0 %5080
        %5082 = vrot.lane.b32.xlu0 %v4907, 8
        %v5083 = vpop.permute.xlu0 %5082
        %5084 = vrot.lane.b32.xlu0 %v4908, 8
        %v5085 = vpop.permute.xlu0 %5084
        %5086 = vrot.lane.b32.xlu0 %v4909, 8
        %v5087 = vpop.permute.xlu0 %5086
        %5088 = vrot.lane.b32.xlu0 %v4910, 8
        %v5089 = vpop.permute.xlu0 %5088
        %5090 = vrot.lane.b32.xlu0 %v4911, 8
        %v5091 = vpop.permute.xlu0 %5090
        %5092 = vrot.lane.b32.xlu0 %v4912, 8
        %v5093 = vpop.permute.xlu0 %5092
        %5094 = vrot.lane.b32.xlu0 %v4913, 8
        %v5095 = vpop.permute.xlu0 %5094
        %5096 = vrot.lane.b32.xlu0 %v4914, 8
        %v5097 = vpop.permute.xlu0 %5096
        %5098 = vrot.lane.b32.xlu0 %v4915, 8
        %v5099 = vpop.permute.xlu0 %5098
        %5100 = vrot.lane.b32.xlu0 %v4916, 8
        %v5101 = vpop.permute.xlu0 %5100
        %5102 = vrot.lane.b32.xlu0 %v4917, 8
        %v5103 = vpop.permute.xlu0 %5102
        %5104 = vrot.lane.b32.xlu0 %v4918, 8
        %v5105 = vpop.permute.xlu0 %5104
        %5106 = vrot.lane.b32.xlu0 %v4919, 8
        %v5107 = vpop.permute.xlu0 %5106
        %5108 = vrot.lane.b32.xlu0 %v4920, 8
        %v5109 = vpop.permute.xlu0 %5108
        %5110 = vrot.lane.b32.xlu0 %v4921, 8
        %v5111 = vpop.permute.xlu0 %5110
        %5112 = vrot.lane.b32.xlu0 %v4922, 8
        %v5113 = vpop.permute.xlu0 %5112
        %5114 = vrot.lane.b32.xlu0 %v4923, 8
        %v5115 = vpop.permute.xlu0 %5114
        %vm5180 = vcmask 130112
        %5181 = vst.msk [vmem:[#allocation5] sm:$0xff] %vm5180, %v4989
        %5182 = vst.msk [vmem:[#allocation5 + $0x8] sm:$0xff] %vm5180, %v4991
        %5183 = vst.msk [vmem:[#allocation5 + $0x10] sm:$0xff] %vm5180, %v4993
        %5184 = vst.msk [vmem:[#allocation5 + $0x18] sm:$0xff] %vm5180, %v4995
        %5185 = vst.msk [vmem:[#allocation5 + $0x20] sm:$0xff] %vm5180, %v4997
        %5186 = vst.msk [vmem:[#allocation5 + $0x28] sm:$0xff] %vm5180, %v4999
        %5187 = vst.msk [vmem:[#allocation5 + $0x30] sm:$0xff] %vm5180, %v5001
        %5188 = vst.msk [vmem:[#allocation5 + $0x38] sm:$0xff] %vm5180, %v5003
        %5189 = vst.msk [vmem:[#allocation5 + $0x40] sm:$0xff] %vm5180, %v5005
        %5190 = vst.msk [vmem:[#allocation5 + $0x48] sm:$0xff] %vm5180, %v5007
        %5191 = vst.msk [vmem:[#allocation5 + $0x50] sm:$0xff] %vm5180, %v5009
        %5192 = vst.msk [vmem:[#allocation5 + $0x58] sm:$0xff] %vm5180, %v5011
        %5193 = vst.msk [vmem:[#allocation5 + $0x60] sm:$0xff] %vm5180, %v5013
        %5194 = vst.msk [vmem:[#allocation5 + $0x68] sm:$0xff] %vm5180, %v5015
        %5195 = vst.msk [vmem:[#allocation5 + $0x70] sm:$0xff] %vm5180, %v5017
        %5196 = vst.msk [vmem:[#allocation5 + $0x78] sm:$0xff] %vm5180, %v5019
        %5197 = vst.msk [vmem:[#allocation5 + $0x80] sm:$0xff] %vm5180, %v5021
        %5198 = vst.msk [vmem:[#allocation5 + $0x88] sm:$0xff] %vm5180, %v5023
        %5199 = vst.msk [vmem:[#allocation5 + $0x90] sm:$0xff] %vm5180, %v5025
        %5200 = vst.msk [vmem:[#allocation5 + $0x98] sm:$0xff] %vm5180, %v5027
        %5201 = vst.msk [vmem:[#allocation5 + $0xa0] sm:$0xff] %vm5180, %v5029
        %5202 = vst.msk [vmem:[#allocation5 + $0xa8] sm:$0xff] %vm5180, %v5031
        %5203 = vst.msk [vmem:[#allocation5 + $0xb0] sm:$0xff] %vm5180, %v5033
        %5204 = vst.msk [vmem:[#allocation5 + $0xb8] sm:$0xff] %vm5180, %v5035
        %5205 = vst.msk [vmem:[#allocation5 + $0xc0] sm:$0xff] %vm5180, %v5037
        %5206 = vst.msk [vmem:[#allocation5 + $0xc8] sm:$0xff] %vm5180, %v5039
        %5207 = vst.msk [vmem:[#allocation5 + $0xd0] sm:$0xff] %vm5180, %v5041
        %5208 = vst.msk [vmem:[#allocation5 + $0xd8] sm:$0xff] %vm5180, %v5043
        %5209 = vst.msk [vmem:[#allocation5 + $0xe0] sm:$0xff] %vm5180, %v5045
        %5210 = vst.msk [vmem:[#allocation5 + $0xe8] sm:$0xff] %vm5180, %v5047
        %5211 = vst.msk [vmem:[#allocation5 + $0xf0] sm:$0xff] %vm5180, %v5049
        %5212 = vst.msk [vmem:[#allocation5 + $0xf8] sm:$0xff] %vm5180, %v5051
        %5213 = vst.msk [vmem:[#allocation5 + $0x100] sm:$0xff] %vm5180, %v5053
        %5214 = vst.msk [vmem:[#allocation5 + $0x108] sm:$0xff] %vm5180, %v5055
        %5215 = vst.msk [vmem:[#allocation5 + $0x110] sm:$0xff] %vm5180, %v5057
        %5216 = vst.msk [vmem:[#allocation5 + $0x118] sm:$0xff] %vm5180, %v5059
        %5217 = vst.msk [vmem:[#allocation5 + $0x120] sm:$0xff] %vm5180, %v5061
        %5218 = vst.msk [vmem:[#allocation5 + $0x128] sm:$0xff] %vm5180, %v5063
        %5219 = vst.msk [vmem:[#allocation5 + $0x130] sm:$0xff] %vm5180, %v5065
        %5220 = vst.msk [vmem:[#allocation5 + $0x138] sm:$0xff] %vm5180, %v5067
        %5221 = vst.msk [vmem:[#allocation5 + $0x140] sm:$0xff] %vm5180, %v5069
        %5222 = vst.msk [vmem:[#allocation5 + $0x148] sm:$0xff] %vm5180, %v5071
        %5223 = vst.msk [vmem:[#allocation5 + $0x150] sm:$0xff] %vm5180, %v5073
        %5224 = vst.msk [vmem:[#allocation5 + $0x158] sm:$0xff] %vm5180, %v5075
        %5225 = vst.msk [vmem:[#allocation5 + $0x160] sm:$0xff] %vm5180, %v5077
        %5226 = vst.msk [vmem:[#allocation5 + $0x168] sm:$0xff] %vm5180, %v5079
        %5227 = vst.msk [vmem:[#allocation5 + $0x170] sm:$0xff] %vm5180, %v5081
        %5228 = vst.msk [vmem:[#allocation5 + $0x178] sm:$0xff] %vm5180, %v5083
        %5229 = vst.msk [vmem:[#allocation5 + $0x180] sm:$0xff] %vm5180, %v5085
        %5230 = vst.msk [vmem:[#allocation5 + $0x188] sm:$0xff] %vm5180, %v5087
        %5231 = vst.msk [vmem:[#allocation5 + $0x190] sm:$0xff] %vm5180, %v5089
        %5232 = vst.msk [vmem:[#allocation5 + $0x198] sm:$0xff] %vm5180, %v5091
        %5233 = vst.msk [vmem:[#allocation5 + $0x1a0] sm:$0xff] %vm5180, %v5093
        %5234 = vst.msk [vmem:[#allocation5 + $0x1a8] sm:$0xff] %vm5180, %v5095
        %5235 = vst.msk [vmem:[#allocation5 + $0x1b0] sm:$0xff] %vm5180, %v5097
        %5236 = vst.msk [vmem:[#allocation5 + $0x1b8] sm:$0xff] %vm5180, %v5099
        %5237 = vst.msk [vmem:[#allocation5 + $0x1c0] sm:$0xff] %vm5180, %v5101
        %5238 = vst.msk [vmem:[#allocation5 + $0x1c8] sm:$0xff] %vm5180, %v5103
        %5239 = vst.msk [vmem:[#allocation5 + $0x1d0] sm:$0xff] %vm5180, %v5105
        %5240 = vst.msk [vmem:[#allocation5 + $0x1d8] sm:$0xff] %vm5180, %v5107
        %5241 = vst.msk [vmem:[#allocation5 + $0x1e0] sm:$0xff] %vm5180, %v5109
        %5242 = vst.msk [vmem:[#allocation5 + $0x1e8] sm:$0xff] %vm5180, %v5111
        %5243 = vst.msk [vmem:[#allocation5 + $0x1f0] sm:$0xff] %vm5180, %v5113
        %5244 = vst.msk [vmem:[#allocation5 + $0x1f8] sm:$0xff] %vm5180, %v5115
        %v5245 = vld [vmem:[#allocation4 + $0x2] sm:$0xff]
        %v5246 = vld [vmem:[#allocation4 + $0xa] sm:$0xff]
        %v5247 = vld [vmem:[#allocation4 + $0x1a] sm:$0xff]
        %v5248 = vld [vmem:[#allocation4 + $0x22] sm:$0xff]
        %v5249 = vld [vmem:[#allocation4 + $0x32] sm:$0xff]
        %v5250 = vld [vmem:[#allocation4 + $0x3a] sm:$0xff]
        %v5251 = vld [vmem:[#allocation4 + $0x4a] sm:$0xff]
        %v5252 = vld [vmem:[#allocation4 + $0x52] sm:$0xff]
        %v5253 = vld [vmem:[#allocation4 + $0x62] sm:$0xff]
        %v5254 = vld [vmem:[#allocation4 + $0x6a] sm:$0xff]
        %v5255 = vld [vmem:[#allocation4 + $0x7a] sm:$0xff]
        %v5256 = vld [vmem:[#allocation4 + $0x82] sm:$0xff]
        %v5257 = vld [vmem:[#allocation4 + $0x92] sm:$0xff]
        %v5258 = vld [vmem:[#allocation4 + $0x9a] sm:$0xff]
        %v5259 = vld [vmem:[#allocation4 + $0xaa] sm:$0xff]
        %v5260 = vld [vmem:[#allocation4 + $0xb2] sm:$0xff]
        %v5261 = vld [vmem:[#allocation4 + $0xc2] sm:$0xff]
        %v5262 = vld [vmem:[#allocation4 + $0xca] sm:$0xff]
        %v5263 = vld [vmem:[#allocation4 + $0xda] sm:$0xff]
        %v5264 = vld [vmem:[#allocation4 + $0xe2] sm:$0xff]
        %v5265 = vld [vmem:[#allocation4 + $0xf2] sm:$0xff]
        %v5266 = vld [vmem:[#allocation4 + $0xfa] sm:$0xff]
        %v5267 = vld [vmem:[#allocation4 + $0x10a] sm:$0xff]
        %v5268 = vld [vmem:[#allocation4 + $0x112] sm:$0xff]
        %v5269 = vld [vmem:[#allocation4 + $0x122] sm:$0xff]
        %v5270 = vld [vmem:[#allocation4 + $0x12a] sm:$0xff]
        %v5271 = vld [vmem:[#allocation4 + $0x13a] sm:$0xff]
        %v5272 = vld [vmem:[#allocation4 + $0x142] sm:$0xff]
        %v5273 = vld [vmem:[#allocation4 + $0x152] sm:$0xff]
        %v5274 = vld [vmem:[#allocation4 + $0x15a] sm:$0xff]
        %v5275 = vld [vmem:[#allocation4 + $0x16a] sm:$0xff]
        %v5276 = vld [vmem:[#allocation4 + $0x172] sm:$0xff]
        %v5277 = vld [vmem:[#allocation4 + $0x1b2] sm:$0xff]
        %v5278 = vld [vmem:[#allocation4 + $0x1ba] sm:$0xff]
        %v5279 = vld [vmem:[#allocation4 + $0x1ca] sm:$0xff]
        %v5280 = vld [vmem:[#allocation4 + $0x1d2] sm:$0xff]
        %v5281 = vld [vmem:[#allocation4 + $0x1e2] sm:$0xff]
        %v5282 = vld [vmem:[#allocation4 + $0x1ea] sm:$0xff]
        %v5283 = vld [vmem:[#allocation4 + $0x1fa] sm:$0xff]
        %v5284 = vld [vmem:[#allocation4 + $0x202] sm:$0xff]
        %v5285 = vld [vmem:[#allocation4 + $0x212] sm:$0xff]
        %v5286 = vld [vmem:[#allocation4 + $0x21a] sm:$0xff]
        %v5287 = vld [vmem:[#allocation4 + $0x22a] sm:$0xff]
        %v5288 = vld [vmem:[#allocation4 + $0x232] sm:$0xff]
        %v5289 = vld [vmem:[#allocation4 + $0x242] sm:$0xff]
        %v5290 = vld [vmem:[#allocation4 + $0x24a] sm:$0xff]
        %v5291 = vld [vmem:[#allocation4 + $0x25a] sm:$0xff]
        %v5292 = vld [vmem:[#allocation4 + $0x262] sm:$0xff]
        %v5293 = vld [vmem:[#allocation4 + $0x272] sm:$0xff]
        %v5294 = vld [vmem:[#allocation4 + $0x27a] sm:$0xff]
        %v5295 = vld [vmem:[#allocation4 + $0x28a] sm:$0xff]
        %v5296 = vld [vmem:[#allocation4 + $0x292] sm:$0xff]
        %v5297 = vld [vmem:[#allocation4 + $0x2a2] sm:$0xff]
        %v5298 = vld [vmem:[#allocation4 + $0x2aa] sm:$0xff]
        %v5299 = vld [vmem:[#allocation4 + $0x2ba] sm:$0xff]
        %v5300 = vld [vmem:[#allocation4 + $0x2c2] sm:$0xff]
        %v5301 = vld [vmem:[#allocation4 + $0x2d2] sm:$0xff]
        %v5302 = vld [vmem:[#allocation4 + $0x2da] sm:$0xff]
        %v5303 = vld [vmem:[#allocation4 + $0x2ea] sm:$0xff]
        %v5304 = vld [vmem:[#allocation4 + $0x2f2] sm:$0xff]
        %v5305 = vld [vmem:[#allocation4 + $0x302] sm:$0xff]
        %v5306 = vld [vmem:[#allocation4 + $0x30a] sm:$0xff]
        %v5307 = vld [vmem:[#allocation4 + $0x31a] sm:$0xff]
        %v5308 = vld [vmem:[#allocation4 + $0x322] sm:$0xff]
        %5373 = vrot.lane.b32.xlu0 %v5245, 16
        %v5374 = vpop.permute.xlu0 %5373
        %5375 = vrot.lane.b32.xlu0 %v5246, 16
        %v5376 = vpop.permute.xlu0 %5375
        %5377 = vrot.lane.b32.xlu0 %v5247, 16
        %v5378 = vpop.permute.xlu0 %5377
        %5379 = vrot.lane.b32.xlu0 %v5248, 16
        %v5380 = vpop.permute.xlu0 %5379
        %5381 = vrot.lane.b32.xlu0 %v5249, 16
        %v5382 = vpop.permute.xlu0 %5381
        %5383 = vrot.lane.b32.xlu0 %v5250, 16
        %v5384 = vpop.permute.xlu0 %5383
        %5385 = vrot.lane.b32.xlu0 %v5251, 16
        %v5386 = vpop.permute.xlu0 %5385
        %5387 = vrot.lane.b32.xlu0 %v5252, 16
        %v5388 = vpop.permute.xlu0 %5387
        %5389 = vrot.lane.b32.xlu0 %v5253, 16
        %v5390 = vpop.permute.xlu0 %5389
        %5391 = vrot.lane.b32.xlu0 %v5254, 16
        %v5392 = vpop.permute.xlu0 %5391
        %5393 = vrot.lane.b32.xlu0 %v5255, 16
        %v5394 = vpop.permute.xlu0 %5393
        %5395 = vrot.lane.b32.xlu0 %v5256, 16
        %v5396 = vpop.permute.xlu0 %5395
        %5397 = vrot.lane.b32.xlu0 %v5257, 16
        %v5398 = vpop.permute.xlu0 %5397
        %5399 = vrot.lane.b32.xlu0 %v5258, 16
        %v5400 = vpop.permute.xlu0 %5399
        %5401 = vrot.lane.b32.xlu0 %v5259, 16
        %v5402 = vpop.permute.xlu0 %5401
        %5403 = vrot.lane.b32.xlu0 %v5260, 16
        %v5404 = vpop.permute.xlu0 %5403
        %5405 = vrot.lane.b32.xlu0 %v5261, 16
        %v5406 = vpop.permute.xlu0 %5405
        %5407 = vrot.lane.b32.xlu0 %v5262, 16
        %v5408 = vpop.permute.xlu0 %5407
        %5409 = vrot.lane.b32.xlu0 %v5263, 16
        %v5410 = vpop.permute.xlu0 %5409
        %5411 = vrot.lane.b32.xlu0 %v5264, 16
        %v5412 = vpop.permute.xlu0 %5411
        %5413 = vrot.lane.b32.xlu0 %v5265, 16
        %v5414 = vpop.permute.xlu0 %5413
        %5415 = vrot.lane.b32.xlu0 %v5266, 16
        %v5416 = vpop.permute.xlu0 %5415
        %5417 = vrot.lane.b32.xlu0 %v5267, 16
        %v5418 = vpop.permute.xlu0 %5417
        %5419 = vrot.lane.b32.xlu0 %v5268, 16
        %v5420 = vpop.permute.xlu0 %5419
        %5421 = vrot.lane.b32.xlu0 %v5269, 16
        %v5422 = vpop.permute.xlu0 %5421
        %5423 = vrot.lane.b32.xlu0 %v5270, 16
        %v5424 = vpop.permute.xlu0 %5423
        %5425 = vrot.lane.b32.xlu0 %v5271, 16
        %v5426 = vpop.permute.xlu0 %5425
        %5427 = vrot.lane.b32.xlu0 %v5272, 16
        %v5428 = vpop.permute.xlu0 %5427
        %5429 = vrot.lane.b32.xlu0 %v5273, 16
        %v5430 = vpop.permute.xlu0 %5429
        %5431 = vrot.lane.b32.xlu0 %v5274, 16
        %v5432 = vpop.permute.xlu0 %5431
        %5433 = vrot.lane.b32.xlu0 %v5275, 16
        %v5434 = vpop.permute.xlu0 %5433
        %5435 = vrot.lane.b32.xlu0 %v5276, 16
        %v5436 = vpop.permute.xlu0 %5435
        %5437 = vrot.lane.b32.xlu0 %v5277, 16
        %v5438 = vpop.permute.xlu0 %5437
        %5439 = vrot.lane.b32.xlu0 %v5278, 16
        %v5440 = vpop.permute.xlu0 %5439
        %5441 = vrot.lane.b32.xlu0 %v5279, 16
        %v5442 = vpop.permute.xlu0 %5441
        %5443 = vrot.lane.b32.xlu0 %v5280, 16
        %v5444 = vpop.permute.xlu0 %5443
        %5445 = vrot.lane.b32.xlu0 %v5281, 16
        %v5446 = vpop.permute.xlu0 %5445
        %5447 = vrot.lane.b32.xlu0 %v5282, 16
        %v5448 = vpop.permute.xlu0 %5447
        %5449 = vrot.lane.b32.xlu0 %v5283, 16
        %v5450 = vpop.permute.xlu0 %5449
        %5451 = vrot.lane.b32.xlu0 %v5284, 16
        %v5452 = vpop.permute.xlu0 %5451
        %5453 = vrot.lane.b32.xlu0 %v5285, 16
        %v5454 = vpop.permute.xlu0 %5453
        %5455 = vrot.lane.b32.xlu0 %v5286, 16
        %v5456 = vpop.permute.xlu0 %5455
        %5457 = vrot.lane.b32.xlu0 %v5287, 16
        %v5458 = vpop.permute.xlu0 %5457
        %5459 = vrot.lane.b32.xlu0 %v5288, 16
        %v5460 = vpop.permute.xlu0 %5459
        %5461 = vrot.lane.b32.xlu0 %v5289, 16
        %v5462 = vpop.permute.xlu0 %5461
        %5463 = vrot.lane.b32.xlu0 %v5290, 16
        %v5464 = vpop.permute.xlu0 %5463
        %5465 = vrot.lane.b32.xlu0 %v5291, 16
        %v5466 = vpop.permute.xlu0 %5465
        %5467 = vrot.lane.b32.xlu0 %v5292, 16
        %v5468 = vpop.permute.xlu0 %5467
        %5469 = vrot.lane.b32.xlu0 %v5293, 16
        %v5470 = vpop.permute.xlu0 %5469
        %5471 = vrot.lane.b32.xlu0 %v5294, 16
        %v5472 = vpop.permute.xlu0 %5471
        %5473 = vrot.lane.b32.xlu0 %v5295, 16
        %v5474 = vpop.permute.xlu0 %5473
        %5475 = vrot.lane.b32.xlu0 %v5296, 16
        %v5476 = vpop.permute.xlu0 %5475
        %5477 = vrot.lane.b32.xlu0 %v5297, 16
        %v5478 = vpop.permute.xlu0 %5477
        %5479 = vrot.lane.b32.xlu0 %v5298, 16
        %v5480 = vpop.permute.xlu0 %5479
        %5481 = vrot.lane.b32.xlu0 %v5299, 16
        %v5482 = vpop.permute.xlu0 %5481
        %5483 = vrot.lane.b32.xlu0 %v5300, 16
        %v5484 = vpop.permute.xlu0 %5483
        %5485 = vrot.lane.b32.xlu0 %v5301, 16
        %v5486 = vpop.permute.xlu0 %5485
        %5487 = vrot.lane.b32.xlu0 %v5302, 16
        %v5488 = vpop.permute.xlu0 %5487
        %5489 = vrot.lane.b32.xlu0 %v5303, 16
        %v5490 = vpop.permute.xlu0 %5489
        %5491 = vrot.lane.b32.xlu0 %v5304, 16
        %v5492 = vpop.permute.xlu0 %5491
        %5493 = vrot.lane.b32.xlu0 %v5305, 16
        %v5494 = vpop.permute.xlu0 %5493
        %5495 = vrot.lane.b32.xlu0 %v5306, 16
        %v5496 = vpop.permute.xlu0 %5495
        %5497 = vrot.lane.b32.xlu0 %v5307, 16
        %v5498 = vpop.permute.xlu0 %5497
        %5499 = vrot.lane.b32.xlu0 %v5308, 16
        %v5500 = vpop.permute.xlu0 %5499
        %vm5565 = vcmask 195712
        %5566 = vst.msk [vmem:[#allocation5] sm:$0xff] %vm5565, %v5374
        %5567 = vst.msk [vmem:[#allocation5 + $0x8] sm:$0xff] %vm5565, %v5376
        %5568 = vst.msk [vmem:[#allocation5 + $0x10] sm:$0xff] %vm5565, %v5378
        %5569 = vst.msk [vmem:[#allocation5 + $0x18] sm:$0xff] %vm5565, %v5380
        %5570 = vst.msk [vmem:[#allocation5 + $0x20] sm:$0xff] %vm5565, %v5382
        %5571 = vst.msk [vmem:[#allocation5 + $0x28] sm:$0xff] %vm5565, %v5384
        %5572 = vst.msk [vmem:[#allocation5 + $0x30] sm:$0xff] %vm5565, %v5386
        %5573 = vst.msk [vmem:[#allocation5 + $0x38] sm:$0xff] %vm5565, %v5388
        %5574 = vst.msk [vmem:[#allocation5 + $0x40] sm:$0xff] %vm5565, %v5390
        %5575 = vst.msk [vmem:[#allocation5 + $0x48] sm:$0xff] %vm5565, %v5392
        %5576 = vst.msk [vmem:[#allocation5 + $0x50] sm:$0xff] %vm5565, %v5394
        %5577 = vst.msk [vmem:[#allocation5 + $0x58] sm:$0xff] %vm5565, %v5396
        %5578 = vst.msk [vmem:[#allocation5 + $0x60] sm:$0xff] %vm5565, %v5398
        %5579 = vst.msk [vmem:[#allocation5 + $0x68] sm:$0xff] %vm5565, %v5400
        %5580 = vst.msk [vmem:[#allocation5 + $0x70] sm:$0xff] %vm5565, %v5402
        %5581 = vst.msk [vmem:[#allocation5 + $0x78] sm:$0xff] %vm5565, %v5404
        %5582 = vst.msk [vmem:[#allocation5 + $0x80] sm:$0xff] %vm5565, %v5406
        %5583 = vst.msk [vmem:[#allocation5 + $0x88] sm:$0xff] %vm5565, %v5408
        %5584 = vst.msk [vmem:[#allocation5 + $0x90] sm:$0xff] %vm5565, %v5410
        %5585 = vst.msk [vmem:[#allocation5 + $0x98] sm:$0xff] %vm5565, %v5412
        %5586 = vst.msk [vmem:[#allocation5 + $0xa0] sm:$0xff] %vm5565, %v5414
        %5587 = vst.msk [vmem:[#allocation5 + $0xa8] sm:$0xff] %vm5565, %v5416
        %5588 = vst.msk [vmem:[#allocation5 + $0xb0] sm:$0xff] %vm5565, %v5418
        %5589 = vst.msk [vmem:[#allocation5 + $0xb8] sm:$0xff] %vm5565, %v5420
        %5590 = vst.msk [vmem:[#allocation5 + $0xc0] sm:$0xff] %vm5565, %v5422
        %5591 = vst.msk [vmem:[#allocation5 + $0xc8] sm:$0xff] %vm5565, %v5424
        %5592 = vst.msk [vmem:[#allocation5 + $0xd0] sm:$0xff] %vm5565, %v5426
        %5593 = vst.msk [vmem:[#allocation5 + $0xd8] sm:$0xff] %vm5565, %v5428
        %5594 = vst.msk [vmem:[#allocation5 + $0xe0] sm:$0xff] %vm5565, %v5430
        %5595 = vst.msk [vmem:[#allocation5 + $0xe8] sm:$0xff] %vm5565, %v5432
        %5596 = vst.msk [vmem:[#allocation5 + $0xf0] sm:$0xff] %vm5565, %v5434
        %5597 = vst.msk [vmem:[#allocation5 + $0xf8] sm:$0xff] %vm5565, %v5436
        %5598 = vst.msk [vmem:[#allocation5 + $0x100] sm:$0xff] %vm5565, %v5438
        %5599 = vst.msk [vmem:[#allocation5 + $0x108] sm:$0xff] %vm5565, %v5440
        %5600 = vst.msk [vmem:[#allocation5 + $0x110] sm:$0xff] %vm5565, %v5442
        %5601 = vst.msk [vmem:[#allocation5 + $0x118] sm:$0xff] %vm5565, %v5444
        %5602 = vst.msk [vmem:[#allocation5 + $0x120] sm:$0xff] %vm5565, %v5446
        %5603 = vst.msk [vmem:[#allocation5 + $0x128] sm:$0xff] %vm5565, %v5448
        %5604 = vst.msk [vmem:[#allocation5 + $0x130] sm:$0xff] %vm5565, %v5450
        %5605 = vst.msk [vmem:[#allocation5 + $0x138] sm:$0xff] %vm5565, %v5452
        %5606 = vst.msk [vmem:[#allocation5 + $0x140] sm:$0xff] %vm5565, %v5454
        %5607 = vst.msk [vmem:[#allocation5 + $0x148] sm:$0xff] %vm5565, %v5456
        %5608 = vst.msk [vmem:[#allocation5 + $0x150] sm:$0xff] %vm5565, %v5458
        %5609 = vst.msk [vmem:[#allocation5 + $0x158] sm:$0xff] %vm5565, %v5460
        %5610 = vst.msk [vmem:[#allocation5 + $0x160] sm:$0xff] %vm5565, %v5462
        %5611 = vst.msk [vmem:[#allocation5 + $0x168] sm:$0xff] %vm5565, %v5464
        %5612 = vst.msk [vmem:[#allocation5 + $0x170] sm:$0xff] %vm5565, %v5466
        %5613 = vst.msk [vmem:[#allocation5 + $0x178] sm:$0xff] %vm5565, %v5468
        %5614 = vst.msk [vmem:[#allocation5 + $0x180] sm:$0xff] %vm5565, %v5470
        %5615 = vst.msk [vmem:[#allocation5 + $0x188] sm:$0xff] %vm5565, %v5472
        %5616 = vst.msk [vmem:[#allocation5 + $0x190] sm:$0xff] %vm5565, %v5474
        %5617 = vst.msk [vmem:[#allocation5 + $0x198] sm:$0xff] %vm5565, %v5476
        %5618 = vst.msk [vmem:[#allocation5 + $0x1a0] sm:$0xff] %vm5565, %v5478
        %5619 = vst.msk [vmem:[#allocation5 + $0x1a8] sm:$0xff] %vm5565, %v5480
        %5620 = vst.msk [vmem:[#allocation5 + $0x1b0] sm:$0xff] %vm5565, %v5482
        %5621 = vst.msk [vmem:[#allocation5 + $0x1b8] sm:$0xff] %vm5565, %v5484
        %5622 = vst.msk [vmem:[#allocation5 + $0x1c0] sm:$0xff] %vm5565, %v5486
        %5623 = vst.msk [vmem:[#allocation5 + $0x1c8] sm:$0xff] %vm5565, %v5488
        %5624 = vst.msk [vmem:[#allocation5 + $0x1d0] sm:$0xff] %vm5565, %v5490
        %5625 = vst.msk [vmem:[#allocation5 + $0x1d8] sm:$0xff] %vm5565, %v5492
        %5626 = vst.msk [vmem:[#allocation5 + $0x1e0] sm:$0xff] %vm5565, %v5494
        %5627 = vst.msk [vmem:[#allocation5 + $0x1e8] sm:$0xff] %vm5565, %v5496
        %5628 = vst.msk [vmem:[#allocation5 + $0x1f0] sm:$0xff] %vm5565, %v5498
        %5629 = vst.msk [vmem:[#allocation5 + $0x1f8] sm:$0xff] %vm5565, %v5500
        %v5630 = vld [vmem:[%s4512] sm:$0xff]
        %v5631 = vld [vmem:[%s4512 + $0x8] sm:$0xff]
        %v5632 = vld [vmem:[%s4512 + $0x18] sm:$0xff]
        %v5633 = vld [vmem:[%s4512 + $0x20] sm:$0xff]
        %v5634 = vld [vmem:[%s4512 + $0x30] sm:$0xff]
        %v5635 = vld [vmem:[%s4512 + $0x38] sm:$0xff]
        %v5636 = vld [vmem:[%s4512 + $0x48] sm:$0xff]
        %v5637 = vld [vmem:[%s4512 + $0x50] sm:$0xff]
        %v5638 = vld [vmem:[%s4512 + $0x60] sm:$0xff]
        %v5639 = vld [vmem:[%s4512 + $0x68] sm:$0xff]
        %v5640 = vld [vmem:[%s4512 + $0x78] sm:$0xff]
        %v5641 = vld [vmem:[%s4512 + $0x80] sm:$0xff]
        %v5642 = vld [vmem:[%s4512 + $0x90] sm:$0xff]
        %v5643 = vld [vmem:[%s4512 + $0x98] sm:$0xff]
        %v5644 = vld [vmem:[%s4512 + $0xa8] sm:$0xff]
        %v5645 = vld [vmem:[%s4512 + $0xb0] sm:$0xff]
        %v5646 = vld [vmem:[%s4512 + $0xc0] sm:$0xff]
        %v5647 = vld [vmem:[%s4512 + $0xc8] sm:$0xff]
        %v5648 = vld [vmem:[%s4512 + $0xd8] sm:$0xff]
        %v5649 = vld [vmem:[%s4512 + $0xe0] sm:$0xff]
        %v5650 = vld [vmem:[%s4512 + $0xf0] sm:$0xff]
        %v5651 = vld [vmem:[%s4512 + $0xf8] sm:$0xff]
        %v5652 = vld [vmem:[%s4512 + $0x108] sm:$0xff]
        %v5653 = vld [vmem:[%s4512 + $0x110] sm:$0xff]
        %v5654 = vld [vmem:[%s4512 + $0x120] sm:$0xff]
        %v5655 = vld [vmem:[%s4512 + $0x128] sm:$0xff]
        %v5656 = vld [vmem:[%s4512 + $0x138] sm:$0xff]
        %v5657 = vld [vmem:[%s4512 + $0x140] sm:$0xff]
        %v5658 = vld [vmem:[%s4512 + $0x150] sm:$0xff]
        %v5659 = vld [vmem:[%s4512 + $0x158] sm:$0xff]
        %v5660 = vld [vmem:[%s4512 + $0x168] sm:$0xff]
        %v5661 = vld [vmem:[%s4512 + $0x170] sm:$0xff]
        %v5662 = vld [vmem:[%s4512 + $0x1b0] sm:$0xff]
        %v5663 = vld [vmem:[%s4512 + $0x1b8] sm:$0xff]
        %v5664 = vld [vmem:[%s4512 + $0x1c8] sm:$0xff]
        %v5665 = vld [vmem:[%s4512 + $0x1d0] sm:$0xff]
        %v5666 = vld [vmem:[%s4512 + $0x1e0] sm:$0xff]
        %v5667 = vld [vmem:[%s4512 + $0x1e8] sm:$0xff]
        %v5668 = vld [vmem:[%s4512 + $0x1f8] sm:$0xff]
        %v5669 = vld [vmem:[%s4512 + $0x200] sm:$0xff]
        %v5670 = vld [vmem:[%s4512 + $0x210] sm:$0xff]
        %v5671 = vld [vmem:[%s4512 + $0x218] sm:$0xff]
        %v5672 = vld [vmem:[%s4512 + $0x228] sm:$0xff]
        %v5673 = vld [vmem:[%s4512 + $0x230] sm:$0xff]
        %v5674 = vld [vmem:[%s4512 + $0x240] sm:$0xff]
        %v5675 = vld [vmem:[%s4512 + $0x248] sm:$0xff]
        %v5676 = vld [vmem:[%s4512 + $0x258] sm:$0xff]
        %v5677 = vld [vmem:[%s4512 + $0x260] sm:$0xff]
        %v5678 = vld [vmem:[%s4512 + $0x270] sm:$0xff]
        %v5679 = vld [vmem:[%s4512 + $0x278] sm:$0xff]
        %v5680 = vld [vmem:[%s4512 + $0x288] sm:$0xff]
        %v5681 = vld [vmem:[%s4512 + $0x290] sm:$0xff]
        %v5682 = vld [vmem:[%s4512 + $0x2a0] sm:$0xff]
        %v5683 = vld [vmem:[%s4512 + $0x2a8] sm:$0xff]
        %v5684 = vld [vmem:[%s4512 + $0x2b8] sm:$0xff]
        %v5685 = vld [vmem:[%s4512 + $0x2c0] sm:$0xff]
        %v5686 = vld [vmem:[%s4512 + $0x2d0] sm:$0xff]
        %v5687 = vld [vmem:[%s4512 + $0x2d8] sm:$0xff]
        %v5688 = vld [vmem:[%s4512 + $0x2e8] sm:$0xff]
        %v5689 = vld [vmem:[%s4512 + $0x2f0] sm:$0xff]
        %v5690 = vld [vmem:[%s4512 + $0x300] sm:$0xff]
        %v5691 = vld [vmem:[%s4512 + $0x308] sm:$0xff]
        %v5692 = vld [vmem:[%s4512 + $0x318] sm:$0xff]
        %v5693 = vld [vmem:[%s4512 + $0x320] sm:$0xff]
        %5758 = vrot.lane.b32.xlu0 %v5630, 24
        %v5759 = vpop.permute.xlu0 %5758
        %5760 = vrot.lane.b32.xlu0 %v5631, 24
        %v5761 = vpop.permute.xlu0 %5760
        %5762 = vrot.lane.b32.xlu0 %v5632, 24
        %v5763 = vpop.permute.xlu0 %5762
        %5764 = vrot.lane.b32.xlu0 %v5633, 24
        %v5765 = vpop.permute.xlu0 %5764
        %5766 = vrot.lane.b32.xlu0 %v5634, 24
        %v5767 = vpop.permute.xlu0 %5766
        %5768 = vrot.lane.b32.xlu0 %v5635, 24
        %v5769 = vpop.permute.xlu0 %5768
        %5770 = vrot.lane.b32.xlu0 %v5636, 24
        %v5771 = vpop.permute.xlu0 %5770
        %5772 = vrot.lane.b32.xlu0 %v5637, 24
        %v5773 = vpop.permute.xlu0 %5772
        %5774 = vrot.lane.b32.xlu0 %v5638, 24
        %v5775 = vpop.permute.xlu0 %5774
        %5776 = vrot.lane.b32.xlu0 %v5639, 24
        %v5777 = vpop.permute.xlu0 %5776
        %5778 = vrot.lane.b32.xlu0 %v5640, 24
        %v5779 = vpop.permute.xlu0 %5778
        %5780 = vrot.lane.b32.xlu0 %v5641, 24
        %v5781 = vpop.permute.xlu0 %5780
        %5782 = vrot.lane.b32.xlu0 %v5642, 24
        %v5783 = vpop.permute.xlu0 %5782
        %5784 = vrot.lane.b32.xlu0 %v5643, 24
        %v5785 = vpop.permute.xlu0 %5784
        %5786 = vrot.lane.b32.xlu0 %v5644, 24
        %v5787 = vpop.permute.xlu0 %5786
        %5788 = vrot.lane.b32.xlu0 %v5645, 24
        %v5789 = vpop.permute.xlu0 %5788
        %5790 = vrot.lane.b32.xlu0 %v5646, 24
        %v5791 = vpop.permute.xlu0 %5790
        %5792 = vrot.lane.b32.xlu0 %v5647, 24
        %v5793 = vpop.permute.xlu0 %5792
        %5794 = vrot.lane.b32.xlu0 %v5648, 24
        %v5795 = vpop.permute.xlu0 %5794
        %5796 = vrot.lane.b32.xlu0 %v5649, 24
        %v5797 = vpop.permute.xlu0 %5796
        %5798 = vrot.lane.b32.xlu0 %v5650, 24
        %v5799 = vpop.permute.xlu0 %5798
        %5800 = vrot.lane.b32.xlu0 %v5651, 24
        %v5801 = vpop.permute.xlu0 %5800
        %5802 = vrot.lane.b32.xlu0 %v5652, 24
        %v5803 = vpop.permute.xlu0 %5802
        %5804 = vrot.lane.b32.xlu0 %v5653, 24
        %v5805 = vpop.permute.xlu0 %5804
        %5806 = vrot.lane.b32.xlu0 %v5654, 24
        %v5807 = vpop.permute.xlu0 %5806
        %5808 = vrot.lane.b32.xlu0 %v5655, 24
        %v5809 = vpop.permute.xlu0 %5808
        %5810 = vrot.lane.b32.xlu0 %v5656, 24
        %v5811 = vpop.permute.xlu0 %5810
        %5812 = vrot.lane.b32.xlu0 %v5657, 24
        %v5813 = vpop.permute.xlu0 %5812
        %5814 = vrot.lane.b32.xlu0 %v5658, 24
        %v5815 = vpop.permute.xlu0 %5814
        %5816 = vrot.lane.b32.xlu0 %v5659, 24
        %v5817 = vpop.permute.xlu0 %5816
        %5818 = vrot.lane.b32.xlu0 %v5660, 24
        %v5819 = vpop.permute.xlu0 %5818
        %5820 = vrot.lane.b32.xlu0 %v5661, 24
        %v5821 = vpop.permute.xlu0 %5820
        %5822 = vrot.lane.b32.xlu0 %v5662, 24
        %v5823 = vpop.permute.xlu0 %5822
        %5824 = vrot.lane.b32.xlu0 %v5663, 24
        %v5825 = vpop.permute.xlu0 %5824
        %5826 = vrot.lane.b32.xlu0 %v5664, 24
        %v5827 = vpop.permute.xlu0 %5826
        %5828 = vrot.lane.b32.xlu0 %v5665, 24
        %v5829 = vpop.permute.xlu0 %5828
        %5830 = vrot.lane.b32.xlu0 %v5666, 24
        %v5831 = vpop.permute.xlu0 %5830
        %5832 = vrot.lane.b32.xlu0 %v5667, 24
        %v5833 = vpop.permute.xlu0 %5832
        %5834 = vrot.lane.b32.xlu0 %v5668, 24
        %v5835 = vpop.permute.xlu0 %5834
        %5836 = vrot.lane.b32.xlu0 %v5669, 24
        %v5837 = vpop.permute.xlu0 %5836
        %5838 = vrot.lane.b32.xlu0 %v5670, 24
        %v5839 = vpop.permute.xlu0 %5838
        %5840 = vrot.lane.b32.xlu0 %v5671, 24
        %v5841 = vpop.permute.xlu0 %5840
        %5842 = vrot.lane.b32.xlu0 %v5672, 24
        %v5843 = vpop.permute.xlu0 %5842
        %5844 = vrot.lane.b32.xlu0 %v5673, 24
        %v5845 = vpop.permute.xlu0 %5844
        %5846 = vrot.lane.b32.xlu0 %v5674, 24
        %v5847 = vpop.permute.xlu0 %5846
        %5848 = vrot.lane.b32.xlu0 %v5675, 24
        %v5849 = vpop.permute.xlu0 %5848
        %5850 = vrot.lane.b32.xlu0 %v5676, 24
        %v5851 = vpop.permute.xlu0 %5850
        %5852 = vrot.lane.b32.xlu0 %v5677, 24
        %v5853 = vpop.permute.xlu0 %5852
        %5854 = vrot.lane.b32.xlu0 %v5678, 24
        %v5855 = vpop.permute.xlu0 %5854
        %5856 = vrot.lane.b32.xlu0 %v5679, 24
        %v5857 = vpop.permute.xlu0 %5856
        %5858 = vrot.lane.b32.xlu0 %v5680, 24
        %v5859 = vpop.permute.xlu0 %5858
        %5860 = vrot.lane.b32.xlu0 %v5681, 24
        %v5861 = vpop.permute.xlu0 %5860
        %5862 = vrot.lane.b32.xlu0 %v5682, 24
        %v5863 = vpop.permute.xlu0 %5862
        %5864 = vrot.lane.b32.xlu0 %v5683, 24
        %v5865 = vpop.permute.xlu0 %5864
        %5866 = vrot.lane.b32.xlu0 %v5684, 24
        %v5867 = vpop.permute.xlu0 %5866
        %5868 = vrot.lane.b32.xlu0 %v5685, 24
        %v5869 = vpop.permute.xlu0 %5868
        %5870 = vrot.lane.b32.xlu0 %v5686, 24
        %v5871 = vpop.permute.xlu0 %5870
        %5872 = vrot.lane.b32.xlu0 %v5687, 24
        %v5873 = vpop.permute.xlu0 %5872
        %5874 = vrot.lane.b32.xlu0 %v5688, 24
        %v5875 = vpop.permute.xlu0 %5874
        %5876 = vrot.lane.b32.xlu0 %v5689, 24
        %v5877 = vpop.permute.xlu0 %5876
        %5878 = vrot.lane.b32.xlu0 %v5690, 24
        %v5879 = vpop.permute.xlu0 %5878
        %5880 = vrot.lane.b32.xlu0 %v5691, 24
        %v5881 = vpop.permute.xlu0 %5880
        %5882 = vrot.lane.b32.xlu0 %v5692, 24
        %v5883 = vpop.permute.xlu0 %5882
        %5884 = vrot.lane.b32.xlu0 %v5693, 24
        %v5885 = vpop.permute.xlu0 %5884
        %vm5950 = vcmask 261312
        %5951 = vst.msk [vmem:[#allocation5] sm:$0xff] %vm5950, %v5759
        %5952 = vst.msk [vmem:[#allocation5 + $0x8] sm:$0xff] %vm5950, %v5761
        %5953 = vst.msk [vmem:[#allocation5 + $0x10] sm:$0xff] %vm5950, %v5763
        %5954 = vst.msk [vmem:[#allocation5 + $0x18] sm:$0xff] %vm5950, %v5765
        %5955 = vst.msk [vmem:[#allocation5 + $0x20] sm:$0xff] %vm5950, %v5767
        %5956 = vst.msk [vmem:[#allocation5 + $0x28] sm:$0xff] %vm5950, %v5769
        %5957 = vst.msk [vmem:[#allocation5 + $0x30] sm:$0xff] %vm5950, %v5771
        %5958 = vst.msk [vmem:[#allocation5 + $0x38] sm:$0xff] %vm5950, %v5773
        %5959 = vst.msk [vmem:[#allocation5 + $0x40] sm:$0xff] %vm5950, %v5775
        %5960 = vst.msk [vmem:[#allocation5 + $0x48] sm:$0xff] %vm5950, %v5777
        %5961 = vst.msk [vmem:[#allocation5 + $0x50] sm:$0xff] %vm5950, %v5779
        %5962 = vst.msk [vmem:[#allocation5 + $0x58] sm:$0xff] %vm5950, %v5781
        %5963 = vst.msk [vmem:[#allocation5 + $0x60] sm:$0xff] %vm5950, %v5783
        %5964 = vst.msk [vmem:[#allocation5 + $0x68] sm:$0xff] %vm5950, %v5785
        %5965 = vst.msk [vmem:[#allocation5 + $0x70] sm:$0xff] %vm5950, %v5787
        %5966 = vst.msk [vmem:[#allocation5 + $0x78] sm:$0xff] %vm5950, %v5789
        %5967 = vst.msk [vmem:[#allocation5 + $0x80] sm:$0xff] %vm5950, %v5791
        %5968 = vst.msk [vmem:[#allocation5 + $0x88] sm:$0xff] %vm5950, %v5793
        %5969 = vst.msk [vmem:[#allocation5 + $0x90] sm:$0xff] %vm5950, %v5795
        %5970 = vst.msk [vmem:[#allocation5 + $0x98] sm:$0xff] %vm5950, %v5797
        %5971 = vst.msk [vmem:[#allocation5 + $0xa0] sm:$0xff] %vm5950, %v5799
        %5972 = vst.msk [vmem:[#allocation5 + $0xa8] sm:$0xff] %vm5950, %v5801
        %5973 = vst.msk [vmem:[#allocation5 + $0xb0] sm:$0xff] %vm5950, %v5803
        %5974 = vst.msk [vmem:[#allocation5 + $0xb8] sm:$0xff] %vm5950, %v5805
        %5975 = vst.msk [vmem:[#allocation5 + $0xc0] sm:$0xff] %vm5950, %v5807
        %5976 = vst.msk [vmem:[#allocation5 + $0xc8] sm:$0xff] %vm5950, %v5809
        %5977 = vst.msk [vmem:[#allocation5 + $0xd0] sm:$0xff] %vm5950, %v5811
        %5978 = vst.msk [vmem:[#allocation5 + $0xd8] sm:$0xff] %vm5950, %v5813
        %5979 = vst.msk [vmem:[#allocation5 + $0xe0] sm:$0xff] %vm5950, %v5815
        %5980 = vst.msk [vmem:[#allocation5 + $0xe8] sm:$0xff] %vm5950, %v5817
        %5981 = vst.msk [vmem:[#allocation5 + $0xf0] sm:$0xff] %vm5950, %v5819
        %5982 = vst.msk [vmem:[#allocation5 + $0xf8] sm:$0xff] %vm5950, %v5821
        %5983 = vst.msk [vmem:[#allocation5 + $0x100] sm:$0xff] %vm5950, %v5823
        %5984 = vst.msk [vmem:[#allocation5 + $0x108] sm:$0xff] %vm5950, %v5825
        %5985 = vst.msk [vmem:[#allocation5 + $0x110] sm:$0xff] %vm5950, %v5827
        %5986 = vst.msk [vmem:[#allocation5 + $0x118] sm:$0xff] %vm5950, %v5829
        %5987 = vst.msk [vmem:[#allocation5 + $0x120] sm:$0xff] %vm5950, %v5831
        %5988 = vst.msk [vmem:[#allocation5 + $0x128] sm:$0xff] %vm5950, %v5833
        %5989 = vst.msk [vmem:[#allocation5 + $0x130] sm:$0xff] %vm5950, %v5835
        %5990 = vst.msk [vmem:[#allocation5 + $0x138] sm:$0xff] %vm5950, %v5837
        %5991 = vst.msk [vmem:[#allocation5 + $0x140] sm:$0xff] %vm5950, %v5839
        %5992 = vst.msk [vmem:[#allocation5 + $0x148] sm:$0xff] %vm5950, %v5841
        %5993 = vst.msk [vmem:[#allocation5 + $0x150] sm:$0xff] %vm5950, %v5843
        %5994 = vst.msk [vmem:[#allocation5 + $0x158] sm:$0xff] %vm5950, %v5845
        %5995 = vst.msk [vmem:[#allocation5 + $0x160] sm:$0xff] %vm5950, %v5847
        %5996 = vst.msk [vmem:[#allocation5 + $0x168] sm:$0xff] %vm5950, %v5849
        %5997 = vst.msk [vmem:[#allocation5 + $0x170] sm:$0xff] %vm5950, %v5851
        %5998 = vst.msk [vmem:[#allocation5 + $0x178] sm:$0xff] %vm5950, %v5853
        %5999 = vst.msk [vmem:[#allocation5 + $0x180] sm:$0xff] %vm5950, %v5855
        %6000 = vst.msk [vmem:[#allocation5 + $0x188] sm:$0xff] %vm5950, %v5857
        %6001 = vst.msk [vmem:[#allocation5 + $0x190] sm:$0xff] %vm5950, %v5859
        %6002 = vst.msk [vmem:[#allocation5 + $0x198] sm:$0xff] %vm5950, %v5861
        %6003 = vst.msk [vmem:[#allocation5 + $0x1a0] sm:$0xff] %vm5950, %v5863
        %6004 = vst.msk [vmem:[#allocation5 + $0x1a8] sm:$0xff] %vm5950, %v5865
        %6005 = vst.msk [vmem:[#allocation5 + $0x1b0] sm:$0xff] %vm5950, %v5867
        %6006 = vst.msk [vmem:[#allocation5 + $0x1b8] sm:$0xff] %vm5950, %v5869
        %6007 = vst.msk [vmem:[#allocation5 + $0x1c0] sm:$0xff] %vm5950, %v5871
        %6008 = vst.msk [vmem:[#allocation5 + $0x1c8] sm:$0xff] %vm5950, %v5873
        %6009 = vst.msk [vmem:[#allocation5 + $0x1d0] sm:$0xff] %vm5950, %v5875
        %6010 = vst.msk [vmem:[#allocation5 + $0x1d8] sm:$0xff] %vm5950, %v5877
        %6011 = vst.msk [vmem:[#allocation5 + $0x1e0] sm:$0xff] %vm5950, %v5879
        %6012 = vst.msk [vmem:[#allocation5 + $0x1e8] sm:$0xff] %vm5950, %v5881
        %6013 = vst.msk [vmem:[#allocation5 + $0x1f0] sm:$0xff] %vm5950, %v5883
        %6014 = vst.msk [vmem:[#allocation5 + $0x1f8] sm:$0xff] %vm5950, %v5885
        %v6015 = vld [vmem:[%s4512 + $0x1] sm:$0xff]
        %v6016 = vld [vmem:[%s4512 + $0x9] sm:$0xff]
        %v6017 = vld [vmem:[%s4512 + $0x19] sm:$0xff]
        %v6018 = vld [vmem:[%s4512 + $0x21] sm:$0xff]
        %v6019 = vld [vmem:[%s4512 + $0x31] sm:$0xff]
        %v6020 = vld [vmem:[%s4512 + $0x39] sm:$0xff]
        %v6021 = vld [vmem:[%s4512 + $0x49] sm:$0xff]
        %v6022 = vld [vmem:[%s4512 + $0x51] sm:$0xff]
        %v6023 = vld [vmem:[%s4512 + $0x61] sm:$0xff]
        %v6024 = vld [vmem:[%s4512 + $0x69] sm:$0xff]
        %v6025 = vld [vmem:[%s4512 + $0x79] sm:$0xff]
        %v6026 = vld [vmem:[%s4512 + $0x81] sm:$0xff]
        %v6027 = vld [vmem:[%s4512 + $0x91] sm:$0xff]
        %v6028 = vld [vmem:[%s4512 + $0x99] sm:$0xff]
        %v6029 = vld [vmem:[%s4512 + $0xa9] sm:$0xff]
        %v6030 = vld [vmem:[%s4512 + $0xb1] sm:$0xff]
        %v6031 = vld [vmem:[%s4512 + $0xc1] sm:$0xff]
        %v6032 = vld [vmem:[%s4512 + $0xc9] sm:$0xff]
        %v6033 = vld [vmem:[%s4512 + $0xd9] sm:$0xff]
        %v6034 = vld [vmem:[%s4512 + $0xe1] sm:$0xff]
        %v6035 = vld [vmem:[%s4512 + $0xf1] sm:$0xff]
        %v6036 = vld [vmem:[%s4512 + $0xf9] sm:$0xff]
        %v6037 = vld [vmem:[%s4512 + $0x109] sm:$0xff]
        %v6038 = vld [vmem:[%s4512 + $0x111] sm:$0xff]
        %v6039 = vld [vmem:[%s4512 + $0x121] sm:$0xff]
        %v6040 = vld [vmem:[%s4512 + $0x129] sm:$0xff]
        %v6041 = vld [vmem:[%s4512 + $0x139] sm:$0xff]
        %v6042 = vld [vmem:[%s4512 + $0x141] sm:$0xff]
        %v6043 = vld [vmem:[%s4512 + $0x151] sm:$0xff]
        %v6044 = vld [vmem:[%s4512 + $0x159] sm:$0xff]
        %v6045 = vld [vmem:[%s4512 + $0x169] sm:$0xff]
        %v6046 = vld [vmem:[%s4512 + $0x171] sm:$0xff]
        %v6047 = vld [vmem:[%s4512 + $0x1b1] sm:$0xff]
        %v6048 = vld [vmem:[%s4512 + $0x1b9] sm:$0xff]
        %v6049 = vld [vmem:[%s4512 + $0x1c9] sm:$0xff]
        %v6050 = vld [vmem:[%s4512 + $0x1d1] sm:$0xff]
        %v6051 = vld [vmem:[%s4512 + $0x1e1] sm:$0xff]
        %v6052 = vld [vmem:[%s4512 + $0x1e9] sm:$0xff]
        %v6053 = vld [vmem:[%s4512 + $0x1f9] sm:$0xff]
        %v6054 = vld [vmem:[%s4512 + $0x201] sm:$0xff]
        %v6055 = vld [vmem:[%s4512 + $0x211] sm:$0xff]
        %v6056 = vld [vmem:[%s4512 + $0x219] sm:$0xff]
        %v6057 = vld [vmem:[%s4512 + $0x229] sm:$0xff]
        %v6058 = vld [vmem:[%s4512 + $0x231] sm:$0xff]
        %v6059 = vld [vmem:[%s4512 + $0x241] sm:$0xff]
        %v6060 = vld [vmem:[%s4512 + $0x249] sm:$0xff]
        %v6061 = vld [vmem:[%s4512 + $0x259] sm:$0xff]
        %v6062 = vld [vmem:[%s4512 + $0x261] sm:$0xff]
        %v6063 = vld [vmem:[%s4512 + $0x271] sm:$0xff]
        %v6064 = vld [vmem:[%s4512 + $0x279] sm:$0xff]
        %v6065 = vld [vmem:[%s4512 + $0x289] sm:$0xff]
        %v6066 = vld [vmem:[%s4512 + $0x291] sm:$0xff]
        %v6067 = vld [vmem:[%s4512 + $0x2a1] sm:$0xff]
        %v6068 = vld [vmem:[%s4512 + $0x2a9] sm:$0xff]
        %v6069 = vld [vmem:[%s4512 + $0x2b9] sm:$0xff]
        %v6070 = vld [vmem:[%s4512 + $0x2c1] sm:$0xff]
        %v6071 = vld [vmem:[%s4512 + $0x2d1] sm:$0xff]
        %v6072 = vld [vmem:[%s4512 + $0x2d9] sm:$0xff]
        %v6073 = vld [vmem:[%s4512 + $0x2e9] sm:$0xff]
        %v6074 = vld [vmem:[%s4512 + $0x2f1] sm:$0xff]
        %v6075 = vld [vmem:[%s4512 + $0x301] sm:$0xff]
        %v6076 = vld [vmem:[%s4512 + $0x309] sm:$0xff]
        %v6077 = vld [vmem:[%s4512 + $0x319] sm:$0xff]
        %v6078 = vld [vmem:[%s4512 + $0x321] sm:$0xff]
        %6143 = vrot.lane.b32.xlu0 %v6015, 32
        %v6144 = vpop.permute.xlu0 %6143
        %6145 = vrot.lane.b32.xlu0 %v6016, 32
        %v6146 = vpop.permute.xlu0 %6145
        %6147 = vrot.lane.b32.xlu0 %v6017, 32
        %v6148 = vpop.permute.xlu0 %6147
        %6149 = vrot.lane.b32.xlu0 %v6018, 32
        %v6150 = vpop.permute.xlu0 %6149
        %6151 = vrot.lane.b32.xlu0 %v6019, 32
        %v6152 = vpop.permute.xlu0 %6151
        %6153 = vrot.lane.b32.xlu0 %v6020, 32
        %v6154 = vpop.permute.xlu0 %6153
        %6155 = vrot.lane.b32.xlu0 %v6021, 32
        %v6156 = vpop.permute.xlu0 %6155
        %6157 = vrot.lane.b32.xlu0 %v6022, 32
        %v6158 = vpop.permute.xlu0 %6157
        %6159 = vrot.lane.b32.xlu0 %v6023, 32
        %v6160 = vpop.permute.xlu0 %6159
        %6161 = vrot.lane.b32.xlu0 %v6024, 32
        %v6162 = vpop.permute.xlu0 %6161
        %6163 = vrot.lane.b32.xlu0 %v6025, 32
        %v6164 = vpop.permute.xlu0 %6163
        %6165 = vrot.lane.b32.xlu0 %v6026, 32
        %v6166 = vpop.permute.xlu0 %6165
        %6167 = vrot.lane.b32.xlu0 %v6027, 32
        %v6168 = vpop.permute.xlu0 %6167
        %6169 = vrot.lane.b32.xlu0 %v6028, 32
        %v6170 = vpop.permute.xlu0 %6169
        %6171 = vrot.lane.b32.xlu0 %v6029, 32
        %v6172 = vpop.permute.xlu0 %6171
        %6173 = vrot.lane.b32.xlu0 %v6030, 32
        %v6174 = vpop.permute.xlu0 %6173
        %6175 = vrot.lane.b32.xlu0 %v6031, 32
        %v6176 = vpop.permute.xlu0 %6175
        %6177 = vrot.lane.b32.xlu0 %v6032, 32
        %v6178 = vpop.permute.xlu0 %6177
        %6179 = vrot.lane.b32.xlu0 %v6033, 32
        %v6180 = vpop.permute.xlu0 %6179
        %6181 = vrot.lane.b32.xlu0 %v6034, 32
        %v6182 = vpop.permute.xlu0 %6181
        %6183 = vrot.lane.b32.xlu0 %v6035, 32
        %v6184 = vpop.permute.xlu0 %6183
        %6185 = vrot.lane.b32.xlu0 %v6036, 32
        %v6186 = vpop.permute.xlu0 %6185
        %6187 = vrot.lane.b32.xlu0 %v6037, 32
        %v6188 = vpop.permute.xlu0 %6187
        %6189 = vrot.lane.b32.xlu0 %v6038, 32
        %v6190 = vpop.permute.xlu0 %6189
        %6191 = vrot.lane.b32.xlu0 %v6039, 32
        %v6192 = vpop.permute.xlu0 %6191
        %6193 = vrot.lane.b32.xlu0 %v6040, 32
        %v6194 = vpop.permute.xlu0 %6193
        %6195 = vrot.lane.b32.xlu0 %v6041, 32
        %v6196 = vpop.permute.xlu0 %6195
        %6197 = vrot.lane.b32.xlu0 %v6042, 32
        %v6198 = vpop.permute.xlu0 %6197
        %6199 = vrot.lane.b32.xlu0 %v6043, 32
        %v6200 = vpop.permute.xlu0 %6199
        %6201 = vrot.lane.b32.xlu0 %v6044, 32
        %v6202 = vpop.permute.xlu0 %6201
        %6203 = vrot.lane.b32.xlu0 %v6045, 32
        %v6204 = vpop.permute.xlu0 %6203
        %6205 = vrot.lane.b32.xlu0 %v6046, 32
        %v6206 = vpop.permute.xlu0 %6205
        %6207 = vrot.lane.b32.xlu0 %v6047, 32
        %v6208 = vpop.permute.xlu0 %6207
        %6209 = vrot.lane.b32.xlu0 %v6048, 32
        %v6210 = vpop.permute.xlu0 %6209
        %6211 = vrot.lane.b32.xlu0 %v6049, 32
        %v6212 = vpop.permute.xlu0 %6211
        %6213 = vrot.lane.b32.xlu0 %v6050, 32
        %v6214 = vpop.permute.xlu0 %6213
        %6215 = vrot.lane.b32.xlu0 %v6051, 32
        %v6216 = vpop.permute.xlu0 %6215
        %6217 = vrot.lane.b32.xlu0 %v6052, 32
        %v6218 = vpop.permute.xlu0 %6217
        %6219 = vrot.lane.b32.xlu0 %v6053, 32
        %v6220 = vpop.permute.xlu0 %6219
        %6221 = vrot.lane.b32.xlu0 %v6054, 32
        %v6222 = vpop.permute.xlu0 %6221
        %6223 = vrot.lane.b32.xlu0 %v6055, 32
        %v6224 = vpop.permute.xlu0 %6223
        %6225 = vrot.lane.b32.xlu0 %v6056, 32
        %v6226 = vpop.permute.xlu0 %6225
        %6227 = vrot.lane.b32.xlu0 %v6057, 32
        %v6228 = vpop.permute.xlu0 %6227
        %6229 = vrot.lane.b32.xlu0 %v6058, 32
        %v6230 = vpop.permute.xlu0 %6229
        %6231 = vrot.lane.b32.xlu0 %v6059, 32
        %v6232 = vpop.permute.xlu0 %6231
        %6233 = vrot.lane.b32.xlu0 %v6060, 32
        %v6234 = vpop.permute.xlu0 %6233
        %6235 = vrot.lane.b32.xlu0 %v6061, 32
        %v6236 = vpop.permute.xlu0 %6235
        %6237 = vrot.lane.b32.xlu0 %v6062, 32
        %v6238 = vpop.permute.xlu0 %6237
        %6239 = vrot.lane.b32.xlu0 %v6063, 32
        %v6240 = vpop.permute.xlu0 %6239
        %6241 = vrot.lane.b32.xlu0 %v6064, 32
        %v6242 = vpop.permute.xlu0 %6241
        %6243 = vrot.lane.b32.xlu0 %v6065, 32
        %v6244 = vpop.permute.xlu0 %6243
        %6245 = vrot.lane.b32.xlu0 %v6066, 32
        %v6246 = vpop.permute.xlu0 %6245
        %6247 = vrot.lane.b32.xlu0 %v6067, 32
        %v6248 = vpop.permute.xlu0 %6247
        %6249 = vrot.lane.b32.xlu0 %v6068, 32
        %v6250 = vpop.permute.xlu0 %6249
        %6251 = vrot.lane.b32.xlu0 %v6069, 32
        %v6252 = vpop.permute.xlu0 %6251
        %6253 = vrot.lane.b32.xlu0 %v6070, 32
        %v6254 = vpop.permute.xlu0 %6253
        %6255 = vrot.lane.b32.xlu0 %v6071, 32
        %v6256 = vpop.permute.xlu0 %6255
        %6257 = vrot.lane.b32.xlu0 %v6072, 32
        %v6258 = vpop.permute.xlu0 %6257
        %6259 = vrot.lane.b32.xlu0 %v6073, 32
        %v6260 = vpop.permute.xlu0 %6259
        %6261 = vrot.lane.b32.xlu0 %v6074, 32
        %v6262 = vpop.permute.xlu0 %6261
        %6263 = vrot.lane.b32.xlu0 %v6075, 32
        %v6264 = vpop.permute.xlu0 %6263
        %6265 = vrot.lane.b32.xlu0 %v6076, 32
        %v6266 = vpop.permute.xlu0 %6265
        %6267 = vrot.lane.b32.xlu0 %v6077, 32
        %v6268 = vpop.permute.xlu0 %6267
        %6269 = vrot.lane.b32.xlu0 %v6078, 32
        %v6270 = vpop.permute.xlu0 %6269
        %vm6335 = vcmask 326912
        %6336 = vst.msk [vmem:[#allocation5] sm:$0xff] %vm6335, %v6144
        %6337 = vst.msk [vmem:[#allocation5 + $0x8] sm:$0xff] %vm6335, %v6146
        %6338 = vst.msk [vmem:[#allocation5 + $0x10] sm:$0xff] %vm6335, %v6148
        %6339 = vst.msk [vmem:[#allocation5 + $0x18] sm:$0xff] %vm6335, %v6150
        %6340 = vst.msk [vmem:[#allocation5 + $0x20] sm:$0xff] %vm6335, %v6152
        %6341 = vst.msk [vmem:[#allocation5 + $0x28] sm:$0xff] %vm6335, %v6154
        %6342 = vst.msk [vmem:[#allocation5 + $0x30] sm:$0xff] %vm6335, %v6156
        %6343 = vst.msk [vmem:[#allocation5 + $0x38] sm:$0xff] %vm6335, %v6158
        %6344 = vst.msk [vmem:[#allocation5 + $0x40] sm:$0xff] %vm6335, %v6160
        %6345 = vst.msk [vmem:[#allocation5 + $0x48] sm:$0xff] %vm6335, %v6162
        %6346 = vst.msk [vmem:[#allocation5 + $0x50] sm:$0xff] %vm6335, %v6164
        %6347 = vst.msk [vmem:[#allocation5 + $0x58] sm:$0xff] %vm6335, %v6166
        %6348 = vst.msk [vmem:[#allocation5 + $0x60] sm:$0xff] %vm6335, %v6168
        %6349 = vst.msk [vmem:[#allocation5 + $0x68] sm:$0xff] %vm6335, %v6170
        %6350 = vst.msk [vmem:[#allocation5 + $0x70] sm:$0xff] %vm6335, %v6172
        %6351 = vst.msk [vmem:[#allocation5 + $0x78] sm:$0xff] %vm6335, %v6174
        %6352 = vst.msk [vmem:[#allocation5 + $0x80] sm:$0xff] %vm6335, %v6176
        %6353 = vst.msk [vmem:[#allocation5 + $0x88] sm:$0xff] %vm6335, %v6178
        %6354 = vst.msk [vmem:[#allocation5 + $0x90] sm:$0xff] %vm6335, %v6180
        %6355 = vst.msk [vmem:[#allocation5 + $0x98] sm:$0xff] %vm6335, %v6182
        %6356 = vst.msk [vmem:[#allocation5 + $0xa0] sm:$0xff] %vm6335, %v6184
        %6357 = vst.msk [vmem:[#allocation5 + $0xa8] sm:$0xff] %vm6335, %v6186
        %6358 = vst.msk [vmem:[#allocation5 + $0xb0] sm:$0xff] %vm6335, %v6188
        %6359 = vst.msk [vmem:[#allocation5 + $0xb8] sm:$0xff] %vm6335, %v6190
        %6360 = vst.msk [vmem:[#allocation5 + $0xc0] sm:$0xff] %vm6335, %v6192
        %6361 = vst.msk [vmem:[#allocation5 + $0xc8] sm:$0xff] %vm6335, %v6194
        %6362 = vst.msk [vmem:[#allocation5 + $0xd0] sm:$0xff] %vm6335, %v6196
        %6363 = vst.msk [vmem:[#allocation5 + $0xd8] sm:$0xff] %vm6335, %v6198
        %6364 = vst.msk [vmem:[#allocation5 + $0xe0] sm:$0xff] %vm6335, %v6200
        %6365 = vst.msk [vmem:[#allocation5 + $0xe8] sm:$0xff] %vm6335, %v6202
        %6366 = vst.msk [vmem:[#allocation5 + $0xf0] sm:$0xff] %vm6335, %v6204
        %6367 = vst.msk [vmem:[#allocation5 + $0xf8] sm:$0xff] %vm6335, %v6206
        %6368 = vst.msk [vmem:[#allocation5 + $0x100] sm:$0xff] %vm6335, %v6208
        %6369 = vst.msk [vmem:[#allocation5 + $0x108] sm:$0xff] %vm6335, %v6210
        %6370 = vst.msk [vmem:[#allocation5 + $0x110] sm:$0xff] %vm6335, %v6212
        %6371 = vst.msk [vmem:[#allocation5 + $0x118] sm:$0xff] %vm6335, %v6214
        %6372 = vst.msk [vmem:[#allocation5 + $0x120] sm:$0xff] %vm6335, %v6216
        %6373 = vst.msk [vmem:[#allocation5 + $0x128] sm:$0xff] %vm6335, %v6218
        %6374 = vst.msk [vmem:[#allocation5 + $0x130] sm:$0xff] %vm6335, %v6220
        %6375 = vst.msk [vmem:[#allocation5 + $0x138] sm:$0xff] %vm6335, %v6222
        %6376 = vst.msk [vmem:[#allocation5 + $0x140] sm:$0xff] %vm6335, %v6224
        %6377 = vst.msk [vmem:[#allocation5 + $0x148] sm:$0xff] %vm6335, %v6226
        %6378 = vst.msk [vmem:[#allocation5 + $0x150] sm:$0xff] %vm6335, %v6228
        %6379 = vst.msk [vmem:[#allocation5 + $0x158] sm:$0xff] %vm6335, %v6230
        %6380 = vst.msk [vmem:[#allocation5 + $0x160] sm:$0xff] %vm6335, %v6232
        %6381 = vst.msk [vmem:[#allocation5 + $0x168] sm:$0xff] %vm6335, %v6234
        %6382 = vst.msk [vmem:[#allocation5 + $0x170] sm:$0xff] %vm6335, %v6236
        %6383 = vst.msk [vmem:[#allocation5 + $0x178] sm:$0xff] %vm6335, %v6238
        %6384 = vst.msk [vmem:[#allocation5 + $0x180] sm:$0xff] %vm6335, %v6240
        %6385 = vst.msk [vmem:[#allocation5 + $0x188] sm:$0xff] %vm6335, %v6242
        %6386 = vst.msk [vmem:[#allocation5 + $0x190] sm:$0xff] %vm6335, %v6244
        %6387 = vst.msk [vmem:[#allocation5 + $0x198] sm:$0xff] %vm6335, %v6246
        %6388 = vst.msk [vmem:[#allocation5 + $0x1a0] sm:$0xff] %vm6335, %v6248
        %6389 = vst.msk [vmem:[#allocation5 + $0x1a8] sm:$0xff] %vm6335, %v6250
        %6390 = vst.msk [vmem:[#allocation5 + $0x1b0] sm:$0xff] %vm6335, %v6252
        %6391 = vst.msk [vmem:[#allocation5 + $0x1b8] sm:$0xff] %vm6335, %v6254
        %6392 = vst.msk [vmem:[#allocation5 + $0x1c0] sm:$0xff] %vm6335, %v6256
        %6393 = vst.msk [vmem:[#allocation5 + $0x1c8] sm:$0xff] %vm6335, %v6258
        %6394 = vst.msk [vmem:[#allocation5 + $0x1d0] sm:$0xff] %vm6335, %v6260
        %6395 = vst.msk [vmem:[#allocation5 + $0x1d8] sm:$0xff] %vm6335, %v6262
        %6396 = vst.msk [vmem:[#allocation5 + $0x1e0] sm:$0xff] %vm6335, %v6264
        %6397 = vst.msk [vmem:[#allocation5 + $0x1e8] sm:$0xff] %vm6335, %v6266
        %6398 = vst.msk [vmem:[#allocation5 + $0x1f0] sm:$0xff] %vm6335, %v6268
        %6399 = vst.msk [vmem:[#allocation5 + $0x1f8] sm:$0xff] %vm6335, %v6270
        %v6400 = vld [vmem:[%s4512 + $0x2] sm:$0xff]
        %v6401 = vld [vmem:[%s4512 + $0xa] sm:$0xff]
        %v6402 = vld [vmem:[%s4512 + $0x1a] sm:$0xff]
        %v6403 = vld [vmem:[%s4512 + $0x22] sm:$0xff]
        %v6404 = vld [vmem:[%s4512 + $0x32] sm:$0xff]
        %v6405 = vld [vmem:[%s4512 + $0x3a] sm:$0xff]
        %v6406 = vld [vmem:[%s4512 + $0x4a] sm:$0xff]
        %v6407 = vld [vmem:[%s4512 + $0x52] sm:$0xff]
        %v6408 = vld [vmem:[%s4512 + $0x62] sm:$0xff]
        %v6409 = vld [vmem:[%s4512 + $0x6a] sm:$0xff]
        %v6410 = vld [vmem:[%s4512 + $0x7a] sm:$0xff]
        %v6411 = vld [vmem:[%s4512 + $0x82] sm:$0xff]
        %v6412 = vld [vmem:[%s4512 + $0x92] sm:$0xff]
        %v6413 = vld [vmem:[%s4512 + $0x9a] sm:$0xff]
        %v6414 = vld [vmem:[%s4512 + $0xaa] sm:$0xff]
        %v6415 = vld [vmem:[%s4512 + $0xb2] sm:$0xff]
        %v6416 = vld [vmem:[%s4512 + $0xc2] sm:$0xff]
        %v6417 = vld [vmem:[%s4512 + $0xca] sm:$0xff]
        %v6418 = vld [vmem:[%s4512 + $0xda] sm:$0xff]
        %v6419 = vld [vmem:[%s4512 + $0xe2] sm:$0xff]
        %v6420 = vld [vmem:[%s4512 + $0xf2] sm:$0xff]
        %v6421 = vld [vmem:[%s4512 + $0xfa] sm:$0xff]
        %v6422 = vld [vmem:[%s4512 + $0x10a] sm:$0xff]
        %v6423 = vld [vmem:[%s4512 + $0x112] sm:$0xff]
        %v6424 = vld [vmem:[%s4512 + $0x122] sm:$0xff]
        %v6425 = vld [vmem:[%s4512 + $0x12a] sm:$0xff]
        %v6426 = vld [vmem:[%s4512 + $0x13a] sm:$0xff]
        %v6427 = vld [vmem:[%s4512 + $0x142] sm:$0xff]
        %v6428 = vld [vmem:[%s4512 + $0x152] sm:$0xff]
        %v6429 = vld [vmem:[%s4512 + $0x15a] sm:$0xff]
        %v6430 = vld [vmem:[%s4512 + $0x16a] sm:$0xff]
        %v6431 = vld [vmem:[%s4512 + $0x172] sm:$0xff]
        %v6432 = vld [vmem:[%s4512 + $0x1b2] sm:$0xff]
        %v6433 = vld [vmem:[%s4512 + $0x1ba] sm:$0xff]
        %v6434 = vld [vmem:[%s4512 + $0x1ca] sm:$0xff]
        %v6435 = vld [vmem:[%s4512 + $0x1d2] sm:$0xff]
        %v6436 = vld [vmem:[%s4512 + $0x1e2] sm:$0xff]
        %v6437 = vld [vmem:[%s4512 + $0x1ea] sm:$0xff]
        %v6438 = vld [vmem:[%s4512 + $0x1fa] sm:$0xff]
        %v6439 = vld [vmem:[%s4512 + $0x202] sm:$0xff]
        %v6440 = vld [vmem:[%s4512 + $0x212] sm:$0xff]
        %v6441 = vld [vmem:[%s4512 + $0x21a] sm:$0xff]
        %v6442 = vld [vmem:[%s4512 + $0x22a] sm:$0xff]
        %v6443 = vld [vmem:[%s4512 + $0x232] sm:$0xff]
        %v6444 = vld [vmem:[%s4512 + $0x242] sm:$0xff]
        %v6445 = vld [vmem:[%s4512 + $0x24a] sm:$0xff]
        %v6446 = vld [vmem:[%s4512 + $0x25a] sm:$0xff]
        %v6447 = vld [vmem:[%s4512 + $0x262] sm:$0xff]
        %v6448 = vld [vmem:[%s4512 + $0x272] sm:$0xff]
        %v6449 = vld [vmem:[%s4512 + $0x27a] sm:$0xff]
        %v6450 = vld [vmem:[%s4512 + $0x28a] sm:$0xff]
        %v6451 = vld [vmem:[%s4512 + $0x292] sm:$0xff]
        %v6452 = vld [vmem:[%s4512 + $0x2a2] sm:$0xff]
        %v6453 = vld [vmem:[%s4512 + $0x2aa] sm:$0xff]
        %v6454 = vld [vmem:[%s4512 + $0x2ba] sm:$0xff]
        %v6455 = vld [vmem:[%s4512 + $0x2c2] sm:$0xff]
        %v6456 = vld [vmem:[%s4512 + $0x2d2] sm:$0xff]
        %v6457 = vld [vmem:[%s4512 + $0x2da] sm:$0xff]
        %v6458 = vld [vmem:[%s4512 + $0x2ea] sm:$0xff]
        %v6459 = vld [vmem:[%s4512 + $0x2f2] sm:$0xff]
        %v6460 = vld [vmem:[%s4512 + $0x302] sm:$0xff]
        %v6461 = vld [vmem:[%s4512 + $0x30a] sm:$0xff]
        %v6462 = vld [vmem:[%s4512 + $0x31a] sm:$0xff]
        %v6463 = vld [vmem:[%s4512 + $0x322] sm:$0xff]
        %6528 = vrot.lane.b32.xlu0 %v6400, 40
        %v6529 = vpop.permute.xlu0 %6528
        %6530 = vrot.lane.b32.xlu0 %v6401, 40
        %v6531 = vpop.permute.xlu0 %6530
        %6532 = vrot.lane.b32.xlu0 %v6402, 40
        %v6533 = vpop.permute.xlu0 %6532
        %6534 = vrot.lane.b32.xlu0 %v6403, 40
        %v6535 = vpop.permute.xlu0 %6534
        %6536 = vrot.lane.b32.xlu0 %v6404, 40
        %v6537 = vpop.permute.xlu0 %6536
        %6538 = vrot.lane.b32.xlu0 %v6405, 40
        %v6539 = vpop.permute.xlu0 %6538
        %6540 = vrot.lane.b32.xlu0 %v6406, 40
        %v6541 = vpop.permute.xlu0 %6540
        %6542 = vrot.lane.b32.xlu0 %v6407, 40
        %v6543 = vpop.permute.xlu0 %6542
        %6544 = vrot.lane.b32.xlu0 %v6408, 40
        %v6545 = vpop.permute.xlu0 %6544
        %6546 = vrot.lane.b32.xlu0 %v6409, 40
        %v6547 = vpop.permute.xlu0 %6546
        %6548 = vrot.lane.b32.xlu0 %v6410, 40
        %v6549 = vpop.permute.xlu0 %6548
        %6550 = vrot.lane.b32.xlu0 %v6411, 40
        %v6551 = vpop.permute.xlu0 %6550
        %6552 = vrot.lane.b32.xlu0 %v6412, 40
        %v6553 = vpop.permute.xlu0 %6552
        %6554 = vrot.lane.b32.xlu0 %v6413, 40
        %v6555 = vpop.permute.xlu0 %6554
        %6556 = vrot.lane.b32.xlu0 %v6414, 40
        %v6557 = vpop.permute.xlu0 %6556
        %6558 = vrot.lane.b32.xlu0 %v6415, 40
        %v6559 = vpop.permute.xlu0 %6558
        %6560 = vrot.lane.b32.xlu0 %v6416, 40
        %v6561 = vpop.permute.xlu0 %6560
        %6562 = vrot.lane.b32.xlu0 %v6417, 40
        %v6563 = vpop.permute.xlu0 %6562
        %6564 = vrot.lane.b32.xlu0 %v6418, 40
        %v6565 = vpop.permute.xlu0 %6564
        %6566 = vrot.lane.b32.xlu0 %v6419, 40
        %v6567 = vpop.permute.xlu0 %6566
        %6568 = vrot.lane.b32.xlu0 %v6420, 40
        %v6569 = vpop.permute.xlu0 %6568
        %6570 = vrot.lane.b32.xlu0 %v6421, 40
        %v6571 = vpop.permute.xlu0 %6570
        %6572 = vrot.lane.b32.xlu0 %v6422, 40
        %v6573 = vpop.permute.xlu0 %6572
        %6574 = vrot.lane.b32.xlu0 %v6423, 40
        %v6575 = vpop.permute.xlu0 %6574
        %6576 = vrot.lane.b32.xlu0 %v6424, 40
        %v6577 = vpop.permute.xlu0 %6576
        %6578 = vrot.lane.b32.xlu0 %v6425, 40
        %v6579 = vpop.permute.xlu0 %6578
        %6580 = vrot.lane.b32.xlu0 %v6426, 40
        %v6581 = vpop.permute.xlu0 %6580
        %6582 = vrot.lane.b32.xlu0 %v6427, 40
        %v6583 = vpop.permute.xlu0 %6582
        %6584 = vrot.lane.b32.xlu0 %v6428, 40
        %v6585 = vpop.permute.xlu0 %6584
        %6586 = vrot.lane.b32.xlu0 %v6429, 40
        %v6587 = vpop.permute.xlu0 %6586
        %6588 = vrot.lane.b32.xlu0 %v6430, 40
        %v6589 = vpop.permute.xlu0 %6588
        %6590 = vrot.lane.b32.xlu0 %v6431, 40
        %v6591 = vpop.permute.xlu0 %6590
        %6592 = vrot.lane.b32.xlu0 %v6432, 40
        %v6593 = vpop.permute.xlu0 %6592
        %6594 = vrot.lane.b32.xlu0 %v6433, 40
        %v6595 = vpop.permute.xlu0 %6594
        %6596 = vrot.lane.b32.xlu0 %v6434, 40
        %v6597 = vpop.permute.xlu0 %6596
        %6598 = vrot.lane.b32.xlu0 %v6435, 40
        %v6599 = vpop.permute.xlu0 %6598
        %6600 = vrot.lane.b32.xlu0 %v6436, 40
        %v6601 = vpop.permute.xlu0 %6600
        %6602 = vrot.lane.b32.xlu0 %v6437, 40
        %v6603 = vpop.permute.xlu0 %6602
        %6604 = vrot.lane.b32.xlu0 %v6438, 40
        %v6605 = vpop.permute.xlu0 %6604
        %6606 = vrot.lane.b32.xlu0 %v6439, 40
        %v6607 = vpop.permute.xlu0 %6606
        %6608 = vrot.lane.b32.xlu0 %v6440, 40
        %v6609 = vpop.permute.xlu0 %6608
        %6610 = vrot.lane.b32.xlu0 %v6441, 40
        %v6611 = vpop.permute.xlu0 %6610
        %6612 = vrot.lane.b32.xlu0 %v6442, 40
        %v6613 = vpop.permute.xlu0 %6612
        %6614 = vrot.lane.b32.xlu0 %v6443, 40
        %v6615 = vpop.permute.xlu0 %6614
        %6616 = vrot.lane.b32.xlu0 %v6444, 40
        %v6617 = vpop.permute.xlu0 %6616
        %6618 = vrot.lane.b32.xlu0 %v6445, 40
        %v6619 = vpop.permute.xlu0 %6618
        %6620 = vrot.lane.b32.xlu0 %v6446, 40
        %v6621 = vpop.permute.xlu0 %6620
        %6622 = vrot.lane.b32.xlu0 %v6447, 40
        %v6623 = vpop.permute.xlu0 %6622
        %6624 = vrot.lane.b32.xlu0 %v6448, 40
        %v6625 = vpop.permute.xlu0 %6624
        %6626 = vrot.lane.b32.xlu0 %v6449, 40
        %v6627 = vpop.permute.xlu0 %6626
        %6628 = vrot.lane.b32.xlu0 %v6450, 40
        %v6629 = vpop.permute.xlu0 %6628
        %6630 = vrot.lane.b32.xlu0 %v6451, 40
        %v6631 = vpop.permute.xlu0 %6630
        %6632 = vrot.lane.b32.xlu0 %v6452, 40
        %v6633 = vpop.permute.xlu0 %6632
        %6634 = vrot.lane.b32.xlu0 %v6453, 40
        %v6635 = vpop.permute.xlu0 %6634
        %6636 = vrot.lane.b32.xlu0 %v6454, 40
        %v6637 = vpop.permute.xlu0 %6636
        %6638 = vrot.lane.b32.xlu0 %v6455, 40
        %v6639 = vpop.permute.xlu0 %6638
        %6640 = vrot.lane.b32.xlu0 %v6456, 40
        %v6641 = vpop.permute.xlu0 %6640
        %6642 = vrot.lane.b32.xlu0 %v6457, 40
        %v6643 = vpop.permute.xlu0 %6642
        %6644 = vrot.lane.b32.xlu0 %v6458, 40
        %v6645 = vpop.permute.xlu0 %6644
        %6646 = vrot.lane.b32.xlu0 %v6459, 40
        %v6647 = vpop.permute.xlu0 %6646
        %6648 = vrot.lane.b32.xlu0 %v6460, 40
        %v6649 = vpop.permute.xlu0 %6648
        %6650 = vrot.lane.b32.xlu0 %v6461, 40
        %v6651 = vpop.permute.xlu0 %6650
        %6652 = vrot.lane.b32.xlu0 %v6462, 40
        %v6653 = vpop.permute.xlu0 %6652
        %6654 = vrot.lane.b32.xlu0 %v6463, 40
        %v6655 = vpop.permute.xlu0 %6654
        %vm6720 = vcmask 392512
        %6721 = vst.msk [vmem:[#allocation5] sm:$0xff] %vm6720, %v6529
        %6722 = vst.msk [vmem:[#allocation5 + $0x8] sm:$0xff] %vm6720, %v6531
        %6723 = vst.msk [vmem:[#allocation5 + $0x10] sm:$0xff] %vm6720, %v6533
        %6724 = vst.msk [vmem:[#allocation5 + $0x18] sm:$0xff] %vm6720, %v6535
        %6725 = vst.msk [vmem:[#allocation5 + $0x20] sm:$0xff] %vm6720, %v6537
        %6726 = vst.msk [vmem:[#allocation5 + $0x28] sm:$0xff] %vm6720, %v6539
        %6727 = vst.msk [vmem:[#allocation5 + $0x30] sm:$0xff] %vm6720, %v6541
        %6728 = vst.msk [vmem:[#allocation5 + $0x38] sm:$0xff] %vm6720, %v6543
        %6729 = vst.msk [vmem:[#allocation5 + $0x40] sm:$0xff] %vm6720, %v6545
        %6730 = vst.msk [vmem:[#allocation5 + $0x48] sm:$0xff] %vm6720, %v6547
        %6731 = vst.msk [vmem:[#allocation5 + $0x50] sm:$0xff] %vm6720, %v6549
        %6732 = vst.msk [vmem:[#allocation5 + $0x58] sm:$0xff] %vm6720, %v6551
        %6733 = vst.msk [vmem:[#allocation5 + $0x60] sm:$0xff] %vm6720, %v6553
        %6734 = vst.msk [vmem:[#allocation5 + $0x68] sm:$0xff] %vm6720, %v6555
        %6735 = vst.msk [vmem:[#allocation5 + $0x70] sm:$0xff] %vm6720, %v6557
        %6736 = vst.msk [vmem:[#allocation5 + $0x78] sm:$0xff] %vm6720, %v6559
        %6737 = vst.msk [vmem:[#allocation5 + $0x80] sm:$0xff] %vm6720, %v6561
        %6738 = vst.msk [vmem:[#allocation5 + $0x88] sm:$0xff] %vm6720, %v6563
        %6739 = vst.msk [vmem:[#allocation5 + $0x90] sm:$0xff] %vm6720, %v6565
        %6740 = vst.msk [vmem:[#allocation5 + $0x98] sm:$0xff] %vm6720, %v6567
        %6741 = vst.msk [vmem:[#allocation5 + $0xa0] sm:$0xff] %vm6720, %v6569
        %6742 = vst.msk [vmem:[#allocation5 + $0xa8] sm:$0xff] %vm6720, %v6571
        %6743 = vst.msk [vmem:[#allocation5 + $0xb0] sm:$0xff] %vm6720, %v6573
        %6744 = vst.msk [vmem:[#allocation5 + $0xb8] sm:$0xff] %vm6720, %v6575
        %6745 = vst.msk [vmem:[#allocation5 + $0xc0] sm:$0xff] %vm6720, %v6577
        %6746 = vst.msk [vmem:[#allocation5 + $0xc8] sm:$0xff] %vm6720, %v6579
        %6747 = vst.msk [vmem:[#allocation5 + $0xd0] sm:$0xff] %vm6720, %v6581
        %6748 = vst.msk [vmem:[#allocation5 + $0xd8] sm:$0xff] %vm6720, %v6583
        %6749 = vst.msk [vmem:[#allocation5 + $0xe0] sm:$0xff] %vm6720, %v6585
        %6750 = vst.msk [vmem:[#allocation5 + $0xe8] sm:$0xff] %vm6720, %v6587
        %6751 = vst.msk [vmem:[#allocation5 + $0xf0] sm:$0xff] %vm6720, %v6589
        %6752 = vst.msk [vmem:[#allocation5 + $0xf8] sm:$0xff] %vm6720, %v6591
        %6753 = vst.msk [vmem:[#allocation5 + $0x100] sm:$0xff] %vm6720, %v6593
        %6754 = vst.msk [vmem:[#allocation5 + $0x108] sm:$0xff] %vm6720, %v6595
        %6755 = vst.msk [vmem:[#allocation5 + $0x110] sm:$0xff] %vm6720, %v6597
        %6756 = vst.msk [vmem:[#allocation5 + $0x118] sm:$0xff] %vm6720, %v6599
        %6757 = vst.msk [vmem:[#allocation5 + $0x120] sm:$0xff] %vm6720, %v6601
        %6758 = vst.msk [vmem:[#allocation5 + $0x128] sm:$0xff] %vm6720, %v6603
        %6759 = vst.msk [vmem:[#allocation5 + $0x130] sm:$0xff] %vm6720, %v6605
        %6760 = vst.msk [vmem:[#allocation5 + $0x138] sm:$0xff] %vm6720, %v6607
        %6761 = vst.msk [vmem:[#allocation5 + $0x140] sm:$0xff] %vm6720, %v6609
        %6762 = vst.msk [vmem:[#allocation5 + $0x148] sm:$0xff] %vm6720, %v6611
        %6763 = vst.msk [vmem:[#allocation5 + $0x150] sm:$0xff] %vm6720, %v6613
        %6764 = vst.msk [vmem:[#allocation5 + $0x158] sm:$0xff] %vm6720, %v6615
        %6765 = vst.msk [vmem:[#allocation5 + $0x160] sm:$0xff] %vm6720, %v6617
        %6766 = vst.msk [vmem:[#allocation5 + $0x168] sm:$0xff] %vm6720, %v6619
        %6767 = vst.msk [vmem:[#allocation5 + $0x170] sm:$0xff] %vm6720, %v6621
        %6768 = vst.msk [vmem:[#allocation5 + $0x178] sm:$0xff] %vm6720, %v6623
        %6769 = vst.msk [vmem:[#allocation5 + $0x180] sm:$0xff] %vm6720, %v6625
        %6770 = vst.msk [vmem:[#allocation5 + $0x188] sm:$0xff] %vm6720, %v6627
        %6771 = vst.msk [vmem:[#allocation5 + $0x190] sm:$0xff] %vm6720, %v6629
        %6772 = vst.msk [vmem:[#allocation5 + $0x198] sm:$0xff] %vm6720, %v6631
        %6773 = vst.msk [vmem:[#allocation5 + $0x1a0] sm:$0xff] %vm6720, %v6633
        %6774 = vst.msk [vmem:[#allocation5 + $0x1a8] sm:$0xff] %vm6720, %v6635
        %6775 = vst.msk [vmem:[#allocation5 + $0x1b0] sm:$0xff] %vm6720, %v6637
        %6776 = vst.msk [vmem:[#allocation5 + $0x1b8] sm:$0xff] %vm6720, %v6639
        %6777 = vst.msk [vmem:[#allocation5 + $0x1c0] sm:$0xff] %vm6720, %v6641
        %6778 = vst.msk [vmem:[#allocation5 + $0x1c8] sm:$0xff] %vm6720, %v6643
        %6779 = vst.msk [vmem:[#allocation5 + $0x1d0] sm:$0xff] %vm6720, %v6645
        %6780 = vst.msk [vmem:[#allocation5 + $0x1d8] sm:$0xff] %vm6720, %v6647
        %6781 = vst.msk [vmem:[#allocation5 + $0x1e0] sm:$0xff] %vm6720, %v6649
        %6782 = vst.msk [vmem:[#allocation5 + $0x1e8] sm:$0xff] %vm6720, %v6651
        %6783 = vst.msk [vmem:[#allocation5 + $0x1f0] sm:$0xff] %vm6720, %v6653
        %6784 = vst.msk [vmem:[#allocation5 + $0x1f8] sm:$0xff] %vm6720, %v6655
        %s6785 = scalar_lea.vmem [#allocation4], 48
        %v6786 = vld [vmem:[%s6785] sm:$0xff]
        %v6787 = vld [vmem:[%s6785 + $0x8] sm:$0xff]
        %v6788 = vld [vmem:[%s6785 + $0x18] sm:$0xff]
        %v6789 = vld [vmem:[%s6785 + $0x20] sm:$0xff]
        %v6790 = vld [vmem:[%s6785 + $0x30] sm:$0xff]
        %v6791 = vld [vmem:[%s6785 + $0x38] sm:$0xff]
        %v6792 = vld [vmem:[%s6785 + $0x48] sm:$0xff]
        %v6793 = vld [vmem:[%s6785 + $0x50] sm:$0xff]
        %v6794 = vld [vmem:[%s6785 + $0x60] sm:$0xff]
        %v6795 = vld [vmem:[%s6785 + $0x68] sm:$0xff]
        %v6796 = vld [vmem:[%s6785 + $0x78] sm:$0xff]
        %v6797 = vld [vmem:[%s6785 + $0x80] sm:$0xff]
        %v6798 = vld [vmem:[%s6785 + $0x90] sm:$0xff]
        %v6799 = vld [vmem:[%s6785 + $0x98] sm:$0xff]
        %v6800 = vld [vmem:[%s6785 + $0xa8] sm:$0xff]
        %v6801 = vld [vmem:[%s6785 + $0xb0] sm:$0xff]
        %v6802 = vld [vmem:[%s6785 + $0xc0] sm:$0xff]
        %v6803 = vld [vmem:[%s6785 + $0xc8] sm:$0xff]
        %v6804 = vld [vmem:[%s6785 + $0xd8] sm:$0xff]
        %v6805 = vld [vmem:[%s6785 + $0xe0] sm:$0xff]
        %v6806 = vld [vmem:[%s6785 + $0xf0] sm:$0xff]
        %v6807 = vld [vmem:[%s6785 + $0xf8] sm:$0xff]
        %v6808 = vld [vmem:[%s6785 + $0x108] sm:$0xff]
        %v6809 = vld [vmem:[%s6785 + $0x110] sm:$0xff]
        %v6810 = vld [vmem:[%s6785 + $0x120] sm:$0xff]
        %v6811 = vld [vmem:[%s6785 + $0x128] sm:$0xff]
        %v6812 = vld [vmem:[%s6785 + $0x138] sm:$0xff]
        %v6813 = vld [vmem:[%s6785 + $0x140] sm:$0xff]
        %v6814 = vld [vmem:[%s6785 + $0x150] sm:$0xff]
        %v6815 = vld [vmem:[%s6785 + $0x158] sm:$0xff]
        %v6816 = vld [vmem:[%s6785 + $0x168] sm:$0xff]
        %v6817 = vld [vmem:[%s6785 + $0x170] sm:$0xff]
        %v6818 = vld [vmem:[%s6785 + $0x1b0] sm:$0xff]
        %v6819 = vld [vmem:[%s6785 + $0x1b8] sm:$0xff]
        %v6820 = vld [vmem:[%s6785 + $0x1c8] sm:$0xff]
        %v6821 = vld [vmem:[%s6785 + $0x1d0] sm:$0xff]
        %v6822 = vld [vmem:[%s6785 + $0x1e0] sm:$0xff]
        %v6823 = vld [vmem:[%s6785 + $0x1e8] sm:$0xff]
        %v6824 = vld [vmem:[%s6785 + $0x1f8] sm:$0xff]
        %v6825 = vld [vmem:[%s6785 + $0x200] sm:$0xff]
        %v6826 = vld [vmem:[%s6785 + $0x210] sm:$0xff]
        %v6827 = vld [vmem:[%s6785 + $0x218] sm:$0xff]
        %v6828 = vld [vmem:[%s6785 + $0x228] sm:$0xff]
        %v6829 = vld [vmem:[%s6785 + $0x230] sm:$0xff]
        %v6830 = vld [vmem:[%s6785 + $0x240] sm:$0xff]
        %v6831 = vld [vmem:[%s6785 + $0x248] sm:$0xff]
        %v6832 = vld [vmem:[%s6785 + $0x258] sm:$0xff]
        %v6833 = vld [vmem:[%s6785 + $0x260] sm:$0xff]
        %v6834 = vld [vmem:[%s6785 + $0x270] sm:$0xff]
        %v6835 = vld [vmem:[%s6785 + $0x278] sm:$0xff]
        %v6836 = vld [vmem:[%s6785 + $0x288] sm:$0xff]
        %v6837 = vld [vmem:[%s6785 + $0x290] sm:$0xff]
        %v6838 = vld [vmem:[%s6785 + $0x2a0] sm:$0xff]
        %v6839 = vld [vmem:[%s6785 + $0x2a8] sm:$0xff]
        %v6840 = vld [vmem:[%s6785 + $0x2b8] sm:$0xff]
        %v6841 = vld [vmem:[%s6785 + $0x2c0] sm:$0xff]
        %v6842 = vld [vmem:[%s6785 + $0x2d0] sm:$0xff]
        %v6843 = vld [vmem:[%s6785 + $0x2d8] sm:$0xff]
        %v6844 = vld [vmem:[%s6785 + $0x2e8] sm:$0xff]
        %v6845 = vld [vmem:[%s6785 + $0x2f0] sm:$0xff]
        %v6846 = vld [vmem:[%s6785 + $0x300] sm:$0xff]
        %v6847 = vld [vmem:[%s6785 + $0x308] sm:$0xff]
        %v6848 = vld [vmem:[%s6785 + $0x318] sm:$0xff]
        %v6849 = vld [vmem:[%s6785 + $0x320] sm:$0xff]
        %6914 = vrot.lane.b32.xlu0 %v6786, 48
        %v6915 = vpop.permute.xlu0 %6914
        %6916 = vrot.lane.b32.xlu0 %v6787, 48
        %v6917 = vpop.permute.xlu0 %6916
        %6918 = vrot.lane.b32.xlu0 %v6788, 48
        %v6919 = vpop.permute.xlu0 %6918
        %6920 = vrot.lane.b32.xlu0 %v6789, 48
        %v6921 = vpop.permute.xlu0 %6920
        %6922 = vrot.lane.b32.xlu0 %v6790, 48
        %v6923 = vpop.permute.xlu0 %6922
        %6924 = vrot.lane.b32.xlu0 %v6791, 48
        %v6925 = vpop.permute.xlu0 %6924
        %6926 = vrot.lane.b32.xlu0 %v6792, 48
        %v6927 = vpop.permute.xlu0 %6926
        %6928 = vrot.lane.b32.xlu0 %v6793, 48
        %v6929 = vpop.permute.xlu0 %6928
        %6930 = vrot.lane.b32.xlu0 %v6794, 48
        %v6931 = vpop.permute.xlu0 %6930
        %6932 = vrot.lane.b32.xlu0 %v6795, 48
        %v6933 = vpop.permute.xlu0 %6932
        %6934 = vrot.lane.b32.xlu0 %v6796, 48
        %v6935 = vpop.permute.xlu0 %6934
        %6936 = vrot.lane.b32.xlu0 %v6797, 48
        %v6937 = vpop.permute.xlu0 %6936
        %6938 = vrot.lane.b32.xlu0 %v6798, 48
        %v6939 = vpop.permute.xlu0 %6938
        %6940 = vrot.lane.b32.xlu0 %v6799, 48
        %v6941 = vpop.permute.xlu0 %6940
        %6942 = vrot.lane.b32.xlu0 %v6800, 48
        %v6943 = vpop.permute.xlu0 %6942
        %6944 = vrot.lane.b32.xlu0 %v6801, 48
        %v6945 = vpop.permute.xlu0 %6944
        %6946 = vrot.lane.b32.xlu0 %v6802, 48
        %v6947 = vpop.permute.xlu0 %6946
        %6948 = vrot.lane.b32.xlu0 %v6803, 48
        %v6949 = vpop.permute.xlu0 %6948
        %6950 = vrot.lane.b32.xlu0 %v6804, 48
        %v6951 = vpop.permute.xlu0 %6950
        %6952 = vrot.lane.b32.xlu0 %v6805, 48
        %v6953 = vpop.permute.xlu0 %6952
        %6954 = vrot.lane.b32.xlu0 %v6806, 48
        %v6955 = vpop.permute.xlu0 %6954
        %6956 = vrot.lane.b32.xlu0 %v6807, 48
        %v6957 = vpop.permute.xlu0 %6956
        %6958 = vrot.lane.b32.xlu0 %v6808, 48
        %v6959 = vpop.permute.xlu0 %6958
        %6960 = vrot.lane.b32.xlu0 %v6809, 48
        %v6961 = vpop.permute.xlu0 %6960
        %6962 = vrot.lane.b32.xlu0 %v6810, 48
        %v6963 = vpop.permute.xlu0 %6962
        %6964 = vrot.lane.b32.xlu0 %v6811, 48
        %v6965 = vpop.permute.xlu0 %6964
        %6966 = vrot.lane.b32.xlu0 %v6812, 48
        %v6967 = vpop.permute.xlu0 %6966
        %6968 = vrot.lane.b32.xlu0 %v6813, 48
        %v6969 = vpop.permute.xlu0 %6968
        %6970 = vrot.lane.b32.xlu0 %v6814, 48
        %v6971 = vpop.permute.xlu0 %6970
        %6972 = vrot.lane.b32.xlu0 %v6815, 48
        %v6973 = vpop.permute.xlu0 %6972
        %6974 = vrot.lane.b32.xlu0 %v6816, 48
        %v6975 = vpop.permute.xlu0 %6974
        %6976 = vrot.lane.b32.xlu0 %v6817, 48
        %v6977 = vpop.permute.xlu0 %6976
        %6978 = vrot.lane.b32.xlu0 %v6818, 48
        %v6979 = vpop.permute.xlu0 %6978
        %6980 = vrot.lane.b32.xlu0 %v6819, 48
        %v6981 = vpop.permute.xlu0 %6980
        %6982 = vrot.lane.b32.xlu0 %v6820, 48
        %v6983 = vpop.permute.xlu0 %6982
        %6984 = vrot.lane.b32.xlu0 %v6821, 48
        %v6985 = vpop.permute.xlu0 %6984
        %6986 = vrot.lane.b32.xlu0 %v6822, 48
        %v6987 = vpop.permute.xlu0 %6986
        %6988 = vrot.lane.b32.xlu0 %v6823, 48
        %v6989 = vpop.permute.xlu0 %6988
        %6990 = vrot.lane.b32.xlu0 %v6824, 48
        %v6991 = vpop.permute.xlu0 %6990
        %6992 = vrot.lane.b32.xlu0 %v6825, 48
        %v6993 = vpop.permute.xlu0 %6992
        %6994 = vrot.lane.b32.xlu0 %v6826, 48
        %v6995 = vpop.permute.xlu0 %6994
        %6996 = vrot.lane.b32.xlu0 %v6827, 48
        %v6997 = vpop.permute.xlu0 %6996
        %6998 = vrot.lane.b32.xlu0 %v6828, 48
        %v6999 = vpop.permute.xlu0 %6998
        %7000 = vrot.lane.b32.xlu0 %v6829, 48
        %v7001 = vpop.permute.xlu0 %7000
        %7002 = vrot.lane.b32.xlu0 %v6830, 48
        %v7003 = vpop.permute.xlu0 %7002
        %7004 = vrot.lane.b32.xlu0 %v6831, 48
        %v7005 = vpop.permute.xlu0 %7004
        %7006 = vrot.lane.b32.xlu0 %v6832, 48
        %v7007 = vpop.permute.xlu0 %7006
        %7008 = vrot.lane.b32.xlu0 %v6833, 48
        %v7009 = vpop.permute.xlu0 %7008
        %7010 = vrot.lane.b32.xlu0 %v6834, 48
        %v7011 = vpop.permute.xlu0 %7010
        %7012 = vrot.lane.b32.xlu0 %v6835, 48
        %v7013 = vpop.permute.xlu0 %7012
        %7014 = vrot.lane.b32.xlu0 %v6836, 48
        %v7015 = vpop.permute.xlu0 %7014
        %7016 = vrot.lane.b32.xlu0 %v6837, 48
        %v7017 = vpop.permute.xlu0 %7016
        %7018 = vrot.lane.b32.xlu0 %v6838, 48
        %v7019 = vpop.permute.xlu0 %7018
        %7020 = vrot.lane.b32.xlu0 %v6839, 48
        %v7021 = vpop.permute.xlu0 %7020
        %7022 = vrot.lane.b32.xlu0 %v6840, 48
        %v7023 = vpop.permute.xlu0 %7022
        %7024 = vrot.lane.b32.xlu0 %v6841, 48
        %v7025 = vpop.permute.xlu0 %7024
        %7026 = vrot.lane.b32.xlu0 %v6842, 48
        %v7027 = vpop.permute.xlu0 %7026
        %7028 = vrot.lane.b32.xlu0 %v6843, 48
        %v7029 = vpop.permute.xlu0 %7028
        %7030 = vrot.lane.b32.xlu0 %v6844, 48
        %v7031 = vpop.permute.xlu0 %7030
        %7032 = vrot.lane.b32.xlu0 %v6845, 48
        %v7033 = vpop.permute.xlu0 %7032
        %7034 = vrot.lane.b32.xlu0 %v6846, 48
        %v7035 = vpop.permute.xlu0 %7034
        %7036 = vrot.lane.b32.xlu0 %v6847, 48
        %v7037 = vpop.permute.xlu0 %7036
        %7038 = vrot.lane.b32.xlu0 %v6848, 48
        %v7039 = vpop.permute.xlu0 %7038
        %7040 = vrot.lane.b32.xlu0 %v6849, 48
        %v7041 = vpop.permute.xlu0 %7040
        %vm7106 = vcmask 458112
        %7107 = vst.msk [vmem:[#allocation5] sm:$0xff] %vm7106, %v6915
        %7108 = vst.msk [vmem:[#allocation5 + $0x8] sm:$0xff] %vm7106, %v6917
        %7109 = vst.msk [vmem:[#allocation5 + $0x10] sm:$0xff] %vm7106, %v6919
        %7110 = vst.msk [vmem:[#allocation5 + $0x18] sm:$0xff] %vm7106, %v6921
        %7111 = vst.msk [vmem:[#allocation5 + $0x20] sm:$0xff] %vm7106, %v6923
        %7112 = vst.msk [vmem:[#allocation5 + $0x28] sm:$0xff] %vm7106, %v6925
        %7113 = vst.msk [vmem:[#allocation5 + $0x30] sm:$0xff] %vm7106, %v6927
        %7114 = vst.msk [vmem:[#allocation5 + $0x38] sm:$0xff] %vm7106, %v6929
        %7115 = vst.msk [vmem:[#allocation5 + $0x40] sm:$0xff] %vm7106, %v6931
        %7116 = vst.msk [vmem:[#allocation5 + $0x48] sm:$0xff] %vm7106, %v6933
        %7117 = vst.msk [vmem:[#allocation5 + $0x50] sm:$0xff] %vm7106, %v6935
        %7118 = vst.msk [vmem:[#allocation5 + $0x58] sm:$0xff] %vm7106, %v6937
        %7119 = vst.msk [vmem:[#allocation5 + $0x60] sm:$0xff] %vm7106, %v6939
        %7120 = vst.msk [vmem:[#allocation5 + $0x68] sm:$0xff] %vm7106, %v6941
        %7121 = vst.msk [vmem:[#allocation5 + $0x70] sm:$0xff] %vm7106, %v6943
        %7122 = vst.msk [vmem:[#allocation5 + $0x78] sm:$0xff] %vm7106, %v6945
        %7123 = vst.msk [vmem:[#allocation5 + $0x80] sm:$0xff] %vm7106, %v6947
        %7124 = vst.msk [vmem:[#allocation5 + $0x88] sm:$0xff] %vm7106, %v6949
        %7125 = vst.msk [vmem:[#allocation5 + $0x90] sm:$0xff] %vm7106, %v6951
        %7126 = vst.msk [vmem:[#allocation5 + $0x98] sm:$0xff] %vm7106, %v6953
        %7127 = vst.msk [vmem:[#allocation5 + $0xa0] sm:$0xff] %vm7106, %v6955
        %7128 = vst.msk [vmem:[#allocation5 + $0xa8] sm:$0xff] %vm7106, %v6957
        %7129 = vst.msk [vmem:[#allocation5 + $0xb0] sm:$0xff] %vm7106, %v6959
        %7130 = vst.msk [vmem:[#allocation5 + $0xb8] sm:$0xff] %vm7106, %v6961
        %7131 = vst.msk [vmem:[#allocation5 + $0xc0] sm:$0xff] %vm7106, %v6963
        %7132 = vst.msk [vmem:[#allocation5 + $0xc8] sm:$0xff] %vm7106, %v6965
        %7133 = vst.msk [vmem:[#allocation5 + $0xd0] sm:$0xff] %vm7106, %v6967
        %7134 = vst.msk [vmem:[#allocation5 + $0xd8] sm:$0xff] %vm7106, %v6969
        %7135 = vst.msk [vmem:[#allocation5 + $0xe0] sm:$0xff] %vm7106, %v6971
        %7136 = vst.msk [vmem:[#allocation5 + $0xe8] sm:$0xff] %vm7106, %v6973
        %7137 = vst.msk [vmem:[#allocation5 + $0xf0] sm:$0xff] %vm7106, %v6975
        %7138 = vst.msk [vmem:[#allocation5 + $0xf8] sm:$0xff] %vm7106, %v6977
        %7139 = vst.msk [vmem:[#allocation5 + $0x100] sm:$0xff] %vm7106, %v6979
        %7140 = vst.msk [vmem:[#allocation5 + $0x108] sm:$0xff] %vm7106, %v6981
        %7141 = vst.msk [vmem:[#allocation5 + $0x110] sm:$0xff] %vm7106, %v6983
        %7142 = vst.msk [vmem:[#allocation5 + $0x118] sm:$0xff] %vm7106, %v6985
        %7143 = vst.msk [vmem:[#allocation5 + $0x120] sm:$0xff] %vm7106, %v6987
        %7144 = vst.msk [vmem:[#allocation5 + $0x128] sm:$0xff] %vm7106, %v6989
        %7145 = vst.msk [vmem:[#allocation5 + $0x130] sm:$0xff] %vm7106, %v6991
        %7146 = vst.msk [vmem:[#allocation5 + $0x138] sm:$0xff] %vm7106, %v6993
        %7147 = vst.msk [vmem:[#allocation5 + $0x140] sm:$0xff] %vm7106, %v6995
        %7148 = vst.msk [vmem:[#allocation5 + $0x148] sm:$0xff] %vm7106, %v6997
        %7149 = vst.msk [vmem:[#allocation5 + $0x150] sm:$0xff] %vm7106, %v6999
        %7150 = vst.msk [vmem:[#allocation5 + $0x158] sm:$0xff] %vm7106, %v7001
        %7151 = vst.msk [vmem:[#allocation5 + $0x160] sm:$0xff] %vm7106, %v7003
        %7152 = vst.msk [vmem:[#allocation5 + $0x168] sm:$0xff] %vm7106, %v7005
        %7153 = vst.msk [vmem:[#allocation5 + $0x170] sm:$0xff] %vm7106, %v7007
        %7154 = vst.msk [vmem:[#allocation5 + $0x178] sm:$0xff] %vm7106, %v7009
        %7155 = vst.msk [vmem:[#allocation5 + $0x180] sm:$0xff] %vm7106, %v7011
        %7156 = vst.msk [vmem:[#allocation5 + $0x188] sm:$0xff] %vm7106, %v7013
        %7157 = vst.msk [vmem:[#allocation5 + $0x190] sm:$0xff] %vm7106, %v7015
        %7158 = vst.msk [vmem:[#allocation5 + $0x198] sm:$0xff] %vm7106, %v7017
        %7159 = vst.msk [vmem:[#allocation5 + $0x1a0] sm:$0xff] %vm7106, %v7019
        %7160 = vst.msk [vmem:[#allocation5 + $0x1a8] sm:$0xff] %vm7106, %v7021
        %7161 = vst.msk [vmem:[#allocation5 + $0x1b0] sm:$0xff] %vm7106, %v7023
        %7162 = vst.msk [vmem:[#allocation5 + $0x1b8] sm:$0xff] %vm7106, %v7025
        %7163 = vst.msk [vmem:[#allocation5 + $0x1c0] sm:$0xff] %vm7106, %v7027
        %7164 = vst.msk [vmem:[#allocation5 + $0x1c8] sm:$0xff] %vm7106, %v7029
        %7165 = vst.msk [vmem:[#allocation5 + $0x1d0] sm:$0xff] %vm7106, %v7031
        %7166 = vst.msk [vmem:[#allocation5 + $0x1d8] sm:$0xff] %vm7106, %v7033
        %7167 = vst.msk [vmem:[#allocation5 + $0x1e0] sm:$0xff] %vm7106, %v7035
        %7168 = vst.msk [vmem:[#allocation5 + $0x1e8] sm:$0xff] %vm7106, %v7037
        %7169 = vst.msk [vmem:[#allocation5 + $0x1f0] sm:$0xff] %vm7106, %v7039
        %7170 = vst.msk [vmem:[#allocation5 + $0x1f8] sm:$0xff] %vm7106, %v7041
        %v7171 = vld [vmem:[%s6785 + $0x1] sm:$0xff]
        %v7172 = vld [vmem:[%s6785 + $0x9] sm:$0xff]
        %v7173 = vld [vmem:[%s6785 + $0x19] sm:$0xff]
        %v7174 = vld [vmem:[%s6785 + $0x21] sm:$0xff]
        %v7175 = vld [vmem:[%s6785 + $0x31] sm:$0xff]
        %v7176 = vld [vmem:[%s6785 + $0x39] sm:$0xff]
        %v7177 = vld [vmem:[%s6785 + $0x49] sm:$0xff]
        %v7178 = vld [vmem:[%s6785 + $0x51] sm:$0xff]
        %v7179 = vld [vmem:[%s6785 + $0x61] sm:$0xff]
        %v7180 = vld [vmem:[%s6785 + $0x69] sm:$0xff]
        %v7181 = vld [vmem:[%s6785 + $0x79] sm:$0xff]
        %v7182 = vld [vmem:[%s6785 + $0x81] sm:$0xff]
        %v7183 = vld [vmem:[%s6785 + $0x91] sm:$0xff]
        %v7184 = vld [vmem:[%s6785 + $0x99] sm:$0xff]
        %v7185 = vld [vmem:[%s6785 + $0xa9] sm:$0xff]
        %v7186 = vld [vmem:[%s6785 + $0xb1] sm:$0xff]
        %v7187 = vld [vmem:[%s6785 + $0xc1] sm:$0xff]
        %v7188 = vld [vmem:[%s6785 + $0xc9] sm:$0xff]
        %v7189 = vld [vmem:[%s6785 + $0xd9] sm:$0xff]
        %v7190 = vld [vmem:[%s6785 + $0xe1] sm:$0xff]
        %v7191 = vld [vmem:[%s6785 + $0xf1] sm:$0xff]
        %v7192 = vld [vmem:[%s6785 + $0xf9] sm:$0xff]
        %v7193 = vld [vmem:[%s6785 + $0x109] sm:$0xff]
        %v7194 = vld [vmem:[%s6785 + $0x111] sm:$0xff]
        %v7195 = vld [vmem:[%s6785 + $0x121] sm:$0xff]
        %v7196 = vld [vmem:[%s6785 + $0x129] sm:$0xff]
        %v7197 = vld [vmem:[%s6785 + $0x139] sm:$0xff]
        %v7198 = vld [vmem:[%s6785 + $0x141] sm:$0xff]
        %v7199 = vld [vmem:[%s6785 + $0x151] sm:$0xff]
        %v7200 = vld [vmem:[%s6785 + $0x159] sm:$0xff]
        %v7201 = vld [vmem:[%s6785 + $0x169] sm:$0xff]
        %v7202 = vld [vmem:[%s6785 + $0x171] sm:$0xff]
        %v7203 = vld [vmem:[%s6785 + $0x1b1] sm:$0xff]
        %v7204 = vld [vmem:[%s6785 + $0x1b9] sm:$0xff]
        %v7205 = vld [vmem:[%s6785 + $0x1c9] sm:$0xff]
        %v7206 = vld [vmem:[%s6785 + $0x1d1] sm:$0xff]
        %v7207 = vld [vmem:[%s6785 + $0x1e1] sm:$0xff]
        %v7208 = vld [vmem:[%s6785 + $0x1e9] sm:$0xff]
        %v7209 = vld [vmem:[%s6785 + $0x1f9] sm:$0xff]
        %v7210 = vld [vmem:[%s6785 + $0x201] sm:$0xff]
        %v7211 = vld [vmem:[%s6785 + $0x211] sm:$0xff]
        %v7212 = vld [vmem:[%s6785 + $0x219] sm:$0xff]
        %v7213 = vld [vmem:[%s6785 + $0x229] sm:$0xff]
        %v7214 = vld [vmem:[%s6785 + $0x231] sm:$0xff]
        %v7215 = vld [vmem:[%s6785 + $0x241] sm:$0xff]
        %v7216 = vld [vmem:[%s6785 + $0x249] sm:$0xff]
        %v7217 = vld [vmem:[%s6785 + $0x259] sm:$0xff]
        %v7218 = vld [vmem:[%s6785 + $0x261] sm:$0xff]
        %v7219 = vld [vmem:[%s6785 + $0x271] sm:$0xff]
        %v7220 = vld [vmem:[%s6785 + $0x279] sm:$0xff]
        %v7221 = vld [vmem:[%s6785 + $0x289] sm:$0xff]
        %v7222 = vld [vmem:[%s6785 + $0x291] sm:$0xff]
        %v7223 = vld [vmem:[%s6785 + $0x2a1] sm:$0xff]
        %v7224 = vld [vmem:[%s6785 + $0x2a9] sm:$0xff]
        %v7225 = vld [vmem:[%s6785 + $0x2b9] sm:$0xff]
        %v7226 = vld [vmem:[%s6785 + $0x2c1] sm:$0xff]
        %v7227 = vld [vmem:[%s6785 + $0x2d1] sm:$0xff]
        %v7228 = vld [vmem:[%s6785 + $0x2d9] sm:$0xff]
        %v7229 = vld [vmem:[%s6785 + $0x2e9] sm:$0xff]
        %v7230 = vld [vmem:[%s6785 + $0x2f1] sm:$0xff]
        %v7231 = vld [vmem:[%s6785 + $0x301] sm:$0xff]
        %v7232 = vld [vmem:[%s6785 + $0x309] sm:$0xff]
        %v7233 = vld [vmem:[%s6785 + $0x319] sm:$0xff]
        %v7234 = vld [vmem:[%s6785 + $0x321] sm:$0xff]
        %7299 = vrot.lane.b32.xlu0 %v7171, 56
        %v7300 = vpop.permute.xlu0 %7299
        %7301 = vrot.lane.b32.xlu0 %v7172, 56
        %v7302 = vpop.permute.xlu0 %7301
        %7303 = vrot.lane.b32.xlu0 %v7173, 56
        %v7304 = vpop.permute.xlu0 %7303
        %7305 = vrot.lane.b32.xlu0 %v7174, 56
        %v7306 = vpop.permute.xlu0 %7305
        %7307 = vrot.lane.b32.xlu0 %v7175, 56
        %v7308 = vpop.permute.xlu0 %7307
        %7309 = vrot.lane.b32.xlu0 %v7176, 56
        %v7310 = vpop.permute.xlu0 %7309
        %7311 = vrot.lane.b32.xlu0 %v7177, 56
        %v7312 = vpop.permute.xlu0 %7311
        %7313 = vrot.lane.b32.xlu0 %v7178, 56
        %v7314 = vpop.permute.xlu0 %7313
        %7315 = vrot.lane.b32.xlu0 %v7179, 56
        %v7316 = vpop.permute.xlu0 %7315
        %7317 = vrot.lane.b32.xlu0 %v7180, 56
        %v7318 = vpop.permute.xlu0 %7317
        %7319 = vrot.lane.b32.xlu0 %v7181, 56
        %v7320 = vpop.permute.xlu0 %7319
        %7321 = vrot.lane.b32.xlu0 %v7182, 56
        %v7322 = vpop.permute.xlu0 %7321
        %7323 = vrot.lane.b32.xlu0 %v7183, 56
        %v7324 = vpop.permute.xlu0 %7323
        %7325 = vrot.lane.b32.xlu0 %v7184, 56
        %v7326 = vpop.permute.xlu0 %7325
        %7327 = vrot.lane.b32.xlu0 %v7185, 56
        %v7328 = vpop.permute.xlu0 %7327
        %7329 = vrot.lane.b32.xlu0 %v7186, 56
        %v7330 = vpop.permute.xlu0 %7329
        %7331 = vrot.lane.b32.xlu0 %v7187, 56
        %v7332 = vpop.permute.xlu0 %7331
        %7333 = vrot.lane.b32.xlu0 %v7188, 56
        %v7334 = vpop.permute.xlu0 %7333
        %7335 = vrot.lane.b32.xlu0 %v7189, 56
        %v7336 = vpop.permute.xlu0 %7335
        %7337 = vrot.lane.b32.xlu0 %v7190, 56
        %v7338 = vpop.permute.xlu0 %7337
        %7339 = vrot.lane.b32.xlu0 %v7191, 56
        %v7340 = vpop.permute.xlu0 %7339
        %7341 = vrot.lane.b32.xlu0 %v7192, 56
        %v7342 = vpop.permute.xlu0 %7341
        %7343 = vrot.lane.b32.xlu0 %v7193, 56
        %v7344 = vpop.permute.xlu0 %7343
        %7345 = vrot.lane.b32.xlu0 %v7194, 56
        %v7346 = vpop.permute.xlu0 %7345
        %7347 = vrot.lane.b32.xlu0 %v7195, 56
        %v7348 = vpop.permute.xlu0 %7347
        %7349 = vrot.lane.b32.xlu0 %v7196, 56
        %v7350 = vpop.permute.xlu0 %7349
        %7351 = vrot.lane.b32.xlu0 %v7197, 56
        %v7352 = vpop.permute.xlu0 %7351
        %7353 = vrot.lane.b32.xlu0 %v7198, 56
        %v7354 = vpop.permute.xlu0 %7353
        %7355 = vrot.lane.b32.xlu0 %v7199, 56
        %v7356 = vpop.permute.xlu0 %7355
        %7357 = vrot.lane.b32.xlu0 %v7200, 56
        %v7358 = vpop.permute.xlu0 %7357
        %7359 = vrot.lane.b32.xlu0 %v7201, 56
        %v7360 = vpop.permute.xlu0 %7359
        %7361 = vrot.lane.b32.xlu0 %v7202, 56
        %v7362 = vpop.permute.xlu0 %7361
        %7363 = vrot.lane.b32.xlu0 %v7203, 56
        %v7364 = vpop.permute.xlu0 %7363
        %7365 = vrot.lane.b32.xlu0 %v7204, 56
        %v7366 = vpop.permute.xlu0 %7365
        %7367 = vrot.lane.b32.xlu0 %v7205, 56
        %v7368 = vpop.permute.xlu0 %7367
        %7369 = vrot.lane.b32.xlu0 %v7206, 56
        %v7370 = vpop.permute.xlu0 %7369
        %7371 = vrot.lane.b32.xlu0 %v7207, 56
        %v7372 = vpop.permute.xlu0 %7371
        %7373 = vrot.lane.b32.xlu0 %v7208, 56
        %v7374 = vpop.permute.xlu0 %7373
        %7375 = vrot.lane.b32.xlu0 %v7209, 56
        %v7376 = vpop.permute.xlu0 %7375
        %7377 = vrot.lane.b32.xlu0 %v7210, 56
        %v7378 = vpop.permute.xlu0 %7377
        %7379 = vrot.lane.b32.xlu0 %v7211, 56
        %v7380 = vpop.permute.xlu0 %7379
        %7381 = vrot.lane.b32.xlu0 %v7212, 56
        %v7382 = vpop.permute.xlu0 %7381
        %7383 = vrot.lane.b32.xlu0 %v7213, 56
        %v7384 = vpop.permute.xlu0 %7383
        %7385 = vrot.lane.b32.xlu0 %v7214, 56
        %v7386 = vpop.permute.xlu0 %7385
        %7387 = vrot.lane.b32.xlu0 %v7215, 56
        %v7388 = vpop.permute.xlu0 %7387
        %7389 = vrot.lane.b32.xlu0 %v7216, 56
        %v7390 = vpop.permute.xlu0 %7389
        %7391 = vrot.lane.b32.xlu0 %v7217, 56
        %v7392 = vpop.permute.xlu0 %7391
        %7393 = vrot.lane.b32.xlu0 %v7218, 56
        %v7394 = vpop.permute.xlu0 %7393
        %7395 = vrot.lane.b32.xlu0 %v7219, 56
        %v7396 = vpop.permute.xlu0 %7395
        %7397 = vrot.lane.b32.xlu0 %v7220, 56
        %v7398 = vpop.permute.xlu0 %7397
        %7399 = vrot.lane.b32.xlu0 %v7221, 56
        %v7400 = vpop.permute.xlu0 %7399
        %7401 = vrot.lane.b32.xlu0 %v7222, 56
        %v7402 = vpop.permute.xlu0 %7401
        %7403 = vrot.lane.b32.xlu0 %v7223, 56
        %v7404 = vpop.permute.xlu0 %7403
        %7405 = vrot.lane.b32.xlu0 %v7224, 56
        %v7406 = vpop.permute.xlu0 %7405
        %7407 = vrot.lane.b32.xlu0 %v7225, 56
        %v7408 = vpop.permute.xlu0 %7407
        %7409 = vrot.lane.b32.xlu0 %v7226, 56
        %v7410 = vpop.permute.xlu0 %7409
        %7411 = vrot.lane.b32.xlu0 %v7227, 56
        %v7412 = vpop.permute.xlu0 %7411
        %7413 = vrot.lane.b32.xlu0 %v7228, 56
        %v7414 = vpop.permute.xlu0 %7413
        %7415 = vrot.lane.b32.xlu0 %v7229, 56
        %v7416 = vpop.permute.xlu0 %7415
        %7417 = vrot.lane.b32.xlu0 %v7230, 56
        %v7418 = vpop.permute.xlu0 %7417
        %7419 = vrot.lane.b32.xlu0 %v7231, 56
        %v7420 = vpop.permute.xlu0 %7419
        %7421 = vrot.lane.b32.xlu0 %v7232, 56
        %v7422 = vpop.permute.xlu0 %7421
        %7423 = vrot.lane.b32.xlu0 %v7233, 56
        %v7424 = vpop.permute.xlu0 %7423
        %7425 = vrot.lane.b32.xlu0 %v7234, 56
        %v7426 = vpop.permute.xlu0 %7425
        %vm7491 = vcmask 523712
        %7492 = vst.msk [vmem:[#allocation5] sm:$0xff] %vm7491, %v7300
        %7493 = vst.msk [vmem:[#allocation5 + $0x8] sm:$0xff] %vm7491, %v7302
        %7494 = vst.msk [vmem:[#allocation5 + $0x10] sm:$0xff] %vm7491, %v7304
        %7495 = vst.msk [vmem:[#allocation5 + $0x18] sm:$0xff] %vm7491, %v7306
        %7496 = vst.msk [vmem:[#allocation5 + $0x20] sm:$0xff] %vm7491, %v7308
        %7497 = vst.msk [vmem:[#allocation5 + $0x28] sm:$0xff] %vm7491, %v7310
        %7498 = vst.msk [vmem:[#allocation5 + $0x30] sm:$0xff] %vm7491, %v7312
        %7499 = vst.msk [vmem:[#allocation5 + $0x38] sm:$0xff] %vm7491, %v7314
        %7500 = vst.msk [vmem:[#allocation5 + $0x40] sm:$0xff] %vm7491, %v7316
        %7501 = vst.msk [vmem:[#allocation5 + $0x48] sm:$0xff] %vm7491, %v7318
        %7502 = vst.msk [vmem:[#allocation5 + $0x50] sm:$0xff] %vm7491, %v7320
        %7503 = vst.msk [vmem:[#allocation5 + $0x58] sm:$0xff] %vm7491, %v7322
        %7504 = vst.msk [vmem:[#allocation5 + $0x60] sm:$0xff] %vm7491, %v7324
        %7505 = vst.msk [vmem:[#allocation5 + $0x68] sm:$0xff] %vm7491, %v7326
        %7506 = vst.msk [vmem:[#allocation5 + $0x70] sm:$0xff] %vm7491, %v7328
        %7507 = vst.msk [vmem:[#allocation5 + $0x78] sm:$0xff] %vm7491, %v7330
        %7508 = vst.msk [vmem:[#allocation5 + $0x80] sm:$0xff] %vm7491, %v7332
        %7509 = vst.msk [vmem:[#allocation5 + $0x88] sm:$0xff] %vm7491, %v7334
        %7510 = vst.msk [vmem:[#allocation5 + $0x90] sm:$0xff] %vm7491, %v7336
        %7511 = vst.msk [vmem:[#allocation5 + $0x98] sm:$0xff] %vm7491, %v7338
        %7512 = vst.msk [vmem:[#allocation5 + $0xa0] sm:$0xff] %vm7491, %v7340
        %7513 = vst.msk [vmem:[#allocation5 + $0xa8] sm:$0xff] %vm7491, %v7342
        %7514 = vst.msk [vmem:[#allocation5 + $0xb0] sm:$0xff] %vm7491, %v7344
        %7515 = vst.msk [vmem:[#allocation5 + $0xb8] sm:$0xff] %vm7491, %v7346
        %7516 = vst.msk [vmem:[#allocation5 + $0xc0] sm:$0xff] %vm7491, %v7348
        %7517 = vst.msk [vmem:[#allocation5 + $0xc8] sm:$0xff] %vm7491, %v7350
        %7518 = vst.msk [vmem:[#allocation5 + $0xd0] sm:$0xff] %vm7491, %v7352
        %7519 = vst.msk [vmem:[#allocation5 + $0xd8] sm:$0xff] %vm7491, %v7354
        %7520 = vst.msk [vmem:[#allocation5 + $0xe0] sm:$0xff] %vm7491, %v7356
        %7521 = vst.msk [vmem:[#allocation5 + $0xe8] sm:$0xff] %vm7491, %v7358
        %7522 = vst.msk [vmem:[#allocation5 + $0xf0] sm:$0xff] %vm7491, %v7360
        %7523 = vst.msk [vmem:[#allocation5 + $0xf8] sm:$0xff] %vm7491, %v7362
        %7524 = vst.msk [vmem:[#allocation5 + $0x100] sm:$0xff] %vm7491, %v7364
        %7525 = vst.msk [vmem:[#allocation5 + $0x108] sm:$0xff] %vm7491, %v7366
        %7526 = vst.msk [vmem:[#allocation5 + $0x110] sm:$0xff] %vm7491, %v7368
        %7527 = vst.msk [vmem:[#allocation5 + $0x118] sm:$0xff] %vm7491, %v7370
        %7528 = vst.msk [vmem:[#allocation5 + $0x120] sm:$0xff] %vm7491, %v7372
        %7529 = vst.msk [vmem:[#allocation5 + $0x128] sm:$0xff] %vm7491, %v7374
        %7530 = vst.msk [vmem:[#allocation5 + $0x130] sm:$0xff] %vm7491, %v7376
        %7531 = vst.msk [vmem:[#allocation5 + $0x138] sm:$0xff] %vm7491, %v7378
        %7532 = vst.msk [vmem:[#allocation5 + $0x140] sm:$0xff] %vm7491, %v7380
        %7533 = vst.msk [vmem:[#allocation5 + $0x148] sm:$0xff] %vm7491, %v7382
        %7534 = vst.msk [vmem:[#allocation5 + $0x150] sm:$0xff] %vm7491, %v7384
        %7535 = vst.msk [vmem:[#allocation5 + $0x158] sm:$0xff] %vm7491, %v7386
        %7536 = vst.msk [vmem:[#allocation5 + $0x160] sm:$0xff] %vm7491, %v7388
        %7537 = vst.msk [vmem:[#allocation5 + $0x168] sm:$0xff] %vm7491, %v7390
        %7538 = vst.msk [vmem:[#allocation5 + $0x170] sm:$0xff] %vm7491, %v7392
        %7539 = vst.msk [vmem:[#allocation5 + $0x178] sm:$0xff] %vm7491, %v7394
        %7540 = vst.msk [vmem:[#allocation5 + $0x180] sm:$0xff] %vm7491, %v7396
        %7541 = vst.msk [vmem:[#allocation5 + $0x188] sm:$0xff] %vm7491, %v7398
        %7542 = vst.msk [vmem:[#allocation5 + $0x190] sm:$0xff] %vm7491, %v7400
        %7543 = vst.msk [vmem:[#allocation5 + $0x198] sm:$0xff] %vm7491, %v7402
        %7544 = vst.msk [vmem:[#allocation5 + $0x1a0] sm:$0xff] %vm7491, %v7404
        %7545 = vst.msk [vmem:[#allocation5 + $0x1a8] sm:$0xff] %vm7491, %v7406
        %7546 = vst.msk [vmem:[#allocation5 + $0x1b0] sm:$0xff] %vm7491, %v7408
        %7547 = vst.msk [vmem:[#allocation5 + $0x1b8] sm:$0xff] %vm7491, %v7410
        %7548 = vst.msk [vmem:[#allocation5 + $0x1c0] sm:$0xff] %vm7491, %v7412
        %7549 = vst.msk [vmem:[#allocation5 + $0x1c8] sm:$0xff] %vm7491, %v7414
        %7550 = vst.msk [vmem:[#allocation5 + $0x1d0] sm:$0xff] %vm7491, %v7416
        %7551 = vst.msk [vmem:[#allocation5 + $0x1d8] sm:$0xff] %vm7491, %v7418
        %7552 = vst.msk [vmem:[#allocation5 + $0x1e0] sm:$0xff] %vm7491, %v7420
        %7553 = vst.msk [vmem:[#allocation5 + $0x1e8] sm:$0xff] %vm7491, %v7422
        %7554 = vst.msk [vmem:[#allocation5 + $0x1f0] sm:$0xff] %vm7491, %v7424
        %7555 = vst.msk [vmem:[#allocation5 + $0x1f8] sm:$0xff] %vm7491, %v7426
        %v7556 = vld [vmem:[%s6785 + $0x2] sm:$0xff]
        %v7557 = vld [vmem:[%s6785 + $0xa] sm:$0xff]
        %v7558 = vld [vmem:[%s6785 + $0x1a] sm:$0xff]
        %v7559 = vld [vmem:[%s6785 + $0x22] sm:$0xff]
        %v7560 = vld [vmem:[%s6785 + $0x32] sm:$0xff]
        %v7561 = vld [vmem:[%s6785 + $0x3a] sm:$0xff]
        %v7562 = vld [vmem:[%s6785 + $0x4a] sm:$0xff]
        %v7563 = vld [vmem:[%s6785 + $0x52] sm:$0xff]
        %v7564 = vld [vmem:[%s6785 + $0x62] sm:$0xff]
        %v7565 = vld [vmem:[%s6785 + $0x6a] sm:$0xff]
        %v7566 = vld [vmem:[%s6785 + $0x7a] sm:$0xff]
        %v7567 = vld [vmem:[%s6785 + $0x82] sm:$0xff]
        %v7568 = vld [vmem:[%s6785 + $0x92] sm:$0xff]
        %v7569 = vld [vmem:[%s6785 + $0x9a] sm:$0xff]
        %v7570 = vld [vmem:[%s6785 + $0xaa] sm:$0xff]
        %v7571 = vld [vmem:[%s6785 + $0xb2] sm:$0xff]
        %v7572 = vld [vmem:[%s6785 + $0xc2] sm:$0xff]
        %v7573 = vld [vmem:[%s6785 + $0xca] sm:$0xff]
        %v7574 = vld [vmem:[%s6785 + $0xda] sm:$0xff]
        %v7575 = vld [vmem:[%s6785 + $0xe2] sm:$0xff]
        %v7576 = vld [vmem:[%s6785 + $0xf2] sm:$0xff]
        %v7577 = vld [vmem:[%s6785 + $0xfa] sm:$0xff]
        %v7578 = vld [vmem:[%s6785 + $0x10a] sm:$0xff]
        %v7579 = vld [vmem:[%s6785 + $0x112] sm:$0xff]
        %v7580 = vld [vmem:[%s6785 + $0x122] sm:$0xff]
        %v7581 = vld [vmem:[%s6785 + $0x12a] sm:$0xff]
        %v7582 = vld [vmem:[%s6785 + $0x13a] sm:$0xff]
        %v7583 = vld [vmem:[%s6785 + $0x142] sm:$0xff]
        %v7584 = vld [vmem:[%s6785 + $0x152] sm:$0xff]
        %v7585 = vld [vmem:[%s6785 + $0x15a] sm:$0xff]
        %v7586 = vld [vmem:[%s6785 + $0x16a] sm:$0xff]
        %v7587 = vld [vmem:[%s6785 + $0x172] sm:$0xff]
        %v7588 = vld [vmem:[%s6785 + $0x1b2] sm:$0xff]
        %v7589 = vld [vmem:[%s6785 + $0x1ba] sm:$0xff]
        %v7590 = vld [vmem:[%s6785 + $0x1ca] sm:$0xff]
        %v7591 = vld [vmem:[%s6785 + $0x1d2] sm:$0xff]
        %v7592 = vld [vmem:[%s6785 + $0x1e2] sm:$0xff]
        %v7593 = vld [vmem:[%s6785 + $0x1ea] sm:$0xff]
        %v7594 = vld [vmem:[%s6785 + $0x1fa] sm:$0xff]
        %v7595 = vld [vmem:[%s6785 + $0x202] sm:$0xff]
        %v7596 = vld [vmem:[%s6785 + $0x212] sm:$0xff]
        %v7597 = vld [vmem:[%s6785 + $0x21a] sm:$0xff]
        %v7598 = vld [vmem:[%s6785 + $0x22a] sm:$0xff]
        %v7599 = vld [vmem:[%s6785 + $0x232] sm:$0xff]
        %v7600 = vld [vmem:[%s6785 + $0x242] sm:$0xff]
        %v7601 = vld [vmem:[%s6785 + $0x24a] sm:$0xff]
        %v7602 = vld [vmem:[%s6785 + $0x25a] sm:$0xff]
        %v7603 = vld [vmem:[%s6785 + $0x262] sm:$0xff]
        %v7604 = vld [vmem:[%s6785 + $0x272] sm:$0xff]
        %v7605 = vld [vmem:[%s6785 + $0x27a] sm:$0xff]
        %v7606 = vld [vmem:[%s6785 + $0x28a] sm:$0xff]
        %v7607 = vld [vmem:[%s6785 + $0x292] sm:$0xff]
        %v7608 = vld [vmem:[%s6785 + $0x2a2] sm:$0xff]
        %v7609 = vld [vmem:[%s6785 + $0x2aa] sm:$0xff]
        %v7610 = vld [vmem:[%s6785 + $0x2ba] sm:$0xff]
        %v7611 = vld [vmem:[%s6785 + $0x2c2] sm:$0xff]
        %v7612 = vld [vmem:[%s6785 + $0x2d2] sm:$0xff]
        %v7613 = vld [vmem:[%s6785 + $0x2da] sm:$0xff]
        %v7614 = vld [vmem:[%s6785 + $0x2ea] sm:$0xff]
        %v7615 = vld [vmem:[%s6785 + $0x2f2] sm:$0xff]
        %v7616 = vld [vmem:[%s6785 + $0x302] sm:$0xff]
        %v7617 = vld [vmem:[%s6785 + $0x30a] sm:$0xff]
        %v7618 = vld [vmem:[%s6785 + $0x31a] sm:$0xff]
        %v7619 = vld [vmem:[%s6785 + $0x322] sm:$0xff]
        %7684 = vrot.lane.b32.xlu0 %v7556, 64
        %v7685 = vpop.permute.xlu0 %7684
        %7686 = vrot.lane.b32.xlu0 %v7557, 64
        %v7687 = vpop.permute.xlu0 %7686
        %7688 = vrot.lane.b32.xlu0 %v7558, 64
        %v7689 = vpop.permute.xlu0 %7688
        %7690 = vrot.lane.b32.xlu0 %v7559, 64
        %v7691 = vpop.permute.xlu0 %7690
        %7692 = vrot.lane.b32.xlu0 %v7560, 64
        %v7693 = vpop.permute.xlu0 %7692
        %7694 = vrot.lane.b32.xlu0 %v7561, 64
        %v7695 = vpop.permute.xlu0 %7694
        %7696 = vrot.lane.b32.xlu0 %v7562, 64
        %v7697 = vpop.permute.xlu0 %7696
        %7698 = vrot.lane.b32.xlu0 %v7563, 64
        %v7699 = vpop.permute.xlu0 %7698
        %7700 = vrot.lane.b32.xlu0 %v7564, 64
        %v7701 = vpop.permute.xlu0 %7700
        %7702 = vrot.lane.b32.xlu0 %v7565, 64
        %v7703 = vpop.permute.xlu0 %7702
        %7704 = vrot.lane.b32.xlu0 %v7566, 64
        %v7705 = vpop.permute.xlu0 %7704
        %7706 = vrot.lane.b32.xlu0 %v7567, 64
        %v7707 = vpop.permute.xlu0 %7706
        %7708 = vrot.lane.b32.xlu0 %v7568, 64
        %v7709 = vpop.permute.xlu0 %7708
        %7710 = vrot.lane.b32.xlu0 %v7569, 64
        %v7711 = vpop.permute.xlu0 %7710
        %7712 = vrot.lane.b32.xlu0 %v7570, 64
        %v7713 = vpop.permute.xlu0 %7712
        %7714 = vrot.lane.b32.xlu0 %v7571, 64
        %v7715 = vpop.permute.xlu0 %7714
        %7716 = vrot.lane.b32.xlu0 %v7572, 64
        %v7717 = vpop.permute.xlu0 %7716
        %7718 = vrot.lane.b32.xlu0 %v7573, 64
        %v7719 = vpop.permute.xlu0 %7718
        %7720 = vrot.lane.b32.xlu0 %v7574, 64
        %v7721 = vpop.permute.xlu0 %7720
        %7722 = vrot.lane.b32.xlu0 %v7575, 64
        %v7723 = vpop.permute.xlu0 %7722
        %7724 = vrot.lane.b32.xlu0 %v7576, 64
        %v7725 = vpop.permute.xlu0 %7724
        %7726 = vrot.lane.b32.xlu0 %v7577, 64
        %v7727 = vpop.permute.xlu0 %7726
        %7728 = vrot.lane.b32.xlu0 %v7578, 64
        %v7729 = vpop.permute.xlu0 %7728
        %7730 = vrot.lane.b32.xlu0 %v7579, 64
        %v7731 = vpop.permute.xlu0 %7730
        %7732 = vrot.lane.b32.xlu0 %v7580, 64
        %v7733 = vpop.permute.xlu0 %7732
        %7734 = vrot.lane.b32.xlu0 %v7581, 64
        %v7735 = vpop.permute.xlu0 %7734
        %7736 = vrot.lane.b32.xlu0 %v7582, 64
        %v7737 = vpop.permute.xlu0 %7736
        %7738 = vrot.lane.b32.xlu0 %v7583, 64
        %v7739 = vpop.permute.xlu0 %7738
        %7740 = vrot.lane.b32.xlu0 %v7584, 64
        %v7741 = vpop.permute.xlu0 %7740
        %7742 = vrot.lane.b32.xlu0 %v7585, 64
        %v7743 = vpop.permute.xlu0 %7742
        %7744 = vrot.lane.b32.xlu0 %v7586, 64
        %v7745 = vpop.permute.xlu0 %7744
        %7746 = vrot.lane.b32.xlu0 %v7587, 64
        %v7747 = vpop.permute.xlu0 %7746
        %7748 = vrot.lane.b32.xlu0 %v7588, 64
        %v7749 = vpop.permute.xlu0 %7748
        %7750 = vrot.lane.b32.xlu0 %v7589, 64
        %v7751 = vpop.permute.xlu0 %7750
        %7752 = vrot.lane.b32.xlu0 %v7590, 64
        %v7753 = vpop.permute.xlu0 %7752
        %7754 = vrot.lane.b32.xlu0 %v7591, 64
        %v7755 = vpop.permute.xlu0 %7754
        %7756 = vrot.lane.b32.xlu0 %v7592, 64
        %v7757 = vpop.permute.xlu0 %7756
        %7758 = vrot.lane.b32.xlu0 %v7593, 64
        %v7759 = vpop.permute.xlu0 %7758
        %7760 = vrot.lane.b32.xlu0 %v7594, 64
        %v7761 = vpop.permute.xlu0 %7760
        %7762 = vrot.lane.b32.xlu0 %v7595, 64
        %v7763 = vpop.permute.xlu0 %7762
        %7764 = vrot.lane.b32.xlu0 %v7596, 64
        %v7765 = vpop.permute.xlu0 %7764
        %7766 = vrot.lane.b32.xlu0 %v7597, 64
        %v7767 = vpop.permute.xlu0 %7766
        %7768 = vrot.lane.b32.xlu0 %v7598, 64
        %v7769 = vpop.permute.xlu0 %7768
        %7770 = vrot.lane.b32.xlu0 %v7599, 64
        %v7771 = vpop.permute.xlu0 %7770
        %7772 = vrot.lane.b32.xlu0 %v7600, 64
        %v7773 = vpop.permute.xlu0 %7772
        %7774 = vrot.lane.b32.xlu0 %v7601, 64
        %v7775 = vpop.permute.xlu0 %7774
        %7776 = vrot.lane.b32.xlu0 %v7602, 64
        %v7777 = vpop.permute.xlu0 %7776
        %7778 = vrot.lane.b32.xlu0 %v7603, 64
        %v7779 = vpop.permute.xlu0 %7778
        %7780 = vrot.lane.b32.xlu0 %v7604, 64
        %v7781 = vpop.permute.xlu0 %7780
        %7782 = vrot.lane.b32.xlu0 %v7605, 64
        %v7783 = vpop.permute.xlu0 %7782
        %7784 = vrot.lane.b32.xlu0 %v7606, 64
        %v7785 = vpop.permute.xlu0 %7784
        %7786 = vrot.lane.b32.xlu0 %v7607, 64
        %v7787 = vpop.permute.xlu0 %7786
        %7788 = vrot.lane.b32.xlu0 %v7608, 64
        %v7789 = vpop.permute.xlu0 %7788
        %7790 = vrot.lane.b32.xlu0 %v7609, 64
        %v7791 = vpop.permute.xlu0 %7790
        %7792 = vrot.lane.b32.xlu0 %v7610, 64
        %v7793 = vpop.permute.xlu0 %7792
        %7794 = vrot.lane.b32.xlu0 %v7611, 64
        %v7795 = vpop.permute.xlu0 %7794
        %7796 = vrot.lane.b32.xlu0 %v7612, 64
        %v7797 = vpop.permute.xlu0 %7796
        %7798 = vrot.lane.b32.xlu0 %v7613, 64
        %v7799 = vpop.permute.xlu0 %7798
        %7800 = vrot.lane.b32.xlu0 %v7614, 64
        %v7801 = vpop.permute.xlu0 %7800
        %7802 = vrot.lane.b32.xlu0 %v7615, 64
        %v7803 = vpop.permute.xlu0 %7802
        %7804 = vrot.lane.b32.xlu0 %v7616, 64
        %v7805 = vpop.permute.xlu0 %7804
        %7806 = vrot.lane.b32.xlu0 %v7617, 64
        %v7807 = vpop.permute.xlu0 %7806
        %7808 = vrot.lane.b32.xlu0 %v7618, 64
        %v7809 = vpop.permute.xlu0 %7808
        %7810 = vrot.lane.b32.xlu0 %v7619, 64
        %v7811 = vpop.permute.xlu0 %7810
        %vm7876 = vcmask 589312
        %7877 = vst.msk [vmem:[#allocation5] sm:$0xff] %vm7876, %v7685
        %7878 = vst.msk [vmem:[#allocation5 + $0x8] sm:$0xff] %vm7876, %v7687
        %7879 = vst.msk [vmem:[#allocation5 + $0x10] sm:$0xff] %vm7876, %v7689
        %7880 = vst.msk [vmem:[#allocation5 + $0x18] sm:$0xff] %vm7876, %v7691
        %7881 = vst.msk [vmem:[#allocation5 + $0x20] sm:$0xff] %vm7876, %v7693
        %7882 = vst.msk [vmem:[#allocation5 + $0x28] sm:$0xff] %vm7876, %v7695
        %7883 = vst.msk [vmem:[#allocation5 + $0x30] sm:$0xff] %vm7876, %v7697
        %7884 = vst.msk [vmem:[#allocation5 + $0x38] sm:$0xff] %vm7876, %v7699
        %7885 = vst.msk [vmem:[#allocation5 + $0x40] sm:$0xff] %vm7876, %v7701
        %7886 = vst.msk [vmem:[#allocation5 + $0x48] sm:$0xff] %vm7876, %v7703
        %7887 = vst.msk [vmem:[#allocation5 + $0x50] sm:$0xff] %vm7876, %v7705
        %7888 = vst.msk [vmem:[#allocation5 + $0x58] sm:$0xff] %vm7876, %v7707
        %7889 = vst.msk [vmem:[#allocation5 + $0x60] sm:$0xff] %vm7876, %v7709
        %7890 = vst.msk [vmem:[#allocation5 + $0x68] sm:$0xff] %vm7876, %v7711
        %7891 = vst.msk [vmem:[#allocation5 + $0x70] sm:$0xff] %vm7876, %v7713
        %7892 = vst.msk [vmem:[#allocation5 + $0x78] sm:$0xff] %vm7876, %v7715
        %7893 = vst.msk [vmem:[#allocation5 + $0x80] sm:$0xff] %vm7876, %v7717
        %7894 = vst.msk [vmem:[#allocation5 + $0x88] sm:$0xff] %vm7876, %v7719
        %7895 = vst.msk [vmem:[#allocation5 + $0x90] sm:$0xff] %vm7876, %v7721
        %7896 = vst.msk [vmem:[#allocation5 + $0x98] sm:$0xff] %vm7876, %v7723
        %7897 = vst.msk [vmem:[#allocation5 + $0xa0] sm:$0xff] %vm7876, %v7725
        %7898 = vst.msk [vmem:[#allocation5 + $0xa8] sm:$0xff] %vm7876, %v7727
        %7899 = vst.msk [vmem:[#allocation5 + $0xb0] sm:$0xff] %vm7876, %v7729
        %7900 = vst.msk [vmem:[#allocation5 + $0xb8] sm:$0xff] %vm7876, %v7731
        %7901 = vst.msk [vmem:[#allocation5 + $0xc0] sm:$0xff] %vm7876, %v7733
        %7902 = vst.msk [vmem:[#allocation5 + $0xc8] sm:$0xff] %vm7876, %v7735
        %7903 = vst.msk [vmem:[#allocation5 + $0xd0] sm:$0xff] %vm7876, %v7737
        %7904 = vst.msk [vmem:[#allocation5 + $0xd8] sm:$0xff] %vm7876, %v7739
        %7905 = vst.msk [vmem:[#allocation5 + $0xe0] sm:$0xff] %vm7876, %v7741
        %7906 = vst.msk [vmem:[#allocation5 + $0xe8] sm:$0xff] %vm7876, %v7743
        %7907 = vst.msk [vmem:[#allocation5 + $0xf0] sm:$0xff] %vm7876, %v7745
        %7908 = vst.msk [vmem:[#allocation5 + $0xf8] sm:$0xff] %vm7876, %v7747
        %7909 = vst.msk [vmem:[#allocation5 + $0x100] sm:$0xff] %vm7876, %v7749
        %7910 = vst.msk [vmem:[#allocation5 + $0x108] sm:$0xff] %vm7876, %v7751
        %7911 = vst.msk [vmem:[#allocation5 + $0x110] sm:$0xff] %vm7876, %v7753
        %7912 = vst.msk [vmem:[#allocation5 + $0x118] sm:$0xff] %vm7876, %v7755
        %7913 = vst.msk [vmem:[#allocation5 + $0x120] sm:$0xff] %vm7876, %v7757
        %7914 = vst.msk [vmem:[#allocation5 + $0x128] sm:$0xff] %vm7876, %v7759
        %7915 = vst.msk [vmem:[#allocation5 + $0x130] sm:$0xff] %vm7876, %v7761
        %7916 = vst.msk [vmem:[#allocation5 + $0x138] sm:$0xff] %vm7876, %v7763
        %7917 = vst.msk [vmem:[#allocation5 + $0x140] sm:$0xff] %vm7876, %v7765
        %7918 = vst.msk [vmem:[#allocation5 + $0x148] sm:$0xff] %vm7876, %v7767
        %7919 = vst.msk [vmem:[#allocation5 + $0x150] sm:$0xff] %vm7876, %v7769
        %7920 = vst.msk [vmem:[#allocation5 + $0x158] sm:$0xff] %vm7876, %v7771
        %7921 = vst.msk [vmem:[#allocation5 + $0x160] sm:$0xff] %vm7876, %v7773
        %7922 = vst.msk [vmem:[#allocation5 + $0x168] sm:$0xff] %vm7876, %v7775
        %7923 = vst.msk [vmem:[#allocation5 + $0x170] sm:$0xff] %vm7876, %v7777
        %7924 = vst.msk [vmem:[#allocation5 + $0x178] sm:$0xff] %vm7876, %v7779
        %7925 = vst.msk [vmem:[#allocation5 + $0x180] sm:$0xff] %vm7876, %v7781
        %7926 = vst.msk [vmem:[#allocation5 + $0x188] sm:$0xff] %vm7876, %v7783
        %7927 = vst.msk [vmem:[#allocation5 + $0x190] sm:$0xff] %vm7876, %v7785
        %7928 = vst.msk [vmem:[#allocation5 + $0x198] sm:$0xff] %vm7876, %v7787
        %7929 = vst.msk [vmem:[#allocation5 + $0x1a0] sm:$0xff] %vm7876, %v7789
        %7930 = vst.msk [vmem:[#allocation5 + $0x1a8] sm:$0xff] %vm7876, %v7791
        %7931 = vst.msk [vmem:[#allocation5 + $0x1b0] sm:$0xff] %vm7876, %v7793
        %7932 = vst.msk [vmem:[#allocation5 + $0x1b8] sm:$0xff] %vm7876, %v7795
        %7933 = vst.msk [vmem:[#allocation5 + $0x1c0] sm:$0xff] %vm7876, %v7797
        %7934 = vst.msk [vmem:[#allocation5 + $0x1c8] sm:$0xff] %vm7876, %v7799
        %7935 = vst.msk [vmem:[#allocation5 + $0x1d0] sm:$0xff] %vm7876, %v7801
        %7936 = vst.msk [vmem:[#allocation5 + $0x1d8] sm:$0xff] %vm7876, %v7803
        %7937 = vst.msk [vmem:[#allocation5 + $0x1e0] sm:$0xff] %vm7876, %v7805
        %7938 = vst.msk [vmem:[#allocation5 + $0x1e8] sm:$0xff] %vm7876, %v7807
        %7939 = vst.msk [vmem:[#allocation5 + $0x1f0] sm:$0xff] %vm7876, %v7809
        %7940 = vst.msk [vmem:[#allocation5 + $0x1f8] sm:$0xff] %vm7876, %v7811
        %v7941 = vld [vmem:[%s291] sm:$0xff]
        %v7942 = vld [vmem:[%s291 + $0x8] sm:$0xff]
        %v7943 = vld [vmem:[%s291 + $0x10] sm:$0xf]
        %v7944 = vld [vmem:[#allocation5] sm:$0xff]
        %v7945 = vld [vmem:[#allocation5 + $0x8] sm:$0xff]
        %v7946 = vld [vmem:[#allocation5 + $0x10] sm:$0xff]
        %v7947 = vld [vmem:[#allocation5 + $0x18] sm:$0xff]
        %v7948 = vld [vmem:[#allocation5 + $0x20] sm:$0xff]
        %v7949 = vld [vmem:[#allocation5 + $0x28] sm:$0xff]
        %v7950 = vld [vmem:[#allocation5 + $0x30] sm:$0xff]
        %v7951 = vld [vmem:[#allocation5 + $0x38] sm:$0xff]
        %v7952 = vld [vmem:[#allocation5 + $0x40] sm:$0xff]
        %v7953 = vld [vmem:[#allocation5 + $0x48] sm:$0xff]
        %v7954 = vld [vmem:[#allocation5 + $0x50] sm:$0xff]
        %v7955 = vld [vmem:[#allocation5 + $0x58] sm:$0xff]
        %v7956 = vld [vmem:[#allocation5 + $0x60] sm:$0xff]
        %v7957 = vld [vmem:[#allocation5 + $0x68] sm:$0xff]
        %v7958 = vld [vmem:[#allocation5 + $0x70] sm:$0xff]
        %v7959 = vld [vmem:[#allocation5 + $0x78] sm:$0xff]
        %v7960 = vld [vmem:[#allocation5 + $0x80] sm:$0xff]
        %v7961 = vld [vmem:[#allocation5 + $0x88] sm:$0xff]
        %v7962 = vld [vmem:[#allocation5 + $0x90] sm:$0xff]
        %v7963 = vld [vmem:[#allocation5 + $0x98] sm:$0xff]
        %v7964 = vld [vmem:[#allocation5 + $0xa0] sm:$0xff]
        %v7965 = vld [vmem:[#allocation5 + $0xa8] sm:$0xff]
        %v7966 = vld [vmem:[#allocation5 + $0xb0] sm:$0xff]
        %v7967 = vld [vmem:[#allocation5 + $0xb8] sm:$0xff]
        %v7968 = vld [vmem:[#allocation5 + $0xc0] sm:$0xff]
        %v7969 = vld [vmem:[#allocation5 + $0xc8] sm:$0xff]
        %v7970 = vld [vmem:[#allocation5 + $0xd0] sm:$0xff]
        %v7971 = vld [vmem:[#allocation5 + $0xd8] sm:$0xff]
        %v7972 = vld [vmem:[#allocation5 + $0xe0] sm:$0xff]
        %v7973 = vld [vmem:[#allocation5 + $0xe8] sm:$0xff]
        %v7974 = vld [vmem:[#allocation5 + $0xf0] sm:$0xff]
        %v7975 = vld [vmem:[#allocation5 + $0xf8] sm:$0xff]
        %v7976 = vld [vmem:[#allocation5 + $0x100] sm:$0xff]
        %v7977 = vld [vmem:[#allocation5 + $0x108] sm:$0xff]
        %v7978 = vld [vmem:[#allocation5 + $0x110] sm:$0xff]
        %v7979 = vld [vmem:[#allocation5 + $0x118] sm:$0xff]
        %v7980 = vld [vmem:[#allocation5 + $0x120] sm:$0xff]
        %v7981 = vld [vmem:[#allocation5 + $0x128] sm:$0xff]
        %v7982 = vld [vmem:[#allocation5 + $0x130] sm:$0xff]
        %v7983 = vld [vmem:[#allocation5 + $0x138] sm:$0xff]
        %v7984 = vld [vmem:[#allocation5 + $0x140] sm:$0xff]
        %v7985 = vld [vmem:[#allocation5 + $0x148] sm:$0xff]
        %v7986 = vld [vmem:[#allocation5 + $0x150] sm:$0xff]
        %v7987 = vld [vmem:[#allocation5 + $0x158] sm:$0xff]
        %v7988 = vld [vmem:[#allocation5 + $0x160] sm:$0xff]
        %v7989 = vld [vmem:[#allocation5 + $0x168] sm:$0xff]
        %v7990 = vld [vmem:[#allocation5 + $0x170] sm:$0xff]
        %v7991 = vld [vmem:[#allocation5 + $0x178] sm:$0xff]
        %v7992 = vld [vmem:[#allocation5 + $0x180] sm:$0xff]
        %v7993 = vld [vmem:[#allocation5 + $0x188] sm:$0xff]
        %v7994 = vld [vmem:[#allocation5 + $0x190] sm:$0xff]
        %v7995 = vld [vmem:[#allocation5 + $0x198] sm:$0xff]
        %v7996 = vld [vmem:[#allocation5 + $0x1a0] sm:$0xff]
        %v7997 = vld [vmem:[#allocation5 + $0x1a8] sm:$0xff]
        %v7998 = vld [vmem:[#allocation5 + $0x1b0] sm:$0xff]
        %v7999 = vld [vmem:[#allocation5 + $0x1b8] sm:$0xff]
        %v8000 = vld [vmem:[#allocation5 + $0x1c0] sm:$0xff]
        %v8001 = vld [vmem:[#allocation5 + $0x1c8] sm:$0xff]
        %v8002 = vld [vmem:[#allocation5 + $0x1d0] sm:$0xff]
        %v8003 = vld [vmem:[#allocation5 + $0x1d8] sm:$0xff]
        %v8004 = vld [vmem:[#allocation5 + $0x1e0] sm:$0xff]
        %v8005 = vld [vmem:[#allocation5 + $0x1e8] sm:$0xff]
        %v8006 = vld [vmem:[#allocation5 + $0x1f0] sm:$0xff]
        %v8007 = vld [vmem:[#allocation5 + $0x1f8] sm:$0xff]
        %v8008 = vld [vmem:[%s296] sm:$0xff]
        %v8009 = vld [vmem:[%s296 + $0x8] sm:$0xff]
        %v8010 = vld [vmem:[%s296 + $0x10] sm:$0xf]
        %8012 = vset.pattern.permute.xlu0 0
        %8013 = vperm.xlu0 %8012, %v8008
        %v8014 = vpop.permute.xlu0 %8013
        %8017 = vset.pattern.permute.xlu0 0
        %8018 = vperm.xlu0 %8017, %v8009
        %v8019 = vpop.permute.xlu0 %8018
        %8022 = vset.pattern.permute.xlu0 0
        %8023 = vperm.xlu0 %8022, %v8010
        %v8024 = vpop.permute.xlu0 %8023
        %vm8026 = vcmask 588800
        %v8028 = vsel %vm8026, %v7941, 0
        %v8031 = vsel %vm8026, %v7942, 0
        %v8034 = vsel %vm8026, %v7943, 0
        %v8037 = vsel %vm8026, %v7944, 0
        %v8040 = vsel %vm8026, %v7945, 0
        %v8043 = vsel %vm8026, %v7946, 0
        %v8046 = vsel %vm8026, %v7947, 0
        %v8049 = vsel %vm8026, %v7948, 0
        %v8052 = vsel %vm8026, %v7949, 0
        %v8055 = vsel %vm8026, %v7950, 0
        %v8058 = vsel %vm8026, %v7951, 0
        %v8061 = vsel %vm8026, %v7952, 0
        %v8064 = vsel %vm8026, %v7953, 0
        %v8067 = vsel %vm8026, %v7954, 0
        %v8070 = vsel %vm8026, %v7955, 0
        %v8073 = vsel %vm8026, %v7956, 0
        %v8076 = vsel %vm8026, %v7957, 0
        %v8079 = vsel %vm8026, %v7958, 0
        %v8082 = vsel %vm8026, %v7959, 0
        %v8085 = vsel %vm8026, %v7960, 0
        %v8088 = vsel %vm8026, %v7961, 0
        %v8091 = vsel %vm8026, %v7962, 0
        %v8094 = vsel %vm8026, %v7963, 0
        %v8097 = vsel %vm8026, %v7964, 0
        %v8100 = vsel %vm8026, %v7965, 0
        %v8103 = vsel %vm8026, %v7966, 0
        %v8106 = vsel %vm8026, %v7967, 0
        %v8109 = vsel %vm8026, %v7968, 0
        %v8112 = vsel %vm8026, %v7969, 0
        %v8115 = vsel %vm8026, %v7970, 0
        %v8118 = vsel %vm8026, %v7971, 0
        %v8121 = vsel %vm8026, %v7972, 0
        %v8124 = vsel %vm8026, %v7973, 0
        %v8127 = vsel %vm8026, %v7974, 0
        %v8130 = vsel %vm8026, %v7975, 0
        %v8133 = vsel %vm8026, %v7976, 0
        %v8136 = vsel %vm8026, %v7977, 0
        %v8139 = vsel %vm8026, %v7978, 0
        %v8142 = vsel %vm8026, %v7979, 0
        %v8145 = vsel %vm8026, %v7980, 0
        %v8148 = vsel %vm8026, %v7981, 0
        %v8151 = vsel %vm8026, %v7982, 0
        %v8154 = vsel %vm8026, %v7983, 0
        %v8157 = vsel %vm8026, %v7984, 0
        %v8160 = vsel %vm8026, %v7985, 0
        %v8163 = vsel %vm8026, %v7986, 0
        %v8166 = vsel %vm8026, %v7987, 0
        %v8169 = vsel %vm8026, %v7988, 0
        %v8172 = vsel %vm8026, %v7989, 0
        %v8175 = vsel %vm8026, %v7990, 0
        %v8178 = vsel %vm8026, %v7991, 0
        %v8181 = vsel %vm8026, %v7992, 0
        %v8184 = vsel %vm8026, %v7993, 0
        %v8187 = vsel %vm8026, %v7994, 0
        %v8190 = vsel %vm8026, %v7995, 0
        %v8193 = vsel %vm8026, %v7996, 0
        %v8196 = vsel %vm8026, %v7997, 0
        %v8199 = vsel %vm8026, %v7998, 0
        %v8202 = vsel %vm8026, %v7999, 0
        %v8205 = vsel %vm8026, %v8000, 0
        %v8208 = vsel %vm8026, %v8001, 0
        %v8211 = vsel %vm8026, %v8002, 0
        %v8214 = vsel %vm8026, %v8003, 0
        %v8217 = vsel %vm8026, %v8004, 0
        %v8220 = vsel %vm8026, %v8005, 0
        %v8223 = vsel %vm8026, %v8006, 0
        %v8226 = vsel %vm8026, %v8007, 0
        %8228 = vmatprep.subr.mxu0 0.0
        %8229 = vmatpush1.xpose.msra.mxu0 %v8037
        %8230 = vmatprep.subr.mxu0 0.0
        %8231 = vmatpush1.xpose.msra.mxu0 %v8040
        %8232 = vmatprep.subr.mxu0 0.0
        %8233 = vmatpush1.xpose.msra.mxu0 %v8043
        %8234 = vmatprep.subr.mxu0 0.0
        %8235 = vmatpush1.xpose.msra.mxu0 %v8046
        %8236 = vmatprep.subr.mxu0 0.0
        %8237 = vmatpush1.xpose.msra.mxu0 %v8049
        %8238 = vmatprep.subr.mxu0 0.0
        %8239 = vmatpush1.xpose.msra.mxu0 %v8052
        %8240 = vmatprep.subr.mxu0 0.0
        %8241 = vmatpush1.xpose.msra.mxu0 %v8055
        %8242 = vmatprep.subr.mxu0 0.0
        %8243 = vmatpush1.xpose.msra.mxu0 %v8058
        %8244 = vmatprep.subr.mxu0 0.0
        %8245 = vmatpush1.xpose.msra.mxu0 %v8061
        %8246 = vmatprep.subr.mxu0 0.0
        %8247 = vmatpush1.xpose.msra.mxu0 %v8064
        %8248 = vmatprep.subr.mxu0 0.0
        %8249 = vmatpush1.xpose.msra.mxu0 %v8067
        %8250 = vmatprep.subr.mxu0 0.0
        %8251 = vmatpush1.xpose.msra.mxu0 %v8070
        %8252 = vmatprep.subr.mxu0 0.0
        %8253 = vmatpush1.xpose.msra.mxu0 %v8073
        %8254 = vmatprep.subr.mxu0 0.0
        %8255 = vmatpush1.xpose.msra.mxu0 %v8076
        %8256 = vmatprep.subr.mxu0 0.0
        %8257 = vmatpush1.xpose.msra.mxu0 %v8079
        %8258 = vmatprep.subr.mxu0 0.0
        %8259 = vmatpush1.xpose.msra.mxu0 %v8082
        %8260 = vmatprep.subr.mxu0 0.0
        %8261 = vmatpush1.xpose.msra.mxu0 %v8085
        %8262 = vmatprep.subr.mxu0 0.0
        %8263 = vmatpush1.xpose.msra.mxu0 %v8088
        %8264 = vmatprep.subr.mxu0 0.0
        %8265 = vmatpush1.xpose.msra.mxu0 %v8091
        %8266 = vmatprep.subr.mxu0 0.0
        %8267 = vmatpush1.xpose.msra.mxu0 %v8094
        %8268 = vmatprep.subr.mxu0 0.0
        %8269 = vmatpush1.xpose.msra.mxu0 %v8097
        %8270 = vmatprep.subr.mxu0 0.0
        %8271 = vmatpush1.xpose.msra.mxu0 %v8100
        %8272 = vmatprep.subr.mxu0 0.0
        %8273 = vmatpush1.xpose.msra.mxu0 %v8103
        %8274 = vmatprep.subr.mxu0 0.0
        %8275 = vmatpush1.xpose.msra.mxu0 %v8106
        %8276 = vmatprep.subr.mxu0 0.0
        %8277 = vmatpush1.xpose.msra.mxu0 %v8109
        %8278 = vmatprep.subr.mxu0 0.0
        %8279 = vmatpush1.xpose.msra.mxu0 %v8112
        %8280 = vmatprep.subr.mxu0 0.0
        %8281 = vmatpush1.xpose.msra.mxu0 %v8115
        %8282 = vmatprep.subr.mxu0 0.0
        %8283 = vmatpush1.xpose.msra.mxu0 %v8118
        %8284 = vmatprep.subr.mxu0 0.0
        %8285 = vmatpush1.xpose.msra.mxu0 %v8121
        %8286 = vmatprep.subr.mxu0 0.0
        %8287 = vmatpush1.xpose.msra.mxu0 %v8124
        %8288 = vmatprep.subr.mxu0 0.0
        %8289 = vmatpush1.xpose.msra.mxu0 %v8127
        %8290 = vmatprep.subr.mxu0 0.0
        %8291 = vmatpush1.xpose.msra.mxu0 %v8130
        %8292 = vmatprep.mubr.f32.mxu0 0.0
        %8293 = vmatmul.mubr.f32.gmra.mrb[0].mxu0 %v8028
        %v8294 = vpop.f32.mrb[0].mxu0
        %v8295 = vadd.f32 %v8014, %v8294
        %v8296 = vpop.f32.mrb[0].mxu0
        %v8297 = vadd.f32 %v8014, %v8296
        %8298 = vmatprep.mubr.f32.mxu0 0.0
        %8299 = vmatmul.mubr.f32.gmra.mrb[0].mxu0 %v8031
        %v8300 = vpop.f32.mrb[0].mxu0
        %v8301 = vadd.f32 %v8019, %v8300
        %v8302 = vpop.f32.mrb[0].mxu0
        %v8303 = vadd.f32 %v8019, %v8302
        %8304 = vmatprep.mubr.f32.mxu0 0.0
        %8305 = vmatmul.mubr.f32.gmra.mrb[0].mxu0 %v8034
        %v8306 = vpop.f32.mrb[0].mxu0
        %v8307 = vadd.f32 %v8024, %v8306
        %v8308 = vpop.f32.mrb[0].mxu0
        %v8309 = vadd.f32 %v8024, %v8308
        %8310 = vdwg.mxu0
        %8311 = vmatprep.subr.mxu0 0.0
        %8312 = vmatpush1.xpose.msra.mxu0 %v8133
        %8313 = vmatprep.subr.mxu0 0.0
        %8314 = vmatpush1.xpose.msra.mxu0 %v8136
        %8315 = vmatprep.subr.mxu0 0.0
        %8316 = vmatpush1.xpose.msra.mxu0 %v8139
        %8317 = vmatprep.subr.mxu0 0.0
        %8318 = vmatpush1.xpose.msra.mxu0 %v8142
        %8319 = vmatprep.subr.mxu0 0.0
        %8320 = vmatpush1.xpose.msra.mxu0 %v8145
        %8321 = vmatprep.subr.mxu0 0.0
        %8322 = vmatpush1.xpose.msra.mxu0 %v8148
        %8323 = vmatprep.subr.mxu0 0.0
        %8324 = vmatpush1.xpose.msra.mxu0 %v8151
        %8325 = vmatprep.subr.mxu0 0.0
        %8326 = vmatpush1.xpose.msra.mxu0 %v8154
        %8327 = vmatprep.subr.mxu0 0.0
        %8328 = vmatpush1.xpose.msra.mxu0 %v8157
        %8329 = vmatprep.subr.mxu0 0.0
        %8330 = vmatpush1.xpose.msra.mxu0 %v8160
        %8331 = vmatprep.subr.mxu0 0.0
        %8332 = vmatpush1.xpose.msra.mxu0 %v8163
        %8333 = vmatprep.subr.mxu0 0.0
        %8334 = vmatpush1.xpose.msra.mxu0 %v8166
        %8335 = vmatprep.subr.mxu0 0.0
        %8336 = vmatpush1.xpose.msra.mxu0 %v8169
        %8337 = vmatprep.subr.mxu0 0.0
        %8338 = vmatpush1.xpose.msra.mxu0 %v8172
        %8339 = vmatprep.subr.mxu0 0.0
        %8340 = vmatpush1.xpose.msra.mxu0 %v8175
        %8341 = vmatprep.subr.mxu0 0.0
        %8342 = vmatpush1.xpose.msra.mxu0 %v8178
        %8343 = vmatprep.subr.mxu0 0.0
        %8344 = vmatpush1.xpose.msra.mxu0 %v8181
        %8345 = vmatprep.subr.mxu0 0.0
        %8346 = vmatpush1.xpose.msra.mxu0 %v8184
        %8347 = vmatprep.subr.mxu0 0.0
        %8348 = vmatpush1.xpose.msra.mxu0 %v8187
        %8349 = vmatprep.subr.mxu0 0.0
        %8350 = vmatpush1.xpose.msra.mxu0 %v8190
        %8351 = vmatprep.subr.mxu0 0.0
        %8352 = vmatpush1.xpose.msra.mxu0 %v8193
        %8353 = vmatprep.subr.mxu0 0.0
        %8354 = vmatpush1.xpose.msra.mxu0 %v8196
        %8355 = vmatprep.subr.mxu0 0.0
        %8356 = vmatpush1.xpose.msra.mxu0 %v8199
        %8357 = vmatprep.subr.mxu0 0.0
        %8358 = vmatpush1.xpose.msra.mxu0 %v8202
        %8359 = vmatprep.subr.mxu0 0.0
        %8360 = vmatpush1.xpose.msra.mxu0 %v8205
        %8361 = vmatprep.subr.mxu0 0.0
        %8362 = vmatpush1.xpose.msra.mxu0 %v8208
        %8363 = vmatprep.subr.mxu0 0.0
        %8364 = vmatpush1.xpose.msra.mxu0 %v8211
        %8365 = vmatprep.subr.mxu0 0.0
        %8366 = vmatpush1.xpose.msra.mxu0 %v8214
        %8367 = vmatprep.subr.mxu0 0.0
        %8368 = vmatpush1.xpose.msra.mxu0 %v8217
        %8369 = vmatprep.subr.mxu0 0.0
        %8370 = vmatpush1.xpose.msra.mxu0 %v8220
        %8371 = vmatprep.subr.mxu0 0.0
        %8372 = vmatpush1.xpose.msra.mxu0 %v8223
        %8373 = vmatprep.subr.mxu0 0.0
        %8374 = vmatpush1.xpose.msra.mxu0 %v8226
        %8375 = vmatprep.mubr.f32.mxu0 0.0
        %8376 = vmatmul.mubr.f32.gmra.mrb[0].mxu0 %v8028
        %v8377 = vpop.f32.mrb[0].mxu0
        %v8378 = vadd.f32 %v8014, %v8377
        %v8379 = vpop.f32.mrb[0].mxu0
        %v8380 = vadd.f32 %v8014, %v8379
        %8381 = vmatprep.mubr.f32.mxu0 0.0
        %8382 = vmatmul.mubr.f32.gmra.mrb[0].mxu0 %v8031
        %v8383 = vpop.f32.mrb[0].mxu0
        %v8384 = vadd.f32 %v8019, %v8383
        %v8385 = vpop.f32.mrb[0].mxu0
        %v8386 = vadd.f32 %v8019, %v8385
        %8387 = vmatprep.mubr.f32.mxu0 0.0
        %8388 = vmatmul.mubr.f32.gmra.mrb[0].mxu0 %v8034
        %v8389 = vpop.f32.mrb[0].mxu0
        %v8390 = vadd.f32 %v8024, %v8389
        %v8391 = vpop.f32.mrb[0].mxu0
        %v8392 = vadd.f32 %v8024, %v8391
        %8393 = vdwg.mxu0
        %8394 = vst [vmem:[%s273] sm:$0xff] %v8295
        %8395 = vst [vmem:[%s273 + $0x8] sm:$0xff] %v8297
        %8396 = vst [vmem:[%s273 + $0x10] sm:$0xff] %v8378
        %8397 = vst [vmem:[%s273 + $0x18] sm:$0xff] %v8380
        %8398 = vst [vmem:[%s273 + $0x20] sm:$0xff] %v8301
        %8399 = vst [vmem:[%s273 + $0x28] sm:$0xff] %v8303
        %8400 = vst [vmem:[%s273 + $0x30] sm:$0xff] %v8384
        %8401 = vst [vmem:[%s273 + $0x38] sm:$0xff] %v8386
        %8402 = vst [vmem:[%s273 + $0x40] sm:$0xf] %v8307
        %8403 = vst [vmem:[%s273 + $0x48] sm:$0xf] %v8309
        %8404 = vst [vmem:[%s273 + $0x50] sm:$0xf] %v8390
        %8405 = vst [vmem:[%s273 + $0x58] sm:$0xf] %v8392
        %s8406 = sand.u32 %s157, 1
        %s8407 = scalar_lea.sflag [#allocation7], %s8406
        %s8408 = sand.u32 %s157, 1
        %s8409 = smul.addr %s8408, 96
        %s8410 = scalar_lea.vmem [#allocation6], %s8409
        // Predicated region
        $region41: #{tpu_custom_call.1} parent=39 // pred_check
          %p8411 = pneg %p167
        $region42: #{tpu_custom_call.1} parent=39 // pred_check_branch
          %8413 = sbr.rel (%p8411) target = $region44
        $region43: #{tpu_custom_call.1} parent=39 // pred_region
          %s8415 = ssub.s32 1536, 1536
          %8416 = vsyncadd %s8407, %s8415
          %s8417 = smul.addr %s19, 12
          %s8418 = smul.addr %s8417, 128
          %s8419 = scalar_lea.hbm %s5, %s8418
          %s8420 = sshll.u32 %s8410, 4
          %s8421 = int_to_ptr.vmem [resolvable:$true] %s8420
          %8426 = dma.vmem_to_hbm [thread:$0]  %s8421, 1536, %s8419, %s8407, 512, 512, 32
        $region44: #{tpu_custom_call.1} parent=39 // pred_fallthru
          _
      $region40: #{tpu_custom_call.1} parent=5 // pred_fallthru
        _
      %p8427 = scmp.le.s32.totalorder 2, %s14
      // Predicated region
      $region45: #{tpu_custom_call.1} parent=5 // pred_check
        %p8428 = pneg %p8427
      $region46: #{tpu_custom_call.1} parent=5 // pred_check_branch
        %8430 = sbr.rel (%p8428) target = $region48
      $region47: #{tpu_custom_call.1} parent=5 // pred_region
        %s8431 = ssub.s32 %s14, 2
        // Predicated region
        $region49: #{tpu_custom_call.1} parent=47 // pred_check
          %p8432 = pneg %p173
        $region50: #{tpu_custom_call.1} parent=47 // pred_check_branch
          %8434 = sbr.rel (%p8432) target = $region52
        $region51: #{tpu_custom_call.1} parent=47 // pred_region
          %s8435 = sand.u32 %s158, 1
          %s8436 = scalar_lea.sflag [#allocation7], %s8435
          %s8437 = sand.u32 %s158, 1
          %s8438 = smul.addr %s8437, 96
          %s8439 = scalar_lea.vmem [#allocation6], %s8438
          %8440 = dma.done %s8436, 1536
        $region52: #{tpu_custom_call.1} parent=47 // pred_fallthru
          _
      $region48: #{tpu_custom_call.1} parent=5 // pred_fallthru
        _
    $region6: #{tpu_custom_call.1} parent=1 // loop_footer
      %s18 = sadd.s32 1, %s14
    $region7: #{tpu_custom_call.1} parent=1 // loop_footer_branch
      %13 = sbr.rel target = $region3
    $region8: #{tpu_custom_call.1} parent=1 // loop_exit
      _
    %8441 = vsyncpa [#allocation7], 1
    %s8442 = scalar_lea.sflag [#allocation7], 1
    %8443 = vsyncpa %s8442, 1

</llo_original>
